<compile_context>
chip_gen: v6e
topology: v6e:2x2x1
jax: 0.10.0
libtpu: 0.0.40
codegen_flags: <defaults>
</compile_context>

<pallas_src>
import jax
import jax.numpy as jnp
import numpy as np
from jax.experimental import pallas as pl
from jax.experimental.pallas import tpu as pltpu

BT = 8  # batch tile per grid step (multiple of 8 keeps in-kernel slices sublane-aligned)


# ----------------------------- Pallas kernels -----------------------------

def _conv_relu_pool_kernel(p_ref, w_ref, b_ref, o_ref):
    # p_ref: (4*Bt*P, F) patch rows, pool-slot major
    # w_ref: (F, 128) zero-padded weights   b_ref: (1, 128)   o_ref: (Bt*P, 128)
    m = o_ref.shape[0]
    h = jnp.dot(p_ref[...], w_ref[...], preferred_element_type=jnp.float32)
    h = jnp.maximum(h + b_ref[...], 0.0)               # bias + ReLU before pooling
    # max over the 4 pool-window slots = 3 VPU maxes over aligned row slices
    o_ref[...] = jnp.maximum(jnp.maximum(h[0:m], h[m:2 * m]),
                             jnp.maximum(h[2 * m:3 * m], h[3 * m:4 * m]))


def conv_relu_pool(rows, w_pad, b_pad, P, Bt):
    m_in = 4 * Bt * P
    m_out = Bt * P
    T = rows.shape[0] // m_in
    F = rows.shape[1]
    cost = pl.CostEstimate(
        flops=int(2 * T * m_in * F * 128),
        transcendentals=0,
        bytes_accessed=int(4 * (rows.size + w_pad.size + b_pad.size + T * m_out * 128)))
    return pl.pallas_call(
        _conv_relu_pool_kernel,
        out_shape=jax.ShapeDtypeStruct((T * m_out, 128), jnp.float32),
        grid=(T,),
        in_specs=[
            pl.BlockSpec((m_in, F), lambda t: (t, 0)),
            pl.BlockSpec((F, 128), lambda t: (0, 0)),    # block-invariant weights
            pl.BlockSpec((1, 128), lambda t: (0, 0)),
        ],
        out_specs=pl.BlockSpec((m_out, 128), lambda t: (t, 0)),
        compiler_params=pltpu.CompilerParams(dimension_semantics=("parallel",)),
        cost_estimate=cost,
    )(rows, w_pad, b_pad)


def _mlp_kernel(x_ref, w1_ref, b1_ref, w2_ref, b2_ref, w3_ref, b3_ref, o_ref):
    h = jnp.dot(x_ref[...], w1_ref[...], preferred_element_type=jnp.float32)
    h = jnp.maximum(h + b1_ref[...], 0.0)
    h = jnp.dot(h, w2_ref[...], preferred_element_type=jnp.float32)
    h = jnp.maximum(h + b2_ref[...], 0.0)
    o_ref[...] = jnp.dot(h, w3_ref[...], preferred_element_type=jnp.float32) + b3_ref[...]


def mlp(x, w1, b1, w2, b2, w3, b3, Bm):
    n, k1 = x.shape
    T = n // Bm
    cost = pl.CostEstimate(
        flops=int(2 * n * (k1 * 128 + 128 * 128 + 128 * 128)),
        transcendentals=0,
        bytes_accessed=int(4 * (x.size + w1.size + w2.size + w3.size
                                + b1.size + b2.size + b3.size + n * 128)))

    def full(a):
        return pl.BlockSpec(a.shape, lambda t: (0, 0))

    return pl.pallas_call(
        _mlp_kernel,
        out_shape=jax.ShapeDtypeStruct((n, 128), jnp.float32),
        grid=(T,),
        in_specs=[pl.BlockSpec((Bm, k1), lambda t: (t, 0)),
                  full(w1), full(b1), full(w2), full(b2), full(w3), full(b3)],
        out_specs=pl.BlockSpec((Bm, 128), lambda t: (t, 0)),
        compiler_params=pltpu.CompilerParams(dimension_semantics=("parallel",)),
        cost_estimate=cost,
    )(x, w1, b1, w2, b2, w3, b3)


# ----------------------------- layout glue (plain JAX, data movement only) -----------------------------

def _im2col_nhwc(x, K):
    # x: (N, H, W, C) -> (N, Ho, Wo, K*K*C); feature order (ky, kx, c)
    N, H, W, C = x.shape
    Ho, Wo = H - K + 1, W - K + 1
    cols = [x[:, ky:ky + Ho, kx:kx + Wo, :] for ky in range(K) for kx in range(K)]
    return jnp.concatenate(cols, axis=-1), Ho, Wo


def _pool_slot_rows(patches, Ho, Wo, Bt):
    # (N, Ho, Wo, F) -> (N//Bt * 4*Bt*P, F): rows ordered (tile, pool-slot,
    # sample-in-tile, pooled position); slot = dy*2+dx of the 2x2 window
    # (floor mode: trailing row/col dropped, like F.max_pool2d).
    N, _, _, F = patches.shape
    Ph, Pw = Ho // 2, Wo // 2
    p = patches[:, :2 * Ph, :2 * Pw, :].reshape(N, Ph, 2, Pw, 2, F)
    p = p.transpose(0, 2, 4, 1, 3, 5)                   # (N, dy, dx, Ph, Pw, F)
    p = p.reshape(N // Bt, Bt, 4, Ph * Pw, F)
    p = p.transpose(0, 2, 1, 3, 4)                      # (T, 4, Bt, P, F)
    return p.reshape(-1, F), Ph * Pw


# ----------------------------- model -----------------------------

def init_params(key):
    ks = jax.random.split(key, 10)

    def u(k, shape, fan_in):
        s = 1.0 / np.sqrt(fan_in)
        return jax.random.uniform(k, shape, jnp.float32, -s, s)

    w_c1 = u(ks[0], (6, 1, 3, 3), 1 * 9)
    b_c1 = u(ks[1], (6,), 1 * 9)
    w_c2 = u(ks[2], (16, 6, 3, 3), 6 * 9)
    b_c2 = u(ks[3], (16,), 6 * 9)
    w_f1 = u(ks[4], (120, 400), 400)
    b_f1 = u(ks[5], (120,), 400)
    w_f2 = u(ks[6], (84, 129), 129)    # shapes exactly as in the module __init__
    b_f2 = u(ks[7], (84,), 129)
    w_f3 = u(ks[8], (10, 84), 84)
    b_f3 = u(ks[9], (10,), 84)
    return (w_c1, b_c1, w_c2, b_c2, w_f1, b_f1, w_f2, b_f2, w_f3, b_f3)


def net_forward(x, params):
    (w_c1, b_c1, w_c2, b_c2, w_f1, b_f1, w_f2, b_f2, w_f3, b_f3) = params
    N = x.shape[0]
    n_pad = -(-N // BT) * BT
    if n_pad != N:
        x = jnp.concatenate([x, jnp.zeros((n_pad - N,) + x.shape[1:], x.dtype)], 0)

    xh = jnp.transpose(x, (0, 2, 3, 1))                 # NHWC, (n_pad, 28, 28, 1)

    # ---- conv1 (1->6, k3) + ReLU + maxpool 2x2 ----
    w1m = jnp.zeros((9, 128), jnp.float32).at[:, :6].set(
        w_c1.transpose(0, 2, 3, 1).reshape(6, 9).T)     # features (ky, kx, c)
    b1m = jnp.zeros((1, 128), jnp.float32).at[0, :6].set(b_c1)
    p1, Ho1, Wo1 = _im2col_nhwc(xh, 3)                  # (n_pad, 26, 26, 9)
    rows1, P1 = _pool_slot_rows(p1, Ho1, Wo1, BT)
    o1 = conv_relu_pool(rows1, w1m, b1m, P1, BT)        # (n_pad*169, 128)
    h1 = o1.reshape(n_pad, 13, 13, 128)[..., :6]        # NHWC, pad lanes dropped

    # ---- conv2 (6->16, k3) + ReLU + maxpool 2x2 (floor) ----
    w2m = jnp.zeros((54, 128), jnp.float32).at[:, :16].set(
        w_c2.transpose(0, 2, 3, 1).reshape(16, 54).T)
    b2m = jnp.zeros((1, 128), jnp.float32).at[0, :16].set(b_c2)
    p2, Ho2, Wo2 = _im2col_nhwc(h1, 3)                  # (n_pad, 11, 11, 54)
    rows2, P2 = _pool_slot_rows(p2, Ho2, Wo2, BT)
    o2 = conv_relu_pool(rows2, w2m, b2m, P2, BT)        # (n_pad*25, 128)

    # ---- fc1 -> relu -> fc2 -> relu -> fc3 ----
    # conv2's (position, 128-padded-channel) output feeds the MLP directly via
    # a free reshape; fc1's weight is permuted/zero-padded to that column order
    # so no channel slice / NCHW transpose of activations is needed.
    flat = o2.reshape(n_pad, 25 * 128)
    wf1 = jnp.zeros((25, 128, 128), jnp.float32).at[:, :16, :120].set(
        w_f1.reshape(120, 16, 25).transpose(2, 1, 0)).reshape(25 * 128, 128)
    bf1 = jnp.zeros((1, 128), jnp.float32).at[0, :120].set(b_f1)
    # TODO(synk): the module declares fc2 = Linear(129, 84) but feeds it the
    # 120-dim fc1 output (shape bug in the original net); keep the (84, 129)
    # parameter and use only its first 120 input columns so the forward runs.
    wf2 = jnp.zeros((128, 128), jnp.float32).at[:120, :84].set(w_f2[:, :120].T)
    bf2 = jnp.zeros((1, 128), jnp.float32).at[0, :84].set(b_f2)
    wf3 = jnp.zeros((128, 128), jnp.float32).at[:84, :10].set(w_f3.T)
    bf3 = jnp.zeros((1, 128), jnp.float32).at[0, :10].set(b_f3)

    out = mlp(flat, wf1, bf1, wf2, bf2, wf3, bf3, Bm=BT)   # (n_pad, 128)
    return out[:N, :10]


# ----------------------------- plain-JAX reference for verification -----------------------------

def reference_forward(x, params):
    (w_c1, b_c1, w_c2, b_c2, w_f1, b_f1, w_f2, b_f2, w_f3, b_f3) = params

    def conv(h, w, b):
        y = jax.lax.conv_general_dilated(
            h, w, window_strides=(1, 1), padding="VALID",
            dimension_numbers=("NCHW", "OIHW", "NCHW"),
            precision=jax.lax.Precision.HIGHEST)
        return y + b[None, :, None, None]

    def pool(h):
        return jax.lax.reduce_window(h, -jnp.inf, jax.lax.max,
                                     (1, 1, 2, 2), (1, 1, 2, 2), "VALID")

    dot = lambda a, b: jnp.dot(a, b, precision=jax.lax.Precision.HIGHEST)
    h = pool(jax.nn.relu(conv(x, w_c1, b_c1)))
    h = pool(jax.nn.relu(conv(h, w_c2, b_c2)))
    h = h.reshape(h.shape[0], -1)
    h = jax.nn.relu(dot(h, w_f1.T) + b_f1)
    h = jax.nn.relu(dot(h, w_f2[:, :120].T) + b_f2)
    return dot(h, w_f3.T) + b_f3


if __name__ == "__main__":
    key = jax.random.PRNGKey(0)
    k_x, k_p = jax.random.split(key)
    x = jax.random.uniform(k_x, (2, 1, 28, 28), dtype=jnp.float32)
    params = init_params(k_p)

    out = jax.block_until_ready(net_forward(x, params))
    assert out.shape == (2, 10), out.shape

    ref = reference_forward(x, params)
    np.testing.assert_allclose(np.asarray(out), np.asarray(ref), rtol=2e-2, atol=2e-2)
    print("KERNEL_OK")
</pallas_src>

<mosaic_0001>
module attributes {stable_mosaic.version = 11 : i64} {
  func.func @_conv_relu_pool_kernel(%arg0: i32, %arg1: memref<5408x9xf32, #tpu.memory_space<vmem>>, %arg2: memref<9x128xf32, #tpu.memory_space<vmem>>, %arg3: memref<1x128xf32, #tpu.memory_space<vmem>>, %arg4: memref<1352x128xf32, #tpu.memory_space<vmem>>) attributes {dimension_semantics = [#tpu.dimension_semantics<parallel>], iteration_bounds = array<i64: 1>, scalar_prefetch = 0 : i64, scratch_operands = 0 : i64, tpu.core_type = #tpu.core_type<tc>, window_params = [{transform_indices = @transform_0, window_bounds = array<i64: 5408, 9>}, {pipeline_mode = #tpu.pipeline_mode<synchronous>, transform_indices = @transform_1, window_bounds = array<i64: 9, 128>}, {pipeline_mode = #tpu.pipeline_mode<synchronous>, transform_indices = @transform_2, window_bounds = array<i64: 1, 128>}, {transform_indices = @transform_3, window_bounds = array<i64: 1352, 128>}]} {
    %c0 = arith.constant 0 : index
    %c0_0 = arith.constant 0 : index
    %0 = vector.load %arg1[%c0, %c0_0] : memref<5408x9xf32, #tpu.memory_space<vmem>>, vector<5408x9xf32>
    %c0_1 = arith.constant 0 : index
    %c0_2 = arith.constant 0 : index
    %1 = vector.load %arg2[%c0_1, %c0_2] : memref<9x128xf32, #tpu.memory_space<vmem>>, vector<9x128xf32>
    %cst = arith.constant dense<0.000000e+00> : vector<5408x128xf32>
    %2 = tpu.matmul %0, %1, %cst {dimension_numbers = #tpu.dot_dimension_numbers<[1], [0], [0], [1], [0, 0, 1, 1], [], []>} : vector<5408x9xf32>, vector<9x128xf32>, vector<5408x128xf32> -> vector<5408x128xf32>
    %c0_3 = arith.constant 0 : index
    %c0_4 = arith.constant 0 : index
    %3 = vector.load %arg3[%c0_3, %c0_4] : memref<1x128xf32, #tpu.memory_space<vmem>>, vector<1x128xf32>
    %4 = vector.broadcast %3 : vector<1x128xf32> to vector<5408x128xf32>
    %5 = arith.addf %2, %4 : vector<5408x128xf32>
    %cst_5 = arith.constant 0.000000e+00 : f32
    %6 = vector.broadcast %cst_5 : f32 to vector<5408x128xf32>
    %7 = arith.maximumf %5, %6 : vector<5408x128xf32>
    %8 = vector.extract_strided_slice %7 {offsets = [0, 0], sizes = [1352, 128], strides = [1, 1]} : vector<5408x128xf32> to vector<1352x128xf32>
    %9 = vector.extract_strided_slice %7 {offsets = [1352, 0], sizes = [1352, 128], strides = [1, 1]} : vector<5408x128xf32> to vector<1352x128xf32>
    %10 = arith.maximumf %8, %9 : vector<1352x128xf32>
    %11 = vector.extract_strided_slice %7 {offsets = [2704, 0], sizes = [1352, 128], strides = [1, 1]} : vector<5408x128xf32> to vector<1352x128xf32>
    %12 = vector.extract_strided_slice %7 {offsets = [4056, 0], sizes = [1352, 128], strides = [1, 1]} : vector<5408x128xf32> to vector<1352x128xf32>
    %13 = arith.maximumf %11, %12 : vector<1352x128xf32>
    %14 = arith.maximumf %10, %13 : vector<1352x128xf32>
    %c0_6 = arith.constant 0 : index
    %c0_7 = arith.constant 0 : index
    %15 = vector.load %arg4[%c0_6, %c0_7] : memref<1352x128xf32, #tpu.memory_space<vmem>>, vector<1352x128xf32>
    tpu.vector_store %arg4[%c0_6, %c0_7], %14 {strides = array<i32>} : memref<1352x128xf32, #tpu.memory_space<vmem>>, vector<1352x128xf32>,
    return
  }
  func.func @transform_0(%arg0: i32) -> (i32, i32) {
    %c0_i32 = arith.constant 0 : i32
    %c0_i32_0 = arith.constant 0 : i32
    return %arg0, %c0_i32 : i32, i32
  }
  func.func @transform_1(%arg0: i32) -> (i32, i32) {
    %c0_i32 = arith.constant 0 : i32
    %c0_i32_0 = arith.constant 0 : i32
    %c0_i32_1 = arith.constant 0 : i32
    return %c0_i32, %c0_i32_0 : i32, i32
  }
  func.func @transform_2(%arg0: i32) -> (i32, i32) {
    %c0_i32 = arith.constant 0 : i32
    %c0_i32_0 = arith.constant 0 : i32
    %c0_i32_1 = arith.constant 0 : i32
    return %c0_i32, %c0_i32_0 : i32, i32
  }
  func.func @transform_3(%arg0: i32) -> (i32, i32) {
    %c0_i32 = arith.constant 0 : i32
    %c0_i32_0 = arith.constant 0 : i32
    return %arg0, %c0_i32 : i32, i32
  }
}

</mosaic_0001>

<llo_original>
// kernel: tpu_custom_call.1
$region0: #{tpu_custom_call.1}
  #allocation0 [shape = 'u32[]', space=smem, size = 0x4, offset = 0x4, fixed_abs, tag = 'smem constant byte address 0x4 - core index']
  #allocation1 [shape = 'u32[144,128]{1,0:T(1,128)}', space=vmem, size = 0x12000, scoped, tag = 'internal scratch']
  %s0 = inlined_call_operand.vmem [shape: f32[5408,9], index: 0, kind: input, shape index: {}]
  %s1 = inlined_call_operand.vmem [shape: f32[9,128], index: 1, kind: input, shape index: {}]
  %s2 = inlined_call_operand.vmem [shape: f32[1,128], index: 2, kind: input, shape index: {}]
  %s3 = inlined_call_operand.hbm [shape: f32[1352,128], index: 3, kind: output, shape index: {}]
  %s4 = sld [smem:[#allocation0]]
  $region22: #{tpu_custom_call.1} parent=0
    _
  %s6 = ssub.s32 1, %s4
  %s7 = scalar_select 0, %s6, %s4
  $region1: #{tpu_custom_call.1} parent=0
    #allocation2 [shape = 'u8[692224]{0}', space=vmem, size = 0xa9000, scoped, tag = 'output window, operand 0, single buffered']
    #allocation3 [shape = 's32[1]{0}', space=sflag, size = 0x4, scoped, tag = 'scoped memory for tpu_custom_call.1']
    %8 = vsyncpa [#allocation3], 0
    // Predicated region
    $region2: #{tpu_custom_call.1} parent=1 // pred_check
      _
    $region3: #{tpu_custom_call.1} parent=1 // pred_check_branch
      %10 = sbr.rel (0) target = $region5
    $region4: #{tpu_custom_call.1} parent=1 // pred_region
      _
    $region5: #{tpu_custom_call.1} parent=1 // pred_fallthru
      _
    // Predicated region
    $region6: #{tpu_custom_call.1} parent=1 // pred_check
      _
    $region7: #{tpu_custom_call.1} parent=1 // pred_check_branch
      %12 = sbr.rel (0) target = $region9
    $region8: #{tpu_custom_call.1} parent=1 // pred_region
      _
    $region9: #{tpu_custom_call.1} parent=1 // pred_fallthru
      _
    // Predicated region
    $region10: #{tpu_custom_call.1} parent=1 // pred_check
      _
    $region11: #{tpu_custom_call.1} parent=1 // pred_check_branch
      %14 = sbr.rel (0) target = $region13
    $region12: #{tpu_custom_call.1} parent=1 // pred_region
      _
    $region13: #{tpu_custom_call.1} parent=1 // pred_fallthru
      _
    %v15 = vld [vmem:[%s0] sm:$0xff]
    %v16 = vld [vmem:[%s0 + $0x8] sm:$0xff]
    %v17 = vld [vmem:[%s0 + $0x10] sm:$0xff]
    %v18 = vld [vmem:[%s0 + $0x18] sm:$0xff]
    %v19 = vld [vmem:[%s0 + $0x20] sm:$0xff]
    %v20 = vld [vmem:[%s0 + $0x28] sm:$0xff]
    %v21 = vld [vmem:[%s0 + $0x30] sm:$0xff]
    %v22 = vld [vmem:[%s0 + $0x38] sm:$0xff]
    %v23 = vld [vmem:[%s0 + $0x40] sm:$0xff]
    %v24 = vld [vmem:[%s0 + $0x48] sm:$0xff]
    %v25 = vld [vmem:[%s0 + $0x50] sm:$0xff]
    %v26 = vld [vmem:[%s0 + $0x58] sm:$0xff]
    %v27 = vld [vmem:[%s0 + $0x60] sm:$0xff]
    %v28 = vld [vmem:[%s0 + $0x68] sm:$0xff]
    %v29 = vld [vmem:[%s0 + $0x70] sm:$0xff]
    %v30 = vld [vmem:[%s0 + $0x78] sm:$0xff]
    %v31 = vld [vmem:[%s0 + $0x80] sm:$0xff]
    %v32 = vld [vmem:[%s0 + $0x88] sm:$0xff]
    %v33 = vld [vmem:[%s0 + $0x90] sm:$0xff]
    %v34 = vld [vmem:[%s0 + $0x98] sm:$0xff]
    %v35 = vld [vmem:[%s0 + $0xa0] sm:$0xff]
    %v36 = vld [vmem:[%s0 + $0xa8] sm:$0xff]
    %v37 = vld [vmem:[%s0 + $0xb0] sm:$0xff]
    %v38 = vld [vmem:[%s0 + $0xb8] sm:$0xff]
    %v39 = vld [vmem:[%s0 + $0xc0] sm:$0xff]
    %v40 = vld [vmem:[%s0 + $0xc8] sm:$0xff]
    %v41 = vld [vmem:[%s0 + $0xd0] sm:$0xff]
    %v42 = vld [vmem:[%s0 + $0xd8] sm:$0xff]
    %v43 = vld [vmem:[%s0 + $0xe0] sm:$0xff]
    %v44 = vld [vmem:[%s0 + $0xe8] sm:$0xff]
    %v45 = vld [vmem:[%s0 + $0xf0] sm:$0xff]
    %v46 = vld [vmem:[%s0 + $0xf8] sm:$0xff]
    %v47 = vld [vmem:[%s0 + $0x100] sm:$0xff]
    %v48 = vld [vmem:[%s0 + $0x108] sm:$0xff]
    %v49 = vld [vmem:[%s0 + $0x110] sm:$0xff]
    %v50 = vld [vmem:[%s0 + $0x118] sm:$0xff]
    %v51 = vld [vmem:[%s0 + $0x120] sm:$0xff]
    %v52 = vld [vmem:[%s0 + $0x128] sm:$0xff]
    %v53 = vld [vmem:[%s0 + $0x130] sm:$0xff]
    %v54 = vld [vmem:[%s0 + $0x138] sm:$0xff]
    %v55 = vld [vmem:[%s0 + $0x140] sm:$0xff]
    %v56 = vld [vmem:[%s0 + $0x148] sm:$0xff]
    %v57 = vld [vmem:[%s0 + $0x150] sm:$0xff]
    %v58 = vld [vmem:[%s0 + $0x158] sm:$0xff]
    %v59 = vld [vmem:[%s0 + $0x160] sm:$0xff]
    %v60 = vld [vmem:[%s0 + $0x168] sm:$0xff]
    %v61 = vld [vmem:[%s0 + $0x170] sm:$0xff]
    %v62 = vld [vmem:[%s0 + $0x178] sm:$0xff]
    %v63 = vld [vmem:[%s0 + $0x180] sm:$0xff]
    %v64 = vld [vmem:[%s0 + $0x188] sm:$0xff]
    %v65 = vld [vmem:[%s0 + $0x190] sm:$0xff]
    %v66 = vld [vmem:[%s0 + $0x198] sm:$0xff]
    %v67 = vld [vmem:[%s0 + $0x1a0] sm:$0xff]
    %v68 = vld [vmem:[%s0 + $0x1a8] sm:$0xff]
    %v69 = vld [vmem:[%s0 + $0x1b0] sm:$0xff]
    %v70 = vld [vmem:[%s0 + $0x1b8] sm:$0xff]
    %v71 = vld [vmem:[%s0 + $0x1c0] sm:$0xff]
    %v72 = vld [vmem:[%s0 + $0x1c8] sm:$0xff]
    %v73 = vld [vmem:[%s0 + $0x1d0] sm:$0xff]
    %v74 = vld [vmem:[%s0 + $0x1d8] sm:$0xff]
    %v75 = vld [vmem:[%s0 + $0x1e0] sm:$0xff]
    %v76 = vld [vmem:[%s0 + $0x1e8] sm:$0xff]
    %v77 = vld [vmem:[%s0 + $0x1f0] sm:$0xff]
    %v78 = vld [vmem:[%s0 + $0x1f8] sm:$0xff]
    %v79 = vld [vmem:[%s0 + $0x200] sm:$0xff]
    %v80 = vld [vmem:[%s0 + $0x208] sm:$0xff]
    %v81 = vld [vmem:[%s0 + $0x210] sm:$0xff]
    %v82 = vld [vmem:[%s0 + $0x218] sm:$0xff]
    %v83 = vld [vmem:[%s0 + $0x220] sm:$0xff]
    %v84 = vld [vmem:[%s0 + $0x228] sm:$0xff]
    %v85 = vld [vmem:[%s0 + $0x230] sm:$0xff]
    %v86 = vld [vmem:[%s0 + $0x238] sm:$0xff]
    %v87 = vld [vmem:[%s0 + $0x240] sm:$0xff]
    %v88 = vld [vmem:[%s0 + $0x248] sm:$0xff]
    %v89 = vld [vmem:[%s0 + $0x250] sm:$0xff]
    %v90 = vld [vmem:[%s0 + $0x258] sm:$0xff]
    %v91 = vld [vmem:[%s0 + $0x260] sm:$0xff]
    %v92 = vld [vmem:[%s0 + $0x268] sm:$0xff]
    %v93 = vld [vmem:[%s0 + $0x270] sm:$0xff]
    %v94 = vld [vmem:[%s0 + $0x278] sm:$0xff]
    %v95 = vld [vmem:[%s0 + $0x280] sm:$0xff]
    %v96 = vld [vmem:[%s0 + $0x288] sm:$0xff]
    %v97 = vld [vmem:[%s0 + $0x290] sm:$0xff]
    %v98 = vld [vmem:[%s0 + $0x298] sm:$0xff]
    %v99 = vld [vmem:[%s0 + $0x2a0] sm:$0xff]
    %v100 = vld [vmem:[%s0 + $0x2a8] sm:$0xff]
    %v101 = vld [vmem:[%s0 + $0x2b0] sm:$0xff]
    %v102 = vld [vmem:[%s0 + $0x2b8] sm:$0xff]
    %v103 = vld [vmem:[%s0 + $0x2c0] sm:$0xff]
    %v104 = vld [vmem:[%s0 + $0x2c8] sm:$0xff]
    %v105 = vld [vmem:[%s0 + $0x2d0] sm:$0xff]
    %v106 = vld [vmem:[%s0 + $0x2d8] sm:$0xff]
    %v107 = vld [vmem:[%s0 + $0x2e0] sm:$0xff]
    %v108 = vld [vmem:[%s0 + $0x2e8] sm:$0xff]
    %v109 = vld [vmem:[%s0 + $0x2f0] sm:$0xff]
    %v110 = vld [vmem:[%s0 + $0x2f8] sm:$0xff]
    %v111 = vld [vmem:[%s0 + $0x300] sm:$0xff]
    %v112 = vld [vmem:[%s0 + $0x308] sm:$0xff]
    %v113 = vld [vmem:[%s0 + $0x310] sm:$0xff]
    %v114 = vld [vmem:[%s0 + $0x318] sm:$0xff]
    %v115 = vld [vmem:[%s0 + $0x320] sm:$0xff]
    %v116 = vld [vmem:[%s0 + $0x328] sm:$0xff]
    %v117 = vld [vmem:[%s0 + $0x330] sm:$0xff]
    %v118 = vld [vmem:[%s0 + $0x338] sm:$0xff]
    %v119 = vld [vmem:[%s0 + $0x340] sm:$0xff]
    %v120 = vld [vmem:[%s0 + $0x348] sm:$0xff]
    %v121 = vld [vmem:[%s0 + $0x350] sm:$0xff]
    %v122 = vld [vmem:[%s0 + $0x358] sm:$0xff]
    %v123 = vld [vmem:[%s0 + $0x360] sm:$0xff]
    %v124 = vld [vmem:[%s0 + $0x368] sm:$0xff]
    %v125 = vld [vmem:[%s0 + $0x370] sm:$0xff]
    %v126 = vld [vmem:[%s0 + $0x378] sm:$0xff]
    %v127 = vld [vmem:[%s0 + $0x380] sm:$0xff]
    %v128 = vld [vmem:[%s0 + $0x388] sm:$0xff]
    %v129 = vld [vmem:[%s0 + $0x390] sm:$0xff]
    %v130 = vld [vmem:[%s0 + $0x398] sm:$0xff]
    %v131 = vld [vmem:[%s0 + $0x3a0] sm:$0xff]
    %v132 = vld [vmem:[%s0 + $0x3a8] sm:$0xff]
    %v133 = vld [vmem:[%s0 + $0x3b0] sm:$0xff]
    %v134 = vld [vmem:[%s0 + $0x3b8] sm:$0xff]
    %v135 = vld [vmem:[%s0 + $0x3c0] sm:$0xff]
    %v136 = vld [vmem:[%s0 + $0x3c8] sm:$0xff]
    %v137 = vld [vmem:[%s0 + $0x3d0] sm:$0xff]
    %v138 = vld [vmem:[%s0 + $0x3d8] sm:$0xff]
    %v139 = vld [vmem:[%s0 + $0x3e0] sm:$0xff]
    %v140 = vld [vmem:[%s0 + $0x3e8] sm:$0xff]
    %v141 = vld [vmem:[%s0 + $0x3f0] sm:$0xff]
    %v142 = vld [vmem:[%s0 + $0x3f8] sm:$0xff]
    %v143 = vld [vmem:[%s0 + $0x400] sm:$0xff]
    %v144 = vld [vmem:[%s0 + $0x408] sm:$0xff]
    %v145 = vld [vmem:[%s0 + $0x410] sm:$0xff]
    %v146 = vld [vmem:[%s0 + $0x418] sm:$0xff]
    %v147 = vld [vmem:[%s0 + $0x420] sm:$0xff]
    %v148 = vld [vmem:[%s0 + $0x428] sm:$0xff]
    %v149 = vld [vmem:[%s0 + $0x430] sm:$0xff]
    %v150 = vld [vmem:[%s0 + $0x438] sm:$0xff]
    %v151 = vld [vmem:[%s0 + $0x440] sm:$0xff]
    %v152 = vld [vmem:[%s0 + $0x448] sm:$0xff]
    %v153 = vld [vmem:[%s0 + $0x450] sm:$0xff]
    %v154 = vld [vmem:[%s0 + $0x458] sm:$0xff]
    %v155 = vld [vmem:[%s0 + $0x460] sm:$0xff]
    %v156 = vld [vmem:[%s0 + $0x468] sm:$0xff]
    %v157 = vld [vmem:[%s0 + $0x470] sm:$0xff]
    %v158 = vld [vmem:[%s0 + $0x478] sm:$0xff]
    %v159 = vld [vmem:[%s0 + $0x480] sm:$0xff]
    %v160 = vld [vmem:[%s0 + $0x488] sm:$0xff]
    %v161 = vld [vmem:[%s0 + $0x490] sm:$0xff]
    %v162 = vld [vmem:[%s0 + $0x498] sm:$0xff]
    %v163 = vld [vmem:[%s0 + $0x4a0] sm:$0xff]
    %v164 = vld [vmem:[%s0 + $0x4a8] sm:$0xff]
    %v165 = vld [vmem:[%s0 + $0x4b0] sm:$0xff]
    %v166 = vld [vmem:[%s0 + $0x4b8] sm:$0xff]
    %v167 = vld [vmem:[%s0 + $0x4c0] sm:$0xff]
    %v168 = vld [vmem:[%s0 + $0x4c8] sm:$0xff]
    %v169 = vld [vmem:[%s0 + $0x4d0] sm:$0xff]
    %v170 = vld [vmem:[%s0 + $0x4d8] sm:$0xff]
    %v171 = vld [vmem:[%s0 + $0x4e0] sm:$0xff]
    %v172 = vld [vmem:[%s0 + $0x4e8] sm:$0xff]
    %v173 = vld [vmem:[%s0 + $0x4f0] sm:$0xff]
    %v174 = vld [vmem:[%s0 + $0x4f8] sm:$0xff]
    %v175 = vld [vmem:[%s0 + $0x500] sm:$0xff]
    %v176 = vld [vmem:[%s0 + $0x508] sm:$0xff]
    %v177 = vld [vmem:[%s0 + $0x510] sm:$0xff]
    %v178 = vld [vmem:[%s0 + $0x518] sm:$0xff]
    %v179 = vld [vmem:[%s0 + $0x520] sm:$0xff]
    %v180 = vld [vmem:[%s0 + $0x528] sm:$0xff]
    %v181 = vld [vmem:[%s0 + $0x530] sm:$0xff]
    %v182 = vld [vmem:[%s0 + $0x538] sm:$0xff]
    %v183 = vld [vmem:[%s0 + $0x540] sm:$0xff]
    %v184 = vld [vmem:[%s0 + $0x548] sm:$0xff]
    %v185 = vld [vmem:[%s0 + $0x550] sm:$0xff]
    %v186 = vld [vmem:[%s0 + $0x558] sm:$0xff]
    %v187 = vld [vmem:[%s0 + $0x560] sm:$0xff]
    %v188 = vld [vmem:[%s0 + $0x568] sm:$0xff]
    %v189 = vld [vmem:[%s0 + $0x570] sm:$0xff]
    %v190 = vld [vmem:[%s0 + $0x578] sm:$0xff]
    %v191 = vld [vmem:[%s0 + $0x580] sm:$0xff]
    %v192 = vld [vmem:[%s0 + $0x588] sm:$0xff]
    %v193 = vld [vmem:[%s0 + $0x590] sm:$0xff]
    %v194 = vld [vmem:[%s0 + $0x598] sm:$0xff]
    %v195 = vld [vmem:[%s0 + $0x5a0] sm:$0xff]
    %v196 = vld [vmem:[%s0 + $0x5a8] sm:$0xff]
    %v197 = vld [vmem:[%s0 + $0x5b0] sm:$0xff]
    %v198 = vld [vmem:[%s0 + $0x5b8] sm:$0xff]
    %v199 = vld [vmem:[%s0 + $0x5c0] sm:$0xff]
    %v200 = vld [vmem:[%s0 + $0x5c8] sm:$0xff]
    %v201 = vld [vmem:[%s0 + $0x5d0] sm:$0xff]
    %v202 = vld [vmem:[%s0 + $0x5d8] sm:$0xff]
    %v203 = vld [vmem:[%s0 + $0x5e0] sm:$0xff]
    %v204 = vld [vmem:[%s0 + $0x5e8] sm:$0xff]
    %v205 = vld [vmem:[%s0 + $0x5f0] sm:$0xff]
    %v206 = vld [vmem:[%s0 + $0x5f8] sm:$0xff]
    %v207 = vld [vmem:[%s0 + $0x600] sm:$0xff]
    %v208 = vld [vmem:[%s0 + $0x608] sm:$0xff]
    %v209 = vld [vmem:[%s0 + $0x610] sm:$0xff]
    %v210 = vld [vmem:[%s0 + $0x618] sm:$0xff]
    %v211 = vld [vmem:[%s0 + $0x620] sm:$0xff]
    %v212 = vld [vmem:[%s0 + $0x628] sm:$0xff]
    %v213 = vld [vmem:[%s0 + $0x630] sm:$0xff]
    %v214 = vld [vmem:[%s0 + $0x638] sm:$0xff]
    %v215 = vld [vmem:[%s0 + $0x640] sm:$0xff]
    %v216 = vld [vmem:[%s0 + $0x648] sm:$0xff]
    %v217 = vld [vmem:[%s0 + $0x650] sm:$0xff]
    %v218 = vld [vmem:[%s0 + $0x658] sm:$0xff]
    %v219 = vld [vmem:[%s0 + $0x660] sm:$0xff]
    %v220 = vld [vmem:[%s0 + $0x668] sm:$0xff]
    %v221 = vld [vmem:[%s0 + $0x670] sm:$0xff]
    %v222 = vld [vmem:[%s0 + $0x678] sm:$0xff]
    %v223 = vld [vmem:[%s0 + $0x680] sm:$0xff]
    %v224 = vld [vmem:[%s0 + $0x688] sm:$0xff]
    %v225 = vld [vmem:[%s0 + $0x690] sm:$0xff]
    %v226 = vld [vmem:[%s0 + $0x698] sm:$0xff]
    %v227 = vld [vmem:[%s0 + $0x6a0] sm:$0xff]
    %v228 = vld [vmem:[%s0 + $0x6a8] sm:$0xff]
    %v229 = vld [vmem:[%s0 + $0x6b0] sm:$0xff]
    %v230 = vld [vmem:[%s0 + $0x6b8] sm:$0xff]
    %v231 = vld [vmem:[%s0 + $0x6c0] sm:$0xff]
    %v232 = vld [vmem:[%s0 + $0x6c8] sm:$0xff]
    %v233 = vld [vmem:[%s0 + $0x6d0] sm:$0xff]
    %v234 = vld [vmem:[%s0 + $0x6d8] sm:$0xff]
    %v235 = vld [vmem:[%s0 + $0x6e0] sm:$0xff]
    %v236 = vld [vmem:[%s0 + $0x6e8] sm:$0xff]
    %v237 = vld [vmem:[%s0 + $0x6f0] sm:$0xff]
    %v238 = vld [vmem:[%s0 + $0x6f8] sm:$0xff]
    %v239 = vld [vmem:[%s0 + $0x700] sm:$0xff]
    %v240 = vld [vmem:[%s0 + $0x708] sm:$0xff]
    %v241 = vld [vmem:[%s0 + $0x710] sm:$0xff]
    %v242 = vld [vmem:[%s0 + $0x718] sm:$0xff]
    %v243 = vld [vmem:[%s0 + $0x720] sm:$0xff]
    %v244 = vld [vmem:[%s0 + $0x728] sm:$0xff]
    %v245 = vld [vmem:[%s0 + $0x730] sm:$0xff]
    %v246 = vld [vmem:[%s0 + $0x738] sm:$0xff]
    %v247 = vld [vmem:[%s0 + $0x740] sm:$0xff]
    %v248 = vld [vmem:[%s0 + $0x748] sm:$0xff]
    %v249 = vld [vmem:[%s0 + $0x750] sm:$0xff]
    %v250 = vld [vmem:[%s0 + $0x758] sm:$0xff]
    %v251 = vld [vmem:[%s0 + $0x760] sm:$0xff]
    %v252 = vld [vmem:[%s0 + $0x768] sm:$0xff]
    %v253 = vld [vmem:[%s0 + $0x770] sm:$0xff]
    %v254 = vld [vmem:[%s0 + $0x778] sm:$0xff]
    %v255 = vld [vmem:[%s0 + $0x780] sm:$0xff]
    %v256 = vld [vmem:[%s0 + $0x788] sm:$0xff]
    %v257 = vld [vmem:[%s0 + $0x790] sm:$0xff]
    %v258 = vld [vmem:[%s0 + $0x798] sm:$0xff]
    %v259 = vld [vmem:[%s0 + $0x7a0] sm:$0xff]
    %v260 = vld [vmem:[%s0 + $0x7a8] sm:$0xff]
    %v261 = vld [vmem:[%s0 + $0x7b0] sm:$0xff]
    %v262 = vld [vmem:[%s0 + $0x7b8] sm:$0xff]
    %v263 = vld [vmem:[%s0 + $0x7c0] sm:$0xff]
    %v264 = vld [vmem:[%s0 + $0x7c8] sm:$0xff]
    %v265 = vld [vmem:[%s0 + $0x7d0] sm:$0xff]
    %v266 = vld [vmem:[%s0 + $0x7d8] sm:$0xff]
    %v267 = vld [vmem:[%s0 + $0x7e0] sm:$0xff]
    %v268 = vld [vmem:[%s0 + $0x7e8] sm:$0xff]
    %v269 = vld [vmem:[%s0 + $0x7f0] sm:$0xff]
    %v270 = vld [vmem:[%s0 + $0x7f8] sm:$0xff]
    %v271 = vld [vmem:[%s0 + $0x800] sm:$0xff]
    %v272 = vld [vmem:[%s0 + $0x808] sm:$0xff]
    %v273 = vld [vmem:[%s0 + $0x810] sm:$0xff]
    %v274 = vld [vmem:[%s0 + $0x818] sm:$0xff]
    %v275 = vld [vmem:[%s0 + $0x820] sm:$0xff]
    %v276 = vld [vmem:[%s0 + $0x828] sm:$0xff]
    %v277 = vld [vmem:[%s0 + $0x830] sm:$0xff]
    %v278 = vld [vmem:[%s0 + $0x838] sm:$0xff]
    %v279 = vld [vmem:[%s0 + $0x840] sm:$0xff]
    %v280 = vld [vmem:[%s0 + $0x848] sm:$0xff]
    %v281 = vld [vmem:[%s0 + $0x850] sm:$0xff]
    %v282 = vld [vmem:[%s0 + $0x858] sm:$0xff]
    %v283 = vld [vmem:[%s0 + $0x860] sm:$0xff]
    %v284 = vld [vmem:[%s0 + $0x868] sm:$0xff]
    %v285 = vld [vmem:[%s0 + $0x870] sm:$0xff]
    %v286 = vld [vmem:[%s0 + $0x878] sm:$0xff]
    %v287 = vld [vmem:[%s0 + $0x880] sm:$0xff]
    %v288 = vld [vmem:[%s0 + $0x888] sm:$0xff]
    %v289 = vld [vmem:[%s0 + $0x890] sm:$0xff]
    %v290 = vld [vmem:[%s0 + $0x898] sm:$0xff]
    %v291 = vld [vmem:[%s0 + $0x8a0] sm:$0xff]
    %v292 = vld [vmem:[%s0 + $0x8a8] sm:$0xff]
    %v293 = vld [vmem:[%s0 + $0x8b0] sm:$0xff]
    %v294 = vld [vmem:[%s0 + $0x8b8] sm:$0xff]
    %v295 = vld [vmem:[%s0 + $0x8c0] sm:$0xff]
    %v296 = vld [vmem:[%s0 + $0x8c8] sm:$0xff]
    %v297 = vld [vmem:[%s0 + $0x8d0] sm:$0xff]
    %v298 = vld [vmem:[%s0 + $0x8d8] sm:$0xff]
    %v299 = vld [vmem:[%s0 + $0x8e0] sm:$0xff]
    %v300 = vld [vmem:[%s0 + $0x8e8] sm:$0xff]
    %v301 = vld [vmem:[%s0 + $0x8f0] sm:$0xff]
    %v302 = vld [vmem:[%s0 + $0x8f8] sm:$0xff]
    %v303 = vld [vmem:[%s0 + $0x900] sm:$0xff]
    %v304 = vld [vmem:[%s0 + $0x908] sm:$0xff]
    %v305 = vld [vmem:[%s0 + $0x910] sm:$0xff]
    %v306 = vld [vmem:[%s0 + $0x918] sm:$0xff]
    %v307 = vld [vmem:[%s0 + $0x920] sm:$0xff]
    %v308 = vld [vmem:[%s0 + $0x928] sm:$0xff]
    %v309 = vld [vmem:[%s0 + $0x930] sm:$0xff]
    %v310 = vld [vmem:[%s0 + $0x938] sm:$0xff]
    %v311 = vld [vmem:[%s0 + $0x940] sm:$0xff]
    %v312 = vld [vmem:[%s0 + $0x948] sm:$0xff]
    %v313 = vld [vmem:[%s0 + $0x950] sm:$0xff]
    %v314 = vld [vmem:[%s0 + $0x958] sm:$0xff]
    %v315 = vld [vmem:[%s0 + $0x960] sm:$0xff]
    %v316 = vld [vmem:[%s0 + $0x968] sm:$0xff]
    %v317 = vld [vmem:[%s0 + $0x970] sm:$0xff]
    %v318 = vld [vmem:[%s0 + $0x978] sm:$0xff]
    %v319 = vld [vmem:[%s0 + $0x980] sm:$0xff]
    %v320 = vld [vmem:[%s0 + $0x988] sm:$0xff]
    %v321 = vld [vmem:[%s0 + $0x990] sm:$0xff]
    %v322 = vld [vmem:[%s0 + $0x998] sm:$0xff]
    %v323 = vld [vmem:[%s0 + $0x9a0] sm:$0xff]
    %v324 = vld [vmem:[%s0 + $0x9a8] sm:$0xff]
    %v325 = vld [vmem:[%s0 + $0x9b0] sm:$0xff]
    %v326 = vld [vmem:[%s0 + $0x9b8] sm:$0xff]
    %v327 = vld [vmem:[%s0 + $0x9c0] sm:$0xff]
    %v328 = vld [vmem:[%s0 + $0x9c8] sm:$0xff]
    %v329 = vld [vmem:[%s0 + $0x9d0] sm:$0xff]
    %v330 = vld [vmem:[%s0 + $0x9d8] sm:$0xff]
    %v331 = vld [vmem:[%s0 + $0x9e0] sm:$0xff]
    %v332 = vld [vmem:[%s0 + $0x9e8] sm:$0xff]
    %v333 = vld [vmem:[%s0 + $0x9f0] sm:$0xff]
    %v334 = vld [vmem:[%s0 + $0x9f8] sm:$0xff]
    %v335 = vld [vmem:[%s0 + $0xa00] sm:$0xff]
    %v336 = vld [vmem:[%s0 + $0xa08] sm:$0xff]
    %v337 = vld [vmem:[%s0 + $0xa10] sm:$0xff]
    %v338 = vld [vmem:[%s0 + $0xa18] sm:$0xff]
    %v339 = vld [vmem:[%s0 + $0xa20] sm:$0xff]
    %v340 = vld [vmem:[%s0 + $0xa28] sm:$0xff]
    %v341 = vld [vmem:[%s0 + $0xa30] sm:$0xff]
    %v342 = vld [vmem:[%s0 + $0xa38] sm:$0xff]
    %v343 = vld [vmem:[%s0 + $0xa40] sm:$0xff]
    %v344 = vld [vmem:[%s0 + $0xa48] sm:$0xff]
    %v345 = vld [vmem:[%s0 + $0xa50] sm:$0xff]
    %v346 = vld [vmem:[%s0 + $0xa58] sm:$0xff]
    %v347 = vld [vmem:[%s0 + $0xa60] sm:$0xff]
    %v348 = vld [vmem:[%s0 + $0xa68] sm:$0xff]
    %v349 = vld [vmem:[%s0 + $0xa70] sm:$0xff]
    %v350 = vld [vmem:[%s0 + $0xa78] sm:$0xff]
    %v351 = vld [vmem:[%s0 + $0xa80] sm:$0xff]
    %v352 = vld [vmem:[%s0 + $0xa88] sm:$0xff]
    %v353 = vld [vmem:[%s0 + $0xa90] sm:$0xff]
    %v354 = vld [vmem:[%s0 + $0xa98] sm:$0xff]
    %v355 = vld [vmem:[%s0 + $0xaa0] sm:$0xff]
    %v356 = vld [vmem:[%s0 + $0xaa8] sm:$0xff]
    %v357 = vld [vmem:[%s0 + $0xab0] sm:$0xff]
    %v358 = vld [vmem:[%s0 + $0xab8] sm:$0xff]
    %v359 = vld [vmem:[%s0 + $0xac0] sm:$0xff]
    %v360 = vld [vmem:[%s0 + $0xac8] sm:$0xff]
    %v361 = vld [vmem:[%s0 + $0xad0] sm:$0xff]
    %v362 = vld [vmem:[%s0 + $0xad8] sm:$0xff]
    %v363 = vld [vmem:[%s0 + $0xae0] sm:$0xff]
    %v364 = vld [vmem:[%s0 + $0xae8] sm:$0xff]
    %v365 = vld [vmem:[%s0 + $0xaf0] sm:$0xff]
    %v366 = vld [vmem:[%s0 + $0xaf8] sm:$0xff]
    %v367 = vld [vmem:[%s0 + $0xb00] sm:$0xff]
    %v368 = vld [vmem:[%s0 + $0xb08] sm:$0xff]
    %v369 = vld [vmem:[%s0 + $0xb10] sm:$0xff]
    %v370 = vld [vmem:[%s0 + $0xb18] sm:$0xff]
    %v371 = vld [vmem:[%s0 + $0xb20] sm:$0xff]
    %v372 = vld [vmem:[%s0 + $0xb28] sm:$0xff]
    %v373 = vld [vmem:[%s0 + $0xb30] sm:$0xff]
    %v374 = vld [vmem:[%s0 + $0xb38] sm:$0xff]
    %v375 = vld [vmem:[%s0 + $0xb40] sm:$0xff]
    %v376 = vld [vmem:[%s0 + $0xb48] sm:$0xff]
    %v377 = vld [vmem:[%s0 + $0xb50] sm:$0xff]
    %v378 = vld [vmem:[%s0 + $0xb58] sm:$0xff]
    %v379 = vld [vmem:[%s0 + $0xb60] sm:$0xff]
    %v380 = vld [vmem:[%s0 + $0xb68] sm:$0xff]
    %v381 = vld [vmem:[%s0 + $0xb70] sm:$0xff]
    %v382 = vld [vmem:[%s0 + $0xb78] sm:$0xff]
    %v383 = vld [vmem:[%s0 + $0xb80] sm:$0xff]
    %v384 = vld [vmem:[%s0 + $0xb88] sm:$0xff]
    %v385 = vld [vmem:[%s0 + $0xb90] sm:$0xff]
    %v386 = vld [vmem:[%s0 + $0xb98] sm:$0xff]
    %v387 = vld [vmem:[%s0 + $0xba0] sm:$0xff]
    %v388 = vld [vmem:[%s0 + $0xba8] sm:$0xff]
    %v389 = vld [vmem:[%s0 + $0xbb0] sm:$0xff]
    %v390 = vld [vmem:[%s0 + $0xbb8] sm:$0xff]
    %v391 = vld [vmem:[%s0 + $0xbc0] sm:$0xff]
    %v392 = vld [vmem:[%s0 + $0xbc8] sm:$0xff]
    %v393 = vld [vmem:[%s0 + $0xbd0] sm:$0xff]
    %v394 = vld [vmem:[%s0 + $0xbd8] sm:$0xff]
    %v395 = vld [vmem:[%s0 + $0xbe0] sm:$0xff]
    %v396 = vld [vmem:[%s0 + $0xbe8] sm:$0xff]
    %v397 = vld [vmem:[%s0 + $0xbf0] sm:$0xff]
    %v398 = vld [vmem:[%s0 + $0xbf8] sm:$0xff]
    %v399 = vld [vmem:[%s0 + $0xc00] sm:$0xff]
    %v400 = vld [vmem:[%s0 + $0xc08] sm:$0xff]
    %v401 = vld [vmem:[%s0 + $0xc10] sm:$0xff]
    %v402 = vld [vmem:[%s0 + $0xc18] sm:$0xff]
    %v403 = vld [vmem:[%s0 + $0xc20] sm:$0xff]
    %v404 = vld [vmem:[%s0 + $0xc28] sm:$0xff]
    %v405 = vld [vmem:[%s0 + $0xc30] sm:$0xff]
    %v406 = vld [vmem:[%s0 + $0xc38] sm:$0xff]
    %v407 = vld [vmem:[%s0 + $0xc40] sm:$0xff]
    %v408 = vld [vmem:[%s0 + $0xc48] sm:$0xff]
    %v409 = vld [vmem:[%s0 + $0xc50] sm:$0xff]
    %v410 = vld [vmem:[%s0 + $0xc58] sm:$0xff]
    %v411 = vld [vmem:[%s0 + $0xc60] sm:$0xff]
    %v412 = vld [vmem:[%s0 + $0xc68] sm:$0xff]
    %v413 = vld [vmem:[%s0 + $0xc70] sm:$0xff]
    %v414 = vld [vmem:[%s0 + $0xc78] sm:$0xff]
    %v415 = vld [vmem:[%s0 + $0xc80] sm:$0xff]
    %v416 = vld [vmem:[%s0 + $0xc88] sm:$0xff]
    %v417 = vld [vmem:[%s0 + $0xc90] sm:$0xff]
    %v418 = vld [vmem:[%s0 + $0xc98] sm:$0xff]
    %v419 = vld [vmem:[%s0 + $0xca0] sm:$0xff]
    %v420 = vld [vmem:[%s0 + $0xca8] sm:$0xff]
    %v421 = vld [vmem:[%s0 + $0xcb0] sm:$0xff]
    %v422 = vld [vmem:[%s0 + $0xcb8] sm:$0xff]
    %v423 = vld [vmem:[%s0 + $0xcc0] sm:$0xff]
    %v424 = vld [vmem:[%s0 + $0xcc8] sm:$0xff]
    %v425 = vld [vmem:[%s0 + $0xcd0] sm:$0xff]
    %v426 = vld [vmem:[%s0 + $0xcd8] sm:$0xff]
    %v427 = vld [vmem:[%s0 + $0xce0] sm:$0xff]
    %v428 = vld [vmem:[%s0 + $0xce8] sm:$0xff]
    %v429 = vld [vmem:[%s0 + $0xcf0] sm:$0xff]
    %v430 = vld [vmem:[%s0 + $0xcf8] sm:$0xff]
    %v431 = vld [vmem:[%s0 + $0xd00] sm:$0xff]
    %v432 = vld [vmem:[%s0 + $0xd08] sm:$0xff]
    %v433 = vld [vmem:[%s0 + $0xd10] sm:$0xff]
    %v434 = vld [vmem:[%s0 + $0xd18] sm:$0xff]
    %v435 = vld [vmem:[%s0 + $0xd20] sm:$0xff]
    %v436 = vld [vmem:[%s0 + $0xd28] sm:$0xff]
    %v437 = vld [vmem:[%s0 + $0xd30] sm:$0xff]
    %v438 = vld [vmem:[%s0 + $0xd38] sm:$0xff]
    %v439 = vld [vmem:[%s0 + $0xd40] sm:$0xff]
    %v440 = vld [vmem:[%s0 + $0xd48] sm:$0xff]
    %v441 = vld [vmem:[%s0 + $0xd50] sm:$0xff]
    %v442 = vld [vmem:[%s0 + $0xd58] sm:$0xff]
    %v443 = vld [vmem:[%s0 + $0xd60] sm:$0xff]
    %v444 = vld [vmem:[%s0 + $0xd68] sm:$0xff]
    %v445 = vld [vmem:[%s0 + $0xd70] sm:$0xff]
    %v446 = vld [vmem:[%s0 + $0xd78] sm:$0xff]
    %v447 = vld [vmem:[%s0 + $0xd80] sm:$0xff]
    %v448 = vld [vmem:[%s0 + $0xd88] sm:$0xff]
    %v449 = vld [vmem:[%s0 + $0xd90] sm:$0xff]
    %v450 = vld [vmem:[%s0 + $0xd98] sm:$0xff]
    %v451 = vld [vmem:[%s0 + $0xda0] sm:$0xff]
    %v452 = vld [vmem:[%s0 + $0xda8] sm:$0xff]
    %v453 = vld [vmem:[%s0 + $0xdb0] sm:$0xff]
    %v454 = vld [vmem:[%s0 + $0xdb8] sm:$0xff]
    %v455 = vld [vmem:[%s0 + $0xdc0] sm:$0xff]
    %v456 = vld [vmem:[%s0 + $0xdc8] sm:$0xff]
    %v457 = vld [vmem:[%s0 + $0xdd0] sm:$0xff]
    %v458 = vld [vmem:[%s0 + $0xdd8] sm:$0xff]
    %v459 = vld [vmem:[%s0 + $0xde0] sm:$0xff]
    %v460 = vld [vmem:[%s0 + $0xde8] sm:$0xff]
    %v461 = vld [vmem:[%s0 + $0xdf0] sm:$0xff]
    %v462 = vld [vmem:[%s0 + $0xdf8] sm:$0xff]
    %v463 = vld [vmem:[%s0 + $0xe00] sm:$0xff]
    %v464 = vld [vmem:[%s0 + $0xe08] sm:$0xff]
    %v465 = vld [vmem:[%s0 + $0xe10] sm:$0xff]
    %v466 = vld [vmem:[%s0 + $0xe18] sm:$0xff]
    %v467 = vld [vmem:[%s0 + $0xe20] sm:$0xff]
    %v468 = vld [vmem:[%s0 + $0xe28] sm:$0xff]
    %v469 = vld [vmem:[%s0 + $0xe30] sm:$0xff]
    %v470 = vld [vmem:[%s0 + $0xe38] sm:$0xff]
    %v471 = vld [vmem:[%s0 + $0xe40] sm:$0xff]
    %v472 = vld [vmem:[%s0 + $0xe48] sm:$0xff]
    %v473 = vld [vmem:[%s0 + $0xe50] sm:$0xff]
    %v474 = vld [vmem:[%s0 + $0xe58] sm:$0xff]
    %v475 = vld [vmem:[%s0 + $0xe60] sm:$0xff]
    %v476 = vld [vmem:[%s0 + $0xe68] sm:$0xff]
    %v477 = vld [vmem:[%s0 + $0xe70] sm:$0xff]
    %v478 = vld [vmem:[%s0 + $0xe78] sm:$0xff]
    %v479 = vld [vmem:[%s0 + $0xe80] sm:$0xff]
    %v480 = vld [vmem:[%s0 + $0xe88] sm:$0xff]
    %v481 = vld [vmem:[%s0 + $0xe90] sm:$0xff]
    %v482 = vld [vmem:[%s0 + $0xe98] sm:$0xff]
    %v483 = vld [vmem:[%s0 + $0xea0] sm:$0xff]
    %v484 = vld [vmem:[%s0 + $0xea8] sm:$0xff]
    %v485 = vld [vmem:[%s0 + $0xeb0] sm:$0xff]
    %v486 = vld [vmem:[%s0 + $0xeb8] sm:$0xff]
    %v487 = vld [vmem:[%s0 + $0xec0] sm:$0xff]
    %v488 = vld [vmem:[%s0 + $0xec8] sm:$0xff]
    %v489 = vld [vmem:[%s0 + $0xed0] sm:$0xff]
    %v490 = vld [vmem:[%s0 + $0xed8] sm:$0xff]
    %v491 = vld [vmem:[%s0 + $0xee0] sm:$0xff]
    %v492 = vld [vmem:[%s0 + $0xee8] sm:$0xff]
    %v493 = vld [vmem:[%s0 + $0xef0] sm:$0xff]
    %v494 = vld [vmem:[%s0 + $0xef8] sm:$0xff]
    %v495 = vld [vmem:[%s0 + $0xf00] sm:$0xff]
    %v496 = vld [vmem:[%s0 + $0xf08] sm:$0xff]
    %v497 = vld [vmem:[%s0 + $0xf10] sm:$0xff]
    %v498 = vld [vmem:[%s0 + $0xf18] sm:$0xff]
    %v499 = vld [vmem:[%s0 + $0xf20] sm:$0xff]
    %v500 = vld [vmem:[%s0 + $0xf28] sm:$0xff]
    %v501 = vld [vmem:[%s0 + $0xf30] sm:$0xff]
    %v502 = vld [vmem:[%s0 + $0xf38] sm:$0xff]
    %v503 = vld [vmem:[%s0 + $0xf40] sm:$0xff]
    %v504 = vld [vmem:[%s0 + $0xf48] sm:$0xff]
    %v505 = vld [vmem:[%s0 + $0xf50] sm:$0xff]
    %v506 = vld [vmem:[%s0 + $0xf58] sm:$0xff]
    %v507 = vld [vmem:[%s0 + $0xf60] sm:$0xff]
    %v508 = vld [vmem:[%s0 + $0xf68] sm:$0xff]
    %v509 = vld [vmem:[%s0 + $0xf70] sm:$0xff]
    %v510 = vld [vmem:[%s0 + $0xf78] sm:$0xff]
    %v511 = vld [vmem:[%s0 + $0xf80] sm:$0xff]
    %v512 = vld [vmem:[%s0 + $0xf88] sm:$0xff]
    %v513 = vld [vmem:[%s0 + $0xf90] sm:$0xff]
    %v514 = vld [vmem:[%s0 + $0xf98] sm:$0xff]
    %v515 = vld [vmem:[%s0 + $0xfa0] sm:$0xff]
    %v516 = vld [vmem:[%s0 + $0xfa8] sm:$0xff]
    %v517 = vld [vmem:[%s0 + $0xfb0] sm:$0xff]
    %v518 = vld [vmem:[%s0 + $0xfb8] sm:$0xff]
    %v519 = vld [vmem:[%s0 + $0xfc0] sm:$0xff]
    %v520 = vld [vmem:[%s0 + $0xfc8] sm:$0xff]
    %v521 = vld [vmem:[%s0 + $0xfd0] sm:$0xff]
    %v522 = vld [vmem:[%s0 + $0xfd8] sm:$0xff]
    %v523 = vld [vmem:[%s0 + $0xfe0] sm:$0xff]
    %v524 = vld [vmem:[%s0 + $0xfe8] sm:$0xff]
    %v525 = vld [vmem:[%s0 + $0xff0] sm:$0xff]
    %v526 = vld [vmem:[%s0 + $0xff8] sm:$0xff]
    %v527 = vld [vmem:[%s0 + $0x1000] sm:$0xff]
    %v528 = vld [vmem:[%s0 + $0x1008] sm:$0xff]
    %v529 = vld [vmem:[%s0 + $0x1010] sm:$0xff]
    %v530 = vld [vmem:[%s0 + $0x1018] sm:$0xff]
    %v531 = vld [vmem:[%s0 + $0x1020] sm:$0xff]
    %v532 = vld [vmem:[%s0 + $0x1028] sm:$0xff]
    %v533 = vld [vmem:[%s0 + $0x1030] sm:$0xff]
    %v534 = vld [vmem:[%s0 + $0x1038] sm:$0xff]
    %v535 = vld [vmem:[%s0 + $0x1040] sm:$0xff]
    %v536 = vld [vmem:[%s0 + $0x1048] sm:$0xff]
    %v537 = vld [vmem:[%s0 + $0x1050] sm:$0xff]
    %v538 = vld [vmem:[%s0 + $0x1058] sm:$0xff]
    %v539 = vld [vmem:[%s0 + $0x1060] sm:$0xff]
    %v540 = vld [vmem:[%s0 + $0x1068] sm:$0xff]
    %v541 = vld [vmem:[%s0 + $0x1070] sm:$0xff]
    %v542 = vld [vmem:[%s0 + $0x1078] sm:$0xff]
    %v543 = vld [vmem:[%s0 + $0x1080] sm:$0xff]
    %v544 = vld [vmem:[%s0 + $0x1088] sm:$0xff]
    %v545 = vld [vmem:[%s0 + $0x1090] sm:$0xff]
    %v546 = vld [vmem:[%s0 + $0x1098] sm:$0xff]
    %v547 = vld [vmem:[%s0 + $0x10a0] sm:$0xff]
    %v548 = vld [vmem:[%s0 + $0x10a8] sm:$0xff]
    %v549 = vld [vmem:[%s0 + $0x10b0] sm:$0xff]
    %v550 = vld [vmem:[%s0 + $0x10b8] sm:$0xff]
    %v551 = vld [vmem:[%s0 + $0x10c0] sm:$0xff]
    %v552 = vld [vmem:[%s0 + $0x10c8] sm:$0xff]
    %v553 = vld [vmem:[%s0 + $0x10d0] sm:$0xff]
    %v554 = vld [vmem:[%s0 + $0x10d8] sm:$0xff]
    %v555 = vld [vmem:[%s0 + $0x10e0] sm:$0xff]
    %v556 = vld [vmem:[%s0 + $0x10e8] sm:$0xff]
    %v557 = vld [vmem:[%s0 + $0x10f0] sm:$0xff]
    %v558 = vld [vmem:[%s0 + $0x10f8] sm:$0xff]
    %v559 = vld [vmem:[%s0 + $0x1100] sm:$0xff]
    %v560 = vld [vmem:[%s0 + $0x1108] sm:$0xff]
    %v561 = vld [vmem:[%s0 + $0x1110] sm:$0xff]
    %v562 = vld [vmem:[%s0 + $0x1118] sm:$0xff]
    %v563 = vld [vmem:[%s0 + $0x1120] sm:$0xff]
    %v564 = vld [vmem:[%s0 + $0x1128] sm:$0xff]
    %v565 = vld [vmem:[%s0 + $0x1130] sm:$0xff]
    %v566 = vld [vmem:[%s0 + $0x1138] sm:$0xff]
    %v567 = vld [vmem:[%s0 + $0x1140] sm:$0xff]
    %v568 = vld [vmem:[%s0 + $0x1148] sm:$0xff]
    %v569 = vld [vmem:[%s0 + $0x1150] sm:$0xff]
    %v570 = vld [vmem:[%s0 + $0x1158] sm:$0xff]
    %v571 = vld [vmem:[%s0 + $0x1160] sm:$0xff]
    %v572 = vld [vmem:[%s0 + $0x1168] sm:$0xff]
    %v573 = vld [vmem:[%s0 + $0x1170] sm:$0xff]
    %v574 = vld [vmem:[%s0 + $0x1178] sm:$0xff]
    %v575 = vld [vmem:[%s0 + $0x1180] sm:$0xff]
    %v576 = vld [vmem:[%s0 + $0x1188] sm:$0xff]
    %v577 = vld [vmem:[%s0 + $0x1190] sm:$0xff]
    %v578 = vld [vmem:[%s0 + $0x1198] sm:$0xff]
    %v579 = vld [vmem:[%s0 + $0x11a0] sm:$0xff]
    %v580 = vld [vmem:[%s0 + $0x11a8] sm:$0xff]
    %v581 = vld [vmem:[%s0 + $0x11b0] sm:$0xff]
    %v582 = vld [vmem:[%s0 + $0x11b8] sm:$0xff]
    %v583 = vld [vmem:[%s0 + $0x11c0] sm:$0xff]
    %v584 = vld [vmem:[%s0 + $0x11c8] sm:$0xff]
    %v585 = vld [vmem:[%s0 + $0x11d0] sm:$0xff]
    %v586 = vld [vmem:[%s0 + $0x11d8] sm:$0xff]
    %v587 = vld [vmem:[%s0 + $0x11e0] sm:$0xff]
    %v588 = vld [vmem:[%s0 + $0x11e8] sm:$0xff]
    %v589 = vld [vmem:[%s0 + $0x11f0] sm:$0xff]
    %v590 = vld [vmem:[%s0 + $0x11f8] sm:$0xff]
    %v591 = vld [vmem:[%s0 + $0x1200] sm:$0xff]
    %v592 = vld [vmem:[%s0 + $0x1208] sm:$0xff]
    %v593 = vld [vmem:[%s0 + $0x1210] sm:$0xff]
    %v594 = vld [vmem:[%s0 + $0x1218] sm:$0xff]
    %v595 = vld [vmem:[%s0 + $0x1220] sm:$0xff]
    %v596 = vld [vmem:[%s0 + $0x1228] sm:$0xff]
    %v597 = vld [vmem:[%s0 + $0x1230] sm:$0xff]
    %v598 = vld [vmem:[%s0 + $0x1238] sm:$0xff]
    %v599 = vld [vmem:[%s0 + $0x1240] sm:$0xff]
    %v600 = vld [vmem:[%s0 + $0x1248] sm:$0xff]
    %v601 = vld [vmem:[%s0 + $0x1250] sm:$0xff]
    %v602 = vld [vmem:[%s0 + $0x1258] sm:$0xff]
    %v603 = vld [vmem:[%s0 + $0x1260] sm:$0xff]
    %v604 = vld [vmem:[%s0 + $0x1268] sm:$0xff]
    %v605 = vld [vmem:[%s0 + $0x1270] sm:$0xff]
    %v606 = vld [vmem:[%s0 + $0x1278] sm:$0xff]
    %v607 = vld [vmem:[%s0 + $0x1280] sm:$0xff]
    %v608 = vld [vmem:[%s0 + $0x1288] sm:$0xff]
    %v609 = vld [vmem:[%s0 + $0x1290] sm:$0xff]
    %v610 = vld [vmem:[%s0 + $0x1298] sm:$0xff]
    %v611 = vld [vmem:[%s0 + $0x12a0] sm:$0xff]
    %v612 = vld [vmem:[%s0 + $0x12a8] sm:$0xff]
    %v613 = vld [vmem:[%s0 + $0x12b0] sm:$0xff]
    %v614 = vld [vmem:[%s0 + $0x12b8] sm:$0xff]
    %v615 = vld [vmem:[%s0 + $0x12c0] sm:$0xff]
    %v616 = vld [vmem:[%s0 + $0x12c8] sm:$0xff]
    %v617 = vld [vmem:[%s0 + $0x12d0] sm:$0xff]
    %v618 = vld [vmem:[%s0 + $0x12d8] sm:$0xff]
    %v619 = vld [vmem:[%s0 + $0x12e0] sm:$0xff]
    %v620 = vld [vmem:[%s0 + $0x12e8] sm:$0xff]
    %v621 = vld [vmem:[%s0 + $0x12f0] sm:$0xff]
    %v622 = vld [vmem:[%s0 + $0x12f8] sm:$0xff]
    %v623 = vld [vmem:[%s0 + $0x1300] sm:$0xff]
    %v624 = vld [vmem:[%s0 + $0x1308] sm:$0xff]
    %v625 = vld [vmem:[%s0 + $0x1310] sm:$0xff]
    %v626 = vld [vmem:[%s0 + $0x1318] sm:$0xff]
    %v627 = vld [vmem:[%s0 + $0x1320] sm:$0xff]
    %v628 = vld [vmem:[%s0 + $0x1328] sm:$0xff]
    %v629 = vld [vmem:[%s0 + $0x1330] sm:$0xff]
    %v630 = vld [vmem:[%s0 + $0x1338] sm:$0xff]
    %v631 = vld [vmem:[%s0 + $0x1340] sm:$0xff]
    %v632 = vld [vmem:[%s0 + $0x1348] sm:$0xff]
    %v633 = vld [vmem:[%s0 + $0x1350] sm:$0xff]
    %v634 = vld [vmem:[%s0 + $0x1358] sm:$0xff]
    %v635 = vld [vmem:[%s0 + $0x1360] sm:$0xff]
    %v636 = vld [vmem:[%s0 + $0x1368] sm:$0xff]
    %v637 = vld [vmem:[%s0 + $0x1370] sm:$0xff]
    %v638 = vld [vmem:[%s0 + $0x1378] sm:$0xff]
    %v639 = vld [vmem:[%s0 + $0x1380] sm:$0xff]
    %v640 = vld [vmem:[%s0 + $0x1388] sm:$0xff]
    %v641 = vld [vmem:[%s0 + $0x1390] sm:$0xff]
    %v642 = vld [vmem:[%s0 + $0x1398] sm:$0xff]
    %v643 = vld [vmem:[%s0 + $0x13a0] sm:$0xff]
    %v644 = vld [vmem:[%s0 + $0x13a8] sm:$0xff]
    %v645 = vld [vmem:[%s0 + $0x13b0] sm:$0xff]
    %v646 = vld [vmem:[%s0 + $0x13b8] sm:$0xff]
    %v647 = vld [vmem:[%s0 + $0x13c0] sm:$0xff]
    %v648 = vld [vmem:[%s0 + $0x13c8] sm:$0xff]
    %v649 = vld [vmem:[%s0 + $0x13d0] sm:$0xff]
    %v650 = vld [vmem:[%s0 + $0x13d8] sm:$0xff]
    %v651 = vld [vmem:[%s0 + $0x13e0] sm:$0xff]
    %v652 = vld [vmem:[%s0 + $0x13e8] sm:$0xff]
    %v653 = vld [vmem:[%s0 + $0x13f0] sm:$0xff]
    %v654 = vld [vmem:[%s0 + $0x13f8] sm:$0xff]
    %v655 = vld [vmem:[%s0 + $0x1400] sm:$0xff]
    %v656 = vld [vmem:[%s0 + $0x1408] sm:$0xff]
    %v657 = vld [vmem:[%s0 + $0x1410] sm:$0xff]
    %v658 = vld [vmem:[%s0 + $0x1418] sm:$0xff]
    %v659 = vld [vmem:[%s0 + $0x1420] sm:$0xff]
    %v660 = vld [vmem:[%s0 + $0x1428] sm:$0xff]
    %v661 = vld [vmem:[%s0 + $0x1430] sm:$0xff]
    %v662 = vld [vmem:[%s0 + $0x1438] sm:$0xff]
    %v663 = vld [vmem:[%s0 + $0x1440] sm:$0xff]
    %v664 = vld [vmem:[%s0 + $0x1448] sm:$0xff]
    %v665 = vld [vmem:[%s0 + $0x1450] sm:$0xff]
    %v666 = vld [vmem:[%s0 + $0x1458] sm:$0xff]
    %v667 = vld [vmem:[%s0 + $0x1460] sm:$0xff]
    %v668 = vld [vmem:[%s0 + $0x1468] sm:$0xff]
    %v669 = vld [vmem:[%s0 + $0x1470] sm:$0xff]
    %v670 = vld [vmem:[%s0 + $0x1478] sm:$0xff]
    %v671 = vld [vmem:[%s0 + $0x1480] sm:$0xff]
    %v672 = vld [vmem:[%s0 + $0x1488] sm:$0xff]
    %v673 = vld [vmem:[%s0 + $0x1490] sm:$0xff]
    %v674 = vld [vmem:[%s0 + $0x1498] sm:$0xff]
    %v675 = vld [vmem:[%s0 + $0x14a0] sm:$0xff]
    %v676 = vld [vmem:[%s0 + $0x14a8] sm:$0xff]
    %v677 = vld [vmem:[%s0 + $0x14b0] sm:$0xff]
    %v678 = vld [vmem:[%s0 + $0x14b8] sm:$0xff]
    %v679 = vld [vmem:[%s0 + $0x14c0] sm:$0xff]
    %v680 = vld [vmem:[%s0 + $0x14c8] sm:$0xff]
    %v681 = vld [vmem:[%s0 + $0x14d0] sm:$0xff]
    %v682 = vld [vmem:[%s0 + $0x14d8] sm:$0xff]
    %v683 = vld [vmem:[%s0 + $0x14e0] sm:$0xff]
    %v684 = vld [vmem:[%s0 + $0x14e8] sm:$0xff]
    %v685 = vld [vmem:[%s0 + $0x14f0] sm:$0xff]
    %v686 = vld [vmem:[%s0 + $0x14f8] sm:$0xff]
    %v687 = vld [vmem:[%s0 + $0x1500] sm:$0xff]
    %v688 = vld [vmem:[%s0 + $0x1508] sm:$0xff]
    %v689 = vld [vmem:[%s0 + $0x1510] sm:$0xff]
    %v690 = vld [vmem:[%s0 + $0x1518] sm:$0xff]
    %v691 = vld [vmem:[%s1] sm:$0xff]
    %v692 = vld [vmem:[%s1 + $0x8] sm:$0x1]
    %v693 = vld [vmem:[%s2] sm:$0x1]
    %v695 = vlaneseq
    %v696 = vshrl.u32 %v695, 7
    %v697 = vsub.s32 0, %v696
    %v698 = vrot.slane %v693, %v697
    %vm700 = vcmask 72704
    %v702 = vsel %vm700, %v15, 0
    %v705 = vsel %vm700, %v16, 0
    %v708 = vsel %vm700, %v17, 0
    %v711 = vsel %vm700, %v18, 0
    %v714 = vsel %vm700, %v19, 0
    %v717 = vsel %vm700, %v20, 0
    %v720 = vsel %vm700, %v21, 0
    %v723 = vsel %vm700, %v22, 0
    %v726 = vsel %vm700, %v23, 0
    %v729 = vsel %vm700, %v24, 0
    %v732 = vsel %vm700, %v25, 0
    %v735 = vsel %vm700, %v26, 0
    %v738 = vsel %vm700, %v27, 0
    %v741 = vsel %vm700, %v28, 0
    %v744 = vsel %vm700, %v29, 0
    %v747 = vsel %vm700, %v30, 0
    %v750 = vsel %vm700, %v31, 0
    %v753 = vsel %vm700, %v32, 0
    %v756 = vsel %vm700, %v33, 0
    %v759 = vsel %vm700, %v34, 0
    %v762 = vsel %vm700, %v35, 0
    %v765 = vsel %vm700, %v36, 0
    %v768 = vsel %vm700, %v37, 0
    %v771 = vsel %vm700, %v38, 0
    %v774 = vsel %vm700, %v39, 0
    %v777 = vsel %vm700, %v40, 0
    %v780 = vsel %vm700, %v41, 0
    %v783 = vsel %vm700, %v42, 0
    %v786 = vsel %vm700, %v43, 0
    %v789 = vsel %vm700, %v44, 0
    %v792 = vsel %vm700, %v45, 0
    %v795 = vsel %vm700, %v46, 0
    %v798 = vsel %vm700, %v47, 0
    %v801 = vsel %vm700, %v48, 0
    %v804 = vsel %vm700, %v49, 0
    %v807 = vsel %vm700, %v50, 0
    %v810 = vsel %vm700, %v51, 0
    %v813 = vsel %vm700, %v52, 0
    %v816 = vsel %vm700, %v53, 0
    %v819 = vsel %vm700, %v54, 0
    %v822 = vsel %vm700, %v55, 0
    %v825 = vsel %vm700, %v56, 0
    %v828 = vsel %vm700, %v57, 0
    %v831 = vsel %vm700, %v58, 0
    %v834 = vsel %vm700, %v59, 0
    %v837 = vsel %vm700, %v60, 0
    %v840 = vsel %vm700, %v61, 0
    %v843 = vsel %vm700, %v62, 0
    %v846 = vsel %vm700, %v63, 0
    %v849 = vsel %vm700, %v64, 0
    %v852 = vsel %vm700, %v65, 0
    %v855 = vsel %vm700, %v66, 0
    %v858 = vsel %vm700, %v67, 0
    %v861 = vsel %vm700, %v68, 0
    %v864 = vsel %vm700, %v69, 0
    %v867 = vsel %vm700, %v70, 0
    %v870 = vsel %vm700, %v71, 0
    %v873 = vsel %vm700, %v72, 0
    %v876 = vsel %vm700, %v73, 0
    %v879 = vsel %vm700, %v74, 0
    %v882 = vsel %vm700, %v75, 0
    %v885 = vsel %vm700, %v76, 0
    %v888 = vsel %vm700, %v77, 0
    %v891 = vsel %vm700, %v78, 0
    %v894 = vsel %vm700, %v79, 0
    %v897 = vsel %vm700, %v80, 0
    %v900 = vsel %vm700, %v81, 0
    %v903 = vsel %vm700, %v82, 0
    %v906 = vsel %vm700, %v83, 0
    %v909 = vsel %vm700, %v84, 0
    %v912 = vsel %vm700, %v85, 0
    %v915 = vsel %vm700, %v86, 0
    %v918 = vsel %vm700, %v87, 0
    %v921 = vsel %vm700, %v88, 0
    %v924 = vsel %vm700, %v89, 0
    %v927 = vsel %vm700, %v90, 0
    %v930 = vsel %vm700, %v91, 0
    %v933 = vsel %vm700, %v92, 0
    %v936 = vsel %vm700, %v93, 0
    %v939 = vsel %vm700, %v94, 0
    %v942 = vsel %vm700, %v95, 0
    %v945 = vsel %vm700, %v96, 0
    %v948 = vsel %vm700, %v97, 0
    %v951 = vsel %vm700, %v98, 0
    %v954 = vsel %vm700, %v99, 0
    %v957 = vsel %vm700, %v100, 0
    %v960 = vsel %vm700, %v101, 0
    %v963 = vsel %vm700, %v102, 0
    %v966 = vsel %vm700, %v103, 0
    %v969 = vsel %vm700, %v104, 0
    %v972 = vsel %vm700, %v105, 0
    %v975 = vsel %vm700, %v106, 0
    %v978 = vsel %vm700, %v107, 0
    %v981 = vsel %vm700, %v108, 0
    %v984 = vsel %vm700, %v109, 0
    %v987 = vsel %vm700, %v110, 0
    %v990 = vsel %vm700, %v111, 0
    %v993 = vsel %vm700, %v112, 0
    %v996 = vsel %vm700, %v113, 0
    %v999 = vsel %vm700, %v114, 0
    %v1002 = vsel %vm700, %v115, 0
    %v1005 = vsel %vm700, %v116, 0
    %v1008 = vsel %vm700, %v117, 0
    %v1011 = vsel %vm700, %v118, 0
    %v1014 = vsel %vm700, %v119, 0
    %v1017 = vsel %vm700, %v120, 0
    %v1020 = vsel %vm700, %v121, 0
    %v1023 = vsel %vm700, %v122, 0
    %v1026 = vsel %vm700, %v123, 0
    %v1029 = vsel %vm700, %v124, 0
    %v1032 = vsel %vm700, %v125, 0
    %v1035 = vsel %vm700, %v126, 0
    %v1038 = vsel %vm700, %v127, 0
    %v1041 = vsel %vm700, %v128, 0
    %v1044 = vsel %vm700, %v129, 0
    %v1047 = vsel %vm700, %v130, 0
    %v1050 = vsel %vm700, %v131, 0
    %v1053 = vsel %vm700, %v132, 0
    %v1056 = vsel %vm700, %v133, 0
    %v1059 = vsel %vm700, %v134, 0
    %v1062 = vsel %vm700, %v135, 0
    %v1065 = vsel %vm700, %v136, 0
    %v1068 = vsel %vm700, %v137, 0
    %v1071 = vsel %vm700, %v138, 0
    %v1074 = vsel %vm700, %v139, 0
    %v1077 = vsel %vm700, %v140, 0
    %v1080 = vsel %vm700, %v141, 0
    %v1083 = vsel %vm700, %v142, 0
    %v1086 = vsel %vm700, %v143, 0
    %v1089 = vsel %vm700, %v144, 0
    %v1092 = vsel %vm700, %v145, 0
    %v1095 = vsel %vm700, %v146, 0
    %v1098 = vsel %vm700, %v147, 0
    %v1101 = vsel %vm700, %v148, 0
    %v1104 = vsel %vm700, %v149, 0
    %v1107 = vsel %vm700, %v150, 0
    %v1110 = vsel %vm700, %v151, 0
    %v1113 = vsel %vm700, %v152, 0
    %v1116 = vsel %vm700, %v153, 0
    %v1119 = vsel %vm700, %v154, 0
    %v1122 = vsel %vm700, %v155, 0
    %v1125 = vsel %vm700, %v156, 0
    %v1128 = vsel %vm700, %v157, 0
    %v1131 = vsel %vm700, %v158, 0
    %v1134 = vsel %vm700, %v159, 0
    %v1137 = vsel %vm700, %v160, 0
    %v1140 = vsel %vm700, %v161, 0
    %v1143 = vsel %vm700, %v162, 0
    %v1146 = vsel %vm700, %v163, 0
    %v1149 = vsel %vm700, %v164, 0
    %v1152 = vsel %vm700, %v165, 0
    %v1155 = vsel %vm700, %v166, 0
    %v1158 = vsel %vm700, %v167, 0
    %v1161 = vsel %vm700, %v168, 0
    %v1164 = vsel %vm700, %v169, 0
    %v1167 = vsel %vm700, %v170, 0
    %v1170 = vsel %vm700, %v171, 0
    %v1173 = vsel %vm700, %v172, 0
    %v1176 = vsel %vm700, %v173, 0
    %v1179 = vsel %vm700, %v174, 0
    %v1182 = vsel %vm700, %v175, 0
    %v1185 = vsel %vm700, %v176, 0
    %v1188 = vsel %vm700, %v177, 0
    %v1191 = vsel %vm700, %v178, 0
    %v1194 = vsel %vm700, %v179, 0
    %v1197 = vsel %vm700, %v180, 0
    %v1200 = vsel %vm700, %v181, 0
    %v1203 = vsel %vm700, %v182, 0
    %v1206 = vsel %vm700, %v183, 0
    %v1209 = vsel %vm700, %v184, 0
    %v1212 = vsel %vm700, %v185, 0
    %v1215 = vsel %vm700, %v186, 0
    %v1218 = vsel %vm700, %v187, 0
    %v1221 = vsel %vm700, %v188, 0
    %v1224 = vsel %vm700, %v189, 0
    %v1227 = vsel %vm700, %v190, 0
    %v1230 = vsel %vm700, %v191, 0
    %v1233 = vsel %vm700, %v192, 0
    %v1236 = vsel %vm700, %v193, 0
    %v1239 = vsel %vm700, %v194, 0
    %v1242 = vsel %vm700, %v195, 0
    %v1245 = vsel %vm700, %v196, 0
    %v1248 = vsel %vm700, %v197, 0
    %v1251 = vsel %vm700, %v198, 0
    %v1254 = vsel %vm700, %v199, 0
    %v1257 = vsel %vm700, %v200, 0
    %v1260 = vsel %vm700, %v201, 0
    %v1263 = vsel %vm700, %v202, 0
    %v1266 = vsel %vm700, %v203, 0
    %v1269 = vsel %vm700, %v204, 0
    %v1272 = vsel %vm700, %v205, 0
    %v1275 = vsel %vm700, %v206, 0
    %v1278 = vsel %vm700, %v207, 0
    %v1281 = vsel %vm700, %v208, 0
    %v1284 = vsel %vm700, %v209, 0
    %v1287 = vsel %vm700, %v210, 0
    %v1290 = vsel %vm700, %v211, 0
    %v1293 = vsel %vm700, %v212, 0
    %v1296 = vsel %vm700, %v213, 0
    %v1299 = vsel %vm700, %v214, 0
    %v1302 = vsel %vm700, %v215, 0
    %v1305 = vsel %vm700, %v216, 0
    %v1308 = vsel %vm700, %v217, 0
    %v1311 = vsel %vm700, %v218, 0
    %v1314 = vsel %vm700, %v219, 0
    %v1317 = vsel %vm700, %v220, 0
    %v1320 = vsel %vm700, %v221, 0
    %v1323 = vsel %vm700, %v222, 0
    %v1326 = vsel %vm700, %v223, 0
    %v1329 = vsel %vm700, %v224, 0
    %v1332 = vsel %vm700, %v225, 0
    %v1335 = vsel %vm700, %v226, 0
    %v1338 = vsel %vm700, %v227, 0
    %v1341 = vsel %vm700, %v228, 0
    %v1344 = vsel %vm700, %v229, 0
    %v1347 = vsel %vm700, %v230, 0
    %v1350 = vsel %vm700, %v231, 0
    %v1353 = vsel %vm700, %v232, 0
    %v1356 = vsel %vm700, %v233, 0
    %v1359 = vsel %vm700, %v234, 0
    %v1362 = vsel %vm700, %v235, 0
    %v1365 = vsel %vm700, %v236, 0
    %v1368 = vsel %vm700, %v237, 0
    %v1371 = vsel %vm700, %v238, 0
    %v1374 = vsel %vm700, %v239, 0
    %v1377 = vsel %vm700, %v240, 0
    %v1380 = vsel %vm700, %v241, 0
    %v1383 = vsel %vm700, %v242, 0
    %v1386 = vsel %vm700, %v243, 0
    %v1389 = vsel %vm700, %v244, 0
    %v1392 = vsel %vm700, %v245, 0
    %v1395 = vsel %vm700, %v246, 0
    %v1398 = vsel %vm700, %v247, 0
    %v1401 = vsel %vm700, %v248, 0
    %v1404 = vsel %vm700, %v249, 0
    %v1407 = vsel %vm700, %v250, 0
    %v1410 = vsel %vm700, %v251, 0
    %v1413 = vsel %vm700, %v252, 0
    %v1416 = vsel %vm700, %v253, 0
    %v1419 = vsel %vm700, %v254, 0
    %v1422 = vsel %vm700, %v255, 0
    %v1425 = vsel %vm700, %v256, 0
    %v1428 = vsel %vm700, %v257, 0
    %v1431 = vsel %vm700, %v258, 0
    %v1434 = vsel %vm700, %v259, 0
    %v1437 = vsel %vm700, %v260, 0
    %v1440 = vsel %vm700, %v261, 0
    %v1443 = vsel %vm700, %v262, 0
    %v1446 = vsel %vm700, %v263, 0
    %v1449 = vsel %vm700, %v264, 0
    %v1452 = vsel %vm700, %v265, 0
    %v1455 = vsel %vm700, %v266, 0
    %v1458 = vsel %vm700, %v267, 0
    %v1461 = vsel %vm700, %v268, 0
    %v1464 = vsel %vm700, %v269, 0
    %v1467 = vsel %vm700, %v270, 0
    %v1470 = vsel %vm700, %v271, 0
    %v1473 = vsel %vm700, %v272, 0
    %v1476 = vsel %vm700, %v273, 0
    %v1479 = vsel %vm700, %v274, 0
    %v1482 = vsel %vm700, %v275, 0
    %v1485 = vsel %vm700, %v276, 0
    %v1488 = vsel %vm700, %v277, 0
    %v1491 = vsel %vm700, %v278, 0
    %v1494 = vsel %vm700, %v279, 0
    %v1497 = vsel %vm700, %v280, 0
    %v1500 = vsel %vm700, %v281, 0
    %v1503 = vsel %vm700, %v282, 0
    %v1506 = vsel %vm700, %v283, 0
    %v1509 = vsel %vm700, %v284, 0
    %v1512 = vsel %vm700, %v285, 0
    %v1515 = vsel %vm700, %v286, 0
    %v1518 = vsel %vm700, %v287, 0
    %v1521 = vsel %vm700, %v288, 0
    %v1524 = vsel %vm700, %v289, 0
    %v1527 = vsel %vm700, %v290, 0
    %v1530 = vsel %vm700, %v291, 0
    %v1533 = vsel %vm700, %v292, 0
    %v1536 = vsel %vm700, %v293, 0
    %v1539 = vsel %vm700, %v294, 0
    %v1542 = vsel %vm700, %v295, 0
    %v1545 = vsel %vm700, %v296, 0
    %v1548 = vsel %vm700, %v297, 0
    %v1551 = vsel %vm700, %v298, 0
    %v1554 = vsel %vm700, %v299, 0
    %v1557 = vsel %vm700, %v300, 0
    %v1560 = vsel %vm700, %v301, 0
    %v1563 = vsel %vm700, %v302, 0
    %v1566 = vsel %vm700, %v303, 0
    %v1569 = vsel %vm700, %v304, 0
    %v1572 = vsel %vm700, %v305, 0
    %v1575 = vsel %vm700, %v306, 0
    %v1578 = vsel %vm700, %v307, 0
    %v1581 = vsel %vm700, %v308, 0
    %v1584 = vsel %vm700, %v309, 0
    %v1587 = vsel %vm700, %v310, 0
    %v1590 = vsel %vm700, %v311, 0
    %v1593 = vsel %vm700, %v312, 0
    %v1596 = vsel %vm700, %v313, 0
    %v1599 = vsel %vm700, %v314, 0
    %v1602 = vsel %vm700, %v315, 0
    %v1605 = vsel %vm700, %v316, 0
    %v1608 = vsel %vm700, %v317, 0
    %v1611 = vsel %vm700, %v318, 0
    %v1614 = vsel %vm700, %v319, 0
    %v1617 = vsel %vm700, %v320, 0
    %v1620 = vsel %vm700, %v321, 0
    %v1623 = vsel %vm700, %v322, 0
    %v1626 = vsel %vm700, %v323, 0
    %v1629 = vsel %vm700, %v324, 0
    %v1632 = vsel %vm700, %v325, 0
    %v1635 = vsel %vm700, %v326, 0
    %v1638 = vsel %vm700, %v327, 0
    %v1641 = vsel %vm700, %v328, 0
    %v1644 = vsel %vm700, %v329, 0
    %v1647 = vsel %vm700, %v330, 0
    %v1650 = vsel %vm700, %v331, 0
    %v1653 = vsel %vm700, %v332, 0
    %v1656 = vsel %vm700, %v333, 0
    %v1659 = vsel %vm700, %v334, 0
    %v1662 = vsel %vm700, %v335, 0
    %v1665 = vsel %vm700, %v336, 0
    %v1668 = vsel %vm700, %v337, 0
    %v1671 = vsel %vm700, %v338, 0
    %v1674 = vsel %vm700, %v339, 0
    %v1677 = vsel %vm700, %v340, 0
    %v1680 = vsel %vm700, %v341, 0
    %v1683 = vsel %vm700, %v342, 0
    %v1686 = vsel %vm700, %v343, 0
    %v1689 = vsel %vm700, %v344, 0
    %v1692 = vsel %vm700, %v345, 0
    %v1695 = vsel %vm700, %v346, 0
    %v1698 = vsel %vm700, %v347, 0
    %v1701 = vsel %vm700, %v348, 0
    %v1704 = vsel %vm700, %v349, 0
    %v1707 = vsel %vm700, %v350, 0
    %v1710 = vsel %vm700, %v351, 0
    %v1713 = vsel %vm700, %v352, 0
    %v1716 = vsel %vm700, %v353, 0
    %v1719 = vsel %vm700, %v354, 0
    %v1722 = vsel %vm700, %v355, 0
    %v1725 = vsel %vm700, %v356, 0
    %v1728 = vsel %vm700, %v357, 0
    %v1731 = vsel %vm700, %v358, 0
    %v1734 = vsel %vm700, %v359, 0
    %v1737 = vsel %vm700, %v360, 0
    %v1740 = vsel %vm700, %v361, 0
    %v1743 = vsel %vm700, %v362, 0
    %v1746 = vsel %vm700, %v363, 0
    %v1749 = vsel %vm700, %v364, 0
    %v1752 = vsel %vm700, %v365, 0
    %v1755 = vsel %vm700, %v366, 0
    %v1758 = vsel %vm700, %v367, 0
    %v1761 = vsel %vm700, %v368, 0
    %v1764 = vsel %vm700, %v369, 0
    %v1767 = vsel %vm700, %v370, 0
    %v1770 = vsel %vm700, %v371, 0
    %v1773 = vsel %vm700, %v372, 0
    %v1776 = vsel %vm700, %v373, 0
    %v1779 = vsel %vm700, %v374, 0
    %v1782 = vsel %vm700, %v375, 0
    %v1785 = vsel %vm700, %v376, 0
    %v1788 = vsel %vm700, %v377, 0
    %v1791 = vsel %vm700, %v378, 0
    %v1794 = vsel %vm700, %v379, 0
    %v1797 = vsel %vm700, %v380, 0
    %v1800 = vsel %vm700, %v381, 0
    %v1803 = vsel %vm700, %v382, 0
    %v1806 = vsel %vm700, %v383, 0
    %v1809 = vsel %vm700, %v384, 0
    %v1812 = vsel %vm700, %v385, 0
    %v1815 = vsel %vm700, %v386, 0
    %v1818 = vsel %vm700, %v387, 0
    %v1821 = vsel %vm700, %v388, 0
    %v1824 = vsel %vm700, %v389, 0
    %v1827 = vsel %vm700, %v390, 0
    %v1830 = vsel %vm700, %v391, 0
    %v1833 = vsel %vm700, %v392, 0
    %v1836 = vsel %vm700, %v393, 0
    %v1839 = vsel %vm700, %v394, 0
    %v1842 = vsel %vm700, %v395, 0
    %v1845 = vsel %vm700, %v396, 0
    %v1848 = vsel %vm700, %v397, 0
    %v1851 = vsel %vm700, %v398, 0
    %v1854 = vsel %vm700, %v399, 0
    %v1857 = vsel %vm700, %v400, 0
    %v1860 = vsel %vm700, %v401, 0
    %v1863 = vsel %vm700, %v402, 0
    %v1866 = vsel %vm700, %v403, 0
    %v1869 = vsel %vm700, %v404, 0
    %v1872 = vsel %vm700, %v405, 0
    %v1875 = vsel %vm700, %v406, 0
    %v1878 = vsel %vm700, %v407, 0
    %v1881 = vsel %vm700, %v408, 0
    %v1884 = vsel %vm700, %v409, 0
    %v1887 = vsel %vm700, %v410, 0
    %v1890 = vsel %vm700, %v411, 0
    %v1893 = vsel %vm700, %v412, 0
    %v1896 = vsel %vm700, %v413, 0
    %v1899 = vsel %vm700, %v414, 0
    %v1902 = vsel %vm700, %v415, 0
    %v1905 = vsel %vm700, %v416, 0
    %v1908 = vsel %vm700, %v417, 0
    %v1911 = vsel %vm700, %v418, 0
    %v1914 = vsel %vm700, %v419, 0
    %v1917 = vsel %vm700, %v420, 0
    %v1920 = vsel %vm700, %v421, 0
    %v1923 = vsel %vm700, %v422, 0
    %v1926 = vsel %vm700, %v423, 0
    %v1929 = vsel %vm700, %v424, 0
    %v1932 = vsel %vm700, %v425, 0
    %v1935 = vsel %vm700, %v426, 0
    %v1938 = vsel %vm700, %v427, 0
    %v1941 = vsel %vm700, %v428, 0
    %v1944 = vsel %vm700, %v429, 0
    %v1947 = vsel %vm700, %v430, 0
    %v1950 = vsel %vm700, %v431, 0
    %v1953 = vsel %vm700, %v432, 0
    %v1956 = vsel %vm700, %v433, 0
    %v1959 = vsel %vm700, %v434, 0
    %v1962 = vsel %vm700, %v435, 0
    %v1965 = vsel %vm700, %v436, 0
    %v1968 = vsel %vm700, %v437, 0
    %v1971 = vsel %vm700, %v438, 0
    %v1974 = vsel %vm700, %v439, 0
    %v1977 = vsel %vm700, %v440, 0
    %v1980 = vsel %vm700, %v441, 0
    %v1983 = vsel %vm700, %v442, 0
    %v1986 = vsel %vm700, %v443, 0
    %v1989 = vsel %vm700, %v444, 0
    %v1992 = vsel %vm700, %v445, 0
    %v1995 = vsel %vm700, %v446, 0
    %v1998 = vsel %vm700, %v447, 0
    %v2001 = vsel %vm700, %v448, 0
    %v2004 = vsel %vm700, %v449, 0
    %v2007 = vsel %vm700, %v450, 0
    %v2010 = vsel %vm700, %v451, 0
    %v2013 = vsel %vm700, %v452, 0
    %v2016 = vsel %vm700, %v453, 0
    %v2019 = vsel %vm700, %v454, 0
    %v2022 = vsel %vm700, %v455, 0
    %v2025 = vsel %vm700, %v456, 0
    %v2028 = vsel %vm700, %v457, 0
    %v2031 = vsel %vm700, %v458, 0
    %v2034 = vsel %vm700, %v459, 0
    %v2037 = vsel %vm700, %v460, 0
    %v2040 = vsel %vm700, %v461, 0
    %v2043 = vsel %vm700, %v462, 0
    %v2046 = vsel %vm700, %v463, 0
    %v2049 = vsel %vm700, %v464, 0
    %v2052 = vsel %vm700, %v465, 0
    %v2055 = vsel %vm700, %v466, 0
    %v2058 = vsel %vm700, %v467, 0
    %v2061 = vsel %vm700, %v468, 0
    %v2064 = vsel %vm700, %v469, 0
    %v2067 = vsel %vm700, %v470, 0
    %v2070 = vsel %vm700, %v471, 0
    %v2073 = vsel %vm700, %v472, 0
    %v2076 = vsel %vm700, %v473, 0
    %v2079 = vsel %vm700, %v474, 0
    %v2082 = vsel %vm700, %v475, 0
    %v2085 = vsel %vm700, %v476, 0
    %v2088 = vsel %vm700, %v477, 0
    %v2091 = vsel %vm700, %v478, 0
    %v2094 = vsel %vm700, %v479, 0
    %v2097 = vsel %vm700, %v480, 0
    %v2100 = vsel %vm700, %v481, 0
    %v2103 = vsel %vm700, %v482, 0
    %v2106 = vsel %vm700, %v483, 0
    %v2109 = vsel %vm700, %v484, 0
    %v2112 = vsel %vm700, %v485, 0
    %v2115 = vsel %vm700, %v486, 0
    %v2118 = vsel %vm700, %v487, 0
    %v2121 = vsel %vm700, %v488, 0
    %v2124 = vsel %vm700, %v489, 0
    %v2127 = vsel %vm700, %v490, 0
    %v2130 = vsel %vm700, %v491, 0
    %v2133 = vsel %vm700, %v492, 0
    %v2136 = vsel %vm700, %v493, 0
    %v2139 = vsel %vm700, %v494, 0
    %v2142 = vsel %vm700, %v495, 0
    %v2145 = vsel %vm700, %v496, 0
    %v2148 = vsel %vm700, %v497, 0
    %v2151 = vsel %vm700, %v498, 0
    %v2154 = vsel %vm700, %v499, 0
    %v2157 = vsel %vm700, %v500, 0
    %v2160 = vsel %vm700, %v501, 0
    %v2163 = vsel %vm700, %v502, 0
    %v2166 = vsel %vm700, %v503, 0
    %v2169 = vsel %vm700, %v504, 0
    %v2172 = vsel %vm700, %v505, 0
    %v2175 = vsel %vm700, %v506, 0
    %v2178 = vsel %vm700, %v507, 0
    %v2181 = vsel %vm700, %v508, 0
    %v2184 = vsel %vm700, %v509, 0
    %v2187 = vsel %vm700, %v510, 0
    %v2190 = vsel %vm700, %v511, 0
    %v2193 = vsel %vm700, %v512, 0
    %v2196 = vsel %vm700, %v513, 0
    %v2199 = vsel %vm700, %v514, 0
    %v2202 = vsel %vm700, %v515, 0
    %v2205 = vsel %vm700, %v516, 0
    %v2208 = vsel %vm700, %v517, 0
    %v2211 = vsel %vm700, %v518, 0
    %v2214 = vsel %vm700, %v519, 0
    %v2217 = vsel %vm700, %v520, 0
    %v2220 = vsel %vm700, %v521, 0
    %v2223 = vsel %vm700, %v522, 0
    %v2226 = vsel %vm700, %v523, 0
    %v2229 = vsel %vm700, %v524, 0
    %v2232 = vsel %vm700, %v525, 0
    %v2235 = vsel %vm700, %v526, 0
    %v2238 = vsel %vm700, %v527, 0
    %v2241 = vsel %vm700, %v528, 0
    %v2244 = vsel %vm700, %v529, 0
    %v2247 = vsel %vm700, %v530, 0
    %v2250 = vsel %vm700, %v531, 0
    %v2253 = vsel %vm700, %v532, 0
    %v2256 = vsel %vm700, %v533, 0
    %v2259 = vsel %vm700, %v534, 0
    %v2262 = vsel %vm700, %v535, 0
    %v2265 = vsel %vm700, %v536, 0
    %v2268 = vsel %vm700, %v537, 0
    %v2271 = vsel %vm700, %v538, 0
    %v2274 = vsel %vm700, %v539, 0
    %v2277 = vsel %vm700, %v540, 0
    %v2280 = vsel %vm700, %v541, 0
    %v2283 = vsel %vm700, %v542, 0
    %v2286 = vsel %vm700, %v543, 0
    %v2289 = vsel %vm700, %v544, 0
    %v2292 = vsel %vm700, %v545, 0
    %v2295 = vsel %vm700, %v546, 0
    %v2298 = vsel %vm700, %v547, 0
    %v2301 = vsel %vm700, %v548, 0
    %v2304 = vsel %vm700, %v549, 0
    %v2307 = vsel %vm700, %v550, 0
    %v2310 = vsel %vm700, %v551, 0
    %v2313 = vsel %vm700, %v552, 0
    %v2316 = vsel %vm700, %v553, 0
    %v2319 = vsel %vm700, %v554, 0
    %v2322 = vsel %vm700, %v555, 0
    %v2325 = vsel %vm700, %v556, 0
    %v2328 = vsel %vm700, %v557, 0
    %v2331 = vsel %vm700, %v558, 0
    %v2334 = vsel %vm700, %v559, 0
    %v2337 = vsel %vm700, %v560, 0
    %v2340 = vsel %vm700, %v561, 0
    %v2343 = vsel %vm700, %v562, 0
    %v2346 = vsel %vm700, %v563, 0
    %v2349 = vsel %vm700, %v564, 0
    %v2352 = vsel %vm700, %v565, 0
    %v2355 = vsel %vm700, %v566, 0
    %v2358 = vsel %vm700, %v567, 0
    %v2361 = vsel %vm700, %v568, 0
    %v2364 = vsel %vm700, %v569, 0
    %v2367 = vsel %vm700, %v570, 0
    %v2370 = vsel %vm700, %v571, 0
    %v2373 = vsel %vm700, %v572, 0
    %v2376 = vsel %vm700, %v573, 0
    %v2379 = vsel %vm700, %v574, 0
    %v2382 = vsel %vm700, %v575, 0
    %v2385 = vsel %vm700, %v576, 0
    %v2388 = vsel %vm700, %v577, 0
    %v2391 = vsel %vm700, %v578, 0
    %v2394 = vsel %vm700, %v579, 0
    %v2397 = vsel %vm700, %v580, 0
    %v2400 = vsel %vm700, %v581, 0
    %v2403 = vsel %vm700, %v582, 0
    %v2406 = vsel %vm700, %v583, 0
    %v2409 = vsel %vm700, %v584, 0
    %v2412 = vsel %vm700, %v585, 0
    %v2415 = vsel %vm700, %v586, 0
    %v2418 = vsel %vm700, %v587, 0
    %v2421 = vsel %vm700, %v588, 0
    %v2424 = vsel %vm700, %v589, 0
    %v2427 = vsel %vm700, %v590, 0
    %v2430 = vsel %vm700, %v591, 0
    %v2433 = vsel %vm700, %v592, 0
    %v2436 = vsel %vm700, %v593, 0
    %v2439 = vsel %vm700, %v594, 0
    %v2442 = vsel %vm700, %v595, 0
    %v2445 = vsel %vm700, %v596, 0
    %v2448 = vsel %vm700, %v597, 0
    %v2451 = vsel %vm700, %v598, 0
    %v2454 = vsel %vm700, %v599, 0
    %v2457 = vsel %vm700, %v600, 0
    %v2460 = vsel %vm700, %v601, 0
    %v2463 = vsel %vm700, %v602, 0
    %v2466 = vsel %vm700, %v603, 0
    %v2469 = vsel %vm700, %v604, 0
    %v2472 = vsel %vm700, %v605, 0
    %v2475 = vsel %vm700, %v606, 0
    %v2478 = vsel %vm700, %v607, 0
    %v2481 = vsel %vm700, %v608, 0
    %v2484 = vsel %vm700, %v609, 0
    %v2487 = vsel %vm700, %v610, 0
    %v2490 = vsel %vm700, %v611, 0
    %v2493 = vsel %vm700, %v612, 0
    %v2496 = vsel %vm700, %v613, 0
    %v2499 = vsel %vm700, %v614, 0
    %v2502 = vsel %vm700, %v615, 0
    %v2505 = vsel %vm700, %v616, 0
    %v2508 = vsel %vm700, %v617, 0
    %v2511 = vsel %vm700, %v618, 0
    %v2514 = vsel %vm700, %v619, 0
    %v2517 = vsel %vm700, %v620, 0
    %v2520 = vsel %vm700, %v621, 0
    %v2523 = vsel %vm700, %v622, 0
    %v2526 = vsel %vm700, %v623, 0
    %v2529 = vsel %vm700, %v624, 0
    %v2532 = vsel %vm700, %v625, 0
    %v2535 = vsel %vm700, %v626, 0
    %v2538 = vsel %vm700, %v627, 0
    %v2541 = vsel %vm700, %v628, 0
    %v2544 = vsel %vm700, %v629, 0
    %v2547 = vsel %vm700, %v630, 0
    %v2550 = vsel %vm700, %v631, 0
    %v2553 = vsel %vm700, %v632, 0
    %v2556 = vsel %vm700, %v633, 0
    %v2559 = vsel %vm700, %v634, 0
    %v2562 = vsel %vm700, %v635, 0
    %v2565 = vsel %vm700, %v636, 0
    %v2568 = vsel %vm700, %v637, 0
    %v2571 = vsel %vm700, %v638, 0
    %v2574 = vsel %vm700, %v639, 0
    %v2577 = vsel %vm700, %v640, 0
    %v2580 = vsel %vm700, %v641, 0
    %v2583 = vsel %vm700, %v642, 0
    %v2586 = vsel %vm700, %v643, 0
    %v2589 = vsel %vm700, %v644, 0
    %v2592 = vsel %vm700, %v645, 0
    %v2595 = vsel %vm700, %v646, 0
    %v2598 = vsel %vm700, %v647, 0
    %v2601 = vsel %vm700, %v648, 0
    %v2604 = vsel %vm700, %v649, 0
    %v2607 = vsel %vm700, %v650, 0
    %v2610 = vsel %vm700, %v651, 0
    %v2613 = vsel %vm700, %v652, 0
    %v2616 = vsel %vm700, %v653, 0
    %v2619 = vsel %vm700, %v654, 0
    %v2622 = vsel %vm700, %v655, 0
    %v2625 = vsel %vm700, %v656, 0
    %v2628 = vsel %vm700, %v657, 0
    %v2631 = vsel %vm700, %v658, 0
    %v2634 = vsel %vm700, %v659, 0
    %v2637 = vsel %vm700, %v660, 0
    %v2640 = vsel %vm700, %v661, 0
    %v2643 = vsel %vm700, %v662, 0
    %v2646 = vsel %vm700, %v663, 0
    %v2649 = vsel %vm700, %v664, 0
    %v2652 = vsel %vm700, %v665, 0
    %v2655 = vsel %vm700, %v666, 0
    %v2658 = vsel %vm700, %v667, 0
    %v2661 = vsel %vm700, %v668, 0
    %v2664 = vsel %vm700, %v669, 0
    %v2667 = vsel %vm700, %v670, 0
    %v2670 = vsel %vm700, %v671, 0
    %v2673 = vsel %vm700, %v672, 0
    %v2676 = vsel %vm700, %v673, 0
    %v2679 = vsel %vm700, %v674, 0
    %v2682 = vsel %vm700, %v675, 0
    %v2685 = vsel %vm700, %v676, 0
    %v2688 = vsel %vm700, %v677, 0
    %v2691 = vsel %vm700, %v678, 0
    %v2694 = vsel %vm700, %v679, 0
    %v2697 = vsel %vm700, %v680, 0
    %v2700 = vsel %vm700, %v681, 0
    %v2703 = vsel %vm700, %v682, 0
    %v2706 = vsel %vm700, %v683, 0
    %v2709 = vsel %vm700, %v684, 0
    %v2712 = vsel %vm700, %v685, 0
    %v2715 = vsel %vm700, %v686, 0
    %v2718 = vsel %vm700, %v687, 0
    %v2721 = vsel %vm700, %v688, 0
    %v2724 = vsel %vm700, %v689, 0
    %v2727 = vsel %vm700, %v690, 0
    %vm2729 = vcmask 1040384
    %v2731 = vsel %vm2729, %v692, 0
    %2733 = vmatprep.subr.mxu0 0.0
    %2734 = vmatpush1.msra.mxu0 0.0
    %2735 = vmatprep.subr.mxu0 0.0
    %2736 = vmatpush1.msra.mxu0 0.0
    %2737 = vmatprep.subr.mxu0 0.0
    %2738 = vmatpush1.msra.mxu0 0.0
    %2739 = vmatprep.subr.mxu0 0.0
    %2740 = vmatpush1.msra.mxu0 0.0
    %2741 = vmatprep.subr.mxu0 0.0
    %2742 = vmatpush1.msra.mxu0 0.0
    %2743 = vmatprep.subr.mxu0 0.0
    %2744 = vmatpush1.msra.mxu0 0.0
    %2745 = vmatprep.subr.mxu0 0.0
    %2746 = vmatpush1.msra.mxu0 0.0
    %2747 = vmatprep.subr.mxu0 0.0
    %2748 = vmatpush1.msra.mxu0 0.0
    %2749 = vmatprep.subr.mxu0 0.0
    %2750 = vmatpush1.msra.mxu0 0.0
    %2751 = vmatprep.subr.mxu0 0.0
    %2752 = vmatpush1.msra.mxu0 0.0
    %2753 = vmatprep.subr.mxu0 0.0
    %2754 = vmatpush1.msra.mxu0 0.0
    %2755 = vmatprep.subr.mxu0 0.0
    %2756 = vmatpush1.msra.mxu0 0.0
    %2757 = vmatprep.subr.mxu0 0.0
    %2758 = vmatpush1.msra.mxu0 0.0
    %2759 = vmatprep.subr.mxu0 0.0
    %2760 = vmatpush1.msra.mxu0 0.0
    %2761 = vmatprep.subr.mxu0 0.0
    %2762 = vmatpush1.msra.mxu0 %v2731
    %2763 = vmatprep.subr.mxu0 0.0
    %2764 = vmatpush1.msra.mxu0 %v691
    %2765 = vmatprep.subr.mxu0 0.0
    %2766 = vmatpush2.msra.mxu0 0.0
    %2767 = vmatprep.subr.mxu0 0.0
    %2768 = vmatpush2.msra.mxu0 0.0
    %2769 = vmatprep.subr.mxu0 0.0
    %2770 = vmatpush2.msra.mxu0 0.0
    %2771 = vmatprep.subr.mxu0 0.0
    %2772 = vmatpush2.msra.mxu0 0.0
    %2773 = vmatprep.subr.mxu0 0.0
    %2774 = vmatpush2.msra.mxu0 0.0
    %2775 = vmatprep.subr.mxu0 0.0
    %2776 = vmatpush2.msra.mxu0 0.0
    %2777 = vmatprep.subr.mxu0 0.0
    %2778 = vmatpush2.msra.mxu0 0.0
    %2779 = vmatprep.subr.mxu0 0.0
    %2780 = vmatpush2.msra.mxu0 0.0
    %2781 = vmatprep.subr.mxu0 0.0
    %2782 = vmatpush2.msra.mxu0 0.0
    %2783 = vmatprep.subr.mxu0 0.0
    %2784 = vmatpush2.msra.mxu0 0.0
    %2785 = vmatprep.subr.mxu0 0.0
    %2786 = vmatpush2.msra.mxu0 0.0
    %2787 = vmatprep.subr.mxu0 0.0
    %2788 = vmatpush2.msra.mxu0 0.0
    %2789 = vmatprep.subr.mxu0 0.0
    %2790 = vmatpush2.msra.mxu0 0.0
    %2791 = vmatprep.subr.mxu0 0.0
    %2792 = vmatpush2.msra.mxu0 0.0
    %2793 = vmatprep.subr.mxu0 0.0
    %2794 = vmatpush2.msra.mxu0 0.0
    %2795 = vmatprep.subr.mxu0 0.0
    %2796 = vmatpush2.msra.mxu0 0.0
    %2797 = vmatprep.mubr.f32.mxu0 0.0
    %2798 = vmatmul.mubr.f32.gmra.mxu0 %v702
    %v2799 = vpop.f32.mrf.mxu0
    %v2800 = vadd.f32 %v698, %v2799
    %v2801 = vpop.f32.mrf.mxu0
    %2802 = vmatprep.mubr.f32.mxu0 0.0
    %2803 = vmatmul.mubr.f32.gmra.mxu0 %v705
    %v2804 = vpop.f32.mrf.mxu0
    %v2805 = vadd.f32 %v698, %v2804
    %v2806 = vpop.f32.mrf.mxu0
    %2807 = vmatprep.mubr.f32.mxu0 0.0
    %2808 = vmatmul.mubr.f32.gmra.mxu0 %v708
    %v2809 = vpop.f32.mrf.mxu0
    %v2810 = vadd.f32 %v698, %v2809
    %v2811 = vpop.f32.mrf.mxu0
    %2812 = vmatprep.mubr.f32.mxu0 0.0
    %2813 = vmatmul.mubr.f32.gmra.mxu0 %v711
    %v2814 = vpop.f32.mrf.mxu0
    %v2815 = vadd.f32 %v698, %v2814
    %v2816 = vpop.f32.mrf.mxu0
    %2817 = vmatprep.mubr.f32.mxu0 0.0
    %2818 = vmatmul.mubr.f32.gmra.mxu0 %v714
    %v2819 = vpop.f32.mrf.mxu0
    %v2820 = vadd.f32 %v698, %v2819
    %v2821 = vpop.f32.mrf.mxu0
    %2822 = vmatprep.mubr.f32.mxu0 0.0
    %2823 = vmatmul.mubr.f32.gmra.mxu0 %v717
    %v2824 = vpop.f32.mrf.mxu0
    %v2825 = vadd.f32 %v698, %v2824
    %v2826 = vpop.f32.mrf.mxu0
    %2827 = vmatprep.mubr.f32.mxu0 0.0
    %2828 = vmatmul.mubr.f32.gmra.mxu0 %v720
    %v2829 = vpop.f32.mrf.mxu0
    %v2830 = vadd.f32 %v698, %v2829
    %v2831 = vpop.f32.mrf.mxu0
    %2832 = vmatprep.mubr.f32.mxu0 0.0
    %2833 = vmatmul.mubr.f32.gmra.mxu0 %v723
    %v2834 = vpop.f32.mrf.mxu0
    %v2835 = vadd.f32 %v698, %v2834
    %v2836 = vpop.f32.mrf.mxu0
    %2837 = vmatprep.mubr.f32.mxu0 0.0
    %2838 = vmatmul.mubr.f32.gmra.mxu0 %v726
    %v2839 = vpop.f32.mrf.mxu0
    %v2840 = vadd.f32 %v698, %v2839
    %v2841 = vpop.f32.mrf.mxu0
    %2842 = vmatprep.mubr.f32.mxu0 0.0
    %2843 = vmatmul.mubr.f32.gmra.mxu0 %v729
    %v2844 = vpop.f32.mrf.mxu0
    %v2845 = vadd.f32 %v698, %v2844
    %v2846 = vpop.f32.mrf.mxu0
    %2847 = vmatprep.mubr.f32.mxu0 0.0
    %2848 = vmatmul.mubr.f32.gmra.mxu0 %v732
    %v2849 = vpop.f32.mrf.mxu0
    %v2850 = vadd.f32 %v698, %v2849
    %v2851 = vpop.f32.mrf.mxu0
    %2852 = vmatprep.mubr.f32.mxu0 0.0
    %2853 = vmatmul.mubr.f32.gmra.mxu0 %v735
    %v2854 = vpop.f32.mrf.mxu0
    %v2855 = vadd.f32 %v698, %v2854
    %v2856 = vpop.f32.mrf.mxu0
    %2857 = vmatprep.mubr.f32.mxu0 0.0
    %2858 = vmatmul.mubr.f32.gmra.mxu0 %v738
    %v2859 = vpop.f32.mrf.mxu0
    %v2860 = vadd.f32 %v698, %v2859
    %v2861 = vpop.f32.mrf.mxu0
    %2862 = vmatprep.mubr.f32.mxu0 0.0
    %2863 = vmatmul.mubr.f32.gmra.mxu0 %v741
    %v2864 = vpop.f32.mrf.mxu0
    %v2865 = vadd.f32 %v698, %v2864
    %v2866 = vpop.f32.mrf.mxu0
    %2867 = vmatprep.mubr.f32.mxu0 0.0
    %2868 = vmatmul.mubr.f32.gmra.mxu0 %v744
    %v2869 = vpop.f32.mrf.mxu0
    %v2870 = vadd.f32 %v698, %v2869
    %v2871 = vpop.f32.mrf.mxu0
    %2872 = vmatprep.mubr.f32.mxu0 0.0
    %2873 = vmatmul.mubr.f32.gmra.mxu0 %v747
    %v2874 = vpop.f32.mrf.mxu0
    %v2875 = vadd.f32 %v698, %v2874
    %v2876 = vpop.f32.mrf.mxu0
    %2877 = vmatprep.mubr.f32.mxu0 0.0
    %2878 = vmatmul.mubr.f32.gmra.mxu0 %v750
    %v2879 = vpop.f32.mrf.mxu0
    %v2880 = vadd.f32 %v698, %v2879
    %v2881 = vpop.f32.mrf.mxu0
    %2882 = vmatprep.mubr.f32.mxu0 0.0
    %2883 = vmatmul.mubr.f32.gmra.mxu0 %v753
    %v2884 = vpop.f32.mrf.mxu0
    %v2885 = vadd.f32 %v698, %v2884
    %v2886 = vpop.f32.mrf.mxu0
    %2887 = vmatprep.mubr.f32.mxu0 0.0
    %2888 = vmatmul.mubr.f32.gmra.mxu0 %v756
    %v2889 = vpop.f32.mrf.mxu0
    %v2890 = vadd.f32 %v698, %v2889
    %v2891 = vpop.f32.mrf.mxu0
    %2892 = vmatprep.mubr.f32.mxu0 0.0
    %2893 = vmatmul.mubr.f32.gmra.mxu0 %v759
    %v2894 = vpop.f32.mrf.mxu0
    %v2895 = vadd.f32 %v698, %v2894
    %v2896 = vpop.f32.mrf.mxu0
    %2897 = vmatprep.mubr.f32.mxu0 0.0
    %2898 = vmatmul.mubr.f32.gmra.mxu0 %v762
    %v2899 = vpop.f32.mrf.mxu0
    %v2900 = vadd.f32 %v698, %v2899
    %v2901 = vpop.f32.mrf.mxu0
    %2902 = vmatprep.mubr.f32.mxu0 0.0
    %2903 = vmatmul.mubr.f32.gmra.mxu0 %v765
    %v2904 = vpop.f32.mrf.mxu0
    %v2905 = vadd.f32 %v698, %v2904
    %v2906 = vpop.f32.mrf.mxu0
    %2907 = vmatprep.mubr.f32.mxu0 0.0
    %2908 = vmatmul.mubr.f32.gmra.mxu0 %v768
    %v2909 = vpop.f32.mrf.mxu0
    %v2910 = vadd.f32 %v698, %v2909
    %v2911 = vpop.f32.mrf.mxu0
    %2912 = vmatprep.mubr.f32.mxu0 0.0
    %2913 = vmatmul.mubr.f32.gmra.mxu0 %v771
    %v2914 = vpop.f32.mrf.mxu0
    %v2915 = vadd.f32 %v698, %v2914
    %v2916 = vpop.f32.mrf.mxu0
    %2917 = vmatprep.mubr.f32.mxu0 0.0
    %2918 = vmatmul.mubr.f32.gmra.mxu0 %v774
    %v2919 = vpop.f32.mrf.mxu0
    %v2920 = vadd.f32 %v698, %v2919
    %v2921 = vpop.f32.mrf.mxu0
    %2922 = vmatprep.mubr.f32.mxu0 0.0
    %2923 = vmatmul.mubr.f32.gmra.mxu0 %v777
    %v2924 = vpop.f32.mrf.mxu0
    %v2925 = vadd.f32 %v698, %v2924
    %v2926 = vpop.f32.mrf.mxu0
    %2927 = vmatprep.mubr.f32.mxu0 0.0
    %2928 = vmatmul.mubr.f32.gmra.mxu0 %v780
    %v2929 = vpop.f32.mrf.mxu0
    %v2930 = vadd.f32 %v698, %v2929
    %v2931 = vpop.f32.mrf.mxu0
    %2932 = vmatprep.mubr.f32.mxu0 0.0
    %2933 = vmatmul.mubr.f32.gmra.mxu0 %v783
    %v2934 = vpop.f32.mrf.mxu0
    %v2935 = vadd.f32 %v698, %v2934
    %v2936 = vpop.f32.mrf.mxu0
    %2937 = vmatprep.mubr.f32.mxu0 0.0
    %2938 = vmatmul.mubr.f32.gmra.mxu0 %v786
    %v2939 = vpop.f32.mrf.mxu0
    %v2940 = vadd.f32 %v698, %v2939
    %v2941 = vpop.f32.mrf.mxu0
    %2942 = vmatprep.mubr.f32.mxu0 0.0
    %2943 = vmatmul.mubr.f32.gmra.mxu0 %v789
    %v2944 = vpop.f32.mrf.mxu0
    %v2945 = vadd.f32 %v698, %v2944
    %v2946 = vpop.f32.mrf.mxu0
    %2947 = vmatprep.mubr.f32.mxu0 0.0
    %2948 = vmatmul.mubr.f32.gmra.mxu0 %v792
    %v2949 = vpop.f32.mrf.mxu0
    %v2950 = vadd.f32 %v698, %v2949
    %v2951 = vpop.f32.mrf.mxu0
    %2952 = vmatprep.mubr.f32.mxu0 0.0
    %2953 = vmatmul.mubr.f32.gmra.mxu0 %v795
    %v2954 = vpop.f32.mrf.mxu0
    %v2955 = vadd.f32 %v698, %v2954
    %v2956 = vpop.f32.mrf.mxu0
    %2957 = vmatprep.mubr.f32.mxu0 0.0
    %2958 = vmatmul.mubr.f32.gmra.mxu0 %v798
    %v2959 = vpop.f32.mrf.mxu0
    %v2960 = vadd.f32 %v698, %v2959
    %v2961 = vpop.f32.mrf.mxu0
    %2962 = vmatprep.mubr.f32.mxu0 0.0
    %2963 = vmatmul.mubr.f32.gmra.mxu0 %v801
    %v2964 = vpop.f32.mrf.mxu0
    %v2965 = vadd.f32 %v698, %v2964
    %v2966 = vpop.f32.mrf.mxu0
    %2967 = vmatprep.mubr.f32.mxu0 0.0
    %2968 = vmatmul.mubr.f32.gmra.mxu0 %v804
    %v2969 = vpop.f32.mrf.mxu0
    %v2970 = vadd.f32 %v698, %v2969
    %v2971 = vpop.f32.mrf.mxu0
    %2972 = vmatprep.mubr.f32.mxu0 0.0
    %2973 = vmatmul.mubr.f32.gmra.mxu0 %v807
    %v2974 = vpop.f32.mrf.mxu0
    %v2975 = vadd.f32 %v698, %v2974
    %v2976 = vpop.f32.mrf.mxu0
    %2977 = vmatprep.mubr.f32.mxu0 0.0
    %2978 = vmatmul.mubr.f32.gmra.mxu0 %v810
    %v2979 = vpop.f32.mrf.mxu0
    %v2980 = vadd.f32 %v698, %v2979
    %v2981 = vpop.f32.mrf.mxu0
    %2982 = vmatprep.mubr.f32.mxu0 0.0
    %2983 = vmatmul.mubr.f32.gmra.mxu0 %v813
    %v2984 = vpop.f32.mrf.mxu0
    %v2985 = vadd.f32 %v698, %v2984
    %v2986 = vpop.f32.mrf.mxu0
    %2987 = vmatprep.mubr.f32.mxu0 0.0
    %2988 = vmatmul.mubr.f32.gmra.mxu0 %v816
    %v2989 = vpop.f32.mrf.mxu0
    %v2990 = vadd.f32 %v698, %v2989
    %v2991 = vpop.f32.mrf.mxu0
    %2992 = vmatprep.mubr.f32.mxu0 0.0
    %2993 = vmatmul.mubr.f32.gmra.mxu0 %v819
    %v2994 = vpop.f32.mrf.mxu0
    %v2995 = vadd.f32 %v698, %v2994
    %v2996 = vpop.f32.mrf.mxu0
    %2997 = vmatprep.mubr.f32.mxu0 0.0
    %2998 = vmatmul.mubr.f32.gmra.mxu0 %v822
    %v2999 = vpop.f32.mrf.mxu0
    %v3000 = vadd.f32 %v698, %v2999
    %v3001 = vpop.f32.mrf.mxu0
    %3002 = vmatprep.mubr.f32.mxu0 0.0
    %3003 = vmatmul.mubr.f32.gmra.mxu0 %v825
    %v3004 = vpop.f32.mrf.mxu0
    %v3005 = vadd.f32 %v698, %v3004
    %v3006 = vpop.f32.mrf.mxu0
    %3007 = vmatprep.mubr.f32.mxu0 0.0
    %3008 = vmatmul.mubr.f32.gmra.mxu0 %v828
    %v3009 = vpop.f32.mrf.mxu0
    %v3010 = vadd.f32 %v698, %v3009
    %v3011 = vpop.f32.mrf.mxu0
    %3012 = vmatprep.mubr.f32.mxu0 0.0
    %3013 = vmatmul.mubr.f32.gmra.mxu0 %v831
    %v3014 = vpop.f32.mrf.mxu0
    %v3015 = vadd.f32 %v698, %v3014
    %v3016 = vpop.f32.mrf.mxu0
    %3017 = vmatprep.mubr.f32.mxu0 0.0
    %3018 = vmatmul.mubr.f32.gmra.mxu0 %v834
    %v3019 = vpop.f32.mrf.mxu0
    %v3020 = vadd.f32 %v698, %v3019
    %v3021 = vpop.f32.mrf.mxu0
    %3022 = vmatprep.mubr.f32.mxu0 0.0
    %3023 = vmatmul.mubr.f32.gmra.mxu0 %v837
    %v3024 = vpop.f32.mrf.mxu0
    %v3025 = vadd.f32 %v698, %v3024
    %v3026 = vpop.f32.mrf.mxu0
    %3027 = vmatprep.mubr.f32.mxu0 0.0
    %3028 = vmatmul.mubr.f32.gmra.mxu0 %v840
    %v3029 = vpop.f32.mrf.mxu0
    %v3030 = vadd.f32 %v698, %v3029
    %v3031 = vpop.f32.mrf.mxu0
    %3032 = vmatprep.mubr.f32.mxu0 0.0
    %3033 = vmatmul.mubr.f32.gmra.mxu0 %v843
    %v3034 = vpop.f32.mrf.mxu0
    %v3035 = vadd.f32 %v698, %v3034
    %v3036 = vpop.f32.mrf.mxu0
    %3037 = vmatprep.mubr.f32.mxu0 0.0
    %3038 = vmatmul.mubr.f32.gmra.mxu0 %v846
    %v3039 = vpop.f32.mrf.mxu0
    %v3040 = vadd.f32 %v698, %v3039
    %v3041 = vpop.f32.mrf.mxu0
    %3042 = vmatprep.mubr.f32.mxu0 0.0
    %3043 = vmatmul.mubr.f32.gmra.mxu0 %v849
    %v3044 = vpop.f32.mrf.mxu0
    %v3045 = vadd.f32 %v698, %v3044
    %v3046 = vpop.f32.mrf.mxu0
    %3047 = vmatprep.mubr.f32.mxu0 0.0
    %3048 = vmatmul.mubr.f32.gmra.mxu0 %v852
    %v3049 = vpop.f32.mrf.mxu0
    %v3050 = vadd.f32 %v698, %v3049
    %v3051 = vpop.f32.mrf.mxu0
    %3052 = vmatprep.mubr.f32.mxu0 0.0
    %3053 = vmatmul.mubr.f32.gmra.mxu0 %v855
    %v3054 = vpop.f32.mrf.mxu0
    %v3055 = vadd.f32 %v698, %v3054
    %v3056 = vpop.f32.mrf.mxu0
    %3057 = vmatprep.mubr.f32.mxu0 0.0
    %3058 = vmatmul.mubr.f32.gmra.mxu0 %v858
    %v3059 = vpop.f32.mrf.mxu0
    %v3060 = vadd.f32 %v698, %v3059
    %v3061 = vpop.f32.mrf.mxu0
    %3062 = vmatprep.mubr.f32.mxu0 0.0
    %3063 = vmatmul.mubr.f32.gmra.mxu0 %v861
    %v3064 = vpop.f32.mrf.mxu0
    %v3065 = vadd.f32 %v698, %v3064
    %v3066 = vpop.f32.mrf.mxu0
    %3067 = vmatprep.mubr.f32.mxu0 0.0
    %3068 = vmatmul.mubr.f32.gmra.mxu0 %v864
    %v3069 = vpop.f32.mrf.mxu0
    %v3070 = vadd.f32 %v698, %v3069
    %v3071 = vpop.f32.mrf.mxu0
    %3072 = vmatprep.mubr.f32.mxu0 0.0
    %3073 = vmatmul.mubr.f32.gmra.mxu0 %v867
    %v3074 = vpop.f32.mrf.mxu0
    %v3075 = vadd.f32 %v698, %v3074
    %v3076 = vpop.f32.mrf.mxu0
    %3077 = vmatprep.mubr.f32.mxu0 0.0
    %3078 = vmatmul.mubr.f32.gmra.mxu0 %v870
    %v3079 = vpop.f32.mrf.mxu0
    %v3080 = vadd.f32 %v698, %v3079
    %v3081 = vpop.f32.mrf.mxu0
    %3082 = vmatprep.mubr.f32.mxu0 0.0
    %3083 = vmatmul.mubr.f32.gmra.mxu0 %v873
    %v3084 = vpop.f32.mrf.mxu0
    %v3085 = vadd.f32 %v698, %v3084
    %v3086 = vpop.f32.mrf.mxu0
    %3087 = vmatprep.mubr.f32.mxu0 0.0
    %3088 = vmatmul.mubr.f32.gmra.mxu0 %v876
    %v3089 = vpop.f32.mrf.mxu0
    %v3090 = vadd.f32 %v698, %v3089
    %v3091 = vpop.f32.mrf.mxu0
    %3092 = vmatprep.mubr.f32.mxu0 0.0
    %3093 = vmatmul.mubr.f32.gmra.mxu0 %v879
    %v3094 = vpop.f32.mrf.mxu0
    %v3095 = vadd.f32 %v698, %v3094
    %v3096 = vpop.f32.mrf.mxu0
    %3097 = vmatprep.mubr.f32.mxu0 0.0
    %3098 = vmatmul.mubr.f32.gmra.mxu0 %v882
    %v3099 = vpop.f32.mrf.mxu0
    %v3100 = vadd.f32 %v698, %v3099
    %v3101 = vpop.f32.mrf.mxu0
    %3102 = vmatprep.mubr.f32.mxu0 0.0
    %3103 = vmatmul.mubr.f32.gmra.mxu0 %v885
    %v3104 = vpop.f32.mrf.mxu0
    %v3105 = vadd.f32 %v698, %v3104
    %v3106 = vpop.f32.mrf.mxu0
    %3107 = vmatprep.mubr.f32.mxu0 0.0
    %3108 = vmatmul.mubr.f32.gmra.mxu0 %v888
    %v3109 = vpop.f32.mrf.mxu0
    %v3110 = vadd.f32 %v698, %v3109
    %v3111 = vpop.f32.mrf.mxu0
    %3112 = vmatprep.mubr.f32.mxu0 0.0
    %3113 = vmatmul.mubr.f32.gmra.mxu0 %v891
    %v3114 = vpop.f32.mrf.mxu0
    %v3115 = vadd.f32 %v698, %v3114
    %v3116 = vpop.f32.mrf.mxu0
    %3117 = vmatprep.mubr.f32.mxu0 0.0
    %3118 = vmatmul.mubr.f32.gmra.mxu0 %v894
    %v3119 = vpop.f32.mrf.mxu0
    %v3120 = vadd.f32 %v698, %v3119
    %v3121 = vpop.f32.mrf.mxu0
    %3122 = vmatprep.mubr.f32.mxu0 0.0
    %3123 = vmatmul.mubr.f32.gmra.mxu0 %v897
    %v3124 = vpop.f32.mrf.mxu0
    %v3125 = vadd.f32 %v698, %v3124
    %v3126 = vpop.f32.mrf.mxu0
    %3127 = vmatprep.mubr.f32.mxu0 0.0
    %3128 = vmatmul.mubr.f32.gmra.mxu0 %v900
    %v3129 = vpop.f32.mrf.mxu0
    %v3130 = vadd.f32 %v698, %v3129
    %v3131 = vpop.f32.mrf.mxu0
    %3132 = vmatprep.mubr.f32.mxu0 0.0
    %3133 = vmatmul.mubr.f32.gmra.mxu0 %v903
    %v3134 = vpop.f32.mrf.mxu0
    %v3135 = vadd.f32 %v698, %v3134
    %v3136 = vpop.f32.mrf.mxu0
    %3137 = vmatprep.mubr.f32.mxu0 0.0
    %3138 = vmatmul.mubr.f32.gmra.mxu0 %v906
    %v3139 = vpop.f32.mrf.mxu0
    %v3140 = vadd.f32 %v698, %v3139
    %v3141 = vpop.f32.mrf.mxu0
    %3142 = vmatprep.mubr.f32.mxu0 0.0
    %3143 = vmatmul.mubr.f32.gmra.mxu0 %v909
    %v3144 = vpop.f32.mrf.mxu0
    %v3145 = vadd.f32 %v698, %v3144
    %v3146 = vpop.f32.mrf.mxu0
    %3147 = vmatprep.mubr.f32.mxu0 0.0
    %3148 = vmatmul.mubr.f32.gmra.mxu0 %v912
    %v3149 = vpop.f32.mrf.mxu0
    %v3150 = vadd.f32 %v698, %v3149
    %v3151 = vpop.f32.mrf.mxu0
    %3152 = vmatprep.mubr.f32.mxu0 0.0
    %3153 = vmatmul.mubr.f32.gmra.mxu0 %v915
    %v3154 = vpop.f32.mrf.mxu0
    %v3155 = vadd.f32 %v698, %v3154
    %v3156 = vpop.f32.mrf.mxu0
    %3157 = vmatprep.mubr.f32.mxu0 0.0
    %3158 = vmatmul.mubr.f32.gmra.mxu0 %v918
    %v3159 = vpop.f32.mrf.mxu0
    %v3160 = vadd.f32 %v698, %v3159
    %v3161 = vpop.f32.mrf.mxu0
    %3162 = vmatprep.mubr.f32.mxu0 0.0
    %3163 = vmatmul.mubr.f32.gmra.mxu0 %v921
    %v3164 = vpop.f32.mrf.mxu0
    %v3165 = vadd.f32 %v698, %v3164
    %v3166 = vpop.f32.mrf.mxu0
    %3167 = vmatprep.mubr.f32.mxu0 0.0
    %3168 = vmatmul.mubr.f32.gmra.mxu0 %v924
    %v3169 = vpop.f32.mrf.mxu0
    %v3170 = vadd.f32 %v698, %v3169
    %v3171 = vpop.f32.mrf.mxu0
    %3172 = vmatprep.mubr.f32.mxu0 0.0
    %3173 = vmatmul.mubr.f32.gmra.mxu0 %v927
    %v3174 = vpop.f32.mrf.mxu0
    %v3175 = vadd.f32 %v698, %v3174
    %v3176 = vpop.f32.mrf.mxu0
    %3177 = vmatprep.mubr.f32.mxu0 0.0
    %3178 = vmatmul.mubr.f32.gmra.mxu0 %v930
    %v3179 = vpop.f32.mrf.mxu0
    %v3180 = vadd.f32 %v698, %v3179
    %v3181 = vpop.f32.mrf.mxu0
    %3182 = vmatprep.mubr.f32.mxu0 0.0
    %3183 = vmatmul.mubr.f32.gmra.mxu0 %v933
    %v3184 = vpop.f32.mrf.mxu0
    %v3185 = vadd.f32 %v698, %v3184
    %v3186 = vpop.f32.mrf.mxu0
    %3187 = vmatprep.mubr.f32.mxu0 0.0
    %3188 = vmatmul.mubr.f32.gmra.mxu0 %v936
    %v3189 = vpop.f32.mrf.mxu0
    %v3190 = vadd.f32 %v698, %v3189
    %v3191 = vpop.f32.mrf.mxu0
    %3192 = vmatprep.mubr.f32.mxu0 0.0
    %3193 = vmatmul.mubr.f32.gmra.mxu0 %v939
    %v3194 = vpop.f32.mrf.mxu0
    %v3195 = vadd.f32 %v698, %v3194
    %v3196 = vpop.f32.mrf.mxu0
    %3197 = vmatprep.mubr.f32.mxu0 0.0
    %3198 = vmatmul.mubr.f32.gmra.mxu0 %v942
    %v3199 = vpop.f32.mrf.mxu0
    %v3200 = vadd.f32 %v698, %v3199
    %v3201 = vpop.f32.mrf.mxu0
    %3202 = vmatprep.mubr.f32.mxu0 0.0
    %3203 = vmatmul.mubr.f32.gmra.mxu0 %v945
    %v3204 = vpop.f32.mrf.mxu0
    %v3205 = vadd.f32 %v698, %v3204
    %v3206 = vpop.f32.mrf.mxu0
    %3207 = vmatprep.mubr.f32.mxu0 0.0
    %3208 = vmatmul.mubr.f32.gmra.mxu0 %v948
    %v3209 = vpop.f32.mrf.mxu0
    %v3210 = vadd.f32 %v698, %v3209
    %v3211 = vpop.f32.mrf.mxu0
    %3212 = vmatprep.mubr.f32.mxu0 0.0
    %3213 = vmatmul.mubr.f32.gmra.mxu0 %v951
    %v3214 = vpop.f32.mrf.mxu0
    %v3215 = vadd.f32 %v698, %v3214
    %v3216 = vpop.f32.mrf.mxu0
    %3217 = vmatprep.mubr.f32.mxu0 0.0
    %3218 = vmatmul.mubr.f32.gmra.mxu0 %v954
    %v3219 = vpop.f32.mrf.mxu0
    %v3220 = vadd.f32 %v698, %v3219
    %v3221 = vpop.f32.mrf.mxu0
    %3222 = vmatprep.mubr.f32.mxu0 0.0
    %3223 = vmatmul.mubr.f32.gmra.mxu0 %v957
    %v3224 = vpop.f32.mrf.mxu0
    %v3225 = vadd.f32 %v698, %v3224
    %v3226 = vpop.f32.mrf.mxu0
    %3227 = vmatprep.mubr.f32.mxu0 0.0
    %3228 = vmatmul.mubr.f32.gmra.mxu0 %v960
    %v3229 = vpop.f32.mrf.mxu0
    %v3230 = vadd.f32 %v698, %v3229
    %v3231 = vpop.f32.mrf.mxu0
    %3232 = vmatprep.mubr.f32.mxu0 0.0
    %3233 = vmatmul.mubr.f32.gmra.mxu0 %v963
    %v3234 = vpop.f32.mrf.mxu0
    %v3235 = vadd.f32 %v698, %v3234
    %v3236 = vpop.f32.mrf.mxu0
    %3237 = vmatprep.mubr.f32.mxu0 0.0
    %3238 = vmatmul.mubr.f32.gmra.mxu0 %v966
    %v3239 = vpop.f32.mrf.mxu0
    %v3240 = vadd.f32 %v698, %v3239
    %v3241 = vpop.f32.mrf.mxu0
    %3242 = vmatprep.mubr.f32.mxu0 0.0
    %3243 = vmatmul.mubr.f32.gmra.mxu0 %v969
    %v3244 = vpop.f32.mrf.mxu0
    %v3245 = vadd.f32 %v698, %v3244
    %v3246 = vpop.f32.mrf.mxu0
    %3247 = vmatprep.mubr.f32.mxu0 0.0
    %3248 = vmatmul.mubr.f32.gmra.mxu0 %v972
    %v3249 = vpop.f32.mrf.mxu0
    %v3250 = vadd.f32 %v698, %v3249
    %v3251 = vpop.f32.mrf.mxu0
    %3252 = vmatprep.mubr.f32.mxu0 0.0
    %3253 = vmatmul.mubr.f32.gmra.mxu0 %v975
    %v3254 = vpop.f32.mrf.mxu0
    %v3255 = vadd.f32 %v698, %v3254
    %v3256 = vpop.f32.mrf.mxu0
    %3257 = vmatprep.mubr.f32.mxu0 0.0
    %3258 = vmatmul.mubr.f32.gmra.mxu0 %v978
    %v3259 = vpop.f32.mrf.mxu0
    %v3260 = vadd.f32 %v698, %v3259
    %v3261 = vpop.f32.mrf.mxu0
    %3262 = vmatprep.mubr.f32.mxu0 0.0
    %3263 = vmatmul.mubr.f32.gmra.mxu0 %v981
    %v3264 = vpop.f32.mrf.mxu0
    %v3265 = vadd.f32 %v698, %v3264
    %v3266 = vpop.f32.mrf.mxu0
    %3267 = vmatprep.mubr.f32.mxu0 0.0
    %3268 = vmatmul.mubr.f32.gmra.mxu0 %v984
    %v3269 = vpop.f32.mrf.mxu0
    %v3270 = vadd.f32 %v698, %v3269
    %v3271 = vpop.f32.mrf.mxu0
    %3272 = vmatprep.mubr.f32.mxu0 0.0
    %3273 = vmatmul.mubr.f32.gmra.mxu0 %v987
    %v3274 = vpop.f32.mrf.mxu0
    %v3275 = vadd.f32 %v698, %v3274
    %v3276 = vpop.f32.mrf.mxu0
    %3277 = vmatprep.mubr.f32.mxu0 0.0
    %3278 = vmatmul.mubr.f32.gmra.mxu0 %v990
    %v3279 = vpop.f32.mrf.mxu0
    %v3280 = vadd.f32 %v698, %v3279
    %v3281 = vpop.f32.mrf.mxu0
    %3282 = vmatprep.mubr.f32.mxu0 0.0
    %3283 = vmatmul.mubr.f32.gmra.mxu0 %v993
    %v3284 = vpop.f32.mrf.mxu0
    %v3285 = vadd.f32 %v698, %v3284
    %v3286 = vpop.f32.mrf.mxu0
    %3287 = vmatprep.mubr.f32.mxu0 0.0
    %3288 = vmatmul.mubr.f32.gmra.mxu0 %v996
    %v3289 = vpop.f32.mrf.mxu0
    %v3290 = vadd.f32 %v698, %v3289
    %v3291 = vpop.f32.mrf.mxu0
    %3292 = vmatprep.mubr.f32.mxu0 0.0
    %3293 = vmatmul.mubr.f32.gmra.mxu0 %v999
    %v3294 = vpop.f32.mrf.mxu0
    %v3295 = vadd.f32 %v698, %v3294
    %v3296 = vpop.f32.mrf.mxu0
    %3297 = vmatprep.mubr.f32.mxu0 0.0
    %3298 = vmatmul.mubr.f32.gmra.mxu0 %v1002
    %v3299 = vpop.f32.mrf.mxu0
    %v3300 = vadd.f32 %v698, %v3299
    %v3301 = vpop.f32.mrf.mxu0
    %3302 = vmatprep.mubr.f32.mxu0 0.0
    %3303 = vmatmul.mubr.f32.gmra.mxu0 %v1005
    %v3304 = vpop.f32.mrf.mxu0
    %v3305 = vadd.f32 %v698, %v3304
    %v3306 = vpop.f32.mrf.mxu0
    %3307 = vmatprep.mubr.f32.mxu0 0.0
    %3308 = vmatmul.mubr.f32.gmra.mxu0 %v1008
    %v3309 = vpop.f32.mrf.mxu0
    %v3310 = vadd.f32 %v698, %v3309
    %v3311 = vpop.f32.mrf.mxu0
    %3312 = vmatprep.mubr.f32.mxu0 0.0
    %3313 = vmatmul.mubr.f32.gmra.mxu0 %v1011
    %v3314 = vpop.f32.mrf.mxu0
    %v3315 = vadd.f32 %v698, %v3314
    %v3316 = vpop.f32.mrf.mxu0
    %3317 = vmatprep.mubr.f32.mxu0 0.0
    %3318 = vmatmul.mubr.f32.gmra.mxu0 %v1014
    %v3319 = vpop.f32.mrf.mxu0
    %v3320 = vadd.f32 %v698, %v3319
    %v3321 = vpop.f32.mrf.mxu0
    %3322 = vmatprep.mubr.f32.mxu0 0.0
    %3323 = vmatmul.mubr.f32.gmra.mxu0 %v1017
    %v3324 = vpop.f32.mrf.mxu0
    %v3325 = vadd.f32 %v698, %v3324
    %v3326 = vpop.f32.mrf.mxu0
    %3327 = vmatprep.mubr.f32.mxu0 0.0
    %3328 = vmatmul.mubr.f32.gmra.mxu0 %v1020
    %v3329 = vpop.f32.mrf.mxu0
    %v3330 = vadd.f32 %v698, %v3329
    %v3331 = vpop.f32.mrf.mxu0
    %3332 = vmatprep.mubr.f32.mxu0 0.0
    %3333 = vmatmul.mubr.f32.gmra.mxu0 %v1023
    %v3334 = vpop.f32.mrf.mxu0
    %v3335 = vadd.f32 %v698, %v3334
    %v3336 = vpop.f32.mrf.mxu0
    %3337 = vmatprep.mubr.f32.mxu0 0.0
    %3338 = vmatmul.mubr.f32.gmra.mxu0 %v1026
    %v3339 = vpop.f32.mrf.mxu0
    %v3340 = vadd.f32 %v698, %v3339
    %v3341 = vpop.f32.mrf.mxu0
    %3342 = vmatprep.mubr.f32.mxu0 0.0
    %3343 = vmatmul.mubr.f32.gmra.mxu0 %v1029
    %v3344 = vpop.f32.mrf.mxu0
    %v3345 = vadd.f32 %v698, %v3344
    %v3346 = vpop.f32.mrf.mxu0
    %3347 = vmatprep.mubr.f32.mxu0 0.0
    %3348 = vmatmul.mubr.f32.gmra.mxu0 %v1032
    %v3349 = vpop.f32.mrf.mxu0
    %v3350 = vadd.f32 %v698, %v3349
    %v3351 = vpop.f32.mrf.mxu0
    %3352 = vmatprep.mubr.f32.mxu0 0.0
    %3353 = vmatmul.mubr.f32.gmra.mxu0 %v1035
    %v3354 = vpop.f32.mrf.mxu0
    %v3355 = vadd.f32 %v698, %v3354
    %v3356 = vpop.f32.mrf.mxu0
    %3357 = vmatprep.mubr.f32.mxu0 0.0
    %3358 = vmatmul.mubr.f32.gmra.mxu0 %v1038
    %v3359 = vpop.f32.mrf.mxu0
    %v3360 = vadd.f32 %v698, %v3359
    %v3361 = vpop.f32.mrf.mxu0
    %3362 = vmatprep.mubr.f32.mxu0 0.0
    %3363 = vmatmul.mubr.f32.gmra.mxu0 %v1041
    %v3364 = vpop.f32.mrf.mxu0
    %v3365 = vadd.f32 %v698, %v3364
    %v3366 = vpop.f32.mrf.mxu0
    %3367 = vmatprep.mubr.f32.mxu0 0.0
    %3368 = vmatmul.mubr.f32.gmra.mxu0 %v1044
    %v3369 = vpop.f32.mrf.mxu0
    %v3370 = vadd.f32 %v698, %v3369
    %v3371 = vpop.f32.mrf.mxu0
    %3372 = vmatprep.mubr.f32.mxu0 0.0
    %3373 = vmatmul.mubr.f32.gmra.mxu0 %v1047
    %v3374 = vpop.f32.mrf.mxu0
    %v3375 = vadd.f32 %v698, %v3374
    %v3376 = vpop.f32.mrf.mxu0
    %3377 = vmatprep.mubr.f32.mxu0 0.0
    %3378 = vmatmul.mubr.f32.gmra.mxu0 %v1050
    %v3379 = vpop.f32.mrf.mxu0
    %v3380 = vadd.f32 %v698, %v3379
    %v3381 = vpop.f32.mrf.mxu0
    %3382 = vmatprep.mubr.f32.mxu0 0.0
    %3383 = vmatmul.mubr.f32.gmra.mxu0 %v1053
    %v3384 = vpop.f32.mrf.mxu0
    %v3385 = vadd.f32 %v698, %v3384
    %v3386 = vpop.f32.mrf.mxu0
    %3387 = vmatprep.mubr.f32.mxu0 0.0
    %3388 = vmatmul.mubr.f32.gmra.mxu0 %v1056
    %v3389 = vpop.f32.mrf.mxu0
    %v3390 = vadd.f32 %v698, %v3389
    %v3391 = vpop.f32.mrf.mxu0
    %3392 = vmatprep.mubr.f32.mxu0 0.0
    %3393 = vmatmul.mubr.f32.gmra.mxu0 %v1059
    %v3394 = vpop.f32.mrf.mxu0
    %v3395 = vadd.f32 %v698, %v3394
    %v3396 = vpop.f32.mrf.mxu0
    %3397 = vmatprep.mubr.f32.mxu0 0.0
    %3398 = vmatmul.mubr.f32.gmra.mxu0 %v1062
    %v3399 = vpop.f32.mrf.mxu0
    %v3400 = vadd.f32 %v698, %v3399
    %v3401 = vpop.f32.mrf.mxu0
    %3402 = vmatprep.mubr.f32.mxu0 0.0
    %3403 = vmatmul.mubr.f32.gmra.mxu0 %v1065
    %v3404 = vpop.f32.mrf.mxu0
    %v3405 = vadd.f32 %v698, %v3404
    %v3406 = vpop.f32.mrf.mxu0
    %3407 = vmatprep.mubr.f32.mxu0 0.0
    %3408 = vmatmul.mubr.f32.gmra.mxu0 %v1068
    %v3409 = vpop.f32.mrf.mxu0
    %v3410 = vadd.f32 %v698, %v3409
    %v3411 = vpop.f32.mrf.mxu0
    %3412 = vmatprep.mubr.f32.mxu0 0.0
    %3413 = vmatmul.mubr.f32.gmra.mxu0 %v1071
    %v3414 = vpop.f32.mrf.mxu0
    %v3415 = vadd.f32 %v698, %v3414
    %v3416 = vpop.f32.mrf.mxu0
    %3417 = vmatprep.mubr.f32.mxu0 0.0
    %3418 = vmatmul.mubr.f32.gmra.mxu0 %v1074
    %v3419 = vpop.f32.mrf.mxu0
    %v3420 = vadd.f32 %v698, %v3419
    %v3421 = vpop.f32.mrf.mxu0
    %3422 = vmatprep.mubr.f32.mxu0 0.0
    %3423 = vmatmul.mubr.f32.gmra.mxu0 %v1077
    %v3424 = vpop.f32.mrf.mxu0
    %v3425 = vadd.f32 %v698, %v3424
    %v3426 = vpop.f32.mrf.mxu0
    %3427 = vmatprep.mubr.f32.mxu0 0.0
    %3428 = vmatmul.mubr.f32.gmra.mxu0 %v1080
    %v3429 = vpop.f32.mrf.mxu0
    %v3430 = vadd.f32 %v698, %v3429
    %v3431 = vpop.f32.mrf.mxu0
    %3432 = vmatprep.mubr.f32.mxu0 0.0
    %3433 = vmatmul.mubr.f32.gmra.mxu0 %v1083
    %v3434 = vpop.f32.mrf.mxu0
    %v3435 = vadd.f32 %v698, %v3434
    %v3436 = vpop.f32.mrf.mxu0
    %3437 = vmatprep.mubr.f32.mxu0 0.0
    %3438 = vmatmul.mubr.f32.gmra.mxu0 %v1086
    %v3439 = vpop.f32.mrf.mxu0
    %v3440 = vadd.f32 %v698, %v3439
    %v3441 = vpop.f32.mrf.mxu0
    %3442 = vmatprep.mubr.f32.mxu0 0.0
    %3443 = vmatmul.mubr.f32.gmra.mxu0 %v1089
    %v3444 = vpop.f32.mrf.mxu0
    %v3445 = vadd.f32 %v698, %v3444
    %v3446 = vpop.f32.mrf.mxu0
    %3447 = vmatprep.mubr.f32.mxu0 0.0
    %3448 = vmatmul.mubr.f32.gmra.mxu0 %v1092
    %v3449 = vpop.f32.mrf.mxu0
    %v3450 = vadd.f32 %v698, %v3449
    %v3451 = vpop.f32.mrf.mxu0
    %3452 = vmatprep.mubr.f32.mxu0 0.0
    %3453 = vmatmul.mubr.f32.gmra.mxu0 %v1095
    %v3454 = vpop.f32.mrf.mxu0
    %v3455 = vadd.f32 %v698, %v3454
    %v3456 = vpop.f32.mrf.mxu0
    %3457 = vmatprep.mubr.f32.mxu0 0.0
    %3458 = vmatmul.mubr.f32.gmra.mxu0 %v1098
    %v3459 = vpop.f32.mrf.mxu0
    %v3460 = vadd.f32 %v698, %v3459
    %v3461 = vpop.f32.mrf.mxu0
    %3462 = vmatprep.mubr.f32.mxu0 0.0
    %3463 = vmatmul.mubr.f32.gmra.mxu0 %v1101
    %v3464 = vpop.f32.mrf.mxu0
    %v3465 = vadd.f32 %v698, %v3464
    %v3466 = vpop.f32.mrf.mxu0
    %3467 = vmatprep.mubr.f32.mxu0 0.0
    %3468 = vmatmul.mubr.f32.gmra.mxu0 %v1104
    %v3469 = vpop.f32.mrf.mxu0
    %v3470 = vadd.f32 %v698, %v3469
    %v3471 = vpop.f32.mrf.mxu0
    %3472 = vmatprep.mubr.f32.mxu0 0.0
    %3473 = vmatmul.mubr.f32.gmra.mxu0 %v1107
    %v3474 = vpop.f32.mrf.mxu0
    %v3475 = vadd.f32 %v698, %v3474
    %v3476 = vpop.f32.mrf.mxu0
    %3477 = vmatprep.mubr.f32.mxu0 0.0
    %3478 = vmatmul.mubr.f32.gmra.mxu0 %v1110
    %v3479 = vpop.f32.mrf.mxu0
    %v3480 = vadd.f32 %v698, %v3479
    %v3481 = vpop.f32.mrf.mxu0
    %3482 = vmatprep.mubr.f32.mxu0 0.0
    %3483 = vmatmul.mubr.f32.gmra.mxu0 %v1113
    %v3484 = vpop.f32.mrf.mxu0
    %v3485 = vadd.f32 %v698, %v3484
    %v3486 = vpop.f32.mrf.mxu0
    %3487 = vmatprep.mubr.f32.mxu0 0.0
    %3488 = vmatmul.mubr.f32.gmra.mxu0 %v1116
    %v3489 = vpop.f32.mrf.mxu0
    %v3490 = vadd.f32 %v698, %v3489
    %v3491 = vpop.f32.mrf.mxu0
    %3492 = vmatprep.mubr.f32.mxu0 0.0
    %3493 = vmatmul.mubr.f32.gmra.mxu0 %v1119
    %v3494 = vpop.f32.mrf.mxu0
    %v3495 = vadd.f32 %v698, %v3494
    %v3496 = vpop.f32.mrf.mxu0
    %3497 = vmatprep.mubr.f32.mxu0 0.0
    %3498 = vmatmul.mubr.f32.gmra.mxu0 %v1122
    %v3499 = vpop.f32.mrf.mxu0
    %v3500 = vadd.f32 %v698, %v3499
    %v3501 = vpop.f32.mrf.mxu0
    %3502 = vmatprep.mubr.f32.mxu0 0.0
    %3503 = vmatmul.mubr.f32.gmra.mxu0 %v1125
    %v3504 = vpop.f32.mrf.mxu0
    %v3505 = vadd.f32 %v698, %v3504
    %v3506 = vpop.f32.mrf.mxu0
    %3507 = vmatprep.mubr.f32.mxu0 0.0
    %3508 = vmatmul.mubr.f32.gmra.mxu0 %v1128
    %v3509 = vpop.f32.mrf.mxu0
    %v3510 = vadd.f32 %v698, %v3509
    %v3511 = vpop.f32.mrf.mxu0
    %3512 = vmatprep.mubr.f32.mxu0 0.0
    %3513 = vmatmul.mubr.f32.gmra.mxu0 %v1131
    %v3514 = vpop.f32.mrf.mxu0
    %v3515 = vadd.f32 %v698, %v3514
    %v3516 = vpop.f32.mrf.mxu0
    %3517 = vmatprep.mubr.f32.mxu0 0.0
    %3518 = vmatmul.mubr.f32.gmra.mxu0 %v1134
    %v3519 = vpop.f32.mrf.mxu0
    %v3520 = vadd.f32 %v698, %v3519
    %v3521 = vpop.f32.mrf.mxu0
    %3522 = vmatprep.mubr.f32.mxu0 0.0
    %3523 = vmatmul.mubr.f32.gmra.mxu0 %v1137
    %v3524 = vpop.f32.mrf.mxu0
    %v3525 = vadd.f32 %v698, %v3524
    %v3526 = vpop.f32.mrf.mxu0
    %3527 = vmatprep.mubr.f32.mxu0 0.0
    %3528 = vmatmul.mubr.f32.gmra.mxu0 %v1140
    %v3529 = vpop.f32.mrf.mxu0
    %v3530 = vadd.f32 %v698, %v3529
    %v3531 = vpop.f32.mrf.mxu0
    %3532 = vmatprep.mubr.f32.mxu0 0.0
    %3533 = vmatmul.mubr.f32.gmra.mxu0 %v1143
    %v3534 = vpop.f32.mrf.mxu0
    %v3535 = vadd.f32 %v698, %v3534
    %v3536 = vpop.f32.mrf.mxu0
    %3537 = vmatprep.mubr.f32.mxu0 0.0
    %3538 = vmatmul.mubr.f32.gmra.mxu0 %v1146
    %v3539 = vpop.f32.mrf.mxu0
    %v3540 = vadd.f32 %v698, %v3539
    %v3541 = vpop.f32.mrf.mxu0
    %3542 = vmatprep.mubr.f32.mxu0 0.0
    %3543 = vmatmul.mubr.f32.gmra.mxu0 %v1149
    %v3544 = vpop.f32.mrf.mxu0
    %v3545 = vadd.f32 %v698, %v3544
    %v3546 = vpop.f32.mrf.mxu0
    %3547 = vmatprep.mubr.f32.mxu0 0.0
    %3548 = vmatmul.mubr.f32.gmra.mxu0 %v1152
    %v3549 = vpop.f32.mrf.mxu0
    %v3550 = vadd.f32 %v698, %v3549
    %v3551 = vpop.f32.mrf.mxu0
    %3552 = vmatprep.mubr.f32.mxu0 0.0
    %3553 = vmatmul.mubr.f32.gmra.mxu0 %v1155
    %v3554 = vpop.f32.mrf.mxu0
    %v3555 = vadd.f32 %v698, %v3554
    %v3556 = vpop.f32.mrf.mxu0
    %3557 = vmatprep.mubr.f32.mxu0 0.0
    %3558 = vmatmul.mubr.f32.gmra.mxu0 %v1158
    %v3559 = vpop.f32.mrf.mxu0
    %v3560 = vadd.f32 %v698, %v3559
    %v3561 = vpop.f32.mrf.mxu0
    %3562 = vmatprep.mubr.f32.mxu0 0.0
    %3563 = vmatmul.mubr.f32.gmra.mxu0 %v1161
    %v3564 = vpop.f32.mrf.mxu0
    %v3565 = vadd.f32 %v698, %v3564
    %v3566 = vpop.f32.mrf.mxu0
    %3567 = vmatprep.mubr.f32.mxu0 0.0
    %3568 = vmatmul.mubr.f32.gmra.mxu0 %v1164
    %v3569 = vpop.f32.mrf.mxu0
    %v3570 = vadd.f32 %v698, %v3569
    %v3571 = vpop.f32.mrf.mxu0
    %3572 = vmatprep.mubr.f32.mxu0 0.0
    %3573 = vmatmul.mubr.f32.gmra.mxu0 %v1167
    %v3574 = vpop.f32.mrf.mxu0
    %v3575 = vadd.f32 %v698, %v3574
    %v3576 = vpop.f32.mrf.mxu0
    %3577 = vmatprep.mubr.f32.mxu0 0.0
    %3578 = vmatmul.mubr.f32.gmra.mxu0 %v1170
    %v3579 = vpop.f32.mrf.mxu0
    %v3580 = vadd.f32 %v698, %v3579
    %v3581 = vpop.f32.mrf.mxu0
    %3582 = vmatprep.mubr.f32.mxu0 0.0
    %3583 = vmatmul.mubr.f32.gmra.mxu0 %v1173
    %v3584 = vpop.f32.mrf.mxu0
    %v3585 = vadd.f32 %v698, %v3584
    %v3586 = vpop.f32.mrf.mxu0
    %3587 = vmatprep.mubr.f32.mxu0 0.0
    %3588 = vmatmul.mubr.f32.gmra.mxu0 %v1176
    %v3589 = vpop.f32.mrf.mxu0
    %v3590 = vadd.f32 %v698, %v3589
    %v3591 = vpop.f32.mrf.mxu0
    %3592 = vmatprep.mubr.f32.mxu0 0.0
    %3593 = vmatmul.mubr.f32.gmra.mxu0 %v1179
    %v3594 = vpop.f32.mrf.mxu0
    %v3595 = vadd.f32 %v698, %v3594
    %v3596 = vpop.f32.mrf.mxu0
    %3597 = vmatprep.mubr.f32.mxu0 0.0
    %3598 = vmatmul.mubr.f32.gmra.mxu0 %v1182
    %v3599 = vpop.f32.mrf.mxu0
    %v3600 = vadd.f32 %v698, %v3599
    %v3601 = vpop.f32.mrf.mxu0
    %3602 = vmatprep.mubr.f32.mxu0 0.0
    %3603 = vmatmul.mubr.f32.gmra.mxu0 %v1185
    %v3604 = vpop.f32.mrf.mxu0
    %v3605 = vadd.f32 %v698, %v3604
    %v3606 = vpop.f32.mrf.mxu0
    %3607 = vmatprep.mubr.f32.mxu0 0.0
    %3608 = vmatmul.mubr.f32.gmra.mxu0 %v1188
    %v3609 = vpop.f32.mrf.mxu0
    %v3610 = vadd.f32 %v698, %v3609
    %v3611 = vpop.f32.mrf.mxu0
    %3612 = vmatprep.mubr.f32.mxu0 0.0
    %3613 = vmatmul.mubr.f32.gmra.mxu0 %v1191
    %v3614 = vpop.f32.mrf.mxu0
    %v3615 = vadd.f32 %v698, %v3614
    %v3616 = vpop.f32.mrf.mxu0
    %3617 = vmatprep.mubr.f32.mxu0 0.0
    %3618 = vmatmul.mubr.f32.gmra.mxu0 %v1194
    %v3619 = vpop.f32.mrf.mxu0
    %v3620 = vadd.f32 %v698, %v3619
    %v3621 = vpop.f32.mrf.mxu0
    %3622 = vmatprep.mubr.f32.mxu0 0.0
    %3623 = vmatmul.mubr.f32.gmra.mxu0 %v1197
    %v3624 = vpop.f32.mrf.mxu0
    %v3625 = vadd.f32 %v698, %v3624
    %v3626 = vpop.f32.mrf.mxu0
    %3627 = vmatprep.mubr.f32.mxu0 0.0
    %3628 = vmatmul.mubr.f32.gmra.mxu0 %v1200
    %v3629 = vpop.f32.mrf.mxu0
    %v3630 = vadd.f32 %v698, %v3629
    %v3631 = vpop.f32.mrf.mxu0
    %3632 = vmatprep.mubr.f32.mxu0 0.0
    %3633 = vmatmul.mubr.f32.gmra.mxu0 %v1203
    %v3634 = vpop.f32.mrf.mxu0
    %v3635 = vadd.f32 %v698, %v3634
    %v3636 = vpop.f32.mrf.mxu0
    %3637 = vmatprep.mubr.f32.mxu0 0.0
    %3638 = vmatmul.mubr.f32.gmra.mxu0 %v1206
    %v3639 = vpop.f32.mrf.mxu0
    %v3640 = vadd.f32 %v698, %v3639
    %v3641 = vpop.f32.mrf.mxu0
    %3642 = vmatprep.mubr.f32.mxu0 0.0
    %3643 = vmatmul.mubr.f32.gmra.mxu0 %v1209
    %v3644 = vpop.f32.mrf.mxu0
    %v3645 = vadd.f32 %v698, %v3644
    %v3646 = vpop.f32.mrf.mxu0
    %3647 = vmatprep.mubr.f32.mxu0 0.0
    %3648 = vmatmul.mubr.f32.gmra.mxu0 %v1212
    %v3649 = vpop.f32.mrf.mxu0
    %v3650 = vadd.f32 %v698, %v3649
    %v3651 = vpop.f32.mrf.mxu0
    %3652 = vmatprep.mubr.f32.mxu0 0.0
    %3653 = vmatmul.mubr.f32.gmra.mxu0 %v1215
    %v3654 = vpop.f32.mrf.mxu0
    %v3655 = vadd.f32 %v698, %v3654
    %v3656 = vpop.f32.mrf.mxu0
    %3657 = vmatprep.mubr.f32.mxu0 0.0
    %3658 = vmatmul.mubr.f32.gmra.mxu0 %v1218
    %v3659 = vpop.f32.mrf.mxu0
    %v3660 = vadd.f32 %v698, %v3659
    %v3661 = vpop.f32.mrf.mxu0
    %3662 = vmatprep.mubr.f32.mxu0 0.0
    %3663 = vmatmul.mubr.f32.gmra.mxu0 %v1221
    %v3664 = vpop.f32.mrf.mxu0
    %v3665 = vadd.f32 %v698, %v3664
    %v3666 = vpop.f32.mrf.mxu0
    %3667 = vmatprep.mubr.f32.mxu0 0.0
    %3668 = vmatmul.mubr.f32.gmra.mxu0 %v1224
    %v3669 = vpop.f32.mrf.mxu0
    %v3670 = vadd.f32 %v698, %v3669
    %v3671 = vpop.f32.mrf.mxu0
    %3672 = vmatprep.mubr.f32.mxu0 0.0
    %3673 = vmatmul.mubr.f32.gmra.mxu0 %v1227
    %v3674 = vpop.f32.mrf.mxu0
    %v3675 = vadd.f32 %v698, %v3674
    %v3676 = vpop.f32.mrf.mxu0
    %3677 = vmatprep.mubr.f32.mxu0 0.0
    %3678 = vmatmul.mubr.f32.gmra.mxu0 %v1230
    %v3679 = vpop.f32.mrf.mxu0
    %v3680 = vadd.f32 %v698, %v3679
    %v3681 = vpop.f32.mrf.mxu0
    %3682 = vmatprep.mubr.f32.mxu0 0.0
    %3683 = vmatmul.mubr.f32.gmra.mxu0 %v1233
    %v3684 = vpop.f32.mrf.mxu0
    %v3685 = vadd.f32 %v698, %v3684
    %v3686 = vpop.f32.mrf.mxu0
    %3687 = vmatprep.mubr.f32.mxu0 0.0
    %3688 = vmatmul.mubr.f32.gmra.mxu0 %v1236
    %v3689 = vpop.f32.mrf.mxu0
    %v3690 = vadd.f32 %v698, %v3689
    %v3691 = vpop.f32.mrf.mxu0
    %3692 = vmatprep.mubr.f32.mxu0 0.0
    %3693 = vmatmul.mubr.f32.gmra.mxu0 %v1239
    %v3694 = vpop.f32.mrf.mxu0
    %v3695 = vadd.f32 %v698, %v3694
    %v3696 = vpop.f32.mrf.mxu0
    %3697 = vmatprep.mubr.f32.mxu0 0.0
    %3698 = vmatmul.mubr.f32.gmra.mxu0 %v1242
    %v3699 = vpop.f32.mrf.mxu0
    %v3700 = vadd.f32 %v698, %v3699
    %v3701 = vpop.f32.mrf.mxu0
    %3702 = vmatprep.mubr.f32.mxu0 0.0
    %3703 = vmatmul.mubr.f32.gmra.mxu0 %v1245
    %v3704 = vpop.f32.mrf.mxu0
    %v3705 = vadd.f32 %v698, %v3704
    %v3706 = vpop.f32.mrf.mxu0
    %3707 = vmatprep.mubr.f32.mxu0 0.0
    %3708 = vmatmul.mubr.f32.gmra.mxu0 %v1248
    %v3709 = vpop.f32.mrf.mxu0
    %v3710 = vadd.f32 %v698, %v3709
    %v3711 = vpop.f32.mrf.mxu0
    %3712 = vmatprep.mubr.f32.mxu0 0.0
    %3713 = vmatmul.mubr.f32.gmra.mxu0 %v1251
    %v3714 = vpop.f32.mrf.mxu0
    %v3715 = vadd.f32 %v698, %v3714
    %v3716 = vpop.f32.mrf.mxu0
    %3717 = vmatprep.mubr.f32.mxu0 0.0
    %3718 = vmatmul.mubr.f32.gmra.mxu0 %v1254
    %v3719 = vpop.f32.mrf.mxu0
    %v3720 = vadd.f32 %v698, %v3719
    %v3721 = vpop.f32.mrf.mxu0
    %3722 = vmatprep.mubr.f32.mxu0 0.0
    %3723 = vmatmul.mubr.f32.gmra.mxu0 %v1257
    %v3724 = vpop.f32.mrf.mxu0
    %v3725 = vadd.f32 %v698, %v3724
    %v3726 = vpop.f32.mrf.mxu0
    %3727 = vmatprep.mubr.f32.mxu0 0.0
    %3728 = vmatmul.mubr.f32.gmra.mxu0 %v1260
    %v3729 = vpop.f32.mrf.mxu0
    %v3730 = vadd.f32 %v698, %v3729
    %v3731 = vpop.f32.mrf.mxu0
    %3732 = vmatprep.mubr.f32.mxu0 0.0
    %3733 = vmatmul.mubr.f32.gmra.mxu0 %v1263
    %v3734 = vpop.f32.mrf.mxu0
    %v3735 = vadd.f32 %v698, %v3734
    %v3736 = vpop.f32.mrf.mxu0
    %3737 = vmatprep.mubr.f32.mxu0 0.0
    %3738 = vmatmul.mubr.f32.gmra.mxu0 %v1266
    %v3739 = vpop.f32.mrf.mxu0
    %v3740 = vadd.f32 %v698, %v3739
    %v3741 = vpop.f32.mrf.mxu0
    %3742 = vmatprep.mubr.f32.mxu0 0.0
    %3743 = vmatmul.mubr.f32.gmra.mxu0 %v1269
    %v3744 = vpop.f32.mrf.mxu0
    %v3745 = vadd.f32 %v698, %v3744
    %v3746 = vpop.f32.mrf.mxu0
    %3747 = vmatprep.mubr.f32.mxu0 0.0
    %3748 = vmatmul.mubr.f32.gmra.mxu0 %v1272
    %v3749 = vpop.f32.mrf.mxu0
    %v3750 = vadd.f32 %v698, %v3749
    %v3751 = vpop.f32.mrf.mxu0
    %3752 = vmatprep.mubr.f32.mxu0 0.0
    %3753 = vmatmul.mubr.f32.gmra.mxu0 %v1275
    %v3754 = vpop.f32.mrf.mxu0
    %v3755 = vadd.f32 %v698, %v3754
    %v3756 = vpop.f32.mrf.mxu0
    %3757 = vmatprep.mubr.f32.mxu0 0.0
    %3758 = vmatmul.mubr.f32.gmra.mxu0 %v1278
    %v3759 = vpop.f32.mrf.mxu0
    %v3760 = vadd.f32 %v698, %v3759
    %v3761 = vpop.f32.mrf.mxu0
    %3762 = vmatprep.mubr.f32.mxu0 0.0
    %3763 = vmatmul.mubr.f32.gmra.mxu0 %v1281
    %v3764 = vpop.f32.mrf.mxu0
    %v3765 = vadd.f32 %v698, %v3764
    %v3766 = vpop.f32.mrf.mxu0
    %3767 = vmatprep.mubr.f32.mxu0 0.0
    %3768 = vmatmul.mubr.f32.gmra.mxu0 %v1284
    %v3769 = vpop.f32.mrf.mxu0
    %v3770 = vadd.f32 %v698, %v3769
    %v3771 = vpop.f32.mrf.mxu0
    %3772 = vmatprep.mubr.f32.mxu0 0.0
    %3773 = vmatmul.mubr.f32.gmra.mxu0 %v1287
    %v3774 = vpop.f32.mrf.mxu0
    %v3775 = vadd.f32 %v698, %v3774
    %v3776 = vpop.f32.mrf.mxu0
    %3777 = vmatprep.mubr.f32.mxu0 0.0
    %3778 = vmatmul.mubr.f32.gmra.mxu0 %v1290
    %v3779 = vpop.f32.mrf.mxu0
    %v3780 = vadd.f32 %v698, %v3779
    %v3781 = vpop.f32.mrf.mxu0
    %3782 = vmatprep.mubr.f32.mxu0 0.0
    %3783 = vmatmul.mubr.f32.gmra.mxu0 %v1293
    %v3784 = vpop.f32.mrf.mxu0
    %v3785 = vadd.f32 %v698, %v3784
    %v3786 = vpop.f32.mrf.mxu0
    %3787 = vmatprep.mubr.f32.mxu0 0.0
    %3788 = vmatmul.mubr.f32.gmra.mxu0 %v1296
    %v3789 = vpop.f32.mrf.mxu0
    %v3790 = vadd.f32 %v698, %v3789
    %v3791 = vpop.f32.mrf.mxu0
    %3792 = vmatprep.mubr.f32.mxu0 0.0
    %3793 = vmatmul.mubr.f32.gmra.mxu0 %v1299
    %v3794 = vpop.f32.mrf.mxu0
    %v3795 = vadd.f32 %v698, %v3794
    %v3796 = vpop.f32.mrf.mxu0
    %3797 = vmatprep.mubr.f32.mxu0 0.0
    %3798 = vmatmul.mubr.f32.gmra.mxu0 %v1302
    %v3799 = vpop.f32.mrf.mxu0
    %v3800 = vadd.f32 %v698, %v3799
    %v3801 = vpop.f32.mrf.mxu0
    %3802 = vmatprep.mubr.f32.mxu0 0.0
    %3803 = vmatmul.mubr.f32.gmra.mxu0 %v1305
    %v3804 = vpop.f32.mrf.mxu0
    %v3805 = vadd.f32 %v698, %v3804
    %v3806 = vpop.f32.mrf.mxu0
    %3807 = vmatprep.mubr.f32.mxu0 0.0
    %3808 = vmatmul.mubr.f32.gmra.mxu0 %v1308
    %v3809 = vpop.f32.mrf.mxu0
    %v3810 = vadd.f32 %v698, %v3809
    %v3811 = vpop.f32.mrf.mxu0
    %3812 = vmatprep.mubr.f32.mxu0 0.0
    %3813 = vmatmul.mubr.f32.gmra.mxu0 %v1311
    %v3814 = vpop.f32.mrf.mxu0
    %v3815 = vadd.f32 %v698, %v3814
    %v3816 = vpop.f32.mrf.mxu0
    %3817 = vmatprep.mubr.f32.mxu0 0.0
    %3818 = vmatmul.mubr.f32.gmra.mxu0 %v1314
    %v3819 = vpop.f32.mrf.mxu0
    %v3820 = vadd.f32 %v698, %v3819
    %v3821 = vpop.f32.mrf.mxu0
    %3822 = vmatprep.mubr.f32.mxu0 0.0
    %3823 = vmatmul.mubr.f32.gmra.mxu0 %v1317
    %v3824 = vpop.f32.mrf.mxu0
    %v3825 = vadd.f32 %v698, %v3824
    %v3826 = vpop.f32.mrf.mxu0
    %3827 = vmatprep.mubr.f32.mxu0 0.0
    %3828 = vmatmul.mubr.f32.gmra.mxu0 %v1320
    %v3829 = vpop.f32.mrf.mxu0
    %v3830 = vadd.f32 %v698, %v3829
    %v3831 = vpop.f32.mrf.mxu0
    %3832 = vmatprep.mubr.f32.mxu0 0.0
    %3833 = vmatmul.mubr.f32.gmra.mxu0 %v1323
    %v3834 = vpop.f32.mrf.mxu0
    %v3835 = vadd.f32 %v698, %v3834
    %v3836 = vpop.f32.mrf.mxu0
    %3837 = vmatprep.mubr.f32.mxu0 0.0
    %3838 = vmatmul.mubr.f32.gmra.mxu0 %v1326
    %v3839 = vpop.f32.mrf.mxu0
    %v3840 = vadd.f32 %v698, %v3839
    %v3841 = vpop.f32.mrf.mxu0
    %3842 = vmatprep.mubr.f32.mxu0 0.0
    %3843 = vmatmul.mubr.f32.gmra.mxu0 %v1329
    %v3844 = vpop.f32.mrf.mxu0
    %v3845 = vadd.f32 %v698, %v3844
    %v3846 = vpop.f32.mrf.mxu0
    %3847 = vmatprep.mubr.f32.mxu0 0.0
    %3848 = vmatmul.mubr.f32.gmra.mxu0 %v1332
    %v3849 = vpop.f32.mrf.mxu0
    %v3850 = vadd.f32 %v698, %v3849
    %v3851 = vpop.f32.mrf.mxu0
    %3852 = vmatprep.mubr.f32.mxu0 0.0
    %3853 = vmatmul.mubr.f32.gmra.mxu0 %v1335
    %v3854 = vpop.f32.mrf.mxu0
    %v3855 = vadd.f32 %v698, %v3854
    %v3856 = vpop.f32.mrf.mxu0
    %3857 = vmatprep.mubr.f32.mxu0 0.0
    %3858 = vmatmul.mubr.f32.gmra.mxu0 %v1338
    %v3859 = vpop.f32.mrf.mxu0
    %v3860 = vadd.f32 %v698, %v3859
    %v3861 = vpop.f32.mrf.mxu0
    %3862 = vmatprep.mubr.f32.mxu0 0.0
    %3863 = vmatmul.mubr.f32.gmra.mxu0 %v1341
    %v3864 = vpop.f32.mrf.mxu0
    %v3865 = vadd.f32 %v698, %v3864
    %v3866 = vpop.f32.mrf.mxu0
    %3867 = vmatprep.mubr.f32.mxu0 0.0
    %3868 = vmatmul.mubr.f32.gmra.mxu0 %v1344
    %v3869 = vpop.f32.mrf.mxu0
    %v3870 = vadd.f32 %v698, %v3869
    %v3871 = vpop.f32.mrf.mxu0
    %3872 = vmatprep.mubr.f32.mxu0 0.0
    %3873 = vmatmul.mubr.f32.gmra.mxu0 %v1347
    %v3874 = vpop.f32.mrf.mxu0
    %v3875 = vadd.f32 %v698, %v3874
    %v3876 = vpop.f32.mrf.mxu0
    %3877 = vmatprep.mubr.f32.mxu0 0.0
    %3878 = vmatmul.mubr.f32.gmra.mxu0 %v1350
    %v3879 = vpop.f32.mrf.mxu0
    %v3880 = vadd.f32 %v698, %v3879
    %v3881 = vpop.f32.mrf.mxu0
    %3882 = vmatprep.mubr.f32.mxu0 0.0
    %3883 = vmatmul.mubr.f32.gmra.mxu0 %v1353
    %v3884 = vpop.f32.mrf.mxu0
    %v3885 = vadd.f32 %v698, %v3884
    %v3886 = vpop.f32.mrf.mxu0
    %3887 = vmatprep.mubr.f32.mxu0 0.0
    %3888 = vmatmul.mubr.f32.gmra.mxu0 %v1356
    %v3889 = vpop.f32.mrf.mxu0
    %v3890 = vadd.f32 %v698, %v3889
    %v3891 = vpop.f32.mrf.mxu0
    %3892 = vmatprep.mubr.f32.mxu0 0.0
    %3893 = vmatmul.mubr.f32.gmra.mxu0 %v1359
    %v3894 = vpop.f32.mrf.mxu0
    %v3895 = vadd.f32 %v698, %v3894
    %v3896 = vpop.f32.mrf.mxu0
    %3897 = vmatprep.mubr.f32.mxu0 0.0
    %3898 = vmatmul.mubr.f32.gmra.mxu0 %v1362
    %v3899 = vpop.f32.mrf.mxu0
    %v3900 = vadd.f32 %v698, %v3899
    %v3901 = vpop.f32.mrf.mxu0
    %3902 = vmatprep.mubr.f32.mxu0 0.0
    %3903 = vmatmul.mubr.f32.gmra.mxu0 %v1365
    %v3904 = vpop.f32.mrf.mxu0
    %v3905 = vadd.f32 %v698, %v3904
    %v3906 = vpop.f32.mrf.mxu0
    %3907 = vmatprep.mubr.f32.mxu0 0.0
    %3908 = vmatmul.mubr.f32.gmra.mxu0 %v1368
    %v3909 = vpop.f32.mrf.mxu0
    %v3910 = vadd.f32 %v698, %v3909
    %v3911 = vpop.f32.mrf.mxu0
    %3912 = vmatprep.mubr.f32.mxu0 0.0
    %3913 = vmatmul.mubr.f32.gmra.mxu0 %v1371
    %v3914 = vpop.f32.mrf.mxu0
    %v3915 = vadd.f32 %v698, %v3914
    %v3916 = vpop.f32.mrf.mxu0
    %3917 = vmatprep.mubr.f32.mxu0 0.0
    %3918 = vmatmul.mubr.f32.gmra.mxu0 %v1374
    %v3919 = vpop.f32.mrf.mxu0
    %v3920 = vadd.f32 %v698, %v3919
    %v3921 = vpop.f32.mrf.mxu0
    %3922 = vmatprep.mubr.f32.mxu0 0.0
    %3923 = vmatmul.mubr.f32.gmra.mxu0 %v1377
    %v3924 = vpop.f32.mrf.mxu0
    %v3925 = vadd.f32 %v698, %v3924
    %v3926 = vpop.f32.mrf.mxu0
    %3927 = vmatprep.mubr.f32.mxu0 0.0
    %3928 = vmatmul.mubr.f32.gmra.mxu0 %v1380
    %v3929 = vpop.f32.mrf.mxu0
    %v3930 = vadd.f32 %v698, %v3929
    %v3931 = vpop.f32.mrf.mxu0
    %3932 = vmatprep.mubr.f32.mxu0 0.0
    %3933 = vmatmul.mubr.f32.gmra.mxu0 %v1383
    %v3934 = vpop.f32.mrf.mxu0
    %v3935 = vadd.f32 %v698, %v3934
    %v3936 = vpop.f32.mrf.mxu0
    %3937 = vmatprep.mubr.f32.mxu0 0.0
    %3938 = vmatmul.mubr.f32.gmra.mxu0 %v1386
    %v3939 = vpop.f32.mrf.mxu0
    %v3940 = vadd.f32 %v698, %v3939
    %v3941 = vpop.f32.mrf.mxu0
    %3942 = vmatprep.mubr.f32.mxu0 0.0
    %3943 = vmatmul.mubr.f32.gmra.mxu0 %v1389
    %v3944 = vpop.f32.mrf.mxu0
    %v3945 = vadd.f32 %v698, %v3944
    %v3946 = vpop.f32.mrf.mxu0
    %3947 = vmatprep.mubr.f32.mxu0 0.0
    %3948 = vmatmul.mubr.f32.gmra.mxu0 %v1392
    %v3949 = vpop.f32.mrf.mxu0
    %v3950 = vadd.f32 %v698, %v3949
    %v3951 = vpop.f32.mrf.mxu0
    %3952 = vmatprep.mubr.f32.mxu0 0.0
    %3953 = vmatmul.mubr.f32.gmra.mxu0 %v1395
    %v3954 = vpop.f32.mrf.mxu0
    %v3955 = vadd.f32 %v698, %v3954
    %v3956 = vpop.f32.mrf.mxu0
    %3957 = vmatprep.mubr.f32.mxu0 0.0
    %3958 = vmatmul.mubr.f32.gmra.mxu0 %v1398
    %v3959 = vpop.f32.mrf.mxu0
    %v3960 = vadd.f32 %v698, %v3959
    %v3961 = vpop.f32.mrf.mxu0
    %3962 = vmatprep.mubr.f32.mxu0 0.0
    %3963 = vmatmul.mubr.f32.gmra.mxu0 %v1401
    %v3964 = vpop.f32.mrf.mxu0
    %v3965 = vadd.f32 %v698, %v3964
    %v3966 = vpop.f32.mrf.mxu0
    %3967 = vmatprep.mubr.f32.mxu0 0.0
    %3968 = vmatmul.mubr.f32.gmra.mxu0 %v1404
    %v3969 = vpop.f32.mrf.mxu0
    %v3970 = vadd.f32 %v698, %v3969
    %v3971 = vpop.f32.mrf.mxu0
    %3972 = vmatprep.mubr.f32.mxu0 0.0
    %3973 = vmatmul.mubr.f32.gmra.mxu0 %v1407
    %v3974 = vpop.f32.mrf.mxu0
    %v3975 = vadd.f32 %v698, %v3974
    %v3976 = vpop.f32.mrf.mxu0
    %3977 = vmatprep.mubr.f32.mxu0 0.0
    %3978 = vmatmul.mubr.f32.gmra.mxu0 %v1410
    %v3979 = vpop.f32.mrf.mxu0
    %v3980 = vadd.f32 %v698, %v3979
    %v3981 = vpop.f32.mrf.mxu0
    %3982 = vmatprep.mubr.f32.mxu0 0.0
    %3983 = vmatmul.mubr.f32.gmra.mxu0 %v1413
    %v3984 = vpop.f32.mrf.mxu0
    %v3985 = vadd.f32 %v698, %v3984
    %v3986 = vpop.f32.mrf.mxu0
    %3987 = vmatprep.mubr.f32.mxu0 0.0
    %3988 = vmatmul.mubr.f32.gmra.mxu0 %v1416
    %v3989 = vpop.f32.mrf.mxu0
    %v3990 = vadd.f32 %v698, %v3989
    %v3991 = vpop.f32.mrf.mxu0
    %3992 = vmatprep.mubr.f32.mxu0 0.0
    %3993 = vmatmul.mubr.f32.gmra.mxu0 %v1419
    %v3994 = vpop.f32.mrf.mxu0
    %v3995 = vadd.f32 %v698, %v3994
    %v3996 = vpop.f32.mrf.mxu0
    %3997 = vmatprep.mubr.f32.mxu0 0.0
    %3998 = vmatmul.mubr.f32.gmra.mxu0 %v1422
    %v3999 = vpop.f32.mrf.mxu0
    %v4000 = vadd.f32 %v698, %v3999
    %v4001 = vpop.f32.mrf.mxu0
    %4002 = vmatprep.mubr.f32.mxu0 0.0
    %4003 = vmatmul.mubr.f32.gmra.mxu0 %v1425
    %v4004 = vpop.f32.mrf.mxu0
    %v4005 = vadd.f32 %v698, %v4004
    %v4006 = vpop.f32.mrf.mxu0
    %4007 = vmatprep.mubr.f32.mxu0 0.0
    %4008 = vmatmul.mubr.f32.gmra.mxu0 %v1428
    %v4009 = vpop.f32.mrf.mxu0
    %v4010 = vadd.f32 %v698, %v4009
    %v4011 = vpop.f32.mrf.mxu0
    %4012 = vmatprep.mubr.f32.mxu0 0.0
    %4013 = vmatmul.mubr.f32.gmra.mxu0 %v1431
    %v4014 = vpop.f32.mrf.mxu0
    %v4015 = vadd.f32 %v698, %v4014
    %v4016 = vpop.f32.mrf.mxu0
    %4017 = vmatprep.mubr.f32.mxu0 0.0
    %4018 = vmatmul.mubr.f32.gmra.mxu0 %v1434
    %v4019 = vpop.f32.mrf.mxu0
    %v4020 = vadd.f32 %v698, %v4019
    %v4021 = vpop.f32.mrf.mxu0
    %4022 = vmatprep.mubr.f32.mxu0 0.0
    %4023 = vmatmul.mubr.f32.gmra.mxu0 %v1437
    %v4024 = vpop.f32.mrf.mxu0
    %v4025 = vadd.f32 %v698, %v4024
    %v4026 = vpop.f32.mrf.mxu0
    %4027 = vmatprep.mubr.f32.mxu0 0.0
    %4028 = vmatmul.mubr.f32.gmra.mxu0 %v1440
    %v4029 = vpop.f32.mrf.mxu0
    %v4030 = vadd.f32 %v698, %v4029
    %v4031 = vpop.f32.mrf.mxu0
    %4032 = vmatprep.mubr.f32.mxu0 0.0
    %4033 = vmatmul.mubr.f32.gmra.mxu0 %v1443
    %v4034 = vpop.f32.mrf.mxu0
    %v4035 = vadd.f32 %v698, %v4034
    %v4036 = vpop.f32.mrf.mxu0
    %4037 = vmatprep.mubr.f32.mxu0 0.0
    %4038 = vmatmul.mubr.f32.gmra.mxu0 %v1446
    %v4039 = vpop.f32.mrf.mxu0
    %v4040 = vadd.f32 %v698, %v4039
    %v4041 = vpop.f32.mrf.mxu0
    %4042 = vmatprep.mubr.f32.mxu0 0.0
    %4043 = vmatmul.mubr.f32.gmra.mxu0 %v1449
    %v4044 = vpop.f32.mrf.mxu0
    %v4045 = vadd.f32 %v698, %v4044
    %v4046 = vpop.f32.mrf.mxu0
    %4047 = vmatprep.mubr.f32.mxu0 0.0
    %4048 = vmatmul.mubr.f32.gmra.mxu0 %v1452
    %v4049 = vpop.f32.mrf.mxu0
    %v4050 = vadd.f32 %v698, %v4049
    %v4051 = vpop.f32.mrf.mxu0
    %4052 = vmatprep.mubr.f32.mxu0 0.0
    %4053 = vmatmul.mubr.f32.gmra.mxu0 %v1455
    %v4054 = vpop.f32.mrf.mxu0
    %v4055 = vadd.f32 %v698, %v4054
    %v4056 = vpop.f32.mrf.mxu0
    %4057 = vmatprep.mubr.f32.mxu0 0.0
    %4058 = vmatmul.mubr.f32.gmra.mxu0 %v1458
    %v4059 = vpop.f32.mrf.mxu0
    %v4060 = vadd.f32 %v698, %v4059
    %v4061 = vpop.f32.mrf.mxu0
    %4062 = vmatprep.mubr.f32.mxu0 0.0
    %4063 = vmatmul.mubr.f32.gmra.mxu0 %v1461
    %v4064 = vpop.f32.mrf.mxu0
    %v4065 = vadd.f32 %v698, %v4064
    %v4066 = vpop.f32.mrf.mxu0
    %4067 = vmatprep.mubr.f32.mxu0 0.0
    %4068 = vmatmul.mubr.f32.gmra.mxu0 %v1464
    %v4069 = vpop.f32.mrf.mxu0
    %v4070 = vadd.f32 %v698, %v4069
    %v4071 = vpop.f32.mrf.mxu0
    %4072 = vmatprep.mubr.f32.mxu0 0.0
    %4073 = vmatmul.mubr.f32.gmra.mxu0 %v1467
    %v4074 = vpop.f32.mrf.mxu0
    %v4075 = vadd.f32 %v698, %v4074
    %v4076 = vpop.f32.mrf.mxu0
    %4077 = vmatprep.mubr.f32.mxu0 0.0
    %4078 = vmatmul.mubr.f32.gmra.mxu0 %v1470
    %v4079 = vpop.f32.mrf.mxu0
    %v4080 = vadd.f32 %v698, %v4079
    %v4081 = vpop.f32.mrf.mxu0
    %4082 = vmatprep.mubr.f32.mxu0 0.0
    %4083 = vmatmul.mubr.f32.gmra.mxu0 %v1473
    %v4084 = vpop.f32.mrf.mxu0
    %v4085 = vadd.f32 %v698, %v4084
    %v4086 = vpop.f32.mrf.mxu0
    %4087 = vmatprep.mubr.f32.mxu0 0.0
    %4088 = vmatmul.mubr.f32.gmra.mxu0 %v1476
    %v4089 = vpop.f32.mrf.mxu0
    %v4090 = vadd.f32 %v698, %v4089
    %v4091 = vpop.f32.mrf.mxu0
    %4092 = vmatprep.mubr.f32.mxu0 0.0
    %4093 = vmatmul.mubr.f32.gmra.mxu0 %v1479
    %v4094 = vpop.f32.mrf.mxu0
    %v4095 = vadd.f32 %v698, %v4094
    %v4096 = vpop.f32.mrf.mxu0
    %4097 = vmatprep.mubr.f32.mxu0 0.0
    %4098 = vmatmul.mubr.f32.gmra.mxu0 %v1482
    %v4099 = vpop.f32.mrf.mxu0
    %v4100 = vadd.f32 %v698, %v4099
    %v4101 = vpop.f32.mrf.mxu0
    %4102 = vmatprep.mubr.f32.mxu0 0.0
    %4103 = vmatmul.mubr.f32.gmra.mxu0 %v1485
    %v4104 = vpop.f32.mrf.mxu0
    %v4105 = vadd.f32 %v698, %v4104
    %v4106 = vpop.f32.mrf.mxu0
    %4107 = vmatprep.mubr.f32.mxu0 0.0
    %4108 = vmatmul.mubr.f32.gmra.mxu0 %v1488
    %v4109 = vpop.f32.mrf.mxu0
    %v4110 = vadd.f32 %v698, %v4109
    %v4111 = vpop.f32.mrf.mxu0
    %4112 = vmatprep.mubr.f32.mxu0 0.0
    %4113 = vmatmul.mubr.f32.gmra.mxu0 %v1491
    %v4114 = vpop.f32.mrf.mxu0
    %v4115 = vadd.f32 %v698, %v4114
    %v4116 = vpop.f32.mrf.mxu0
    %4117 = vmatprep.mubr.f32.mxu0 0.0
    %4118 = vmatmul.mubr.f32.gmra.mxu0 %v1494
    %v4119 = vpop.f32.mrf.mxu0
    %v4120 = vadd.f32 %v698, %v4119
    %v4121 = vpop.f32.mrf.mxu0
    %4122 = vmatprep.mubr.f32.mxu0 0.0
    %4123 = vmatmul.mubr.f32.gmra.mxu0 %v1497
    %v4124 = vpop.f32.mrf.mxu0
    %v4125 = vadd.f32 %v698, %v4124
    %v4126 = vpop.f32.mrf.mxu0
    %4127 = vmatprep.mubr.f32.mxu0 0.0
    %4128 = vmatmul.mubr.f32.gmra.mxu0 %v1500
    %v4129 = vpop.f32.mrf.mxu0
    %v4130 = vadd.f32 %v698, %v4129
    %v4131 = vpop.f32.mrf.mxu0
    %4132 = vmatprep.mubr.f32.mxu0 0.0
    %4133 = vmatmul.mubr.f32.gmra.mxu0 %v1503
    %v4134 = vpop.f32.mrf.mxu0
    %v4135 = vadd.f32 %v698, %v4134
    %v4136 = vpop.f32.mrf.mxu0
    %4137 = vmatprep.mubr.f32.mxu0 0.0
    %4138 = vmatmul.mubr.f32.gmra.mxu0 %v1506
    %v4139 = vpop.f32.mrf.mxu0
    %v4140 = vadd.f32 %v698, %v4139
    %v4141 = vpop.f32.mrf.mxu0
    %4142 = vmatprep.mubr.f32.mxu0 0.0
    %4143 = vmatmul.mubr.f32.gmra.mxu0 %v1509
    %v4144 = vpop.f32.mrf.mxu0
    %v4145 = vadd.f32 %v698, %v4144
    %v4146 = vpop.f32.mrf.mxu0
    %4147 = vmatprep.mubr.f32.mxu0 0.0
    %4148 = vmatmul.mubr.f32.gmra.mxu0 %v1512
    %v4149 = vpop.f32.mrf.mxu0
    %v4150 = vadd.f32 %v698, %v4149
    %v4151 = vpop.f32.mrf.mxu0
    %4152 = vmatprep.mubr.f32.mxu0 0.0
    %4153 = vmatmul.mubr.f32.gmra.mxu0 %v1515
    %v4154 = vpop.f32.mrf.mxu0
    %v4155 = vadd.f32 %v698, %v4154
    %v4156 = vpop.f32.mrf.mxu0
    %4157 = vmatprep.mubr.f32.mxu0 0.0
    %4158 = vmatmul.mubr.f32.gmra.mxu0 %v1518
    %v4159 = vpop.f32.mrf.mxu0
    %v4160 = vadd.f32 %v698, %v4159
    %v4161 = vpop.f32.mrf.mxu0
    %4162 = vmatprep.mubr.f32.mxu0 0.0
    %4163 = vmatmul.mubr.f32.gmra.mxu0 %v1521
    %v4164 = vpop.f32.mrf.mxu0
    %v4165 = vadd.f32 %v698, %v4164
    %v4166 = vpop.f32.mrf.mxu0
    %4167 = vmatprep.mubr.f32.mxu0 0.0
    %4168 = vmatmul.mubr.f32.gmra.mxu0 %v1524
    %v4169 = vpop.f32.mrf.mxu0
    %v4170 = vadd.f32 %v698, %v4169
    %v4171 = vpop.f32.mrf.mxu0
    %4172 = vmatprep.mubr.f32.mxu0 0.0
    %4173 = vmatmul.mubr.f32.gmra.mxu0 %v1527
    %v4174 = vpop.f32.mrf.mxu0
    %v4175 = vadd.f32 %v698, %v4174
    %v4176 = vpop.f32.mrf.mxu0
    %4177 = vmatprep.mubr.f32.mxu0 0.0
    %4178 = vmatmul.mubr.f32.gmra.mxu0 %v1530
    %v4179 = vpop.f32.mrf.mxu0
    %v4180 = vadd.f32 %v698, %v4179
    %v4181 = vpop.f32.mrf.mxu0
    %4182 = vmatprep.mubr.f32.mxu0 0.0
    %4183 = vmatmul.mubr.f32.gmra.mxu0 %v1533
    %v4184 = vpop.f32.mrf.mxu0
    %v4185 = vadd.f32 %v698, %v4184
    %v4186 = vpop.f32.mrf.mxu0
    %4187 = vmatprep.mubr.f32.mxu0 0.0
    %4188 = vmatmul.mubr.f32.gmra.mxu0 %v1536
    %v4189 = vpop.f32.mrf.mxu0
    %v4190 = vadd.f32 %v698, %v4189
    %v4191 = vpop.f32.mrf.mxu0
    %4192 = vmatprep.mubr.f32.mxu0 0.0
    %4193 = vmatmul.mubr.f32.gmra.mxu0 %v1539
    %v4194 = vpop.f32.mrf.mxu0
    %v4195 = vadd.f32 %v698, %v4194
    %v4196 = vpop.f32.mrf.mxu0
    %4197 = vmatprep.mubr.f32.mxu0 0.0
    %4198 = vmatmul.mubr.f32.gmra.mxu0 %v1542
    %v4199 = vpop.f32.mrf.mxu0
    %v4200 = vadd.f32 %v698, %v4199
    %v4201 = vpop.f32.mrf.mxu0
    %4202 = vmatprep.mubr.f32.mxu0 0.0
    %4203 = vmatmul.mubr.f32.gmra.mxu0 %v1545
    %v4204 = vpop.f32.mrf.mxu0
    %v4205 = vadd.f32 %v698, %v4204
    %v4206 = vpop.f32.mrf.mxu0
    %4207 = vmatprep.mubr.f32.mxu0 0.0
    %4208 = vmatmul.mubr.f32.gmra.mxu0 %v1548
    %v4209 = vpop.f32.mrf.mxu0
    %v4210 = vadd.f32 %v698, %v4209
    %v4211 = vpop.f32.mrf.mxu0
    %4212 = vmatprep.mubr.f32.mxu0 0.0
    %4213 = vmatmul.mubr.f32.gmra.mxu0 %v1551
    %v4214 = vpop.f32.mrf.mxu0
    %v4215 = vadd.f32 %v698, %v4214
    %v4216 = vpop.f32.mrf.mxu0
    %4217 = vmatprep.mubr.f32.mxu0 0.0
    %4218 = vmatmul.mubr.f32.gmra.mxu0 %v1554
    %v4219 = vpop.f32.mrf.mxu0
    %v4220 = vadd.f32 %v698, %v4219
    %v4221 = vpop.f32.mrf.mxu0
    %4222 = vmatprep.mubr.f32.mxu0 0.0
    %4223 = vmatmul.mubr.f32.gmra.mxu0 %v1557
    %v4224 = vpop.f32.mrf.mxu0
    %v4225 = vadd.f32 %v698, %v4224
    %v4226 = vpop.f32.mrf.mxu0
    %4227 = vmatprep.mubr.f32.mxu0 0.0
    %4228 = vmatmul.mubr.f32.gmra.mxu0 %v1560
    %v4229 = vpop.f32.mrf.mxu0
    %v4230 = vadd.f32 %v698, %v4229
    %v4231 = vpop.f32.mrf.mxu0
    %4232 = vmatprep.mubr.f32.mxu0 0.0
    %4233 = vmatmul.mubr.f32.gmra.mxu0 %v1563
    %v4234 = vpop.f32.mrf.mxu0
    %v4235 = vadd.f32 %v698, %v4234
    %v4236 = vpop.f32.mrf.mxu0
    %4237 = vmatprep.mubr.f32.mxu0 0.0
    %4238 = vmatmul.mubr.f32.gmra.mxu0 %v1566
    %v4239 = vpop.f32.mrf.mxu0
    %v4240 = vadd.f32 %v698, %v4239
    %v4241 = vpop.f32.mrf.mxu0
    %4242 = vmatprep.mubr.f32.mxu0 0.0
    %4243 = vmatmul.mubr.f32.gmra.mxu0 %v1569
    %v4244 = vpop.f32.mrf.mxu0
    %v4245 = vadd.f32 %v698, %v4244
    %v4246 = vpop.f32.mrf.mxu0
    %4247 = vmatprep.mubr.f32.mxu0 0.0
    %4248 = vmatmul.mubr.f32.gmra.mxu0 %v1572
    %v4249 = vpop.f32.mrf.mxu0
    %v4250 = vadd.f32 %v698, %v4249
    %v4251 = vpop.f32.mrf.mxu0
    %4252 = vmatprep.mubr.f32.mxu0 0.0
    %4253 = vmatmul.mubr.f32.gmra.mxu0 %v1575
    %v4254 = vpop.f32.mrf.mxu0
    %v4255 = vadd.f32 %v698, %v4254
    %v4256 = vpop.f32.mrf.mxu0
    %4257 = vmatprep.mubr.f32.mxu0 0.0
    %4258 = vmatmul.mubr.f32.gmra.mxu0 %v1578
    %v4259 = vpop.f32.mrf.mxu0
    %v4260 = vadd.f32 %v698, %v4259
    %v4261 = vpop.f32.mrf.mxu0
    %4262 = vmatprep.mubr.f32.mxu0 0.0
    %4263 = vmatmul.mubr.f32.gmra.mxu0 %v1581
    %v4264 = vpop.f32.mrf.mxu0
    %v4265 = vadd.f32 %v698, %v4264
    %v4266 = vpop.f32.mrf.mxu0
    %4267 = vmatprep.mubr.f32.mxu0 0.0
    %4268 = vmatmul.mubr.f32.gmra.mxu0 %v1584
    %v4269 = vpop.f32.mrf.mxu0
    %v4270 = vadd.f32 %v698, %v4269
    %v4271 = vpop.f32.mrf.mxu0
    %4272 = vmatprep.mubr.f32.mxu0 0.0
    %4273 = vmatmul.mubr.f32.gmra.mxu0 %v1587
    %v4274 = vpop.f32.mrf.mxu0
    %v4275 = vadd.f32 %v698, %v4274
    %v4276 = vpop.f32.mrf.mxu0
    %4277 = vmatprep.mubr.f32.mxu0 0.0
    %4278 = vmatmul.mubr.f32.gmra.mxu0 %v1590
    %v4279 = vpop.f32.mrf.mxu0
    %v4280 = vadd.f32 %v698, %v4279
    %v4281 = vpop.f32.mrf.mxu0
    %4282 = vmatprep.mubr.f32.mxu0 0.0
    %4283 = vmatmul.mubr.f32.gmra.mxu0 %v1593
    %v4284 = vpop.f32.mrf.mxu0
    %v4285 = vadd.f32 %v698, %v4284
    %v4286 = vpop.f32.mrf.mxu0
    %4287 = vmatprep.mubr.f32.mxu0 0.0
    %4288 = vmatmul.mubr.f32.gmra.mxu0 %v1596
    %v4289 = vpop.f32.mrf.mxu0
    %v4290 = vadd.f32 %v698, %v4289
    %v4291 = vpop.f32.mrf.mxu0
    %4292 = vmatprep.mubr.f32.mxu0 0.0
    %4293 = vmatmul.mubr.f32.gmra.mxu0 %v1599
    %v4294 = vpop.f32.mrf.mxu0
    %v4295 = vadd.f32 %v698, %v4294
    %v4296 = vpop.f32.mrf.mxu0
    %4297 = vmatprep.mubr.f32.mxu0 0.0
    %4298 = vmatmul.mubr.f32.gmra.mxu0 %v1602
    %v4299 = vpop.f32.mrf.mxu0
    %v4300 = vadd.f32 %v698, %v4299
    %v4301 = vpop.f32.mrf.mxu0
    %4302 = vmatprep.mubr.f32.mxu0 0.0
    %4303 = vmatmul.mubr.f32.gmra.mxu0 %v1605
    %v4304 = vpop.f32.mrf.mxu0
    %v4305 = vadd.f32 %v698, %v4304
    %v4306 = vpop.f32.mrf.mxu0
    %4307 = vmatprep.mubr.f32.mxu0 0.0
    %4308 = vmatmul.mubr.f32.gmra.mxu0 %v1608
    %v4309 = vpop.f32.mrf.mxu0
    %v4310 = vadd.f32 %v698, %v4309
    %v4311 = vpop.f32.mrf.mxu0
    %4312 = vmatprep.mubr.f32.mxu0 0.0
    %4313 = vmatmul.mubr.f32.gmra.mxu0 %v1611
    %v4314 = vpop.f32.mrf.mxu0
    %v4315 = vadd.f32 %v698, %v4314
    %v4316 = vpop.f32.mrf.mxu0
    %4317 = vmatprep.mubr.f32.mxu0 0.0
    %4318 = vmatmul.mubr.f32.gmra.mxu0 %v1614
    %v4319 = vpop.f32.mrf.mxu0
    %v4320 = vadd.f32 %v698, %v4319
    %v4321 = vpop.f32.mrf.mxu0
    %4322 = vmatprep.mubr.f32.mxu0 0.0
    %4323 = vmatmul.mubr.f32.gmra.mxu0 %v1617
    %v4324 = vpop.f32.mrf.mxu0
    %v4325 = vadd.f32 %v698, %v4324
    %v4326 = vpop.f32.mrf.mxu0
    %4327 = vmatprep.mubr.f32.mxu0 0.0
    %4328 = vmatmul.mubr.f32.gmra.mxu0 %v1620
    %v4329 = vpop.f32.mrf.mxu0
    %v4330 = vadd.f32 %v698, %v4329
    %v4331 = vpop.f32.mrf.mxu0
    %4332 = vmatprep.mubr.f32.mxu0 0.0
    %4333 = vmatmul.mubr.f32.gmra.mxu0 %v1623
    %v4334 = vpop.f32.mrf.mxu0
    %v4335 = vadd.f32 %v698, %v4334
    %v4336 = vpop.f32.mrf.mxu0
    %4337 = vmatprep.mubr.f32.mxu0 0.0
    %4338 = vmatmul.mubr.f32.gmra.mxu0 %v1626
    %v4339 = vpop.f32.mrf.mxu0
    %v4340 = vadd.f32 %v698, %v4339
    %v4341 = vpop.f32.mrf.mxu0
    %4342 = vmatprep.mubr.f32.mxu0 0.0
    %4343 = vmatmul.mubr.f32.gmra.mxu0 %v1629
    %v4344 = vpop.f32.mrf.mxu0
    %v4345 = vadd.f32 %v698, %v4344
    %v4346 = vpop.f32.mrf.mxu0
    %4347 = vmatprep.mubr.f32.mxu0 0.0
    %4348 = vmatmul.mubr.f32.gmra.mxu0 %v1632
    %v4349 = vpop.f32.mrf.mxu0
    %v4350 = vadd.f32 %v698, %v4349
    %v4351 = vpop.f32.mrf.mxu0
    %4352 = vmatprep.mubr.f32.mxu0 0.0
    %4353 = vmatmul.mubr.f32.gmra.mxu0 %v1635
    %v4354 = vpop.f32.mrf.mxu0
    %v4355 = vadd.f32 %v698, %v4354
    %v4356 = vpop.f32.mrf.mxu0
    %4357 = vmatprep.mubr.f32.mxu0 0.0
    %4358 = vmatmul.mubr.f32.gmra.mxu0 %v1638
    %v4359 = vpop.f32.mrf.mxu0
    %v4360 = vadd.f32 %v698, %v4359
    %v4361 = vpop.f32.mrf.mxu0
    %4362 = vmatprep.mubr.f32.mxu0 0.0
    %4363 = vmatmul.mubr.f32.gmra.mxu0 %v1641
    %v4364 = vpop.f32.mrf.mxu0
    %v4365 = vadd.f32 %v698, %v4364
    %v4366 = vpop.f32.mrf.mxu0
    %4367 = vmatprep.mubr.f32.mxu0 0.0
    %4368 = vmatmul.mubr.f32.gmra.mxu0 %v1644
    %v4369 = vpop.f32.mrf.mxu0
    %v4370 = vadd.f32 %v698, %v4369
    %v4371 = vpop.f32.mrf.mxu0
    %4372 = vmatprep.mubr.f32.mxu0 0.0
    %4373 = vmatmul.mubr.f32.gmra.mxu0 %v1647
    %v4374 = vpop.f32.mrf.mxu0
    %v4375 = vadd.f32 %v698, %v4374
    %v4376 = vpop.f32.mrf.mxu0
    %4377 = vmatprep.mubr.f32.mxu0 0.0
    %4378 = vmatmul.mubr.f32.gmra.mxu0 %v1650
    %v4379 = vpop.f32.mrf.mxu0
    %v4380 = vadd.f32 %v698, %v4379
    %v4381 = vpop.f32.mrf.mxu0
    %4382 = vmatprep.mubr.f32.mxu0 0.0
    %4383 = vmatmul.mubr.f32.gmra.mxu0 %v1653
    %v4384 = vpop.f32.mrf.mxu0
    %v4385 = vadd.f32 %v698, %v4384
    %v4386 = vpop.f32.mrf.mxu0
    %4387 = vmatprep.mubr.f32.mxu0 0.0
    %4388 = vmatmul.mubr.f32.gmra.mxu0 %v1656
    %v4389 = vpop.f32.mrf.mxu0
    %v4390 = vadd.f32 %v698, %v4389
    %v4391 = vpop.f32.mrf.mxu0
    %4392 = vmatprep.mubr.f32.mxu0 0.0
    %4393 = vmatmul.mubr.f32.gmra.mxu0 %v1659
    %v4394 = vpop.f32.mrf.mxu0
    %v4395 = vadd.f32 %v698, %v4394
    %v4396 = vpop.f32.mrf.mxu0
    %4397 = vmatprep.mubr.f32.mxu0 0.0
    %4398 = vmatmul.mubr.f32.gmra.mxu0 %v1662
    %v4399 = vpop.f32.mrf.mxu0
    %v4400 = vadd.f32 %v698, %v4399
    %v4401 = vpop.f32.mrf.mxu0
    %4402 = vmatprep.mubr.f32.mxu0 0.0
    %4403 = vmatmul.mubr.f32.gmra.mxu0 %v1665
    %v4404 = vpop.f32.mrf.mxu0
    %v4405 = vadd.f32 %v698, %v4404
    %v4406 = vpop.f32.mrf.mxu0
    %4407 = vmatprep.mubr.f32.mxu0 0.0
    %4408 = vmatmul.mubr.f32.gmra.mxu0 %v1668
    %v4409 = vpop.f32.mrf.mxu0
    %v4410 = vadd.f32 %v698, %v4409
    %v4411 = vpop.f32.mrf.mxu0
    %4412 = vmatprep.mubr.f32.mxu0 0.0
    %4413 = vmatmul.mubr.f32.gmra.mxu0 %v1671
    %v4414 = vpop.f32.mrf.mxu0
    %v4415 = vadd.f32 %v698, %v4414
    %v4416 = vpop.f32.mrf.mxu0
    %4417 = vmatprep.mubr.f32.mxu0 0.0
    %4418 = vmatmul.mubr.f32.gmra.mxu0 %v1674
    %v4419 = vpop.f32.mrf.mxu0
    %v4420 = vadd.f32 %v698, %v4419
    %v4421 = vpop.f32.mrf.mxu0
    %4422 = vmatprep.mubr.f32.mxu0 0.0
    %4423 = vmatmul.mubr.f32.gmra.mxu0 %v1677
    %v4424 = vpop.f32.mrf.mxu0
    %v4425 = vadd.f32 %v698, %v4424
    %v4426 = vpop.f32.mrf.mxu0
    %4427 = vmatprep.mubr.f32.mxu0 0.0
    %4428 = vmatmul.mubr.f32.gmra.mxu0 %v1680
    %v4429 = vpop.f32.mrf.mxu0
    %v4430 = vadd.f32 %v698, %v4429
    %v4431 = vpop.f32.mrf.mxu0
    %4432 = vmatprep.mubr.f32.mxu0 0.0
    %4433 = vmatmul.mubr.f32.gmra.mxu0 %v1683
    %v4434 = vpop.f32.mrf.mxu0
    %v4435 = vadd.f32 %v698, %v4434
    %v4436 = vpop.f32.mrf.mxu0
    %4437 = vmatprep.mubr.f32.mxu0 0.0
    %4438 = vmatmul.mubr.f32.gmra.mxu0 %v1686
    %v4439 = vpop.f32.mrf.mxu0
    %v4440 = vadd.f32 %v698, %v4439
    %v4441 = vpop.f32.mrf.mxu0
    %4442 = vmatprep.mubr.f32.mxu0 0.0
    %4443 = vmatmul.mubr.f32.gmra.mxu0 %v1689
    %v4444 = vpop.f32.mrf.mxu0
    %v4445 = vadd.f32 %v698, %v4444
    %v4446 = vpop.f32.mrf.mxu0
    %4447 = vmatprep.mubr.f32.mxu0 0.0
    %4448 = vmatmul.mubr.f32.gmra.mxu0 %v1692
    %v4449 = vpop.f32.mrf.mxu0
    %v4450 = vadd.f32 %v698, %v4449
    %v4451 = vpop.f32.mrf.mxu0
    %4452 = vmatprep.mubr.f32.mxu0 0.0
    %4453 = vmatmul.mubr.f32.gmra.mxu0 %v1695
    %v4454 = vpop.f32.mrf.mxu0
    %v4455 = vadd.f32 %v698, %v4454
    %v4456 = vpop.f32.mrf.mxu0
    %4457 = vmatprep.mubr.f32.mxu0 0.0
    %4458 = vmatmul.mubr.f32.gmra.mxu0 %v1698
    %v4459 = vpop.f32.mrf.mxu0
    %v4460 = vadd.f32 %v698, %v4459
    %v4461 = vpop.f32.mrf.mxu0
    %4462 = vmatprep.mubr.f32.mxu0 0.0
    %4463 = vmatmul.mubr.f32.gmra.mxu0 %v1701
    %v4464 = vpop.f32.mrf.mxu0
    %v4465 = vadd.f32 %v698, %v4464
    %v4466 = vpop.f32.mrf.mxu0
    %4467 = vmatprep.mubr.f32.mxu0 0.0
    %4468 = vmatmul.mubr.f32.gmra.mxu0 %v1704
    %v4469 = vpop.f32.mrf.mxu0
    %v4470 = vadd.f32 %v698, %v4469
    %v4471 = vpop.f32.mrf.mxu0
    %4472 = vmatprep.mubr.f32.mxu0 0.0
    %4473 = vmatmul.mubr.f32.gmra.mxu0 %v1707
    %v4474 = vpop.f32.mrf.mxu0
    %v4475 = vadd.f32 %v698, %v4474
    %v4476 = vpop.f32.mrf.mxu0
    %4477 = vmatprep.mubr.f32.mxu0 0.0
    %4478 = vmatmul.mubr.f32.gmra.mxu0 %v1710
    %v4479 = vpop.f32.mrf.mxu0
    %v4480 = vadd.f32 %v698, %v4479
    %v4481 = vpop.f32.mrf.mxu0
    %4482 = vmatprep.mubr.f32.mxu0 0.0
    %4483 = vmatmul.mubr.f32.gmra.mxu0 %v1713
    %v4484 = vpop.f32.mrf.mxu0
    %v4485 = vadd.f32 %v698, %v4484
    %v4486 = vpop.f32.mrf.mxu0
    %4487 = vmatprep.mubr.f32.mxu0 0.0
    %4488 = vmatmul.mubr.f32.gmra.mxu0 %v1716
    %v4489 = vpop.f32.mrf.mxu0
    %v4490 = vadd.f32 %v698, %v4489
    %v4491 = vpop.f32.mrf.mxu0
    %4492 = vmatprep.mubr.f32.mxu0 0.0
    %4493 = vmatmul.mubr.f32.gmra.mxu0 %v1719
    %v4494 = vpop.f32.mrf.mxu0
    %v4495 = vadd.f32 %v698, %v4494
    %v4496 = vpop.f32.mrf.mxu0
    %4497 = vmatprep.mubr.f32.mxu0 0.0
    %4498 = vmatmul.mubr.f32.gmra.mxu0 %v1722
    %v4499 = vpop.f32.mrf.mxu0
    %v4500 = vadd.f32 %v698, %v4499
    %v4501 = vpop.f32.mrf.mxu0
    %4502 = vmatprep.mubr.f32.mxu0 0.0
    %4503 = vmatmul.mubr.f32.gmra.mxu0 %v1725
    %v4504 = vpop.f32.mrf.mxu0
    %v4505 = vadd.f32 %v698, %v4504
    %v4506 = vpop.f32.mrf.mxu0
    %4507 = vmatprep.mubr.f32.mxu0 0.0
    %4508 = vmatmul.mubr.f32.gmra.mxu0 %v1728
    %v4509 = vpop.f32.mrf.mxu0
    %v4510 = vadd.f32 %v698, %v4509
    %v4511 = vpop.f32.mrf.mxu0
    %4512 = vmatprep.mubr.f32.mxu0 0.0
    %4513 = vmatmul.mubr.f32.gmra.mxu0 %v1731
    %v4514 = vpop.f32.mrf.mxu0
    %v4515 = vadd.f32 %v698, %v4514
    %v4516 = vpop.f32.mrf.mxu0
    %4517 = vmatprep.mubr.f32.mxu0 0.0
    %4518 = vmatmul.mubr.f32.gmra.mxu0 %v1734
    %v4519 = vpop.f32.mrf.mxu0
    %v4520 = vadd.f32 %v698, %v4519
    %v4521 = vpop.f32.mrf.mxu0
    %4522 = vmatprep.mubr.f32.mxu0 0.0
    %4523 = vmatmul.mubr.f32.gmra.mxu0 %v1737
    %v4524 = vpop.f32.mrf.mxu0
    %v4525 = vadd.f32 %v698, %v4524
    %v4526 = vpop.f32.mrf.mxu0
    %4527 = vmatprep.mubr.f32.mxu0 0.0
    %4528 = vmatmul.mubr.f32.gmra.mxu0 %v1740
    %v4529 = vpop.f32.mrf.mxu0
    %v4530 = vadd.f32 %v698, %v4529
    %v4531 = vpop.f32.mrf.mxu0
    %4532 = vmatprep.mubr.f32.mxu0 0.0
    %4533 = vmatmul.mubr.f32.gmra.mxu0 %v1743
    %v4534 = vpop.f32.mrf.mxu0
    %v4535 = vadd.f32 %v698, %v4534
    %v4536 = vpop.f32.mrf.mxu0
    %4537 = vmatprep.mubr.f32.mxu0 0.0
    %4538 = vmatmul.mubr.f32.gmra.mxu0 %v1746
    %v4539 = vpop.f32.mrf.mxu0
    %v4540 = vadd.f32 %v698, %v4539
    %v4541 = vpop.f32.mrf.mxu0
    %4542 = vmatprep.mubr.f32.mxu0 0.0
    %4543 = vmatmul.mubr.f32.gmra.mxu0 %v1749
    %v4544 = vpop.f32.mrf.mxu0
    %v4545 = vadd.f32 %v698, %v4544
    %v4546 = vpop.f32.mrf.mxu0
    %4547 = vmatprep.mubr.f32.mxu0 0.0
    %4548 = vmatmul.mubr.f32.gmra.mxu0 %v1752
    %v4549 = vpop.f32.mrf.mxu0
    %v4550 = vadd.f32 %v698, %v4549
    %v4551 = vpop.f32.mrf.mxu0
    %4552 = vmatprep.mubr.f32.mxu0 0.0
    %4553 = vmatmul.mubr.f32.gmra.mxu0 %v1755
    %v4554 = vpop.f32.mrf.mxu0
    %v4555 = vadd.f32 %v698, %v4554
    %v4556 = vpop.f32.mrf.mxu0
    %4557 = vmatprep.mubr.f32.mxu0 0.0
    %4558 = vmatmul.mubr.f32.gmra.mxu0 %v1758
    %v4559 = vpop.f32.mrf.mxu0
    %v4560 = vadd.f32 %v698, %v4559
    %v4561 = vpop.f32.mrf.mxu0
    %4562 = vmatprep.mubr.f32.mxu0 0.0
    %4563 = vmatmul.mubr.f32.gmra.mxu0 %v1761
    %v4564 = vpop.f32.mrf.mxu0
    %v4565 = vadd.f32 %v698, %v4564
    %v4566 = vpop.f32.mrf.mxu0
    %4567 = vmatprep.mubr.f32.mxu0 0.0
    %4568 = vmatmul.mubr.f32.gmra.mxu0 %v1764
    %v4569 = vpop.f32.mrf.mxu0
    %v4570 = vadd.f32 %v698, %v4569
    %v4571 = vpop.f32.mrf.mxu0
    %4572 = vmatprep.mubr.f32.mxu0 0.0
    %4573 = vmatmul.mubr.f32.gmra.mxu0 %v1767
    %v4574 = vpop.f32.mrf.mxu0
    %v4575 = vadd.f32 %v698, %v4574
    %v4576 = vpop.f32.mrf.mxu0
    %4577 = vmatprep.mubr.f32.mxu0 0.0
    %4578 = vmatmul.mubr.f32.gmra.mxu0 %v1770
    %v4579 = vpop.f32.mrf.mxu0
    %v4580 = vadd.f32 %v698, %v4579
    %v4581 = vpop.f32.mrf.mxu0
    %4582 = vmatprep.mubr.f32.mxu0 0.0
    %4583 = vmatmul.mubr.f32.gmra.mxu0 %v1773
    %v4584 = vpop.f32.mrf.mxu0
    %v4585 = vadd.f32 %v698, %v4584
    %v4586 = vpop.f32.mrf.mxu0
    %4587 = vmatprep.mubr.f32.mxu0 0.0
    %4588 = vmatmul.mubr.f32.gmra.mxu0 %v1776
    %v4589 = vpop.f32.mrf.mxu0
    %v4590 = vadd.f32 %v698, %v4589
    %v4591 = vpop.f32.mrf.mxu0
    %4592 = vmatprep.mubr.f32.mxu0 0.0
    %4593 = vmatmul.mubr.f32.gmra.mxu0 %v1779
    %v4594 = vpop.f32.mrf.mxu0
    %v4595 = vadd.f32 %v698, %v4594
    %v4596 = vpop.f32.mrf.mxu0
    %4597 = vmatprep.mubr.f32.mxu0 0.0
    %4598 = vmatmul.mubr.f32.gmra.mxu0 %v1782
    %v4599 = vpop.f32.mrf.mxu0
    %v4600 = vadd.f32 %v698, %v4599
    %v4601 = vpop.f32.mrf.mxu0
    %4602 = vmatprep.mubr.f32.mxu0 0.0
    %4603 = vmatmul.mubr.f32.gmra.mxu0 %v1785
    %v4604 = vpop.f32.mrf.mxu0
    %v4605 = vadd.f32 %v698, %v4604
    %v4606 = vpop.f32.mrf.mxu0
    %4607 = vmatprep.mubr.f32.mxu0 0.0
    %4608 = vmatmul.mubr.f32.gmra.mxu0 %v1788
    %v4609 = vpop.f32.mrf.mxu0
    %v4610 = vadd.f32 %v698, %v4609
    %v4611 = vpop.f32.mrf.mxu0
    %4612 = vmatprep.mubr.f32.mxu0 0.0
    %4613 = vmatmul.mubr.f32.gmra.mxu0 %v1791
    %v4614 = vpop.f32.mrf.mxu0
    %v4615 = vadd.f32 %v698, %v4614
    %v4616 = vpop.f32.mrf.mxu0
    %4617 = vmatprep.mubr.f32.mxu0 0.0
    %4618 = vmatmul.mubr.f32.gmra.mxu0 %v1794
    %v4619 = vpop.f32.mrf.mxu0
    %v4620 = vadd.f32 %v698, %v4619
    %v4621 = vpop.f32.mrf.mxu0
    %4622 = vmatprep.mubr.f32.mxu0 0.0
    %4623 = vmatmul.mubr.f32.gmra.mxu0 %v1797
    %v4624 = vpop.f32.mrf.mxu0
    %v4625 = vadd.f32 %v698, %v4624
    %v4626 = vpop.f32.mrf.mxu0
    %4627 = vmatprep.mubr.f32.mxu0 0.0
    %4628 = vmatmul.mubr.f32.gmra.mxu0 %v1800
    %v4629 = vpop.f32.mrf.mxu0
    %v4630 = vadd.f32 %v698, %v4629
    %v4631 = vpop.f32.mrf.mxu0
    %4632 = vmatprep.mubr.f32.mxu0 0.0
    %4633 = vmatmul.mubr.f32.gmra.mxu0 %v1803
    %v4634 = vpop.f32.mrf.mxu0
    %v4635 = vadd.f32 %v698, %v4634
    %v4636 = vpop.f32.mrf.mxu0
    %4637 = vmatprep.mubr.f32.mxu0 0.0
    %4638 = vmatmul.mubr.f32.gmra.mxu0 %v1806
    %v4639 = vpop.f32.mrf.mxu0
    %v4640 = vadd.f32 %v698, %v4639
    %v4641 = vpop.f32.mrf.mxu0
    %4642 = vmatprep.mubr.f32.mxu0 0.0
    %4643 = vmatmul.mubr.f32.gmra.mxu0 %v1809
    %v4644 = vpop.f32.mrf.mxu0
    %v4645 = vadd.f32 %v698, %v4644
    %v4646 = vpop.f32.mrf.mxu0
    %4647 = vmatprep.mubr.f32.mxu0 0.0
    %4648 = vmatmul.mubr.f32.gmra.mxu0 %v1812
    %v4649 = vpop.f32.mrf.mxu0
    %v4650 = vadd.f32 %v698, %v4649
    %v4651 = vpop.f32.mrf.mxu0
    %4652 = vmatprep.mubr.f32.mxu0 0.0
    %4653 = vmatmul.mubr.f32.gmra.mxu0 %v1815
    %v4654 = vpop.f32.mrf.mxu0
    %v4655 = vadd.f32 %v698, %v4654
    %v4656 = vpop.f32.mrf.mxu0
    %4657 = vmatprep.mubr.f32.mxu0 0.0
    %4658 = vmatmul.mubr.f32.gmra.mxu0 %v1818
    %v4659 = vpop.f32.mrf.mxu0
    %v4660 = vadd.f32 %v698, %v4659
    %v4661 = vpop.f32.mrf.mxu0
    %4662 = vmatprep.mubr.f32.mxu0 0.0
    %4663 = vmatmul.mubr.f32.gmra.mxu0 %v1821
    %v4664 = vpop.f32.mrf.mxu0
    %v4665 = vadd.f32 %v698, %v4664
    %v4666 = vpop.f32.mrf.mxu0
    %4667 = vmatprep.mubr.f32.mxu0 0.0
    %4668 = vmatmul.mubr.f32.gmra.mxu0 %v1824
    %v4669 = vpop.f32.mrf.mxu0
    %v4670 = vadd.f32 %v698, %v4669
    %v4671 = vpop.f32.mrf.mxu0
    %4672 = vmatprep.mubr.f32.mxu0 0.0
    %4673 = vmatmul.mubr.f32.gmra.mxu0 %v1827
    %v4674 = vpop.f32.mrf.mxu0
    %v4675 = vadd.f32 %v698, %v4674
    %v4676 = vpop.f32.mrf.mxu0
    %4677 = vmatprep.mubr.f32.mxu0 0.0
    %4678 = vmatmul.mubr.f32.gmra.mxu0 %v1830
    %v4679 = vpop.f32.mrf.mxu0
    %v4680 = vadd.f32 %v698, %v4679
    %v4681 = vpop.f32.mrf.mxu0
    %4682 = vmatprep.mubr.f32.mxu0 0.0
    %4683 = vmatmul.mubr.f32.gmra.mxu0 %v1833
    %v4684 = vpop.f32.mrf.mxu0
    %v4685 = vadd.f32 %v698, %v4684
    %v4686 = vpop.f32.mrf.mxu0
    %4687 = vmatprep.mubr.f32.mxu0 0.0
    %4688 = vmatmul.mubr.f32.gmra.mxu0 %v1836
    %v4689 = vpop.f32.mrf.mxu0
    %v4690 = vadd.f32 %v698, %v4689
    %v4691 = vpop.f32.mrf.mxu0
    %4692 = vmatprep.mubr.f32.mxu0 0.0
    %4693 = vmatmul.mubr.f32.gmra.mxu0 %v1839
    %v4694 = vpop.f32.mrf.mxu0
    %v4695 = vadd.f32 %v698, %v4694
    %v4696 = vpop.f32.mrf.mxu0
    %4697 = vmatprep.mubr.f32.mxu0 0.0
    %4698 = vmatmul.mubr.f32.gmra.mxu0 %v1842
    %v4699 = vpop.f32.mrf.mxu0
    %v4700 = vadd.f32 %v698, %v4699
    %v4701 = vpop.f32.mrf.mxu0
    %4702 = vmatprep.mubr.f32.mxu0 0.0
    %4703 = vmatmul.mubr.f32.gmra.mxu0 %v1845
    %v4704 = vpop.f32.mrf.mxu0
    %v4705 = vadd.f32 %v698, %v4704
    %v4706 = vpop.f32.mrf.mxu0
    %4707 = vmatprep.mubr.f32.mxu0 0.0
    %4708 = vmatmul.mubr.f32.gmra.mxu0 %v1848
    %v4709 = vpop.f32.mrf.mxu0
    %v4710 = vadd.f32 %v698, %v4709
    %v4711 = vpop.f32.mrf.mxu0
    %4712 = vmatprep.mubr.f32.mxu0 0.0
    %4713 = vmatmul.mubr.f32.gmra.mxu0 %v1851
    %v4714 = vpop.f32.mrf.mxu0
    %v4715 = vadd.f32 %v698, %v4714
    %v4716 = vpop.f32.mrf.mxu0
    %4717 = vmatprep.mubr.f32.mxu0 0.0
    %4718 = vmatmul.mubr.f32.gmra.mxu0 %v1854
    %v4719 = vpop.f32.mrf.mxu0
    %v4720 = vadd.f32 %v698, %v4719
    %v4721 = vpop.f32.mrf.mxu0
    %4722 = vmatprep.mubr.f32.mxu0 0.0
    %4723 = vmatmul.mubr.f32.gmra.mxu0 %v1857
    %v4724 = vpop.f32.mrf.mxu0
    %v4725 = vadd.f32 %v698, %v4724
    %v4726 = vpop.f32.mrf.mxu0
    %4727 = vmatprep.mubr.f32.mxu0 0.0
    %4728 = vmatmul.mubr.f32.gmra.mxu0 %v1860
    %v4729 = vpop.f32.mrf.mxu0
    %v4730 = vadd.f32 %v698, %v4729
    %v4731 = vpop.f32.mrf.mxu0
    %4732 = vmatprep.mubr.f32.mxu0 0.0
    %4733 = vmatmul.mubr.f32.gmra.mxu0 %v1863
    %v4734 = vpop.f32.mrf.mxu0
    %v4735 = vadd.f32 %v698, %v4734
    %v4736 = vpop.f32.mrf.mxu0
    %4737 = vmatprep.mubr.f32.mxu0 0.0
    %4738 = vmatmul.mubr.f32.gmra.mxu0 %v1866
    %v4739 = vpop.f32.mrf.mxu0
    %v4740 = vadd.f32 %v698, %v4739
    %v4741 = vpop.f32.mrf.mxu0
    %4742 = vmatprep.mubr.f32.mxu0 0.0
    %4743 = vmatmul.mubr.f32.gmra.mxu0 %v1869
    %v4744 = vpop.f32.mrf.mxu0
    %v4745 = vadd.f32 %v698, %v4744
    %v4746 = vpop.f32.mrf.mxu0
    %4747 = vmatprep.mubr.f32.mxu0 0.0
    %4748 = vmatmul.mubr.f32.gmra.mxu0 %v1872
    %v4749 = vpop.f32.mrf.mxu0
    %v4750 = vadd.f32 %v698, %v4749
    %v4751 = vpop.f32.mrf.mxu0
    %4752 = vmatprep.mubr.f32.mxu0 0.0
    %4753 = vmatmul.mubr.f32.gmra.mxu0 %v1875
    %v4754 = vpop.f32.mrf.mxu0
    %v4755 = vadd.f32 %v698, %v4754
    %v4756 = vpop.f32.mrf.mxu0
    %4757 = vmatprep.mubr.f32.mxu0 0.0
    %4758 = vmatmul.mubr.f32.gmra.mxu0 %v1878
    %v4759 = vpop.f32.mrf.mxu0
    %v4760 = vadd.f32 %v698, %v4759
    %v4761 = vpop.f32.mrf.mxu0
    %4762 = vmatprep.mubr.f32.mxu0 0.0
    %4763 = vmatmul.mubr.f32.gmra.mxu0 %v1881
    %v4764 = vpop.f32.mrf.mxu0
    %v4765 = vadd.f32 %v698, %v4764
    %v4766 = vpop.f32.mrf.mxu0
    %4767 = vmatprep.mubr.f32.mxu0 0.0
    %4768 = vmatmul.mubr.f32.gmra.mxu0 %v1884
    %v4769 = vpop.f32.mrf.mxu0
    %v4770 = vadd.f32 %v698, %v4769
    %v4771 = vpop.f32.mrf.mxu0
    %4772 = vmatprep.mubr.f32.mxu0 0.0
    %4773 = vmatmul.mubr.f32.gmra.mxu0 %v1887
    %v4774 = vpop.f32.mrf.mxu0
    %v4775 = vadd.f32 %v698, %v4774
    %v4776 = vpop.f32.mrf.mxu0
    %4777 = vmatprep.mubr.f32.mxu0 0.0
    %4778 = vmatmul.mubr.f32.gmra.mxu0 %v1890
    %v4779 = vpop.f32.mrf.mxu0
    %v4780 = vadd.f32 %v698, %v4779
    %v4781 = vpop.f32.mrf.mxu0
    %4782 = vmatprep.mubr.f32.mxu0 0.0
    %4783 = vmatmul.mubr.f32.gmra.mxu0 %v1893
    %v4784 = vpop.f32.mrf.mxu0
    %v4785 = vadd.f32 %v698, %v4784
    %v4786 = vpop.f32.mrf.mxu0
    %4787 = vmatprep.mubr.f32.mxu0 0.0
    %4788 = vmatmul.mubr.f32.gmra.mxu0 %v1896
    %v4789 = vpop.f32.mrf.mxu0
    %v4790 = vadd.f32 %v698, %v4789
    %v4791 = vpop.f32.mrf.mxu0
    %4792 = vmatprep.mubr.f32.mxu0 0.0
    %4793 = vmatmul.mubr.f32.gmra.mxu0 %v1899
    %v4794 = vpop.f32.mrf.mxu0
    %v4795 = vadd.f32 %v698, %v4794
    %v4796 = vpop.f32.mrf.mxu0
    %4797 = vmatprep.mubr.f32.mxu0 0.0
    %4798 = vmatmul.mubr.f32.gmra.mxu0 %v1902
    %v4799 = vpop.f32.mrf.mxu0
    %v4800 = vadd.f32 %v698, %v4799
    %v4801 = vpop.f32.mrf.mxu0
    %4802 = vmatprep.mubr.f32.mxu0 0.0
    %4803 = vmatmul.mubr.f32.gmra.mxu0 %v1905
    %v4804 = vpop.f32.mrf.mxu0
    %v4805 = vadd.f32 %v698, %v4804
    %v4806 = vpop.f32.mrf.mxu0
    %4807 = vmatprep.mubr.f32.mxu0 0.0
    %4808 = vmatmul.mubr.f32.gmra.mxu0 %v1908
    %v4809 = vpop.f32.mrf.mxu0
    %v4810 = vadd.f32 %v698, %v4809
    %v4811 = vpop.f32.mrf.mxu0
    %4812 = vmatprep.mubr.f32.mxu0 0.0
    %4813 = vmatmul.mubr.f32.gmra.mxu0 %v1911
    %v4814 = vpop.f32.mrf.mxu0
    %v4815 = vadd.f32 %v698, %v4814
    %v4816 = vpop.f32.mrf.mxu0
    %4817 = vmatprep.mubr.f32.mxu0 0.0
    %4818 = vmatmul.mubr.f32.gmra.mxu0 %v1914
    %v4819 = vpop.f32.mrf.mxu0
    %v4820 = vadd.f32 %v698, %v4819
    %v4821 = vpop.f32.mrf.mxu0
    %4822 = vmatprep.mubr.f32.mxu0 0.0
    %4823 = vmatmul.mubr.f32.gmra.mxu0 %v1917
    %v4824 = vpop.f32.mrf.mxu0
    %v4825 = vadd.f32 %v698, %v4824
    %v4826 = vpop.f32.mrf.mxu0
    %4827 = vmatprep.mubr.f32.mxu0 0.0
    %4828 = vmatmul.mubr.f32.gmra.mxu0 %v1920
    %v4829 = vpop.f32.mrf.mxu0
    %v4830 = vadd.f32 %v698, %v4829
    %v4831 = vpop.f32.mrf.mxu0
    %4832 = vmatprep.mubr.f32.mxu0 0.0
    %4833 = vmatmul.mubr.f32.gmra.mxu0 %v1923
    %v4834 = vpop.f32.mrf.mxu0
    %v4835 = vadd.f32 %v698, %v4834
    %v4836 = vpop.f32.mrf.mxu0
    %4837 = vmatprep.mubr.f32.mxu0 0.0
    %4838 = vmatmul.mubr.f32.gmra.mxu0 %v1926
    %v4839 = vpop.f32.mrf.mxu0
    %v4840 = vadd.f32 %v698, %v4839
    %v4841 = vpop.f32.mrf.mxu0
    %4842 = vmatprep.mubr.f32.mxu0 0.0
    %4843 = vmatmul.mubr.f32.gmra.mxu0 %v1929
    %v4844 = vpop.f32.mrf.mxu0
    %v4845 = vadd.f32 %v698, %v4844
    %v4846 = vpop.f32.mrf.mxu0
    %4847 = vmatprep.mubr.f32.mxu0 0.0
    %4848 = vmatmul.mubr.f32.gmra.mxu0 %v1932
    %v4849 = vpop.f32.mrf.mxu0
    %v4850 = vadd.f32 %v698, %v4849
    %v4851 = vpop.f32.mrf.mxu0
    %4852 = vmatprep.mubr.f32.mxu0 0.0
    %4853 = vmatmul.mubr.f32.gmra.mxu0 %v1935
    %v4854 = vpop.f32.mrf.mxu0
    %v4855 = vadd.f32 %v698, %v4854
    %v4856 = vpop.f32.mrf.mxu0
    %4857 = vmatprep.mubr.f32.mxu0 0.0
    %4858 = vmatmul.mubr.f32.gmra.mxu0 %v1938
    %v4859 = vpop.f32.mrf.mxu0
    %v4860 = vadd.f32 %v698, %v4859
    %v4861 = vpop.f32.mrf.mxu0
    %4862 = vmatprep.mubr.f32.mxu0 0.0
    %4863 = vmatmul.mubr.f32.gmra.mxu0 %v1941
    %v4864 = vpop.f32.mrf.mxu0
    %v4865 = vadd.f32 %v698, %v4864
    %v4866 = vpop.f32.mrf.mxu0
    %4867 = vmatprep.mubr.f32.mxu0 0.0
    %4868 = vmatmul.mubr.f32.gmra.mxu0 %v1944
    %v4869 = vpop.f32.mrf.mxu0
    %v4870 = vadd.f32 %v698, %v4869
    %v4871 = vpop.f32.mrf.mxu0
    %4872 = vmatprep.mubr.f32.mxu0 0.0
    %4873 = vmatmul.mubr.f32.gmra.mxu0 %v1947
    %v4874 = vpop.f32.mrf.mxu0
    %v4875 = vadd.f32 %v698, %v4874
    %v4876 = vpop.f32.mrf.mxu0
    %4877 = vmatprep.mubr.f32.mxu0 0.0
    %4878 = vmatmul.mubr.f32.gmra.mxu0 %v1950
    %v4879 = vpop.f32.mrf.mxu0
    %v4880 = vadd.f32 %v698, %v4879
    %v4881 = vpop.f32.mrf.mxu0
    %4882 = vmatprep.mubr.f32.mxu0 0.0
    %4883 = vmatmul.mubr.f32.gmra.mxu0 %v1953
    %v4884 = vpop.f32.mrf.mxu0
    %v4885 = vadd.f32 %v698, %v4884
    %v4886 = vpop.f32.mrf.mxu0
    %4887 = vmatprep.mubr.f32.mxu0 0.0
    %4888 = vmatmul.mubr.f32.gmra.mxu0 %v1956
    %v4889 = vpop.f32.mrf.mxu0
    %v4890 = vadd.f32 %v698, %v4889
    %v4891 = vpop.f32.mrf.mxu0
    %4892 = vmatprep.mubr.f32.mxu0 0.0
    %4893 = vmatmul.mubr.f32.gmra.mxu0 %v1959
    %v4894 = vpop.f32.mrf.mxu0
    %v4895 = vadd.f32 %v698, %v4894
    %v4896 = vpop.f32.mrf.mxu0
    %4897 = vmatprep.mubr.f32.mxu0 0.0
    %4898 = vmatmul.mubr.f32.gmra.mxu0 %v1962
    %v4899 = vpop.f32.mrf.mxu0
    %v4900 = vadd.f32 %v698, %v4899
    %v4901 = vpop.f32.mrf.mxu0
    %4902 = vmatprep.mubr.f32.mxu0 0.0
    %4903 = vmatmul.mubr.f32.gmra.mxu0 %v1965
    %v4904 = vpop.f32.mrf.mxu0
    %v4905 = vadd.f32 %v698, %v4904
    %v4906 = vpop.f32.mrf.mxu0
    %4907 = vmatprep.mubr.f32.mxu0 0.0
    %4908 = vmatmul.mubr.f32.gmra.mxu0 %v1968
    %v4909 = vpop.f32.mrf.mxu0
    %v4910 = vadd.f32 %v698, %v4909
    %v4911 = vpop.f32.mrf.mxu0
    %4912 = vmatprep.mubr.f32.mxu0 0.0
    %4913 = vmatmul.mubr.f32.gmra.mxu0 %v1971
    %v4914 = vpop.f32.mrf.mxu0
    %v4915 = vadd.f32 %v698, %v4914
    %v4916 = vpop.f32.mrf.mxu0
    %4917 = vmatprep.mubr.f32.mxu0 0.0
    %4918 = vmatmul.mubr.f32.gmra.mxu0 %v1974
    %v4919 = vpop.f32.mrf.mxu0
    %v4920 = vadd.f32 %v698, %v4919
    %v4921 = vpop.f32.mrf.mxu0
    %4922 = vmatprep.mubr.f32.mxu0 0.0
    %4923 = vmatmul.mubr.f32.gmra.mxu0 %v1977
    %v4924 = vpop.f32.mrf.mxu0
    %v4925 = vadd.f32 %v698, %v4924
    %v4926 = vpop.f32.mrf.mxu0
    %4927 = vmatprep.mubr.f32.mxu0 0.0
    %4928 = vmatmul.mubr.f32.gmra.mxu0 %v1980
    %v4929 = vpop.f32.mrf.mxu0
    %v4930 = vadd.f32 %v698, %v4929
    %v4931 = vpop.f32.mrf.mxu0
    %4932 = vmatprep.mubr.f32.mxu0 0.0
    %4933 = vmatmul.mubr.f32.gmra.mxu0 %v1983
    %v4934 = vpop.f32.mrf.mxu0
    %v4935 = vadd.f32 %v698, %v4934
    %v4936 = vpop.f32.mrf.mxu0
    %4937 = vmatprep.mubr.f32.mxu0 0.0
    %4938 = vmatmul.mubr.f32.gmra.mxu0 %v1986
    %v4939 = vpop.f32.mrf.mxu0
    %v4940 = vadd.f32 %v698, %v4939
    %v4941 = vpop.f32.mrf.mxu0
    %4942 = vmatprep.mubr.f32.mxu0 0.0
    %4943 = vmatmul.mubr.f32.gmra.mxu0 %v1989
    %v4944 = vpop.f32.mrf.mxu0
    %v4945 = vadd.f32 %v698, %v4944
    %v4946 = vpop.f32.mrf.mxu0
    %4947 = vmatprep.mubr.f32.mxu0 0.0
    %4948 = vmatmul.mubr.f32.gmra.mxu0 %v1992
    %v4949 = vpop.f32.mrf.mxu0
    %v4950 = vadd.f32 %v698, %v4949
    %v4951 = vpop.f32.mrf.mxu0
    %4952 = vmatprep.mubr.f32.mxu0 0.0
    %4953 = vmatmul.mubr.f32.gmra.mxu0 %v1995
    %v4954 = vpop.f32.mrf.mxu0
    %v4955 = vadd.f32 %v698, %v4954
    %v4956 = vpop.f32.mrf.mxu0
    %4957 = vmatprep.mubr.f32.mxu0 0.0
    %4958 = vmatmul.mubr.f32.gmra.mxu0 %v1998
    %v4959 = vpop.f32.mrf.mxu0
    %v4960 = vadd.f32 %v698, %v4959
    %v4961 = vpop.f32.mrf.mxu0
    %4962 = vmatprep.mubr.f32.mxu0 0.0
    %4963 = vmatmul.mubr.f32.gmra.mxu0 %v2001
    %v4964 = vpop.f32.mrf.mxu0
    %v4965 = vadd.f32 %v698, %v4964
    %v4966 = vpop.f32.mrf.mxu0
    %4967 = vmatprep.mubr.f32.mxu0 0.0
    %4968 = vmatmul.mubr.f32.gmra.mxu0 %v2004
    %v4969 = vpop.f32.mrf.mxu0
    %v4970 = vadd.f32 %v698, %v4969
    %v4971 = vpop.f32.mrf.mxu0
    %4972 = vmatprep.mubr.f32.mxu0 0.0
    %4973 = vmatmul.mubr.f32.gmra.mxu0 %v2007
    %v4974 = vpop.f32.mrf.mxu0
    %v4975 = vadd.f32 %v698, %v4974
    %v4976 = vpop.f32.mrf.mxu0
    %4977 = vmatprep.mubr.f32.mxu0 0.0
    %4978 = vmatmul.mubr.f32.gmra.mxu0 %v2010
    %v4979 = vpop.f32.mrf.mxu0
    %v4980 = vadd.f32 %v698, %v4979
    %v4981 = vpop.f32.mrf.mxu0
    %4982 = vmatprep.mubr.f32.mxu0 0.0
    %4983 = vmatmul.mubr.f32.gmra.mxu0 %v2013
    %v4984 = vpop.f32.mrf.mxu0
    %v4985 = vadd.f32 %v698, %v4984
    %v4986 = vpop.f32.mrf.mxu0
    %4987 = vmatprep.mubr.f32.mxu0 0.0
    %4988 = vmatmul.mubr.f32.gmra.mxu0 %v2016
    %v4989 = vpop.f32.mrf.mxu0
    %v4990 = vadd.f32 %v698, %v4989
    %v4991 = vpop.f32.mrf.mxu0
    %4992 = vmatprep.mubr.f32.mxu0 0.0
    %4993 = vmatmul.mubr.f32.gmra.mxu0 %v2019
    %v4994 = vpop.f32.mrf.mxu0
    %v4995 = vadd.f32 %v698, %v4994
    %v4996 = vpop.f32.mrf.mxu0
    %4997 = vmatprep.mubr.f32.mxu0 0.0
    %4998 = vmatmul.mubr.f32.gmra.mxu0 %v2022
    %v4999 = vpop.f32.mrf.mxu0
    %v5000 = vadd.f32 %v698, %v4999
    %v5001 = vpop.f32.mrf.mxu0
    %5002 = vmatprep.mubr.f32.mxu0 0.0
    %5003 = vmatmul.mubr.f32.gmra.mxu0 %v2025
    %v5004 = vpop.f32.mrf.mxu0
    %v5005 = vadd.f32 %v698, %v5004
    %v5006 = vpop.f32.mrf.mxu0
    %5007 = vmatprep.mubr.f32.mxu0 0.0
    %5008 = vmatmul.mubr.f32.gmra.mxu0 %v2028
    %v5009 = vpop.f32.mrf.mxu0
    %v5010 = vadd.f32 %v698, %v5009
    %v5011 = vpop.f32.mrf.mxu0
    %5012 = vmatprep.mubr.f32.mxu0 0.0
    %5013 = vmatmul.mubr.f32.gmra.mxu0 %v2031
    %v5014 = vpop.f32.mrf.mxu0
    %v5015 = vadd.f32 %v698, %v5014
    %v5016 = vpop.f32.mrf.mxu0
    %5017 = vmatprep.mubr.f32.mxu0 0.0
    %5018 = vmatmul.mubr.f32.gmra.mxu0 %v2034
    %v5019 = vpop.f32.mrf.mxu0
    %v5020 = vadd.f32 %v698, %v5019
    %v5021 = vpop.f32.mrf.mxu0
    %5022 = vmatprep.mubr.f32.mxu0 0.0
    %5023 = vmatmul.mubr.f32.gmra.mxu0 %v2037
    %v5024 = vpop.f32.mrf.mxu0
    %v5025 = vadd.f32 %v698, %v5024
    %v5026 = vpop.f32.mrf.mxu0
    %5027 = vmatprep.mubr.f32.mxu0 0.0
    %5028 = vmatmul.mubr.f32.gmra.mxu0 %v2040
    %v5029 = vpop.f32.mrf.mxu0
    %v5030 = vadd.f32 %v698, %v5029
    %v5031 = vpop.f32.mrf.mxu0
    %5032 = vmatprep.mubr.f32.mxu0 0.0
    %5033 = vmatmul.mubr.f32.gmra.mxu0 %v2043
    %v5034 = vpop.f32.mrf.mxu0
    %v5035 = vadd.f32 %v698, %v5034
    %v5036 = vpop.f32.mrf.mxu0
    %5037 = vmatprep.mubr.f32.mxu0 0.0
    %5038 = vmatmul.mubr.f32.gmra.mxu0 %v2046
    %v5039 = vpop.f32.mrf.mxu0
    %v5040 = vadd.f32 %v698, %v5039
    %v5041 = vpop.f32.mrf.mxu0
    %5042 = vmatprep.mubr.f32.mxu0 0.0
    %5043 = vmatmul.mubr.f32.gmra.mxu0 %v2049
    %v5044 = vpop.f32.mrf.mxu0
    %v5045 = vadd.f32 %v698, %v5044
    %v5046 = vpop.f32.mrf.mxu0
    %5047 = vmatprep.mubr.f32.mxu0 0.0
    %5048 = vmatmul.mubr.f32.gmra.mxu0 %v2052
    %v5049 = vpop.f32.mrf.mxu0
    %v5050 = vadd.f32 %v698, %v5049
    %v5051 = vpop.f32.mrf.mxu0
    %5052 = vmatprep.mubr.f32.mxu0 0.0
    %5053 = vmatmul.mubr.f32.gmra.mxu0 %v2055
    %v5054 = vpop.f32.mrf.mxu0
    %v5055 = vadd.f32 %v698, %v5054
    %v5056 = vpop.f32.mrf.mxu0
    %5057 = vmatprep.mubr.f32.mxu0 0.0
    %5058 = vmatmul.mubr.f32.gmra.mxu0 %v2058
    %v5059 = vpop.f32.mrf.mxu0
    %v5060 = vadd.f32 %v698, %v5059
    %v5061 = vpop.f32.mrf.mxu0
    %5062 = vmatprep.mubr.f32.mxu0 0.0
    %5063 = vmatmul.mubr.f32.gmra.mxu0 %v2061
    %v5064 = vpop.f32.mrf.mxu0
    %v5065 = vadd.f32 %v698, %v5064
    %v5066 = vpop.f32.mrf.mxu0
    %5067 = vmatprep.mubr.f32.mxu0 0.0
    %5068 = vmatmul.mubr.f32.gmra.mxu0 %v2064
    %v5069 = vpop.f32.mrf.mxu0
    %v5070 = vadd.f32 %v698, %v5069
    %v5071 = vpop.f32.mrf.mxu0
    %5072 = vmatprep.mubr.f32.mxu0 0.0
    %5073 = vmatmul.mubr.f32.gmra.mxu0 %v2067
    %v5074 = vpop.f32.mrf.mxu0
    %v5075 = vadd.f32 %v698, %v5074
    %v5076 = vpop.f32.mrf.mxu0
    %5077 = vmatprep.mubr.f32.mxu0 0.0
    %5078 = vmatmul.mubr.f32.gmra.mxu0 %v2070
    %v5079 = vpop.f32.mrf.mxu0
    %v5080 = vadd.f32 %v698, %v5079
    %v5081 = vpop.f32.mrf.mxu0
    %5082 = vmatprep.mubr.f32.mxu0 0.0
    %5083 = vmatmul.mubr.f32.gmra.mxu0 %v2073
    %v5084 = vpop.f32.mrf.mxu0
    %v5085 = vadd.f32 %v698, %v5084
    %v5086 = vpop.f32.mrf.mxu0
    %5087 = vmatprep.mubr.f32.mxu0 0.0
    %5088 = vmatmul.mubr.f32.gmra.mxu0 %v2076
    %v5089 = vpop.f32.mrf.mxu0
    %v5090 = vadd.f32 %v698, %v5089
    %v5091 = vpop.f32.mrf.mxu0
    %5092 = vmatprep.mubr.f32.mxu0 0.0
    %5093 = vmatmul.mubr.f32.gmra.mxu0 %v2079
    %v5094 = vpop.f32.mrf.mxu0
    %v5095 = vadd.f32 %v698, %v5094
    %v5096 = vpop.f32.mrf.mxu0
    %5097 = vmatprep.mubr.f32.mxu0 0.0
    %5098 = vmatmul.mubr.f32.gmra.mxu0 %v2082
    %v5099 = vpop.f32.mrf.mxu0
    %v5100 = vadd.f32 %v698, %v5099
    %v5101 = vpop.f32.mrf.mxu0
    %5102 = vmatprep.mubr.f32.mxu0 0.0
    %5103 = vmatmul.mubr.f32.gmra.mxu0 %v2085
    %v5104 = vpop.f32.mrf.mxu0
    %v5105 = vadd.f32 %v698, %v5104
    %v5106 = vpop.f32.mrf.mxu0
    %5107 = vmatprep.mubr.f32.mxu0 0.0
    %5108 = vmatmul.mubr.f32.gmra.mxu0 %v2088
    %v5109 = vpop.f32.mrf.mxu0
    %v5110 = vadd.f32 %v698, %v5109
    %v5111 = vpop.f32.mrf.mxu0
    %5112 = vmatprep.mubr.f32.mxu0 0.0
    %5113 = vmatmul.mubr.f32.gmra.mxu0 %v2091
    %v5114 = vpop.f32.mrf.mxu0
    %v5115 = vadd.f32 %v698, %v5114
    %v5116 = vpop.f32.mrf.mxu0
    %5117 = vmatprep.mubr.f32.mxu0 0.0
    %5118 = vmatmul.mubr.f32.gmra.mxu0 %v2094
    %v5119 = vpop.f32.mrf.mxu0
    %v5120 = vadd.f32 %v698, %v5119
    %v5121 = vpop.f32.mrf.mxu0
    %5122 = vmatprep.mubr.f32.mxu0 0.0
    %5123 = vmatmul.mubr.f32.gmra.mxu0 %v2097
    %v5124 = vpop.f32.mrf.mxu0
    %v5125 = vadd.f32 %v698, %v5124
    %v5126 = vpop.f32.mrf.mxu0
    %5127 = vmatprep.mubr.f32.mxu0 0.0
    %5128 = vmatmul.mubr.f32.gmra.mxu0 %v2100
    %v5129 = vpop.f32.mrf.mxu0
    %v5130 = vadd.f32 %v698, %v5129
    %v5131 = vpop.f32.mrf.mxu0
    %5132 = vmatprep.mubr.f32.mxu0 0.0
    %5133 = vmatmul.mubr.f32.gmra.mxu0 %v2103
    %v5134 = vpop.f32.mrf.mxu0
    %v5135 = vadd.f32 %v698, %v5134
    %v5136 = vpop.f32.mrf.mxu0
    %5137 = vmatprep.mubr.f32.mxu0 0.0
    %5138 = vmatmul.mubr.f32.gmra.mxu0 %v2106
    %v5139 = vpop.f32.mrf.mxu0
    %v5140 = vadd.f32 %v698, %v5139
    %v5141 = vpop.f32.mrf.mxu0
    %5142 = vmatprep.mubr.f32.mxu0 0.0
    %5143 = vmatmul.mubr.f32.gmra.mxu0 %v2109
    %v5144 = vpop.f32.mrf.mxu0
    %v5145 = vadd.f32 %v698, %v5144
    %v5146 = vpop.f32.mrf.mxu0
    %5147 = vmatprep.mubr.f32.mxu0 0.0
    %5148 = vmatmul.mubr.f32.gmra.mxu0 %v2112
    %v5149 = vpop.f32.mrf.mxu0
    %v5150 = vadd.f32 %v698, %v5149
    %v5151 = vpop.f32.mrf.mxu0
    %5152 = vmatprep.mubr.f32.mxu0 0.0
    %5153 = vmatmul.mubr.f32.gmra.mxu0 %v2115
    %v5154 = vpop.f32.mrf.mxu0
    %v5155 = vadd.f32 %v698, %v5154
    %v5156 = vpop.f32.mrf.mxu0
    %5157 = vmatprep.mubr.f32.mxu0 0.0
    %5158 = vmatmul.mubr.f32.gmra.mxu0 %v2118
    %v5159 = vpop.f32.mrf.mxu0
    %v5160 = vadd.f32 %v698, %v5159
    %v5161 = vpop.f32.mrf.mxu0
    %5162 = vmatprep.mubr.f32.mxu0 0.0
    %5163 = vmatmul.mubr.f32.gmra.mxu0 %v2121
    %v5164 = vpop.f32.mrf.mxu0
    %v5165 = vadd.f32 %v698, %v5164
    %v5166 = vpop.f32.mrf.mxu0
    %5167 = vmatprep.mubr.f32.mxu0 0.0
    %5168 = vmatmul.mubr.f32.gmra.mxu0 %v2124
    %v5169 = vpop.f32.mrf.mxu0
    %v5170 = vadd.f32 %v698, %v5169
    %v5171 = vpop.f32.mrf.mxu0
    %5172 = vmatprep.mubr.f32.mxu0 0.0
    %5173 = vmatmul.mubr.f32.gmra.mxu0 %v2127
    %v5174 = vpop.f32.mrf.mxu0
    %v5175 = vadd.f32 %v698, %v5174
    %v5176 = vpop.f32.mrf.mxu0
    %5177 = vmatprep.mubr.f32.mxu0 0.0
    %5178 = vmatmul.mubr.f32.gmra.mxu0 %v2130
    %v5179 = vpop.f32.mrf.mxu0
    %v5180 = vadd.f32 %v698, %v5179
    %v5181 = vpop.f32.mrf.mxu0
    %5182 = vmatprep.mubr.f32.mxu0 0.0
    %5183 = vmatmul.mubr.f32.gmra.mxu0 %v2133
    %v5184 = vpop.f32.mrf.mxu0
    %v5185 = vadd.f32 %v698, %v5184
    %v5186 = vpop.f32.mrf.mxu0
    %5187 = vmatprep.mubr.f32.mxu0 0.0
    %5188 = vmatmul.mubr.f32.gmra.mxu0 %v2136
    %v5189 = vpop.f32.mrf.mxu0
    %v5190 = vadd.f32 %v698, %v5189
    %v5191 = vpop.f32.mrf.mxu0
    %5192 = vmatprep.mubr.f32.mxu0 0.0
    %5193 = vmatmul.mubr.f32.gmra.mxu0 %v2139
    %v5194 = vpop.f32.mrf.mxu0
    %v5195 = vadd.f32 %v698, %v5194
    %v5196 = vpop.f32.mrf.mxu0
    %5197 = vmatprep.mubr.f32.mxu0 0.0
    %5198 = vmatmul.mubr.f32.gmra.mxu0 %v2142
    %v5199 = vpop.f32.mrf.mxu0
    %v5200 = vadd.f32 %v698, %v5199
    %v5201 = vpop.f32.mrf.mxu0
    %5202 = vmatprep.mubr.f32.mxu0 0.0
    %5203 = vmatmul.mubr.f32.gmra.mxu0 %v2145
    %v5204 = vpop.f32.mrf.mxu0
    %v5205 = vadd.f32 %v698, %v5204
    %v5206 = vpop.f32.mrf.mxu0
    %5207 = vmatprep.mubr.f32.mxu0 0.0
    %5208 = vmatmul.mubr.f32.gmra.mxu0 %v2148
    %v5209 = vpop.f32.mrf.mxu0
    %v5210 = vadd.f32 %v698, %v5209
    %v5211 = vpop.f32.mrf.mxu0
    %5212 = vmatprep.mubr.f32.mxu0 0.0
    %5213 = vmatmul.mubr.f32.gmra.mxu0 %v2151
    %v5214 = vpop.f32.mrf.mxu0
    %v5215 = vadd.f32 %v698, %v5214
    %v5216 = vpop.f32.mrf.mxu0
    %5217 = vmatprep.mubr.f32.mxu0 0.0
    %5218 = vmatmul.mubr.f32.gmra.mxu0 %v2154
    %v5219 = vpop.f32.mrf.mxu0
    %v5220 = vadd.f32 %v698, %v5219
    %v5221 = vpop.f32.mrf.mxu0
    %5222 = vmatprep.mubr.f32.mxu0 0.0
    %5223 = vmatmul.mubr.f32.gmra.mxu0 %v2157
    %v5224 = vpop.f32.mrf.mxu0
    %v5225 = vadd.f32 %v698, %v5224
    %v5226 = vpop.f32.mrf.mxu0
    %5227 = vmatprep.mubr.f32.mxu0 0.0
    %5228 = vmatmul.mubr.f32.gmra.mxu0 %v2160
    %v5229 = vpop.f32.mrf.mxu0
    %v5230 = vadd.f32 %v698, %v5229
    %v5231 = vpop.f32.mrf.mxu0
    %5232 = vmatprep.mubr.f32.mxu0 0.0
    %5233 = vmatmul.mubr.f32.gmra.mxu0 %v2163
    %v5234 = vpop.f32.mrf.mxu0
    %v5235 = vadd.f32 %v698, %v5234
    %v5236 = vpop.f32.mrf.mxu0
    %5237 = vmatprep.mubr.f32.mxu0 0.0
    %5238 = vmatmul.mubr.f32.gmra.mxu0 %v2166
    %v5239 = vpop.f32.mrf.mxu0
    %v5240 = vadd.f32 %v698, %v5239
    %v5241 = vpop.f32.mrf.mxu0
    %5242 = vmatprep.mubr.f32.mxu0 0.0
    %5243 = vmatmul.mubr.f32.gmra.mxu0 %v2169
    %v5244 = vpop.f32.mrf.mxu0
    %v5245 = vadd.f32 %v698, %v5244
    %v5246 = vpop.f32.mrf.mxu0
    %5247 = vmatprep.mubr.f32.mxu0 0.0
    %5248 = vmatmul.mubr.f32.gmra.mxu0 %v2172
    %v5249 = vpop.f32.mrf.mxu0
    %v5250 = vadd.f32 %v698, %v5249
    %v5251 = vpop.f32.mrf.mxu0
    %5252 = vmatprep.mubr.f32.mxu0 0.0
    %5253 = vmatmul.mubr.f32.gmra.mxu0 %v2175
    %v5254 = vpop.f32.mrf.mxu0
    %v5255 = vadd.f32 %v698, %v5254
    %v5256 = vpop.f32.mrf.mxu0
    %5257 = vmatprep.mubr.f32.mxu0 0.0
    %5258 = vmatmul.mubr.f32.gmra.mxu0 %v2178
    %v5259 = vpop.f32.mrf.mxu0
    %v5260 = vadd.f32 %v698, %v5259
    %v5261 = vpop.f32.mrf.mxu0
    %5262 = vmatprep.mubr.f32.mxu0 0.0
    %5263 = vmatmul.mubr.f32.gmra.mxu0 %v2181
    %v5264 = vpop.f32.mrf.mxu0
    %v5265 = vadd.f32 %v698, %v5264
    %v5266 = vpop.f32.mrf.mxu0
    %5267 = vmatprep.mubr.f32.mxu0 0.0
    %5268 = vmatmul.mubr.f32.gmra.mxu0 %v2184
    %v5269 = vpop.f32.mrf.mxu0
    %v5270 = vadd.f32 %v698, %v5269
    %v5271 = vpop.f32.mrf.mxu0
    %5272 = vmatprep.mubr.f32.mxu0 0.0
    %5273 = vmatmul.mubr.f32.gmra.mxu0 %v2187
    %v5274 = vpop.f32.mrf.mxu0
    %v5275 = vadd.f32 %v698, %v5274
    %v5276 = vpop.f32.mrf.mxu0
    %5277 = vmatprep.mubr.f32.mxu0 0.0
    %5278 = vmatmul.mubr.f32.gmra.mxu0 %v2190
    %v5279 = vpop.f32.mrf.mxu0
    %v5280 = vadd.f32 %v698, %v5279
    %v5281 = vpop.f32.mrf.mxu0
    %5282 = vmatprep.mubr.f32.mxu0 0.0
    %5283 = vmatmul.mubr.f32.gmra.mxu0 %v2193
    %v5284 = vpop.f32.mrf.mxu0
    %v5285 = vadd.f32 %v698, %v5284
    %v5286 = vpop.f32.mrf.mxu0
    %5287 = vmatprep.mubr.f32.mxu0 0.0
    %5288 = vmatmul.mubr.f32.gmra.mxu0 %v2196
    %v5289 = vpop.f32.mrf.mxu0
    %v5290 = vadd.f32 %v698, %v5289
    %v5291 = vpop.f32.mrf.mxu0
    %5292 = vmatprep.mubr.f32.mxu0 0.0
    %5293 = vmatmul.mubr.f32.gmra.mxu0 %v2199
    %v5294 = vpop.f32.mrf.mxu0
    %v5295 = vadd.f32 %v698, %v5294
    %v5296 = vpop.f32.mrf.mxu0
    %5297 = vmatprep.mubr.f32.mxu0 0.0
    %5298 = vmatmul.mubr.f32.gmra.mxu0 %v2202
    %v5299 = vpop.f32.mrf.mxu0
    %v5300 = vadd.f32 %v698, %v5299
    %v5301 = vpop.f32.mrf.mxu0
    %5302 = vmatprep.mubr.f32.mxu0 0.0
    %5303 = vmatmul.mubr.f32.gmra.mxu0 %v2205
    %v5304 = vpop.f32.mrf.mxu0
    %v5305 = vadd.f32 %v698, %v5304
    %v5306 = vpop.f32.mrf.mxu0
    %5307 = vmatprep.mubr.f32.mxu0 0.0
    %5308 = vmatmul.mubr.f32.gmra.mxu0 %v2208
    %v5309 = vpop.f32.mrf.mxu0
    %v5310 = vadd.f32 %v698, %v5309
    %v5311 = vpop.f32.mrf.mxu0
    %5312 = vmatprep.mubr.f32.mxu0 0.0
    %5313 = vmatmul.mubr.f32.gmra.mxu0 %v2211
    %v5314 = vpop.f32.mrf.mxu0
    %v5315 = vadd.f32 %v698, %v5314
    %v5316 = vpop.f32.mrf.mxu0
    %5317 = vmatprep.mubr.f32.mxu0 0.0
    %5318 = vmatmul.mubr.f32.gmra.mxu0 %v2214
    %v5319 = vpop.f32.mrf.mxu0
    %v5320 = vadd.f32 %v698, %v5319
    %v5321 = vpop.f32.mrf.mxu0
    %5322 = vmatprep.mubr.f32.mxu0 0.0
    %5323 = vmatmul.mubr.f32.gmra.mxu0 %v2217
    %v5324 = vpop.f32.mrf.mxu0
    %v5325 = vadd.f32 %v698, %v5324
    %v5326 = vpop.f32.mrf.mxu0
    %5327 = vmatprep.mubr.f32.mxu0 0.0
    %5328 = vmatmul.mubr.f32.gmra.mxu0 %v2220
    %v5329 = vpop.f32.mrf.mxu0
    %v5330 = vadd.f32 %v698, %v5329
    %v5331 = vpop.f32.mrf.mxu0
    %5332 = vmatprep.mubr.f32.mxu0 0.0
    %5333 = vmatmul.mubr.f32.gmra.mxu0 %v2223
    %v5334 = vpop.f32.mrf.mxu0
    %v5335 = vadd.f32 %v698, %v5334
    %v5336 = vpop.f32.mrf.mxu0
    %5337 = vmatprep.mubr.f32.mxu0 0.0
    %5338 = vmatmul.mubr.f32.gmra.mxu0 %v2226
    %v5339 = vpop.f32.mrf.mxu0
    %v5340 = vadd.f32 %v698, %v5339
    %v5341 = vpop.f32.mrf.mxu0
    %5342 = vmatprep.mubr.f32.mxu0 0.0
    %5343 = vmatmul.mubr.f32.gmra.mxu0 %v2229
    %v5344 = vpop.f32.mrf.mxu0
    %v5345 = vadd.f32 %v698, %v5344
    %v5346 = vpop.f32.mrf.mxu0
    %5347 = vmatprep.mubr.f32.mxu0 0.0
    %5348 = vmatmul.mubr.f32.gmra.mxu0 %v2232
    %v5349 = vpop.f32.mrf.mxu0
    %v5350 = vadd.f32 %v698, %v5349
    %v5351 = vpop.f32.mrf.mxu0
    %5352 = vmatprep.mubr.f32.mxu0 0.0
    %5353 = vmatmul.mubr.f32.gmra.mxu0 %v2235
    %v5354 = vpop.f32.mrf.mxu0
    %v5355 = vadd.f32 %v698, %v5354
    %v5356 = vpop.f32.mrf.mxu0
    %5357 = vmatprep.mubr.f32.mxu0 0.0
    %5358 = vmatmul.mubr.f32.gmra.mxu0 %v2238
    %v5359 = vpop.f32.mrf.mxu0
    %v5360 = vadd.f32 %v698, %v5359
    %v5361 = vpop.f32.mrf.mxu0
    %5362 = vmatprep.mubr.f32.mxu0 0.0
    %5363 = vmatmul.mubr.f32.gmra.mxu0 %v2241
    %v5364 = vpop.f32.mrf.mxu0
    %v5365 = vadd.f32 %v698, %v5364
    %v5366 = vpop.f32.mrf.mxu0
    %5367 = vmatprep.mubr.f32.mxu0 0.0
    %5368 = vmatmul.mubr.f32.gmra.mxu0 %v2244
    %v5369 = vpop.f32.mrf.mxu0
    %v5370 = vadd.f32 %v698, %v5369
    %v5371 = vpop.f32.mrf.mxu0
    %5372 = vmatprep.mubr.f32.mxu0 0.0
    %5373 = vmatmul.mubr.f32.gmra.mxu0 %v2247
    %v5374 = vpop.f32.mrf.mxu0
    %v5375 = vadd.f32 %v698, %v5374
    %v5376 = vpop.f32.mrf.mxu0
    %5377 = vmatprep.mubr.f32.mxu0 0.0
    %5378 = vmatmul.mubr.f32.gmra.mxu0 %v2250
    %v5379 = vpop.f32.mrf.mxu0
    %v5380 = vadd.f32 %v698, %v5379
    %v5381 = vpop.f32.mrf.mxu0
    %5382 = vmatprep.mubr.f32.mxu0 0.0
    %5383 = vmatmul.mubr.f32.gmra.mxu0 %v2253
    %v5384 = vpop.f32.mrf.mxu0
    %v5385 = vadd.f32 %v698, %v5384
    %v5386 = vpop.f32.mrf.mxu0
    %5387 = vmatprep.mubr.f32.mxu0 0.0
    %5388 = vmatmul.mubr.f32.gmra.mxu0 %v2256
    %v5389 = vpop.f32.mrf.mxu0
    %v5390 = vadd.f32 %v698, %v5389
    %v5391 = vpop.f32.mrf.mxu0
    %5392 = vmatprep.mubr.f32.mxu0 0.0
    %5393 = vmatmul.mubr.f32.gmra.mxu0 %v2259
    %v5394 = vpop.f32.mrf.mxu0
    %v5395 = vadd.f32 %v698, %v5394
    %v5396 = vpop.f32.mrf.mxu0
    %5397 = vmatprep.mubr.f32.mxu0 0.0
    %5398 = vmatmul.mubr.f32.gmra.mxu0 %v2262
    %v5399 = vpop.f32.mrf.mxu0
    %v5400 = vadd.f32 %v698, %v5399
    %v5401 = vpop.f32.mrf.mxu0
    %5402 = vmatprep.mubr.f32.mxu0 0.0
    %5403 = vmatmul.mubr.f32.gmra.mxu0 %v2265
    %v5404 = vpop.f32.mrf.mxu0
    %v5405 = vadd.f32 %v698, %v5404
    %v5406 = vpop.f32.mrf.mxu0
    %5407 = vmatprep.mubr.f32.mxu0 0.0
    %5408 = vmatmul.mubr.f32.gmra.mxu0 %v2268
    %v5409 = vpop.f32.mrf.mxu0
    %v5410 = vadd.f32 %v698, %v5409
    %v5411 = vpop.f32.mrf.mxu0
    %5412 = vmatprep.mubr.f32.mxu0 0.0
    %5413 = vmatmul.mubr.f32.gmra.mxu0 %v2271
    %v5414 = vpop.f32.mrf.mxu0
    %v5415 = vadd.f32 %v698, %v5414
    %v5416 = vpop.f32.mrf.mxu0
    %5417 = vmatprep.mubr.f32.mxu0 0.0
    %5418 = vmatmul.mubr.f32.gmra.mxu0 %v2274
    %v5419 = vpop.f32.mrf.mxu0
    %v5420 = vadd.f32 %v698, %v5419
    %v5421 = vpop.f32.mrf.mxu0
    %5422 = vmatprep.mubr.f32.mxu0 0.0
    %5423 = vmatmul.mubr.f32.gmra.mxu0 %v2277
    %v5424 = vpop.f32.mrf.mxu0
    %v5425 = vadd.f32 %v698, %v5424
    %v5426 = vpop.f32.mrf.mxu0
    %5427 = vmatprep.mubr.f32.mxu0 0.0
    %5428 = vmatmul.mubr.f32.gmra.mxu0 %v2280
    %v5429 = vpop.f32.mrf.mxu0
    %v5430 = vadd.f32 %v698, %v5429
    %v5431 = vpop.f32.mrf.mxu0
    %5432 = vmatprep.mubr.f32.mxu0 0.0
    %5433 = vmatmul.mubr.f32.gmra.mxu0 %v2283
    %v5434 = vpop.f32.mrf.mxu0
    %v5435 = vadd.f32 %v698, %v5434
    %v5436 = vpop.f32.mrf.mxu0
    %5437 = vmatprep.mubr.f32.mxu0 0.0
    %5438 = vmatmul.mubr.f32.gmra.mxu0 %v2286
    %v5439 = vpop.f32.mrf.mxu0
    %v5440 = vadd.f32 %v698, %v5439
    %v5441 = vpop.f32.mrf.mxu0
    %5442 = vmatprep.mubr.f32.mxu0 0.0
    %5443 = vmatmul.mubr.f32.gmra.mxu0 %v2289
    %v5444 = vpop.f32.mrf.mxu0
    %v5445 = vadd.f32 %v698, %v5444
    %v5446 = vpop.f32.mrf.mxu0
    %5447 = vmatprep.mubr.f32.mxu0 0.0
    %5448 = vmatmul.mubr.f32.gmra.mxu0 %v2292
    %v5449 = vpop.f32.mrf.mxu0
    %v5450 = vadd.f32 %v698, %v5449
    %v5451 = vpop.f32.mrf.mxu0
    %5452 = vmatprep.mubr.f32.mxu0 0.0
    %5453 = vmatmul.mubr.f32.gmra.mxu0 %v2295
    %v5454 = vpop.f32.mrf.mxu0
    %v5455 = vadd.f32 %v698, %v5454
    %v5456 = vpop.f32.mrf.mxu0
    %5457 = vmatprep.mubr.f32.mxu0 0.0
    %5458 = vmatmul.mubr.f32.gmra.mxu0 %v2298
    %v5459 = vpop.f32.mrf.mxu0
    %v5460 = vadd.f32 %v698, %v5459
    %v5461 = vpop.f32.mrf.mxu0
    %5462 = vmatprep.mubr.f32.mxu0 0.0
    %5463 = vmatmul.mubr.f32.gmra.mxu0 %v2301
    %v5464 = vpop.f32.mrf.mxu0
    %v5465 = vadd.f32 %v698, %v5464
    %v5466 = vpop.f32.mrf.mxu0
    %5467 = vmatprep.mubr.f32.mxu0 0.0
    %5468 = vmatmul.mubr.f32.gmra.mxu0 %v2304
    %v5469 = vpop.f32.mrf.mxu0
    %v5470 = vadd.f32 %v698, %v5469
    %v5471 = vpop.f32.mrf.mxu0
    %5472 = vmatprep.mubr.f32.mxu0 0.0
    %5473 = vmatmul.mubr.f32.gmra.mxu0 %v2307
    %v5474 = vpop.f32.mrf.mxu0
    %v5475 = vadd.f32 %v698, %v5474
    %v5476 = vpop.f32.mrf.mxu0
    %5477 = vmatprep.mubr.f32.mxu0 0.0
    %5478 = vmatmul.mubr.f32.gmra.mxu0 %v2310
    %v5479 = vpop.f32.mrf.mxu0
    %v5480 = vadd.f32 %v698, %v5479
    %v5481 = vpop.f32.mrf.mxu0
    %5482 = vmatprep.mubr.f32.mxu0 0.0
    %5483 = vmatmul.mubr.f32.gmra.mxu0 %v2313
    %v5484 = vpop.f32.mrf.mxu0
    %v5485 = vadd.f32 %v698, %v5484
    %v5486 = vpop.f32.mrf.mxu0
    %5487 = vmatprep.mubr.f32.mxu0 0.0
    %5488 = vmatmul.mubr.f32.gmra.mxu0 %v2316
    %v5489 = vpop.f32.mrf.mxu0
    %v5490 = vadd.f32 %v698, %v5489
    %v5491 = vpop.f32.mrf.mxu0
    %5492 = vmatprep.mubr.f32.mxu0 0.0
    %5493 = vmatmul.mubr.f32.gmra.mxu0 %v2319
    %v5494 = vpop.f32.mrf.mxu0
    %v5495 = vadd.f32 %v698, %v5494
    %v5496 = vpop.f32.mrf.mxu0
    %5497 = vmatprep.mubr.f32.mxu0 0.0
    %5498 = vmatmul.mubr.f32.gmra.mxu0 %v2322
    %v5499 = vpop.f32.mrf.mxu0
    %v5500 = vadd.f32 %v698, %v5499
    %v5501 = vpop.f32.mrf.mxu0
    %5502 = vmatprep.mubr.f32.mxu0 0.0
    %5503 = vmatmul.mubr.f32.gmra.mxu0 %v2325
    %v5504 = vpop.f32.mrf.mxu0
    %v5505 = vadd.f32 %v698, %v5504
    %v5506 = vpop.f32.mrf.mxu0
    %5507 = vmatprep.mubr.f32.mxu0 0.0
    %5508 = vmatmul.mubr.f32.gmra.mxu0 %v2328
    %v5509 = vpop.f32.mrf.mxu0
    %v5510 = vadd.f32 %v698, %v5509
    %v5511 = vpop.f32.mrf.mxu0
    %5512 = vmatprep.mubr.f32.mxu0 0.0
    %5513 = vmatmul.mubr.f32.gmra.mxu0 %v2331
    %v5514 = vpop.f32.mrf.mxu0
    %v5515 = vadd.f32 %v698, %v5514
    %v5516 = vpop.f32.mrf.mxu0
    %5517 = vmatprep.mubr.f32.mxu0 0.0
    %5518 = vmatmul.mubr.f32.gmra.mxu0 %v2334
    %v5519 = vpop.f32.mrf.mxu0
    %v5520 = vadd.f32 %v698, %v5519
    %v5521 = vpop.f32.mrf.mxu0
    %5522 = vmatprep.mubr.f32.mxu0 0.0
    %5523 = vmatmul.mubr.f32.gmra.mxu0 %v2337
    %v5524 = vpop.f32.mrf.mxu0
    %v5525 = vadd.f32 %v698, %v5524
    %v5526 = vpop.f32.mrf.mxu0
    %5527 = vmatprep.mubr.f32.mxu0 0.0
    %5528 = vmatmul.mubr.f32.gmra.mxu0 %v2340
    %v5529 = vpop.f32.mrf.mxu0
    %v5530 = vadd.f32 %v698, %v5529
    %v5531 = vpop.f32.mrf.mxu0
    %5532 = vmatprep.mubr.f32.mxu0 0.0
    %5533 = vmatmul.mubr.f32.gmra.mxu0 %v2343
    %v5534 = vpop.f32.mrf.mxu0
    %v5535 = vadd.f32 %v698, %v5534
    %v5536 = vpop.f32.mrf.mxu0
    %5537 = vmatprep.mubr.f32.mxu0 0.0
    %5538 = vmatmul.mubr.f32.gmra.mxu0 %v2346
    %v5539 = vpop.f32.mrf.mxu0
    %v5540 = vadd.f32 %v698, %v5539
    %v5541 = vpop.f32.mrf.mxu0
    %5542 = vmatprep.mubr.f32.mxu0 0.0
    %5543 = vmatmul.mubr.f32.gmra.mxu0 %v2349
    %v5544 = vpop.f32.mrf.mxu0
    %v5545 = vadd.f32 %v698, %v5544
    %v5546 = vpop.f32.mrf.mxu0
    %5547 = vmatprep.mubr.f32.mxu0 0.0
    %5548 = vmatmul.mubr.f32.gmra.mxu0 %v2352
    %v5549 = vpop.f32.mrf.mxu0
    %v5550 = vadd.f32 %v698, %v5549
    %v5551 = vpop.f32.mrf.mxu0
    %5552 = vmatprep.mubr.f32.mxu0 0.0
    %5553 = vmatmul.mubr.f32.gmra.mxu0 %v2355
    %v5554 = vpop.f32.mrf.mxu0
    %v5555 = vadd.f32 %v698, %v5554
    %v5556 = vpop.f32.mrf.mxu0
    %5557 = vmatprep.mubr.f32.mxu0 0.0
    %5558 = vmatmul.mubr.f32.gmra.mxu0 %v2358
    %v5559 = vpop.f32.mrf.mxu0
    %v5560 = vadd.f32 %v698, %v5559
    %v5561 = vpop.f32.mrf.mxu0
    %5562 = vmatprep.mubr.f32.mxu0 0.0
    %5563 = vmatmul.mubr.f32.gmra.mxu0 %v2361
    %v5564 = vpop.f32.mrf.mxu0
    %v5565 = vadd.f32 %v698, %v5564
    %v5566 = vpop.f32.mrf.mxu0
    %5567 = vmatprep.mubr.f32.mxu0 0.0
    %5568 = vmatmul.mubr.f32.gmra.mxu0 %v2364
    %v5569 = vpop.f32.mrf.mxu0
    %v5570 = vadd.f32 %v698, %v5569
    %v5571 = vpop.f32.mrf.mxu0
    %5572 = vmatprep.mubr.f32.mxu0 0.0
    %5573 = vmatmul.mubr.f32.gmra.mxu0 %v2367
    %v5574 = vpop.f32.mrf.mxu0
    %v5575 = vadd.f32 %v698, %v5574
    %v5576 = vpop.f32.mrf.mxu0
    %5577 = vmatprep.mubr.f32.mxu0 0.0
    %5578 = vmatmul.mubr.f32.gmra.mxu0 %v2370
    %v5579 = vpop.f32.mrf.mxu0
    %v5580 = vadd.f32 %v698, %v5579
    %v5581 = vpop.f32.mrf.mxu0
    %5582 = vmatprep.mubr.f32.mxu0 0.0
    %5583 = vmatmul.mubr.f32.gmra.mxu0 %v2373
    %v5584 = vpop.f32.mrf.mxu0
    %v5585 = vadd.f32 %v698, %v5584
    %v5586 = vpop.f32.mrf.mxu0
    %5587 = vmatprep.mubr.f32.mxu0 0.0
    %5588 = vmatmul.mubr.f32.gmra.mxu0 %v2376
    %v5589 = vpop.f32.mrf.mxu0
    %v5590 = vadd.f32 %v698, %v5589
    %v5591 = vpop.f32.mrf.mxu0
    %5592 = vmatprep.mubr.f32.mxu0 0.0
    %5593 = vmatmul.mubr.f32.gmra.mxu0 %v2379
    %v5594 = vpop.f32.mrf.mxu0
    %v5595 = vadd.f32 %v698, %v5594
    %v5596 = vpop.f32.mrf.mxu0
    %5597 = vmatprep.mubr.f32.mxu0 0.0
    %5598 = vmatmul.mubr.f32.gmra.mxu0 %v2382
    %v5599 = vpop.f32.mrf.mxu0
    %v5600 = vadd.f32 %v698, %v5599
    %v5601 = vpop.f32.mrf.mxu0
    %5602 = vmatprep.mubr.f32.mxu0 0.0
    %5603 = vmatmul.mubr.f32.gmra.mxu0 %v2385
    %v5604 = vpop.f32.mrf.mxu0
    %v5605 = vadd.f32 %v698, %v5604
    %v5606 = vpop.f32.mrf.mxu0
    %5607 = vmatprep.mubr.f32.mxu0 0.0
    %5608 = vmatmul.mubr.f32.gmra.mxu0 %v2388
    %v5609 = vpop.f32.mrf.mxu0
    %v5610 = vadd.f32 %v698, %v5609
    %v5611 = vpop.f32.mrf.mxu0
    %5612 = vmatprep.mubr.f32.mxu0 0.0
    %5613 = vmatmul.mubr.f32.gmra.mxu0 %v2391
    %v5614 = vpop.f32.mrf.mxu0
    %v5615 = vadd.f32 %v698, %v5614
    %v5616 = vpop.f32.mrf.mxu0
    %5617 = vmatprep.mubr.f32.mxu0 0.0
    %5618 = vmatmul.mubr.f32.gmra.mxu0 %v2394
    %v5619 = vpop.f32.mrf.mxu0
    %v5620 = vadd.f32 %v698, %v5619
    %v5621 = vpop.f32.mrf.mxu0
    %5622 = vmatprep.mubr.f32.mxu0 0.0
    %5623 = vmatmul.mubr.f32.gmra.mxu0 %v2397
    %v5624 = vpop.f32.mrf.mxu0
    %v5625 = vadd.f32 %v698, %v5624
    %v5626 = vpop.f32.mrf.mxu0
    %5627 = vmatprep.mubr.f32.mxu0 0.0
    %5628 = vmatmul.mubr.f32.gmra.mxu0 %v2400
    %v5629 = vpop.f32.mrf.mxu0
    %v5630 = vadd.f32 %v698, %v5629
    %v5631 = vpop.f32.mrf.mxu0
    %5632 = vmatprep.mubr.f32.mxu0 0.0
    %5633 = vmatmul.mubr.f32.gmra.mxu0 %v2403
    %v5634 = vpop.f32.mrf.mxu0
    %v5635 = vadd.f32 %v698, %v5634
    %v5636 = vpop.f32.mrf.mxu0
    %5637 = vmatprep.mubr.f32.mxu0 0.0
    %5638 = vmatmul.mubr.f32.gmra.mxu0 %v2406
    %v5639 = vpop.f32.mrf.mxu0
    %v5640 = vadd.f32 %v698, %v5639
    %v5641 = vpop.f32.mrf.mxu0
    %5642 = vmatprep.mubr.f32.mxu0 0.0
    %5643 = vmatmul.mubr.f32.gmra.mxu0 %v2409
    %v5644 = vpop.f32.mrf.mxu0
    %v5645 = vadd.f32 %v698, %v5644
    %v5646 = vpop.f32.mrf.mxu0
    %5647 = vmatprep.mubr.f32.mxu0 0.0
    %5648 = vmatmul.mubr.f32.gmra.mxu0 %v2412
    %v5649 = vpop.f32.mrf.mxu0
    %v5650 = vadd.f32 %v698, %v5649
    %v5651 = vpop.f32.mrf.mxu0
    %5652 = vmatprep.mubr.f32.mxu0 0.0
    %5653 = vmatmul.mubr.f32.gmra.mxu0 %v2415
    %v5654 = vpop.f32.mrf.mxu0
    %v5655 = vadd.f32 %v698, %v5654
    %v5656 = vpop.f32.mrf.mxu0
    %5657 = vmatprep.mubr.f32.mxu0 0.0
    %5658 = vmatmul.mubr.f32.gmra.mxu0 %v2418
    %v5659 = vpop.f32.mrf.mxu0
    %v5660 = vadd.f32 %v698, %v5659
    %v5661 = vpop.f32.mrf.mxu0
    %5662 = vmatprep.mubr.f32.mxu0 0.0
    %5663 = vmatmul.mubr.f32.gmra.mxu0 %v2421
    %v5664 = vpop.f32.mrf.mxu0
    %v5665 = vadd.f32 %v698, %v5664
    %v5666 = vpop.f32.mrf.mxu0
    %5667 = vmatprep.mubr.f32.mxu0 0.0
    %5668 = vmatmul.mubr.f32.gmra.mxu0 %v2424
    %v5669 = vpop.f32.mrf.mxu0
    %v5670 = vadd.f32 %v698, %v5669
    %v5671 = vpop.f32.mrf.mxu0
    %5672 = vmatprep.mubr.f32.mxu0 0.0
    %5673 = vmatmul.mubr.f32.gmra.mxu0 %v2427
    %v5674 = vpop.f32.mrf.mxu0
    %v5675 = vadd.f32 %v698, %v5674
    %v5676 = vpop.f32.mrf.mxu0
    %5677 = vmatprep.mubr.f32.mxu0 0.0
    %5678 = vmatmul.mubr.f32.gmra.mxu0 %v2430
    %v5679 = vpop.f32.mrf.mxu0
    %v5680 = vadd.f32 %v698, %v5679
    %v5681 = vpop.f32.mrf.mxu0
    %5682 = vmatprep.mubr.f32.mxu0 0.0
    %5683 = vmatmul.mubr.f32.gmra.mxu0 %v2433
    %v5684 = vpop.f32.mrf.mxu0
    %v5685 = vadd.f32 %v698, %v5684
    %v5686 = vpop.f32.mrf.mxu0
    %5687 = vmatprep.mubr.f32.mxu0 0.0
    %5688 = vmatmul.mubr.f32.gmra.mxu0 %v2436
    %v5689 = vpop.f32.mrf.mxu0
    %v5690 = vadd.f32 %v698, %v5689
    %v5691 = vpop.f32.mrf.mxu0
    %5692 = vmatprep.mubr.f32.mxu0 0.0
    %5693 = vmatmul.mubr.f32.gmra.mxu0 %v2439
    %v5694 = vpop.f32.mrf.mxu0
    %v5695 = vadd.f32 %v698, %v5694
    %v5696 = vpop.f32.mrf.mxu0
    %5697 = vmatprep.mubr.f32.mxu0 0.0
    %5698 = vmatmul.mubr.f32.gmra.mxu0 %v2442
    %v5699 = vpop.f32.mrf.mxu0
    %v5700 = vadd.f32 %v698, %v5699
    %v5701 = vpop.f32.mrf.mxu0
    %5702 = vmatprep.mubr.f32.mxu0 0.0
    %5703 = vmatmul.mubr.f32.gmra.mxu0 %v2445
    %v5704 = vpop.f32.mrf.mxu0
    %v5705 = vadd.f32 %v698, %v5704
    %v5706 = vpop.f32.mrf.mxu0
    %5707 = vmatprep.mubr.f32.mxu0 0.0
    %5708 = vmatmul.mubr.f32.gmra.mxu0 %v2448
    %v5709 = vpop.f32.mrf.mxu0
    %v5710 = vadd.f32 %v698, %v5709
    %v5711 = vpop.f32.mrf.mxu0
    %5712 = vmatprep.mubr.f32.mxu0 0.0
    %5713 = vmatmul.mubr.f32.gmra.mxu0 %v2451
    %v5714 = vpop.f32.mrf.mxu0
    %v5715 = vadd.f32 %v698, %v5714
    %v5716 = vpop.f32.mrf.mxu0
    %5717 = vmatprep.mubr.f32.mxu0 0.0
    %5718 = vmatmul.mubr.f32.gmra.mxu0 %v2454
    %v5719 = vpop.f32.mrf.mxu0
    %v5720 = vadd.f32 %v698, %v5719
    %v5721 = vpop.f32.mrf.mxu0
    %5722 = vmatprep.mubr.f32.mxu0 0.0
    %5723 = vmatmul.mubr.f32.gmra.mxu0 %v2457
    %v5724 = vpop.f32.mrf.mxu0
    %v5725 = vadd.f32 %v698, %v5724
    %v5726 = vpop.f32.mrf.mxu0
    %5727 = vmatprep.mubr.f32.mxu0 0.0
    %5728 = vmatmul.mubr.f32.gmra.mxu0 %v2460
    %v5729 = vpop.f32.mrf.mxu0
    %v5730 = vadd.f32 %v698, %v5729
    %v5731 = vpop.f32.mrf.mxu0
    %5732 = vmatprep.mubr.f32.mxu0 0.0
    %5733 = vmatmul.mubr.f32.gmra.mxu0 %v2463
    %v5734 = vpop.f32.mrf.mxu0
    %v5735 = vadd.f32 %v698, %v5734
    %v5736 = vpop.f32.mrf.mxu0
    %5737 = vmatprep.mubr.f32.mxu0 0.0
    %5738 = vmatmul.mubr.f32.gmra.mxu0 %v2466
    %v5739 = vpop.f32.mrf.mxu0
    %v5740 = vadd.f32 %v698, %v5739
    %v5741 = vpop.f32.mrf.mxu0
    %5742 = vmatprep.mubr.f32.mxu0 0.0
    %5743 = vmatmul.mubr.f32.gmra.mxu0 %v2469
    %v5744 = vpop.f32.mrf.mxu0
    %v5745 = vadd.f32 %v698, %v5744
    %v5746 = vpop.f32.mrf.mxu0
    %5747 = vmatprep.mubr.f32.mxu0 0.0
    %5748 = vmatmul.mubr.f32.gmra.mxu0 %v2472
    %v5749 = vpop.f32.mrf.mxu0
    %v5750 = vadd.f32 %v698, %v5749
    %v5751 = vpop.f32.mrf.mxu0
    %5752 = vmatprep.mubr.f32.mxu0 0.0
    %5753 = vmatmul.mubr.f32.gmra.mxu0 %v2475
    %v5754 = vpop.f32.mrf.mxu0
    %v5755 = vadd.f32 %v698, %v5754
    %v5756 = vpop.f32.mrf.mxu0
    %5757 = vmatprep.mubr.f32.mxu0 0.0
    %5758 = vmatmul.mubr.f32.gmra.mxu0 %v2478
    %v5759 = vpop.f32.mrf.mxu0
    %v5760 = vadd.f32 %v698, %v5759
    %v5761 = vpop.f32.mrf.mxu0
    %5762 = vmatprep.mubr.f32.mxu0 0.0
    %5763 = vmatmul.mubr.f32.gmra.mxu0 %v2481
    %v5764 = vpop.f32.mrf.mxu0
    %v5765 = vadd.f32 %v698, %v5764
    %v5766 = vpop.f32.mrf.mxu0
    %5767 = vmatprep.mubr.f32.mxu0 0.0
    %5768 = vmatmul.mubr.f32.gmra.mxu0 %v2484
    %v5769 = vpop.f32.mrf.mxu0
    %v5770 = vadd.f32 %v698, %v5769
    %v5771 = vpop.f32.mrf.mxu0
    %5772 = vmatprep.mubr.f32.mxu0 0.0
    %5773 = vmatmul.mubr.f32.gmra.mxu0 %v2487
    %v5774 = vpop.f32.mrf.mxu0
    %v5775 = vadd.f32 %v698, %v5774
    %v5776 = vpop.f32.mrf.mxu0
    %5777 = vmatprep.mubr.f32.mxu0 0.0
    %5778 = vmatmul.mubr.f32.gmra.mxu0 %v2490
    %v5779 = vpop.f32.mrf.mxu0
    %v5780 = vadd.f32 %v698, %v5779
    %v5781 = vpop.f32.mrf.mxu0
    %5782 = vmatprep.mubr.f32.mxu0 0.0
    %5783 = vmatmul.mubr.f32.gmra.mxu0 %v2493
    %v5784 = vpop.f32.mrf.mxu0
    %v5785 = vadd.f32 %v698, %v5784
    %v5786 = vpop.f32.mrf.mxu0
    %5787 = vmatprep.mubr.f32.mxu0 0.0
    %5788 = vmatmul.mubr.f32.gmra.mxu0 %v2496
    %v5789 = vpop.f32.mrf.mxu0
    %v5790 = vadd.f32 %v698, %v5789
    %v5791 = vpop.f32.mrf.mxu0
    %5792 = vmatprep.mubr.f32.mxu0 0.0
    %5793 = vmatmul.mubr.f32.gmra.mxu0 %v2499
    %v5794 = vpop.f32.mrf.mxu0
    %v5795 = vadd.f32 %v698, %v5794
    %v5796 = vpop.f32.mrf.mxu0
    %5797 = vmatprep.mubr.f32.mxu0 0.0
    %5798 = vmatmul.mubr.f32.gmra.mxu0 %v2502
    %v5799 = vpop.f32.mrf.mxu0
    %v5800 = vadd.f32 %v698, %v5799
    %v5801 = vpop.f32.mrf.mxu0
    %5802 = vmatprep.mubr.f32.mxu0 0.0
    %5803 = vmatmul.mubr.f32.gmra.mxu0 %v2505
    %v5804 = vpop.f32.mrf.mxu0
    %v5805 = vadd.f32 %v698, %v5804
    %v5806 = vpop.f32.mrf.mxu0
    %5807 = vmatprep.mubr.f32.mxu0 0.0
    %5808 = vmatmul.mubr.f32.gmra.mxu0 %v2508
    %v5809 = vpop.f32.mrf.mxu0
    %v5810 = vadd.f32 %v698, %v5809
    %v5811 = vpop.f32.mrf.mxu0
    %5812 = vmatprep.mubr.f32.mxu0 0.0
    %5813 = vmatmul.mubr.f32.gmra.mxu0 %v2511
    %v5814 = vpop.f32.mrf.mxu0
    %v5815 = vadd.f32 %v698, %v5814
    %v5816 = vpop.f32.mrf.mxu0
    %5817 = vmatprep.mubr.f32.mxu0 0.0
    %5818 = vmatmul.mubr.f32.gmra.mxu0 %v2514
    %v5819 = vpop.f32.mrf.mxu0
    %v5820 = vadd.f32 %v698, %v5819
    %v5821 = vpop.f32.mrf.mxu0
    %5822 = vmatprep.mubr.f32.mxu0 0.0
    %5823 = vmatmul.mubr.f32.gmra.mxu0 %v2517
    %v5824 = vpop.f32.mrf.mxu0
    %v5825 = vadd.f32 %v698, %v5824
    %v5826 = vpop.f32.mrf.mxu0
    %5827 = vmatprep.mubr.f32.mxu0 0.0
    %5828 = vmatmul.mubr.f32.gmra.mxu0 %v2520
    %v5829 = vpop.f32.mrf.mxu0
    %v5830 = vadd.f32 %v698, %v5829
    %v5831 = vpop.f32.mrf.mxu0
    %5832 = vmatprep.mubr.f32.mxu0 0.0
    %5833 = vmatmul.mubr.f32.gmra.mxu0 %v2523
    %v5834 = vpop.f32.mrf.mxu0
    %v5835 = vadd.f32 %v698, %v5834
    %v5836 = vpop.f32.mrf.mxu0
    %5837 = vmatprep.mubr.f32.mxu0 0.0
    %5838 = vmatmul.mubr.f32.gmra.mxu0 %v2526
    %v5839 = vpop.f32.mrf.mxu0
    %v5840 = vadd.f32 %v698, %v5839
    %v5841 = vpop.f32.mrf.mxu0
    %5842 = vmatprep.mubr.f32.mxu0 0.0
    %5843 = vmatmul.mubr.f32.gmra.mxu0 %v2529
    %v5844 = vpop.f32.mrf.mxu0
    %v5845 = vadd.f32 %v698, %v5844
    %v5846 = vpop.f32.mrf.mxu0
    %5847 = vmatprep.mubr.f32.mxu0 0.0
    %5848 = vmatmul.mubr.f32.gmra.mxu0 %v2532
    %v5849 = vpop.f32.mrf.mxu0
    %v5850 = vadd.f32 %v698, %v5849
    %v5851 = vpop.f32.mrf.mxu0
    %5852 = vmatprep.mubr.f32.mxu0 0.0
    %5853 = vmatmul.mubr.f32.gmra.mxu0 %v2535
    %v5854 = vpop.f32.mrf.mxu0
    %v5855 = vadd.f32 %v698, %v5854
    %v5856 = vpop.f32.mrf.mxu0
    %5857 = vmatprep.mubr.f32.mxu0 0.0
    %5858 = vmatmul.mubr.f32.gmra.mxu0 %v2538
    %v5859 = vpop.f32.mrf.mxu0
    %v5860 = vadd.f32 %v698, %v5859
    %v5861 = vpop.f32.mrf.mxu0
    %5862 = vmatprep.mubr.f32.mxu0 0.0
    %5863 = vmatmul.mubr.f32.gmra.mxu0 %v2541
    %v5864 = vpop.f32.mrf.mxu0
    %v5865 = vadd.f32 %v698, %v5864
    %v5866 = vpop.f32.mrf.mxu0
    %5867 = vmatprep.mubr.f32.mxu0 0.0
    %5868 = vmatmul.mubr.f32.gmra.mxu0 %v2544
    %v5869 = vpop.f32.mrf.mxu0
    %v5870 = vadd.f32 %v698, %v5869
    %v5871 = vpop.f32.mrf.mxu0
    %5872 = vmatprep.mubr.f32.mxu0 0.0
    %5873 = vmatmul.mubr.f32.gmra.mxu0 %v2547
    %v5874 = vpop.f32.mrf.mxu0
    %v5875 = vadd.f32 %v698, %v5874
    %v5876 = vpop.f32.mrf.mxu0
    %5877 = vmatprep.mubr.f32.mxu0 0.0
    %5878 = vmatmul.mubr.f32.gmra.mxu0 %v2550
    %v5879 = vpop.f32.mrf.mxu0
    %v5880 = vadd.f32 %v698, %v5879
    %v5881 = vpop.f32.mrf.mxu0
    %5882 = vmatprep.mubr.f32.mxu0 0.0
    %5883 = vmatmul.mubr.f32.gmra.mxu0 %v2553
    %v5884 = vpop.f32.mrf.mxu0
    %v5885 = vadd.f32 %v698, %v5884
    %v5886 = vpop.f32.mrf.mxu0
    %5887 = vmatprep.mubr.f32.mxu0 0.0
    %5888 = vmatmul.mubr.f32.gmra.mxu0 %v2556
    %v5889 = vpop.f32.mrf.mxu0
    %v5890 = vadd.f32 %v698, %v5889
    %v5891 = vpop.f32.mrf.mxu0
    %5892 = vmatprep.mubr.f32.mxu0 0.0
    %5893 = vmatmul.mubr.f32.gmra.mxu0 %v2559
    %v5894 = vpop.f32.mrf.mxu0
    %v5895 = vadd.f32 %v698, %v5894
    %v5896 = vpop.f32.mrf.mxu0
    %5897 = vmatprep.mubr.f32.mxu0 0.0
    %5898 = vmatmul.mubr.f32.gmra.mxu0 %v2562
    %v5899 = vpop.f32.mrf.mxu0
    %v5900 = vadd.f32 %v698, %v5899
    %v5901 = vpop.f32.mrf.mxu0
    %5902 = vmatprep.mubr.f32.mxu0 0.0
    %5903 = vmatmul.mubr.f32.gmra.mxu0 %v2565
    %v5904 = vpop.f32.mrf.mxu0
    %v5905 = vadd.f32 %v698, %v5904
    %v5906 = vpop.f32.mrf.mxu0
    %5907 = vmatprep.mubr.f32.mxu0 0.0
    %5908 = vmatmul.mubr.f32.gmra.mxu0 %v2568
    %v5909 = vpop.f32.mrf.mxu0
    %v5910 = vadd.f32 %v698, %v5909
    %v5911 = vpop.f32.mrf.mxu0
    %5912 = vmatprep.mubr.f32.mxu0 0.0
    %5913 = vmatmul.mubr.f32.gmra.mxu0 %v2571
    %v5914 = vpop.f32.mrf.mxu0
    %v5915 = vadd.f32 %v698, %v5914
    %v5916 = vpop.f32.mrf.mxu0
    %5917 = vmatprep.mubr.f32.mxu0 0.0
    %5918 = vmatmul.mubr.f32.gmra.mxu0 %v2574
    %v5919 = vpop.f32.mrf.mxu0
    %v5920 = vadd.f32 %v698, %v5919
    %v5921 = vpop.f32.mrf.mxu0
    %5922 = vmatprep.mubr.f32.mxu0 0.0
    %5923 = vmatmul.mubr.f32.gmra.mxu0 %v2577
    %v5924 = vpop.f32.mrf.mxu0
    %v5925 = vadd.f32 %v698, %v5924
    %v5926 = vpop.f32.mrf.mxu0
    %5927 = vmatprep.mubr.f32.mxu0 0.0
    %5928 = vmatmul.mubr.f32.gmra.mxu0 %v2580
    %v5929 = vpop.f32.mrf.mxu0
    %v5930 = vadd.f32 %v698, %v5929
    %v5931 = vpop.f32.mrf.mxu0
    %5932 = vmatprep.mubr.f32.mxu0 0.0
    %5933 = vmatmul.mubr.f32.gmra.mxu0 %v2583
    %v5934 = vpop.f32.mrf.mxu0
    %v5935 = vadd.f32 %v698, %v5934
    %v5936 = vpop.f32.mrf.mxu0
    %5937 = vmatprep.mubr.f32.mxu0 0.0
    %5938 = vmatmul.mubr.f32.gmra.mxu0 %v2586
    %v5939 = vpop.f32.mrf.mxu0
    %v5940 = vadd.f32 %v698, %v5939
    %v5941 = vpop.f32.mrf.mxu0
    %5942 = vmatprep.mubr.f32.mxu0 0.0
    %5943 = vmatmul.mubr.f32.gmra.mxu0 %v2589
    %v5944 = vpop.f32.mrf.mxu0
    %v5945 = vadd.f32 %v698, %v5944
    %v5946 = vpop.f32.mrf.mxu0
    %5947 = vmatprep.mubr.f32.mxu0 0.0
    %5948 = vmatmul.mubr.f32.gmra.mxu0 %v2592
    %v5949 = vpop.f32.mrf.mxu0
    %v5950 = vadd.f32 %v698, %v5949
    %v5951 = vpop.f32.mrf.mxu0
    %5952 = vmatprep.mubr.f32.mxu0 0.0
    %5953 = vmatmul.mubr.f32.gmra.mxu0 %v2595
    %v5954 = vpop.f32.mrf.mxu0
    %v5955 = vadd.f32 %v698, %v5954
    %v5956 = vpop.f32.mrf.mxu0
    %5957 = vmatprep.mubr.f32.mxu0 0.0
    %5958 = vmatmul.mubr.f32.gmra.mxu0 %v2598
    %v5959 = vpop.f32.mrf.mxu0
    %v5960 = vadd.f32 %v698, %v5959
    %v5961 = vpop.f32.mrf.mxu0
    %5962 = vmatprep.mubr.f32.mxu0 0.0
    %5963 = vmatmul.mubr.f32.gmra.mxu0 %v2601
    %v5964 = vpop.f32.mrf.mxu0
    %v5965 = vadd.f32 %v698, %v5964
    %v5966 = vpop.f32.mrf.mxu0
    %5967 = vmatprep.mubr.f32.mxu0 0.0
    %5968 = vmatmul.mubr.f32.gmra.mxu0 %v2604
    %v5969 = vpop.f32.mrf.mxu0
    %v5970 = vadd.f32 %v698, %v5969
    %v5971 = vpop.f32.mrf.mxu0
    %5972 = vmatprep.mubr.f32.mxu0 0.0
    %5973 = vmatmul.mubr.f32.gmra.mxu0 %v2607
    %v5974 = vpop.f32.mrf.mxu0
    %v5975 = vadd.f32 %v698, %v5974
    %v5976 = vpop.f32.mrf.mxu0
    %5977 = vmatprep.mubr.f32.mxu0 0.0
    %5978 = vmatmul.mubr.f32.gmra.mxu0 %v2610
    %v5979 = vpop.f32.mrf.mxu0
    %v5980 = vadd.f32 %v698, %v5979
    %v5981 = vpop.f32.mrf.mxu0
    %5982 = vmatprep.mubr.f32.mxu0 0.0
    %5983 = vmatmul.mubr.f32.gmra.mxu0 %v2613
    %v5984 = vpop.f32.mrf.mxu0
    %v5985 = vadd.f32 %v698, %v5984
    %v5986 = vpop.f32.mrf.mxu0
    %5987 = vmatprep.mubr.f32.mxu0 0.0
    %5988 = vmatmul.mubr.f32.gmra.mxu0 %v2616
    %v5989 = vpop.f32.mrf.mxu0
    %v5990 = vadd.f32 %v698, %v5989
    %v5991 = vpop.f32.mrf.mxu0
    %5992 = vmatprep.mubr.f32.mxu0 0.0
    %5993 = vmatmul.mubr.f32.gmra.mxu0 %v2619
    %v5994 = vpop.f32.mrf.mxu0
    %v5995 = vadd.f32 %v698, %v5994
    %v5996 = vpop.f32.mrf.mxu0
    %5997 = vmatprep.mubr.f32.mxu0 0.0
    %5998 = vmatmul.mubr.f32.gmra.mxu0 %v2622
    %v5999 = vpop.f32.mrf.mxu0
    %v6000 = vadd.f32 %v698, %v5999
    %v6001 = vpop.f32.mrf.mxu0
    %6002 = vmatprep.mubr.f32.mxu0 0.0
    %6003 = vmatmul.mubr.f32.gmra.mxu0 %v2625
    %v6004 = vpop.f32.mrf.mxu0
    %v6005 = vadd.f32 %v698, %v6004
    %v6006 = vpop.f32.mrf.mxu0
    %6007 = vmatprep.mubr.f32.mxu0 0.0
    %6008 = vmatmul.mubr.f32.gmra.mxu0 %v2628
    %v6009 = vpop.f32.mrf.mxu0
    %v6010 = vadd.f32 %v698, %v6009
    %v6011 = vpop.f32.mrf.mxu0
    %6012 = vmatprep.mubr.f32.mxu0 0.0
    %6013 = vmatmul.mubr.f32.gmra.mxu0 %v2631
    %v6014 = vpop.f32.mrf.mxu0
    %v6015 = vadd.f32 %v698, %v6014
    %v6016 = vpop.f32.mrf.mxu0
    %6017 = vmatprep.mubr.f32.mxu0 0.0
    %6018 = vmatmul.mubr.f32.gmra.mxu0 %v2634
    %v6019 = vpop.f32.mrf.mxu0
    %v6020 = vadd.f32 %v698, %v6019
    %v6021 = vpop.f32.mrf.mxu0
    %6022 = vmatprep.mubr.f32.mxu0 0.0
    %6023 = vmatmul.mubr.f32.gmra.mxu0 %v2637
    %v6024 = vpop.f32.mrf.mxu0
    %v6025 = vadd.f32 %v698, %v6024
    %v6026 = vpop.f32.mrf.mxu0
    %6027 = vmatprep.mubr.f32.mxu0 0.0
    %6028 = vmatmul.mubr.f32.gmra.mxu0 %v2640
    %v6029 = vpop.f32.mrf.mxu0
    %v6030 = vadd.f32 %v698, %v6029
    %v6031 = vpop.f32.mrf.mxu0
    %6032 = vmatprep.mubr.f32.mxu0 0.0
    %6033 = vmatmul.mubr.f32.gmra.mxu0 %v2643
    %v6034 = vpop.f32.mrf.mxu0
    %v6035 = vadd.f32 %v698, %v6034
    %v6036 = vpop.f32.mrf.mxu0
    %6037 = vmatprep.mubr.f32.mxu0 0.0
    %6038 = vmatmul.mubr.f32.gmra.mxu0 %v2646
    %v6039 = vpop.f32.mrf.mxu0
    %v6040 = vadd.f32 %v698, %v6039
    %v6041 = vpop.f32.mrf.mxu0
    %6042 = vmatprep.mubr.f32.mxu0 0.0
    %6043 = vmatmul.mubr.f32.gmra.mxu0 %v2649
    %v6044 = vpop.f32.mrf.mxu0
    %v6045 = vadd.f32 %v698, %v6044
    %v6046 = vpop.f32.mrf.mxu0
    %6047 = vmatprep.mubr.f32.mxu0 0.0
    %6048 = vmatmul.mubr.f32.gmra.mxu0 %v2652
    %v6049 = vpop.f32.mrf.mxu0
    %v6050 = vadd.f32 %v698, %v6049
    %v6051 = vpop.f32.mrf.mxu0
    %6052 = vmatprep.mubr.f32.mxu0 0.0
    %6053 = vmatmul.mubr.f32.gmra.mxu0 %v2655
    %v6054 = vpop.f32.mrf.mxu0
    %v6055 = vadd.f32 %v698, %v6054
    %v6056 = vpop.f32.mrf.mxu0
    %6057 = vmatprep.mubr.f32.mxu0 0.0
    %6058 = vmatmul.mubr.f32.gmra.mxu0 %v2658
    %v6059 = vpop.f32.mrf.mxu0
    %v6060 = vadd.f32 %v698, %v6059
    %v6061 = vpop.f32.mrf.mxu0
    %6062 = vmatprep.mubr.f32.mxu0 0.0
    %6063 = vmatmul.mubr.f32.gmra.mxu0 %v2661
    %v6064 = vpop.f32.mrf.mxu0
    %v6065 = vadd.f32 %v698, %v6064
    %v6066 = vpop.f32.mrf.mxu0
    %6067 = vmatprep.mubr.f32.mxu0 0.0
    %6068 = vmatmul.mubr.f32.gmra.mxu0 %v2664
    %v6069 = vpop.f32.mrf.mxu0
    %v6070 = vadd.f32 %v698, %v6069
    %v6071 = vpop.f32.mrf.mxu0
    %6072 = vmatprep.mubr.f32.mxu0 0.0
    %6073 = vmatmul.mubr.f32.gmra.mxu0 %v2667
    %v6074 = vpop.f32.mrf.mxu0
    %v6075 = vadd.f32 %v698, %v6074
    %v6076 = vpop.f32.mrf.mxu0
    %6077 = vmatprep.mubr.f32.mxu0 0.0
    %6078 = vmatmul.mubr.f32.gmra.mxu0 %v2670
    %v6079 = vpop.f32.mrf.mxu0
    %v6080 = vadd.f32 %v698, %v6079
    %v6081 = vpop.f32.mrf.mxu0
    %6082 = vmatprep.mubr.f32.mxu0 0.0
    %6083 = vmatmul.mubr.f32.gmra.mxu0 %v2673
    %v6084 = vpop.f32.mrf.mxu0
    %v6085 = vadd.f32 %v698, %v6084
    %v6086 = vpop.f32.mrf.mxu0
    %6087 = vmatprep.mubr.f32.mxu0 0.0
    %6088 = vmatmul.mubr.f32.gmra.mxu0 %v2676
    %v6089 = vpop.f32.mrf.mxu0
    %v6090 = vadd.f32 %v698, %v6089
    %v6091 = vpop.f32.mrf.mxu0
    %6092 = vmatprep.mubr.f32.mxu0 0.0
    %6093 = vmatmul.mubr.f32.gmra.mxu0 %v2679
    %v6094 = vpop.f32.mrf.mxu0
    %v6095 = vadd.f32 %v698, %v6094
    %v6096 = vpop.f32.mrf.mxu0
    %6097 = vmatprep.mubr.f32.mxu0 0.0
    %6098 = vmatmul.mubr.f32.gmra.mxu0 %v2682
    %v6099 = vpop.f32.mrf.mxu0
    %v6100 = vadd.f32 %v698, %v6099
    %v6101 = vpop.f32.mrf.mxu0
    %6102 = vmatprep.mubr.f32.mxu0 0.0
    %6103 = vmatmul.mubr.f32.gmra.mxu0 %v2685
    %v6104 = vpop.f32.mrf.mxu0
    %v6105 = vadd.f32 %v698, %v6104
    %v6106 = vpop.f32.mrf.mxu0
    %6107 = vmatprep.mubr.f32.mxu0 0.0
    %6108 = vmatmul.mubr.f32.gmra.mxu0 %v2688
    %v6109 = vpop.f32.mrf.mxu0
    %v6110 = vadd.f32 %v698, %v6109
    %v6111 = vpop.f32.mrf.mxu0
    %6112 = vmatprep.mubr.f32.mxu0 0.0
    %6113 = vmatmul.mubr.f32.gmra.mxu0 %v2691
    %v6114 = vpop.f32.mrf.mxu0
    %v6115 = vadd.f32 %v698, %v6114
    %v6116 = vpop.f32.mrf.mxu0
    %6117 = vmatprep.mubr.f32.mxu0 0.0
    %6118 = vmatmul.mubr.f32.gmra.mxu0 %v2694
    %v6119 = vpop.f32.mrf.mxu0
    %v6120 = vadd.f32 %v698, %v6119
    %v6121 = vpop.f32.mrf.mxu0
    %6122 = vmatprep.mubr.f32.mxu0 0.0
    %6123 = vmatmul.mubr.f32.gmra.mxu0 %v2697
    %v6124 = vpop.f32.mrf.mxu0
    %v6125 = vadd.f32 %v698, %v6124
    %v6126 = vpop.f32.mrf.mxu0
    %6127 = vmatprep.mubr.f32.mxu0 0.0
    %6128 = vmatmul.mubr.f32.gmra.mxu0 %v2700
    %v6129 = vpop.f32.mrf.mxu0
    %v6130 = vadd.f32 %v698, %v6129
    %v6131 = vpop.f32.mrf.mxu0
    %6132 = vmatprep.mubr.f32.mxu0 0.0
    %6133 = vmatmul.mubr.f32.gmra.mxu0 %v2703
    %v6134 = vpop.f32.mrf.mxu0
    %v6135 = vadd.f32 %v698, %v6134
    %v6136 = vpop.f32.mrf.mxu0
    %6137 = vmatprep.mubr.f32.mxu0 0.0
    %6138 = vmatmul.mubr.f32.gmra.mxu0 %v2706
    %v6139 = vpop.f32.mrf.mxu0
    %v6140 = vadd.f32 %v698, %v6139
    %v6141 = vpop.f32.mrf.mxu0
    %6142 = vmatprep.mubr.f32.mxu0 0.0
    %6143 = vmatmul.mubr.f32.gmra.mxu0 %v2709
    %v6144 = vpop.f32.mrf.mxu0
    %v6145 = vadd.f32 %v698, %v6144
    %v6146 = vpop.f32.mrf.mxu0
    %6147 = vmatprep.mubr.f32.mxu0 0.0
    %6148 = vmatmul.mubr.f32.gmra.mxu0 %v2712
    %v6149 = vpop.f32.mrf.mxu0
    %v6150 = vadd.f32 %v698, %v6149
    %v6151 = vpop.f32.mrf.mxu0
    %6152 = vmatprep.mubr.f32.mxu0 0.0
    %6153 = vmatmul.mubr.f32.gmra.mxu0 %v2715
    %v6154 = vpop.f32.mrf.mxu0
    %v6155 = vadd.f32 %v698, %v6154
    %v6156 = vpop.f32.mrf.mxu0
    %6157 = vmatprep.mubr.f32.mxu0 0.0
    %6158 = vmatmul.mubr.f32.gmra.mxu0 %v2718
    %v6159 = vpop.f32.mrf.mxu0
    %v6160 = vadd.f32 %v698, %v6159
    %v6161 = vpop.f32.mrf.mxu0
    %6162 = vmatprep.mubr.f32.mxu0 0.0
    %6163 = vmatmul.mubr.f32.gmra.mxu0 %v2721
    %v6164 = vpop.f32.mrf.mxu0
    %v6165 = vadd.f32 %v698, %v6164
    %v6166 = vpop.f32.mrf.mxu0
    %6167 = vmatprep.mubr.f32.mxu0 0.0
    %6168 = vmatmul.mubr.f32.gmra.mxu0 %v2724
    %v6169 = vpop.f32.mrf.mxu0
    %v6170 = vadd.f32 %v698, %v6169
    %v6171 = vpop.f32.mrf.mxu0
    %6172 = vmatprep.mubr.f32.mxu0 0.0
    %6173 = vmatmul.mubr.f32.gmra.mxu0 %v2727
    %v6174 = vpop.f32.mrf.mxu0
    %v6175 = vadd.f32 %v698, %v6174
    %v6176 = vpop.f32.mrf.mxu0
    %6177 = vdwg.mxu0
    %v6178 = vmax.f32 %v2800, 0.0
    %v6179 = vmax.f32 %v2805, 0.0
    %v6180 = vmax.f32 %v2810, 0.0
    %v6181 = vmax.f32 %v2815, 0.0
    %v6182 = vmax.f32 %v2820, 0.0
    %v6183 = vmax.f32 %v2825, 0.0
    %v6184 = vmax.f32 %v2830, 0.0
    %v6185 = vmax.f32 %v2835, 0.0
    %v6186 = vmax.f32 %v2840, 0.0
    %v6187 = vmax.f32 %v2845, 0.0
    %v6188 = vmax.f32 %v2850, 0.0
    %v6189 = vmax.f32 %v2855, 0.0
    %v6190 = vmax.f32 %v2860, 0.0
    %v6191 = vmax.f32 %v2865, 0.0
    %v6192 = vmax.f32 %v2870, 0.0
    %v6193 = vmax.f32 %v2875, 0.0
    %v6194 = vmax.f32 %v2880, 0.0
    %v6195 = vmax.f32 %v2885, 0.0
    %v6196 = vmax.f32 %v2890, 0.0
    %v6197 = vmax.f32 %v2895, 0.0
    %v6198 = vmax.f32 %v2900, 0.0
    %v6199 = vmax.f32 %v2905, 0.0
    %v6200 = vmax.f32 %v2910, 0.0
    %v6201 = vmax.f32 %v2915, 0.0
    %v6202 = vmax.f32 %v2920, 0.0
    %v6203 = vmax.f32 %v2925, 0.0
    %v6204 = vmax.f32 %v2930, 0.0
    %v6205 = vmax.f32 %v2935, 0.0
    %v6206 = vmax.f32 %v2940, 0.0
    %v6207 = vmax.f32 %v2945, 0.0
    %v6208 = vmax.f32 %v2950, 0.0
    %v6209 = vmax.f32 %v2955, 0.0
    %v6210 = vmax.f32 %v2960, 0.0
    %v6211 = vmax.f32 %v2965, 0.0
    %v6212 = vmax.f32 %v2970, 0.0
    %v6213 = vmax.f32 %v2975, 0.0
    %v6214 = vmax.f32 %v2980, 0.0
    %v6215 = vmax.f32 %v2985, 0.0
    %v6216 = vmax.f32 %v2990, 0.0
    %v6217 = vmax.f32 %v2995, 0.0
    %v6218 = vmax.f32 %v3000, 0.0
    %v6219 = vmax.f32 %v3005, 0.0
    %v6220 = vmax.f32 %v3010, 0.0
    %v6221 = vmax.f32 %v3015, 0.0
    %v6222 = vmax.f32 %v3020, 0.0
    %v6223 = vmax.f32 %v3025, 0.0
    %v6224 = vmax.f32 %v3030, 0.0
    %v6225 = vmax.f32 %v3035, 0.0
    %v6226 = vmax.f32 %v3040, 0.0
    %v6227 = vmax.f32 %v3045, 0.0
    %v6228 = vmax.f32 %v3050, 0.0
    %v6229 = vmax.f32 %v3055, 0.0
    %v6230 = vmax.f32 %v3060, 0.0
    %v6231 = vmax.f32 %v3065, 0.0
    %v6232 = vmax.f32 %v3070, 0.0
    %v6233 = vmax.f32 %v3075, 0.0
    %v6234 = vmax.f32 %v3080, 0.0
    %v6235 = vmax.f32 %v3085, 0.0
    %v6236 = vmax.f32 %v3090, 0.0
    %v6237 = vmax.f32 %v3095, 0.0
    %v6238 = vmax.f32 %v3100, 0.0
    %v6239 = vmax.f32 %v3105, 0.0
    %v6240 = vmax.f32 %v3110, 0.0
    %v6241 = vmax.f32 %v3115, 0.0
    %v6242 = vmax.f32 %v3120, 0.0
    %v6243 = vmax.f32 %v3125, 0.0
    %v6244 = vmax.f32 %v3130, 0.0
    %v6245 = vmax.f32 %v3135, 0.0
    %v6246 = vmax.f32 %v3140, 0.0
    %v6247 = vmax.f32 %v3145, 0.0
    %v6248 = vmax.f32 %v3150, 0.0
    %v6249 = vmax.f32 %v3155, 0.0
    %v6250 = vmax.f32 %v3160, 0.0
    %v6251 = vmax.f32 %v3165, 0.0
    %v6252 = vmax.f32 %v3170, 0.0
    %v6253 = vmax.f32 %v3175, 0.0
    %v6254 = vmax.f32 %v3180, 0.0
    %v6255 = vmax.f32 %v3185, 0.0
    %v6256 = vmax.f32 %v3190, 0.0
    %v6257 = vmax.f32 %v3195, 0.0
    %v6258 = vmax.f32 %v3200, 0.0
    %v6259 = vmax.f32 %v3205, 0.0
    %v6260 = vmax.f32 %v3210, 0.0
    %v6261 = vmax.f32 %v3215, 0.0
    %v6262 = vmax.f32 %v3220, 0.0
    %v6263 = vmax.f32 %v3225, 0.0
    %v6264 = vmax.f32 %v3230, 0.0
    %v6265 = vmax.f32 %v3235, 0.0
    %v6266 = vmax.f32 %v3240, 0.0
    %v6267 = vmax.f32 %v3245, 0.0
    %v6268 = vmax.f32 %v3250, 0.0
    %v6269 = vmax.f32 %v3255, 0.0
    %v6270 = vmax.f32 %v3260, 0.0
    %v6271 = vmax.f32 %v3265, 0.0
    %v6272 = vmax.f32 %v3270, 0.0
    %v6273 = vmax.f32 %v3275, 0.0
    %v6274 = vmax.f32 %v3280, 0.0
    %v6275 = vmax.f32 %v3285, 0.0
    %v6276 = vmax.f32 %v3290, 0.0
    %v6277 = vmax.f32 %v3295, 0.0
    %v6278 = vmax.f32 %v3300, 0.0
    %v6279 = vmax.f32 %v3305, 0.0
    %v6280 = vmax.f32 %v3310, 0.0
    %v6281 = vmax.f32 %v3315, 0.0
    %v6282 = vmax.f32 %v3320, 0.0
    %v6283 = vmax.f32 %v3325, 0.0
    %v6284 = vmax.f32 %v3330, 0.0
    %v6285 = vmax.f32 %v3335, 0.0
    %v6286 = vmax.f32 %v3340, 0.0
    %v6287 = vmax.f32 %v3345, 0.0
    %v6288 = vmax.f32 %v3350, 0.0
    %v6289 = vmax.f32 %v3355, 0.0
    %v6290 = vmax.f32 %v3360, 0.0
    %v6291 = vmax.f32 %v3365, 0.0
    %v6292 = vmax.f32 %v3370, 0.0
    %v6293 = vmax.f32 %v3375, 0.0
    %v6294 = vmax.f32 %v3380, 0.0
    %v6295 = vmax.f32 %v3385, 0.0
    %v6296 = vmax.f32 %v3390, 0.0
    %v6297 = vmax.f32 %v3395, 0.0
    %v6298 = vmax.f32 %v3400, 0.0
    %v6299 = vmax.f32 %v3405, 0.0
    %v6300 = vmax.f32 %v3410, 0.0
    %v6301 = vmax.f32 %v3415, 0.0
    %v6302 = vmax.f32 %v3420, 0.0
    %v6303 = vmax.f32 %v3425, 0.0
    %v6304 = vmax.f32 %v3430, 0.0
    %v6305 = vmax.f32 %v3435, 0.0
    %v6306 = vmax.f32 %v3440, 0.0
    %v6307 = vmax.f32 %v3445, 0.0
    %v6308 = vmax.f32 %v3450, 0.0
    %v6309 = vmax.f32 %v3455, 0.0
    %v6310 = vmax.f32 %v3460, 0.0
    %v6311 = vmax.f32 %v3465, 0.0
    %v6312 = vmax.f32 %v3470, 0.0
    %v6313 = vmax.f32 %v3475, 0.0
    %v6314 = vmax.f32 %v3480, 0.0
    %v6315 = vmax.f32 %v3485, 0.0
    %v6316 = vmax.f32 %v3490, 0.0
    %v6317 = vmax.f32 %v3495, 0.0
    %v6318 = vmax.f32 %v3500, 0.0
    %v6319 = vmax.f32 %v3505, 0.0
    %v6320 = vmax.f32 %v3510, 0.0
    %v6321 = vmax.f32 %v3515, 0.0
    %v6322 = vmax.f32 %v3520, 0.0
    %v6323 = vmax.f32 %v3525, 0.0
    %v6324 = vmax.f32 %v3530, 0.0
    %v6325 = vmax.f32 %v3535, 0.0
    %v6326 = vmax.f32 %v3540, 0.0
    %v6327 = vmax.f32 %v3545, 0.0
    %v6328 = vmax.f32 %v3550, 0.0
    %v6329 = vmax.f32 %v3555, 0.0
    %v6330 = vmax.f32 %v3560, 0.0
    %v6331 = vmax.f32 %v3565, 0.0
    %v6332 = vmax.f32 %v3570, 0.0
    %v6333 = vmax.f32 %v3575, 0.0
    %v6334 = vmax.f32 %v3580, 0.0
    %v6335 = vmax.f32 %v3585, 0.0
    %v6336 = vmax.f32 %v3590, 0.0
    %v6337 = vmax.f32 %v3595, 0.0
    %v6338 = vmax.f32 %v3600, 0.0
    %v6339 = vmax.f32 %v3605, 0.0
    %v6340 = vmax.f32 %v3610, 0.0
    %v6341 = vmax.f32 %v3615, 0.0
    %v6342 = vmax.f32 %v3620, 0.0
    %v6343 = vmax.f32 %v3625, 0.0
    %v6344 = vmax.f32 %v3630, 0.0
    %v6345 = vmax.f32 %v3635, 0.0
    %v6346 = vmax.f32 %v3640, 0.0
    %v6347 = vmax.f32 %v3645, 0.0
    %v6348 = vmax.f32 %v3650, 0.0
    %v6349 = vmax.f32 %v3655, 0.0
    %v6350 = vmax.f32 %v3660, 0.0
    %v6351 = vmax.f32 %v3665, 0.0
    %v6352 = vmax.f32 %v3670, 0.0
    %v6353 = vmax.f32 %v3675, 0.0
    %v6354 = vmax.f32 %v3680, 0.0
    %v6355 = vmax.f32 %v3685, 0.0
    %v6356 = vmax.f32 %v3690, 0.0
    %v6357 = vmax.f32 %v3695, 0.0
    %v6358 = vmax.f32 %v3700, 0.0
    %v6359 = vmax.f32 %v3705, 0.0
    %v6360 = vmax.f32 %v3710, 0.0
    %v6361 = vmax.f32 %v3715, 0.0
    %v6362 = vmax.f32 %v3720, 0.0
    %v6363 = vmax.f32 %v3725, 0.0
    %v6364 = vmax.f32 %v3730, 0.0
    %v6365 = vmax.f32 %v3735, 0.0
    %v6366 = vmax.f32 %v3740, 0.0
    %v6367 = vmax.f32 %v3745, 0.0
    %v6368 = vmax.f32 %v3750, 0.0
    %v6369 = vmax.f32 %v3755, 0.0
    %v6370 = vmax.f32 %v3760, 0.0
    %v6371 = vmax.f32 %v3765, 0.0
    %v6372 = vmax.f32 %v3770, 0.0
    %v6373 = vmax.f32 %v3775, 0.0
    %v6374 = vmax.f32 %v3780, 0.0
    %v6375 = vmax.f32 %v3785, 0.0
    %v6376 = vmax.f32 %v3790, 0.0
    %v6377 = vmax.f32 %v3795, 0.0
    %v6378 = vmax.f32 %v3800, 0.0
    %v6379 = vmax.f32 %v3805, 0.0
    %v6380 = vmax.f32 %v3810, 0.0
    %v6381 = vmax.f32 %v3815, 0.0
    %v6382 = vmax.f32 %v3820, 0.0
    %v6383 = vmax.f32 %v3825, 0.0
    %v6384 = vmax.f32 %v3830, 0.0
    %v6385 = vmax.f32 %v3835, 0.0
    %v6386 = vmax.f32 %v3840, 0.0
    %v6387 = vmax.f32 %v3845, 0.0
    %v6388 = vmax.f32 %v3850, 0.0
    %v6389 = vmax.f32 %v3855, 0.0
    %v6390 = vmax.f32 %v3860, 0.0
    %v6391 = vmax.f32 %v3865, 0.0
    %v6392 = vmax.f32 %v3870, 0.0
    %v6393 = vmax.f32 %v3875, 0.0
    %v6394 = vmax.f32 %v3880, 0.0
    %v6395 = vmax.f32 %v3885, 0.0
    %v6396 = vmax.f32 %v3890, 0.0
    %v6397 = vmax.f32 %v3895, 0.0
    %v6398 = vmax.f32 %v3900, 0.0
    %v6399 = vmax.f32 %v3905, 0.0
    %v6400 = vmax.f32 %v3910, 0.0
    %v6401 = vmax.f32 %v3915, 0.0
    %v6402 = vmax.f32 %v3920, 0.0
    %v6403 = vmax.f32 %v3925, 0.0
    %v6404 = vmax.f32 %v3930, 0.0
    %v6405 = vmax.f32 %v3935, 0.0
    %v6406 = vmax.f32 %v3940, 0.0
    %v6407 = vmax.f32 %v3945, 0.0
    %v6408 = vmax.f32 %v3950, 0.0
    %v6409 = vmax.f32 %v3955, 0.0
    %v6410 = vmax.f32 %v3960, 0.0
    %v6411 = vmax.f32 %v3965, 0.0
    %v6412 = vmax.f32 %v3970, 0.0
    %v6413 = vmax.f32 %v3975, 0.0
    %v6414 = vmax.f32 %v3980, 0.0
    %v6415 = vmax.f32 %v3985, 0.0
    %v6416 = vmax.f32 %v3990, 0.0
    %v6417 = vmax.f32 %v3995, 0.0
    %v6418 = vmax.f32 %v4000, 0.0
    %v6419 = vmax.f32 %v4005, 0.0
    %v6420 = vmax.f32 %v4010, 0.0
    %v6421 = vmax.f32 %v4015, 0.0
    %v6422 = vmax.f32 %v4020, 0.0
    %v6423 = vmax.f32 %v4025, 0.0
    %v6424 = vmax.f32 %v4030, 0.0
    %v6425 = vmax.f32 %v4035, 0.0
    %v6426 = vmax.f32 %v4040, 0.0
    %v6427 = vmax.f32 %v4045, 0.0
    %v6428 = vmax.f32 %v4050, 0.0
    %v6429 = vmax.f32 %v4055, 0.0
    %v6430 = vmax.f32 %v4060, 0.0
    %v6431 = vmax.f32 %v4065, 0.0
    %v6432 = vmax.f32 %v4070, 0.0
    %v6433 = vmax.f32 %v4075, 0.0
    %v6434 = vmax.f32 %v4080, 0.0
    %v6435 = vmax.f32 %v4085, 0.0
    %v6436 = vmax.f32 %v4090, 0.0
    %v6437 = vmax.f32 %v4095, 0.0
    %v6438 = vmax.f32 %v4100, 0.0
    %v6439 = vmax.f32 %v4105, 0.0
    %v6440 = vmax.f32 %v4110, 0.0
    %v6441 = vmax.f32 %v4115, 0.0
    %v6442 = vmax.f32 %v4120, 0.0
    %v6443 = vmax.f32 %v4125, 0.0
    %v6444 = vmax.f32 %v4130, 0.0
    %v6445 = vmax.f32 %v4135, 0.0
    %v6446 = vmax.f32 %v4140, 0.0
    %v6447 = vmax.f32 %v4145, 0.0
    %v6448 = vmax.f32 %v4150, 0.0
    %v6449 = vmax.f32 %v4155, 0.0
    %v6450 = vmax.f32 %v4160, 0.0
    %v6451 = vmax.f32 %v4165, 0.0
    %v6452 = vmax.f32 %v4170, 0.0
    %v6453 = vmax.f32 %v4175, 0.0
    %v6454 = vmax.f32 %v4180, 0.0
    %v6455 = vmax.f32 %v4185, 0.0
    %v6456 = vmax.f32 %v4190, 0.0
    %v6457 = vmax.f32 %v4195, 0.0
    %v6458 = vmax.f32 %v4200, 0.0
    %v6459 = vmax.f32 %v4205, 0.0
    %v6460 = vmax.f32 %v4210, 0.0
    %v6461 = vmax.f32 %v4215, 0.0
    %v6462 = vmax.f32 %v4220, 0.0
    %v6463 = vmax.f32 %v4225, 0.0
    %v6464 = vmax.f32 %v4230, 0.0
    %v6465 = vmax.f32 %v4235, 0.0
    %v6466 = vmax.f32 %v4240, 0.0
    %v6467 = vmax.f32 %v4245, 0.0
    %v6468 = vmax.f32 %v4250, 0.0
    %v6469 = vmax.f32 %v4255, 0.0
    %v6470 = vmax.f32 %v4260, 0.0
    %v6471 = vmax.f32 %v4265, 0.0
    %v6472 = vmax.f32 %v4270, 0.0
    %v6473 = vmax.f32 %v4275, 0.0
    %v6474 = vmax.f32 %v4280, 0.0
    %v6475 = vmax.f32 %v4285, 0.0
    %v6476 = vmax.f32 %v4290, 0.0
    %v6477 = vmax.f32 %v4295, 0.0
    %v6478 = vmax.f32 %v4300, 0.0
    %v6479 = vmax.f32 %v4305, 0.0
    %v6480 = vmax.f32 %v4310, 0.0
    %v6481 = vmax.f32 %v4315, 0.0
    %v6482 = vmax.f32 %v4320, 0.0
    %v6483 = vmax.f32 %v4325, 0.0
    %v6484 = vmax.f32 %v4330, 0.0
    %v6485 = vmax.f32 %v4335, 0.0
    %v6486 = vmax.f32 %v4340, 0.0
    %v6487 = vmax.f32 %v4345, 0.0
    %v6488 = vmax.f32 %v4350, 0.0
    %v6489 = vmax.f32 %v4355, 0.0
    %v6490 = vmax.f32 %v4360, 0.0
    %v6491 = vmax.f32 %v4365, 0.0
    %v6492 = vmax.f32 %v4370, 0.0
    %v6493 = vmax.f32 %v4375, 0.0
    %v6494 = vmax.f32 %v4380, 0.0
    %v6495 = vmax.f32 %v4385, 0.0
    %v6496 = vmax.f32 %v4390, 0.0
    %v6497 = vmax.f32 %v4395, 0.0
    %v6498 = vmax.f32 %v4400, 0.0
    %v6499 = vmax.f32 %v4405, 0.0
    %v6500 = vmax.f32 %v4410, 0.0
    %v6501 = vmax.f32 %v4415, 0.0
    %v6502 = vmax.f32 %v4420, 0.0
    %v6503 = vmax.f32 %v4425, 0.0
    %v6504 = vmax.f32 %v4430, 0.0
    %v6505 = vmax.f32 %v4435, 0.0
    %v6506 = vmax.f32 %v4440, 0.0
    %v6507 = vmax.f32 %v4445, 0.0
    %v6508 = vmax.f32 %v4450, 0.0
    %v6509 = vmax.f32 %v4455, 0.0
    %v6510 = vmax.f32 %v4460, 0.0
    %v6511 = vmax.f32 %v4465, 0.0
    %v6512 = vmax.f32 %v4470, 0.0
    %v6513 = vmax.f32 %v4475, 0.0
    %v6514 = vmax.f32 %v4480, 0.0
    %v6515 = vmax.f32 %v4485, 0.0
    %v6516 = vmax.f32 %v4490, 0.0
    %v6517 = vmax.f32 %v4495, 0.0
    %v6518 = vmax.f32 %v4500, 0.0
    %v6519 = vmax.f32 %v4505, 0.0
    %v6520 = vmax.f32 %v4510, 0.0
    %v6521 = vmax.f32 %v4515, 0.0
    %v6522 = vmax.f32 %v4520, 0.0
    %v6523 = vmax.f32 %v4525, 0.0
    %v6524 = vmax.f32 %v4530, 0.0
    %v6525 = vmax.f32 %v4535, 0.0
    %v6526 = vmax.f32 %v4540, 0.0
    %v6527 = vmax.f32 %v4545, 0.0
    %v6528 = vmax.f32 %v4550, 0.0
    %v6529 = vmax.f32 %v4555, 0.0
    %v6530 = vmax.f32 %v4560, 0.0
    %v6531 = vmax.f32 %v4565, 0.0
    %v6532 = vmax.f32 %v4570, 0.0
    %v6533 = vmax.f32 %v4575, 0.0
    %v6534 = vmax.f32 %v4580, 0.0
    %v6535 = vmax.f32 %v4585, 0.0
    %v6536 = vmax.f32 %v4590, 0.0
    %v6537 = vmax.f32 %v4595, 0.0
    %v6538 = vmax.f32 %v4600, 0.0
    %v6539 = vmax.f32 %v4605, 0.0
    %v6540 = vmax.f32 %v4610, 0.0
    %v6541 = vmax.f32 %v4615, 0.0
    %v6542 = vmax.f32 %v4620, 0.0
    %v6543 = vmax.f32 %v4625, 0.0
    %v6544 = vmax.f32 %v4630, 0.0
    %v6545 = vmax.f32 %v4635, 0.0
    %v6546 = vmax.f32 %v4640, 0.0
    %v6547 = vmax.f32 %v4645, 0.0
    %v6548 = vmax.f32 %v4650, 0.0
    %v6549 = vmax.f32 %v4655, 0.0
    %v6550 = vmax.f32 %v4660, 0.0
    %v6551 = vmax.f32 %v4665, 0.0
    %v6552 = vmax.f32 %v4670, 0.0
    %v6553 = vmax.f32 %v4675, 0.0
    %v6554 = vmax.f32 %v4680, 0.0
    %v6555 = vmax.f32 %v4685, 0.0
    %v6556 = vmax.f32 %v4690, 0.0
    %v6557 = vmax.f32 %v4695, 0.0
    %v6558 = vmax.f32 %v4700, 0.0
    %v6559 = vmax.f32 %v4705, 0.0
    %v6560 = vmax.f32 %v4710, 0.0
    %v6561 = vmax.f32 %v4715, 0.0
    %v6562 = vmax.f32 %v4720, 0.0
    %v6563 = vmax.f32 %v4725, 0.0
    %v6564 = vmax.f32 %v4730, 0.0
    %v6565 = vmax.f32 %v4735, 0.0
    %v6566 = vmax.f32 %v4740, 0.0
    %v6567 = vmax.f32 %v4745, 0.0
    %v6568 = vmax.f32 %v4750, 0.0
    %v6569 = vmax.f32 %v4755, 0.0
    %v6570 = vmax.f32 %v4760, 0.0
    %v6571 = vmax.f32 %v4765, 0.0
    %v6572 = vmax.f32 %v4770, 0.0
    %v6573 = vmax.f32 %v4775, 0.0
    %v6574 = vmax.f32 %v4780, 0.0
    %v6575 = vmax.f32 %v4785, 0.0
    %v6576 = vmax.f32 %v4790, 0.0
    %v6577 = vmax.f32 %v4795, 0.0
    %v6578 = vmax.f32 %v4800, 0.0
    %v6579 = vmax.f32 %v4805, 0.0
    %v6580 = vmax.f32 %v4810, 0.0
    %v6581 = vmax.f32 %v4815, 0.0
    %v6582 = vmax.f32 %v4820, 0.0
    %v6583 = vmax.f32 %v4825, 0.0
    %v6584 = vmax.f32 %v4830, 0.0
    %v6585 = vmax.f32 %v4835, 0.0
    %v6586 = vmax.f32 %v4840, 0.0
    %v6587 = vmax.f32 %v4845, 0.0
    %v6588 = vmax.f32 %v4850, 0.0
    %v6589 = vmax.f32 %v4855, 0.0
    %v6590 = vmax.f32 %v4860, 0.0
    %v6591 = vmax.f32 %v4865, 0.0
    %v6592 = vmax.f32 %v4870, 0.0
    %v6593 = vmax.f32 %v4875, 0.0
    %v6594 = vmax.f32 %v4880, 0.0
    %v6595 = vmax.f32 %v4885, 0.0
    %v6596 = vmax.f32 %v4890, 0.0
    %v6597 = vmax.f32 %v4895, 0.0
    %v6598 = vmax.f32 %v4900, 0.0
    %v6599 = vmax.f32 %v4905, 0.0
    %v6600 = vmax.f32 %v4910, 0.0
    %v6601 = vmax.f32 %v4915, 0.0
    %v6602 = vmax.f32 %v4920, 0.0
    %v6603 = vmax.f32 %v4925, 0.0
    %v6604 = vmax.f32 %v4930, 0.0
    %v6605 = vmax.f32 %v4935, 0.0
    %v6606 = vmax.f32 %v4940, 0.0
    %v6607 = vmax.f32 %v4945, 0.0
    %v6608 = vmax.f32 %v4950, 0.0
    %v6609 = vmax.f32 %v4955, 0.0
    %v6610 = vmax.f32 %v4960, 0.0
    %v6611 = vmax.f32 %v4965, 0.0
    %v6612 = vmax.f32 %v4970, 0.0
    %v6613 = vmax.f32 %v4975, 0.0
    %v6614 = vmax.f32 %v4980, 0.0
    %v6615 = vmax.f32 %v4985, 0.0
    %v6616 = vmax.f32 %v4990, 0.0
    %v6617 = vmax.f32 %v4995, 0.0
    %v6618 = vmax.f32 %v5000, 0.0
    %v6619 = vmax.f32 %v5005, 0.0
    %v6620 = vmax.f32 %v5010, 0.0
    %v6621 = vmax.f32 %v5015, 0.0
    %v6622 = vmax.f32 %v5020, 0.0
    %v6623 = vmax.f32 %v5025, 0.0
    %v6624 = vmax.f32 %v5030, 0.0
    %v6625 = vmax.f32 %v5035, 0.0
    %v6626 = vmax.f32 %v5040, 0.0
    %v6627 = vmax.f32 %v5045, 0.0
    %v6628 = vmax.f32 %v5050, 0.0
    %v6629 = vmax.f32 %v5055, 0.0
    %v6630 = vmax.f32 %v5060, 0.0
    %v6631 = vmax.f32 %v5065, 0.0
    %v6632 = vmax.f32 %v5070, 0.0
    %v6633 = vmax.f32 %v5075, 0.0
    %v6634 = vmax.f32 %v5080, 0.0
    %v6635 = vmax.f32 %v5085, 0.0
    %v6636 = vmax.f32 %v5090, 0.0
    %v6637 = vmax.f32 %v5095, 0.0
    %v6638 = vmax.f32 %v5100, 0.0
    %v6639 = vmax.f32 %v5105, 0.0
    %v6640 = vmax.f32 %v5110, 0.0
    %v6641 = vmax.f32 %v5115, 0.0
    %v6642 = vmax.f32 %v5120, 0.0
    %v6643 = vmax.f32 %v5125, 0.0
    %v6644 = vmax.f32 %v5130, 0.0
    %v6645 = vmax.f32 %v5135, 0.0
    %v6646 = vmax.f32 %v5140, 0.0
    %v6647 = vmax.f32 %v5145, 0.0
    %v6648 = vmax.f32 %v5150, 0.0
    %v6649 = vmax.f32 %v5155, 0.0
    %v6650 = vmax.f32 %v5160, 0.0
    %v6651 = vmax.f32 %v5165, 0.0
    %v6652 = vmax.f32 %v5170, 0.0
    %v6653 = vmax.f32 %v5175, 0.0
    %v6654 = vmax.f32 %v5180, 0.0
    %v6655 = vmax.f32 %v5185, 0.0
    %v6656 = vmax.f32 %v5190, 0.0
    %v6657 = vmax.f32 %v5195, 0.0
    %v6658 = vmax.f32 %v5200, 0.0
    %v6659 = vmax.f32 %v5205, 0.0
    %v6660 = vmax.f32 %v5210, 0.0
    %v6661 = vmax.f32 %v5215, 0.0
    %v6662 = vmax.f32 %v5220, 0.0
    %v6663 = vmax.f32 %v5225, 0.0
    %v6664 = vmax.f32 %v5230, 0.0
    %v6665 = vmax.f32 %v5235, 0.0
    %v6666 = vmax.f32 %v5240, 0.0
    %v6667 = vmax.f32 %v5245, 0.0
    %v6668 = vmax.f32 %v5250, 0.0
    %v6669 = vmax.f32 %v5255, 0.0
    %v6670 = vmax.f32 %v5260, 0.0
    %v6671 = vmax.f32 %v5265, 0.0
    %v6672 = vmax.f32 %v5270, 0.0
    %v6673 = vmax.f32 %v5275, 0.0
    %v6674 = vmax.f32 %v5280, 0.0
    %v6675 = vmax.f32 %v5285, 0.0
    %v6676 = vmax.f32 %v5290, 0.0
    %v6677 = vmax.f32 %v5295, 0.0
    %v6678 = vmax.f32 %v5300, 0.0
    %v6679 = vmax.f32 %v5305, 0.0
    %v6680 = vmax.f32 %v5310, 0.0
    %v6681 = vmax.f32 %v5315, 0.0
    %v6682 = vmax.f32 %v5320, 0.0
    %v6683 = vmax.f32 %v5325, 0.0
    %v6684 = vmax.f32 %v5330, 0.0
    %v6685 = vmax.f32 %v5335, 0.0
    %v6686 = vmax.f32 %v5340, 0.0
    %v6687 = vmax.f32 %v5345, 0.0
    %v6688 = vmax.f32 %v5350, 0.0
    %v6689 = vmax.f32 %v5355, 0.0
    %v6690 = vmax.f32 %v5360, 0.0
    %v6691 = vmax.f32 %v5365, 0.0
    %v6692 = vmax.f32 %v5370, 0.0
    %v6693 = vmax.f32 %v5375, 0.0
    %v6694 = vmax.f32 %v5380, 0.0
    %v6695 = vmax.f32 %v5385, 0.0
    %v6696 = vmax.f32 %v5390, 0.0
    %v6697 = vmax.f32 %v5395, 0.0
    %v6698 = vmax.f32 %v5400, 0.0
    %v6699 = vmax.f32 %v5405, 0.0
    %v6700 = vmax.f32 %v5410, 0.0
    %v6701 = vmax.f32 %v5415, 0.0
    %v6702 = vmax.f32 %v5420, 0.0
    %v6703 = vmax.f32 %v5425, 0.0
    %v6704 = vmax.f32 %v5430, 0.0
    %v6705 = vmax.f32 %v5435, 0.0
    %v6706 = vmax.f32 %v5440, 0.0
    %v6707 = vmax.f32 %v5445, 0.0
    %v6708 = vmax.f32 %v5450, 0.0
    %v6709 = vmax.f32 %v5455, 0.0
    %v6710 = vmax.f32 %v5460, 0.0
    %v6711 = vmax.f32 %v5465, 0.0
    %v6712 = vmax.f32 %v5470, 0.0
    %v6713 = vmax.f32 %v5475, 0.0
    %v6714 = vmax.f32 %v5480, 0.0
    %v6715 = vmax.f32 %v5485, 0.0
    %v6716 = vmax.f32 %v5490, 0.0
    %v6717 = vmax.f32 %v5495, 0.0
    %v6718 = vmax.f32 %v5500, 0.0
    %v6719 = vmax.f32 %v5505, 0.0
    %v6720 = vmax.f32 %v5510, 0.0
    %v6721 = vmax.f32 %v5515, 0.0
    %v6722 = vmax.f32 %v5520, 0.0
    %v6723 = vmax.f32 %v5525, 0.0
    %v6724 = vmax.f32 %v5530, 0.0
    %v6725 = vmax.f32 %v5535, 0.0
    %v6726 = vmax.f32 %v5540, 0.0
    %v6727 = vmax.f32 %v5545, 0.0
    %v6728 = vmax.f32 %v5550, 0.0
    %v6729 = vmax.f32 %v5555, 0.0
    %v6730 = vmax.f32 %v5560, 0.0
    %v6731 = vmax.f32 %v5565, 0.0
    %v6732 = vmax.f32 %v5570, 0.0
    %v6733 = vmax.f32 %v5575, 0.0
    %v6734 = vmax.f32 %v5580, 0.0
    %v6735 = vmax.f32 %v5585, 0.0
    %v6736 = vmax.f32 %v5590, 0.0
    %v6737 = vmax.f32 %v5595, 0.0
    %v6738 = vmax.f32 %v5600, 0.0
    %v6739 = vmax.f32 %v5605, 0.0
    %v6740 = vmax.f32 %v5610, 0.0
    %v6741 = vmax.f32 %v5615, 0.0
    %v6742 = vmax.f32 %v5620, 0.0
    %v6743 = vmax.f32 %v5625, 0.0
    %v6744 = vmax.f32 %v5630, 0.0
    %v6745 = vmax.f32 %v5635, 0.0
    %v6746 = vmax.f32 %v5640, 0.0
    %v6747 = vmax.f32 %v5645, 0.0
    %v6748 = vmax.f32 %v5650, 0.0
    %v6749 = vmax.f32 %v5655, 0.0
    %v6750 = vmax.f32 %v5660, 0.0
    %v6751 = vmax.f32 %v5665, 0.0
    %v6752 = vmax.f32 %v5670, 0.0
    %v6753 = vmax.f32 %v5675, 0.0
    %v6754 = vmax.f32 %v5680, 0.0
    %v6755 = vmax.f32 %v5685, 0.0
    %v6756 = vmax.f32 %v5690, 0.0
    %v6757 = vmax.f32 %v5695, 0.0
    %v6758 = vmax.f32 %v5700, 0.0
    %v6759 = vmax.f32 %v5705, 0.0
    %v6760 = vmax.f32 %v5710, 0.0
    %v6761 = vmax.f32 %v5715, 0.0
    %v6762 = vmax.f32 %v5720, 0.0
    %v6763 = vmax.f32 %v5725, 0.0
    %v6764 = vmax.f32 %v5730, 0.0
    %v6765 = vmax.f32 %v5735, 0.0
    %v6766 = vmax.f32 %v5740, 0.0
    %v6767 = vmax.f32 %v5745, 0.0
    %v6768 = vmax.f32 %v5750, 0.0
    %v6769 = vmax.f32 %v5755, 0.0
    %v6770 = vmax.f32 %v5760, 0.0
    %v6771 = vmax.f32 %v5765, 0.0
    %v6772 = vmax.f32 %v5770, 0.0
    %v6773 = vmax.f32 %v5775, 0.0
    %v6774 = vmax.f32 %v5780, 0.0
    %v6775 = vmax.f32 %v5785, 0.0
    %v6776 = vmax.f32 %v5790, 0.0
    %v6777 = vmax.f32 %v5795, 0.0
    %v6778 = vmax.f32 %v5800, 0.0
    %v6779 = vmax.f32 %v5805, 0.0
    %v6780 = vmax.f32 %v5810, 0.0
    %v6781 = vmax.f32 %v5815, 0.0
    %v6782 = vmax.f32 %v5820, 0.0
    %v6783 = vmax.f32 %v5825, 0.0
    %v6784 = vmax.f32 %v5830, 0.0
    %v6785 = vmax.f32 %v5835, 0.0
    %v6786 = vmax.f32 %v5840, 0.0
    %v6787 = vmax.f32 %v5845, 0.0
    %v6788 = vmax.f32 %v5850, 0.0
    %v6789 = vmax.f32 %v5855, 0.0
    %v6790 = vmax.f32 %v5860, 0.0
    %v6791 = vmax.f32 %v5865, 0.0
    %v6792 = vmax.f32 %v5870, 0.0
    %v6793 = vmax.f32 %v5875, 0.0
    %v6794 = vmax.f32 %v5880, 0.0
    %v6795 = vmax.f32 %v5885, 0.0
    %v6796 = vmax.f32 %v5890, 0.0
    %v6797 = vmax.f32 %v5895, 0.0
    %v6798 = vmax.f32 %v5900, 0.0
    %v6799 = vmax.f32 %v5905, 0.0
    %v6800 = vmax.f32 %v5910, 0.0
    %v6801 = vmax.f32 %v5915, 0.0
    %v6802 = vmax.f32 %v5920, 0.0
    %v6803 = vmax.f32 %v5925, 0.0
    %v6804 = vmax.f32 %v5930, 0.0
    %v6805 = vmax.f32 %v5935, 0.0
    %v6806 = vmax.f32 %v5940, 0.0
    %v6807 = vmax.f32 %v5945, 0.0
    %v6808 = vmax.f32 %v5950, 0.0
    %v6809 = vmax.f32 %v5955, 0.0
    %v6810 = vmax.f32 %v5960, 0.0
    %v6811 = vmax.f32 %v5965, 0.0
    %v6812 = vmax.f32 %v5970, 0.0
    %v6813 = vmax.f32 %v5975, 0.0
    %v6814 = vmax.f32 %v5980, 0.0
    %v6815 = vmax.f32 %v5985, 0.0
    %v6816 = vmax.f32 %v5990, 0.0
    %v6817 = vmax.f32 %v5995, 0.0
    %v6818 = vmax.f32 %v6000, 0.0
    %v6819 = vmax.f32 %v6005, 0.0
    %v6820 = vmax.f32 %v6010, 0.0
    %v6821 = vmax.f32 %v6015, 0.0
    %v6822 = vmax.f32 %v6020, 0.0
    %v6823 = vmax.f32 %v6025, 0.0
    %v6824 = vmax.f32 %v6030, 0.0
    %v6825 = vmax.f32 %v6035, 0.0
    %v6826 = vmax.f32 %v6040, 0.0
    %v6827 = vmax.f32 %v6045, 0.0
    %v6828 = vmax.f32 %v6050, 0.0
    %v6829 = vmax.f32 %v6055, 0.0
    %v6830 = vmax.f32 %v6060, 0.0
    %v6831 = vmax.f32 %v6065, 0.0
    %v6832 = vmax.f32 %v6070, 0.0
    %v6833 = vmax.f32 %v6075, 0.0
    %v6834 = vmax.f32 %v6080, 0.0
    %v6835 = vmax.f32 %v6085, 0.0
    %v6836 = vmax.f32 %v6090, 0.0
    %v6837 = vmax.f32 %v6095, 0.0
    %v6838 = vmax.f32 %v6100, 0.0
    %v6839 = vmax.f32 %v6105, 0.0
    %v6840 = vmax.f32 %v6110, 0.0
    %v6841 = vmax.f32 %v6115, 0.0
    %v6842 = vmax.f32 %v6120, 0.0
    %v6843 = vmax.f32 %v6125, 0.0
    %v6844 = vmax.f32 %v6130, 0.0
    %v6845 = vmax.f32 %v6135, 0.0
    %v6846 = vmax.f32 %v6140, 0.0
    %v6847 = vmax.f32 %v6145, 0.0
    %v6848 = vmax.f32 %v6150, 0.0
    %v6849 = vmax.f32 %v6155, 0.0
    %v6850 = vmax.f32 %v6160, 0.0
    %v6851 = vmax.f32 %v6165, 0.0
    %v6852 = vmax.f32 %v6170, 0.0
    %v6853 = vmax.f32 %v6175, 0.0
    %v6854 = vmax.f32 %v6178, %v6347
    %v6855 = vmax.f32 %v6179, %v6348
    %v6856 = vmax.f32 %v6180, %v6349
    %v6857 = vmax.f32 %v6181, %v6350
    %v6858 = vmax.f32 %v6182, %v6351
    %v6859 = vmax.f32 %v6183, %v6352
    %v6860 = vmax.f32 %v6184, %v6353
    %v6861 = vmax.f32 %v6185, %v6354
    %v6862 = vmax.f32 %v6186, %v6355
    %v6863 = vmax.f32 %v6187, %v6356
    %v6864 = vmax.f32 %v6188, %v6357
    %v6865 = vmax.f32 %v6189, %v6358
    %v6866 = vmax.f32 %v6190, %v6359
    %v6867 = vmax.f32 %v6191, %v6360
    %v6868 = vmax.f32 %v6192, %v6361
    %v6869 = vmax.f32 %v6193, %v6362
    %v6870 = vmax.f32 %v6194, %v6363
    %v6871 = vmax.f32 %v6195, %v6364
    %v6872 = vmax.f32 %v6196, %v6365
    %v6873 = vmax.f32 %v6197, %v6366
    %v6874 = vmax.f32 %v6198, %v6367
    %v6875 = vmax.f32 %v6199, %v6368
    %v6876 = vmax.f32 %v6200, %v6369
    %v6877 = vmax.f32 %v6201, %v6370
    %v6878 = vmax.f32 %v6202, %v6371
    %v6879 = vmax.f32 %v6203, %v6372
    %v6880 = vmax.f32 %v6204, %v6373
    %v6881 = vmax.f32 %v6205, %v6374
    %v6882 = vmax.f32 %v6206, %v6375
    %v6883 = vmax.f32 %v6207, %v6376
    %v6884 = vmax.f32 %v6208, %v6377
    %v6885 = vmax.f32 %v6209, %v6378
    %v6886 = vmax.f32 %v6210, %v6379
    %v6887 = vmax.f32 %v6211, %v6380
    %v6888 = vmax.f32 %v6212, %v6381
    %v6889 = vmax.f32 %v6213, %v6382
    %v6890 = vmax.f32 %v6214, %v6383
    %v6891 = vmax.f32 %v6215, %v6384
    %v6892 = vmax.f32 %v6216, %v6385
    %v6893 = vmax.f32 %v6217, %v6386
    %v6894 = vmax.f32 %v6218, %v6387
    %v6895 = vmax.f32 %v6219, %v6388
    %v6896 = vmax.f32 %v6220, %v6389
    %v6897 = vmax.f32 %v6221, %v6390
    %v6898 = vmax.f32 %v6222, %v6391
    %v6899 = vmax.f32 %v6223, %v6392
    %v6900 = vmax.f32 %v6224, %v6393
    %v6901 = vmax.f32 %v6225, %v6394
    %v6902 = vmax.f32 %v6226, %v6395
    %v6903 = vmax.f32 %v6227, %v6396
    %v6904 = vmax.f32 %v6228, %v6397
    %v6905 = vmax.f32 %v6229, %v6398
    %v6906 = vmax.f32 %v6230, %v6399
    %v6907 = vmax.f32 %v6231, %v6400
    %v6908 = vmax.f32 %v6232, %v6401
    %v6909 = vmax.f32 %v6233, %v6402
    %v6910 = vmax.f32 %v6234, %v6403
    %v6911 = vmax.f32 %v6235, %v6404
    %v6912 = vmax.f32 %v6236, %v6405
    %v6913 = vmax.f32 %v6237, %v6406
    %v6914 = vmax.f32 %v6238, %v6407
    %v6915 = vmax.f32 %v6239, %v6408
    %v6916 = vmax.f32 %v6240, %v6409
    %v6917 = vmax.f32 %v6241, %v6410
    %v6918 = vmax.f32 %v6242, %v6411
    %v6919 = vmax.f32 %v6243, %v6412
    %v6920 = vmax.f32 %v6244, %v6413
    %v6921 = vmax.f32 %v6245, %v6414
    %v6922 = vmax.f32 %v6246, %v6415
    %v6923 = vmax.f32 %v6247, %v6416
    %v6924 = vmax.f32 %v6248, %v6417
    %v6925 = vmax.f32 %v6249, %v6418
    %v6926 = vmax.f32 %v6250, %v6419
    %v6927 = vmax.f32 %v6251, %v6420
    %v6928 = vmax.f32 %v6252, %v6421
    %v6929 = vmax.f32 %v6253, %v6422
    %v6930 = vmax.f32 %v6254, %v6423
    %v6931 = vmax.f32 %v6255, %v6424
    %v6932 = vmax.f32 %v6256, %v6425
    %v6933 = vmax.f32 %v6257, %v6426
    %v6934 = vmax.f32 %v6258, %v6427
    %v6935 = vmax.f32 %v6259, %v6428
    %v6936 = vmax.f32 %v6260, %v6429
    %v6937 = vmax.f32 %v6261, %v6430
    %v6938 = vmax.f32 %v6262, %v6431
    %v6939 = vmax.f32 %v6263, %v6432
    %v6940 = vmax.f32 %v6264, %v6433
    %v6941 = vmax.f32 %v6265, %v6434
    %v6942 = vmax.f32 %v6266, %v6435
    %v6943 = vmax.f32 %v6267, %v6436
    %v6944 = vmax.f32 %v6268, %v6437
    %v6945 = vmax.f32 %v6269, %v6438
    %v6946 = vmax.f32 %v6270, %v6439
    %v6947 = vmax.f32 %v6271, %v6440
    %v6948 = vmax.f32 %v6272, %v6441
    %v6949 = vmax.f32 %v6273, %v6442
    %v6950 = vmax.f32 %v6274, %v6443
    %v6951 = vmax.f32 %v6275, %v6444
    %v6952 = vmax.f32 %v6276, %v6445
    %v6953 = vmax.f32 %v6277, %v6446
    %v6954 = vmax.f32 %v6278, %v6447
    %v6955 = vmax.f32 %v6279, %v6448
    %v6956 = vmax.f32 %v6280, %v6449
    %v6957 = vmax.f32 %v6281, %v6450
    %v6958 = vmax.f32 %v6282, %v6451
    %v6959 = vmax.f32 %v6283, %v6452
    %v6960 = vmax.f32 %v6284, %v6453
    %v6961 = vmax.f32 %v6285, %v6454
    %v6962 = vmax.f32 %v6286, %v6455
    %v6963 = vmax.f32 %v6287, %v6456
    %v6964 = vmax.f32 %v6288, %v6457
    %v6965 = vmax.f32 %v6289, %v6458
    %v6966 = vmax.f32 %v6290, %v6459
    %v6967 = vmax.f32 %v6291, %v6460
    %v6968 = vmax.f32 %v6292, %v6461
    %v6969 = vmax.f32 %v6293, %v6462
    %v6970 = vmax.f32 %v6294, %v6463
    %v6971 = vmax.f32 %v6295, %v6464
    %v6972 = vmax.f32 %v6296, %v6465
    %v6973 = vmax.f32 %v6297, %v6466
    %v6974 = vmax.f32 %v6298, %v6467
    %v6975 = vmax.f32 %v6299, %v6468
    %v6976 = vmax.f32 %v6300, %v6469
    %v6977 = vmax.f32 %v6301, %v6470
    %v6978 = vmax.f32 %v6302, %v6471
    %v6979 = vmax.f32 %v6303, %v6472
    %v6980 = vmax.f32 %v6304, %v6473
    %v6981 = vmax.f32 %v6305, %v6474
    %v6982 = vmax.f32 %v6306, %v6475
    %v6983 = vmax.f32 %v6307, %v6476
    %v6984 = vmax.f32 %v6308, %v6477
    %v6985 = vmax.f32 %v6309, %v6478
    %v6986 = vmax.f32 %v6310, %v6479
    %v6987 = vmax.f32 %v6311, %v6480
    %v6988 = vmax.f32 %v6312, %v6481
    %v6989 = vmax.f32 %v6313, %v6482
    %v6990 = vmax.f32 %v6314, %v6483
    %v6991 = vmax.f32 %v6315, %v6484
    %v6992 = vmax.f32 %v6316, %v6485
    %v6993 = vmax.f32 %v6317, %v6486
    %v6994 = vmax.f32 %v6318, %v6487
    %v6995 = vmax.f32 %v6319, %v6488
    %v6996 = vmax.f32 %v6320, %v6489
    %v6997 = vmax.f32 %v6321, %v6490
    %v6998 = vmax.f32 %v6322, %v6491
    %v6999 = vmax.f32 %v6323, %v6492
    %v7000 = vmax.f32 %v6324, %v6493
    %v7001 = vmax.f32 %v6325, %v6494
    %v7002 = vmax.f32 %v6326, %v6495
    %v7003 = vmax.f32 %v6327, %v6496
    %v7004 = vmax.f32 %v6328, %v6497
    %v7005 = vmax.f32 %v6329, %v6498
    %v7006 = vmax.f32 %v6330, %v6499
    %v7007 = vmax.f32 %v6331, %v6500
    %v7008 = vmax.f32 %v6332, %v6501
    %v7009 = vmax.f32 %v6333, %v6502
    %v7010 = vmax.f32 %v6334, %v6503
    %v7011 = vmax.f32 %v6335, %v6504
    %v7012 = vmax.f32 %v6336, %v6505
    %v7013 = vmax.f32 %v6337, %v6506
    %v7014 = vmax.f32 %v6338, %v6507
    %v7015 = vmax.f32 %v6339, %v6508
    %v7016 = vmax.f32 %v6340, %v6509
    %v7017 = vmax.f32 %v6341, %v6510
    %v7018 = vmax.f32 %v6342, %v6511
    %v7019 = vmax.f32 %v6343, %v6512
    %v7020 = vmax.f32 %v6344, %v6513
    %v7021 = vmax.f32 %v6345, %v6514
    %v7022 = vmax.f32 %v6346, %v6515
    %v7023 = vmax.f32 %v6516, %v6685
    %v7024 = vmax.f32 %v6517, %v6686
    %v7025 = vmax.f32 %v6518, %v6687
    %v7026 = vmax.f32 %v6519, %v6688
    %v7027 = vmax.f32 %v6520, %v6689
    %v7028 = vmax.f32 %v6521, %v6690
    %v7029 = vmax.f32 %v6522, %v6691
    %v7030 = vmax.f32 %v6523, %v6692
    %v7031 = vmax.f32 %v6524, %v6693
    %v7032 = vmax.f32 %v6525, %v6694
    %v7033 = vmax.f32 %v6526, %v6695
    %v7034 = vmax.f32 %v6527, %v6696
    %v7035 = vmax.f32 %v6528, %v6697
    %v7036 = vmax.f32 %v6529, %v6698
    %v7037 = vmax.f32 %v6530, %v6699
    %v7038 = vmax.f32 %v6531, %v6700
    %v7039 = vmax.f32 %v6532, %v6701
    %v7040 = vmax.f32 %v6533, %v6702
    %v7041 = vmax.f32 %v6534, %v6703
    %v7042 = vmax.f32 %v6535, %v6704
    %v7043 = vmax.f32 %v6536, %v6705
    %v7044 = vmax.f32 %v6537, %v6706
    %v7045 = vmax.f32 %v6538, %v6707
    %v7046 = vmax.f32 %v6539, %v6708
    %v7047 = vmax.f32 %v6540, %v6709
    %v7048 = vmax.f32 %v6541, %v6710
    %v7049 = vmax.f32 %v6542, %v6711
    %v7050 = vmax.f32 %v6543, %v6712
    %v7051 = vmax.f32 %v6544, %v6713
    %v7052 = vmax.f32 %v6545, %v6714
    %v7053 = vmax.f32 %v6546, %v6715
    %v7054 = vmax.f32 %v6547, %v6716
    %v7055 = vmax.f32 %v6548, %v6717
    %v7056 = vmax.f32 %v6549, %v6718
    %v7057 = vmax.f32 %v6550, %v6719
    %v7058 = vmax.f32 %v6551, %v6720
    %v7059 = vmax.f32 %v6552, %v6721
    %v7060 = vmax.f32 %v6553, %v6722
    %v7061 = vmax.f32 %v6554, %v6723
    %v7062 = vmax.f32 %v6555, %v6724
    %v7063 = vmax.f32 %v6556, %v6725
    %v7064 = vmax.f32 %v6557, %v6726
    %v7065 = vmax.f32 %v6558, %v6727
    %v7066 = vmax.f32 %v6559, %v6728
    %v7067 = vmax.f32 %v6560, %v6729
    %v7068 = vmax.f32 %v6561, %v6730
    %v7069 = vmax.f32 %v6562, %v6731
    %v7070 = vmax.f32 %v6563, %v6732
    %v7071 = vmax.f32 %v6564, %v6733
    %v7072 = vmax.f32 %v6565, %v6734
    %v7073 = vmax.f32 %v6566, %v6735
    %v7074 = vmax.f32 %v6567, %v6736
    %v7075 = vmax.f32 %v6568, %v6737
    %v7076 = vmax.f32 %v6569, %v6738
    %v7077 = vmax.f32 %v6570, %v6739
    %v7078 = vmax.f32 %v6571, %v6740
    %v7079 = vmax.f32 %v6572, %v6741
    %v7080 = vmax.f32 %v6573, %v6742
    %v7081 = vmax.f32 %v6574, %v6743
    %v7082 = vmax.f32 %v6575, %v6744
    %v7083 = vmax.f32 %v6576, %v6745
    %v7084 = vmax.f32 %v6577, %v6746
    %v7085 = vmax.f32 %v6578, %v6747
    %v7086 = vmax.f32 %v6579, %v6748
    %v7087 = vmax.f32 %v6580, %v6749
    %v7088 = vmax.f32 %v6581, %v6750
    %v7089 = vmax.f32 %v6582, %v6751
    %v7090 = vmax.f32 %v6583, %v6752
    %v7091 = vmax.f32 %v6584, %v6753
    %v7092 = vmax.f32 %v6585, %v6754
    %v7093 = vmax.f32 %v6586, %v6755
    %v7094 = vmax.f32 %v6587, %v6756
    %v7095 = vmax.f32 %v6588, %v6757
    %v7096 = vmax.f32 %v6589, %v6758
    %v7097 = vmax.f32 %v6590, %v6759
    %v7098 = vmax.f32 %v6591, %v6760
    %v7099 = vmax.f32 %v6592, %v6761
    %v7100 = vmax.f32 %v6593, %v6762
    %v7101 = vmax.f32 %v6594, %v6763
    %v7102 = vmax.f32 %v6595, %v6764
    %v7103 = vmax.f32 %v6596, %v6765
    %v7104 = vmax.f32 %v6597, %v6766
    %v7105 = vmax.f32 %v6598, %v6767
    %v7106 = vmax.f32 %v6599, %v6768
    %v7107 = vmax.f32 %v6600, %v6769
    %v7108 = vmax.f32 %v6601, %v6770
    %v7109 = vmax.f32 %v6602, %v6771
    %v7110 = vmax.f32 %v6603, %v6772
    %v7111 = vmax.f32 %v6604, %v6773
    %v7112 = vmax.f32 %v6605, %v6774
    %v7113 = vmax.f32 %v6606, %v6775
    %v7114 = vmax.f32 %v6607, %v6776
    %v7115 = vmax.f32 %v6608, %v6777
    %v7116 = vmax.f32 %v6609, %v6778
    %v7117 = vmax.f32 %v6610, %v6779
    %v7118 = vmax.f32 %v6611, %v6780
    %v7119 = vmax.f32 %v6612, %v6781
    %v7120 = vmax.f32 %v6613, %v6782
    %v7121 = vmax.f32 %v6614, %v6783
    %v7122 = vmax.f32 %v6615, %v6784
    %v7123 = vmax.f32 %v6616, %v6785
    %v7124 = vmax.f32 %v6617, %v6786
    %v7125 = vmax.f32 %v6618, %v6787
    %v7126 = vmax.f32 %v6619, %v6788
    %v7127 = vmax.f32 %v6620, %v6789
    %v7128 = vmax.f32 %v6621, %v6790
    %v7129 = vmax.f32 %v6622, %v6791
    %v7130 = vmax.f32 %v6623, %v6792
    %v7131 = vmax.f32 %v6624, %v6793
    %v7132 = vmax.f32 %v6625, %v6794
    %v7133 = vmax.f32 %v6626, %v6795
    %v7134 = vmax.f32 %v6627, %v6796
    %v7135 = vmax.f32 %v6628, %v6797
    %v7136 = vmax.f32 %v6629, %v6798
    %v7137 = vmax.f32 %v6630, %v6799
    %v7138 = vmax.f32 %v6631, %v6800
    %v7139 = vmax.f32 %v6632, %v6801
    %v7140 = vmax.f32 %v6633, %v6802
    %v7141 = vmax.f32 %v6634, %v6803
    %v7142 = vmax.f32 %v6635, %v6804
    %v7143 = vmax.f32 %v6636, %v6805
    %v7144 = vmax.f32 %v6637, %v6806
    %v7145 = vmax.f32 %v6638, %v6807
    %v7146 = vmax.f32 %v6639, %v6808
    %v7147 = vmax.f32 %v6640, %v6809
    %v7148 = vmax.f32 %v6641, %v6810
    %v7149 = vmax.f32 %v6642, %v6811
    %v7150 = vmax.f32 %v6643, %v6812
    %v7151 = vmax.f32 %v6644, %v6813
    %v7152 = vmax.f32 %v6645, %v6814
    %v7153 = vmax.f32 %v6646, %v6815
    %v7154 = vmax.f32 %v6647, %v6816
    %v7155 = vmax.f32 %v6648, %v6817
    %v7156 = vmax.f32 %v6649, %v6818
    %v7157 = vmax.f32 %v6650, %v6819
    %v7158 = vmax.f32 %v6651, %v6820
    %v7159 = vmax.f32 %v6652, %v6821
    %v7160 = vmax.f32 %v6653, %v6822
    %v7161 = vmax.f32 %v6654, %v6823
    %v7162 = vmax.f32 %v6655, %v6824
    %v7163 = vmax.f32 %v6656, %v6825
    %v7164 = vmax.f32 %v6657, %v6826
    %v7165 = vmax.f32 %v6658, %v6827
    %v7166 = vmax.f32 %v6659, %v6828
    %v7167 = vmax.f32 %v6660, %v6829
    %v7168 = vmax.f32 %v6661, %v6830
    %v7169 = vmax.f32 %v6662, %v6831
    %v7170 = vmax.f32 %v6663, %v6832
    %v7171 = vmax.f32 %v6664, %v6833
    %v7172 = vmax.f32 %v6665, %v6834
    %v7173 = vmax.f32 %v6666, %v6835
    %v7174 = vmax.f32 %v6667, %v6836
    %v7175 = vmax.f32 %v6668, %v6837
    %v7176 = vmax.f32 %v6669, %v6838
    %v7177 = vmax.f32 %v6670, %v6839
    %v7178 = vmax.f32 %v6671, %v6840
    %v7179 = vmax.f32 %v6672, %v6841
    %v7180 = vmax.f32 %v6673, %v6842
    %v7181 = vmax.f32 %v6674, %v6843
    %v7182 = vmax.f32 %v6675, %v6844
    %v7183 = vmax.f32 %v6676, %v6845
    %v7184 = vmax.f32 %v6677, %v6846
    %v7185 = vmax.f32 %v6678, %v6847
    %v7186 = vmax.f32 %v6679, %v6848
    %v7187 = vmax.f32 %v6680, %v6849
    %v7188 = vmax.f32 %v6681, %v6850
    %v7189 = vmax.f32 %v6682, %v6851
    %v7190 = vmax.f32 %v6683, %v6852
    %v7191 = vmax.f32 %v6684, %v6853
    %v7192 = vmax.f32 %v6854, %v7023
    %v7193 = vmax.f32 %v6855, %v7024
    %v7194 = vmax.f32 %v6856, %v7025
    %v7195 = vmax.f32 %v6857, %v7026
    %v7196 = vmax.f32 %v6858, %v7027
    %v7197 = vmax.f32 %v6859, %v7028
    %v7198 = vmax.f32 %v6860, %v7029
    %v7199 = vmax.f32 %v6861, %v7030
    %v7200 = vmax.f32 %v6862, %v7031
    %v7201 = vmax.f32 %v6863, %v7032
    %v7202 = vmax.f32 %v6864, %v7033
    %v7203 = vmax.f32 %v6865, %v7034
    %v7204 = vmax.f32 %v6866, %v7035
    %v7205 = vmax.f32 %v6867, %v7036
    %v7206 = vmax.f32 %v6868, %v7037
    %v7207 = vmax.f32 %v6869, %v7038
    %v7208 = vmax.f32 %v6870, %v7039
    %v7209 = vmax.f32 %v6871, %v7040
    %v7210 = vmax.f32 %v6872, %v7041
    %v7211 = vmax.f32 %v6873, %v7042
    %v7212 = vmax.f32 %v6874, %v7043
    %v7213 = vmax.f32 %v6875, %v7044
    %v7214 = vmax.f32 %v6876, %v7045
    %v7215 = vmax.f32 %v6877, %v7046
    %v7216 = vmax.f32 %v6878, %v7047
    %v7217 = vmax.f32 %v6879, %v7048
    %v7218 = vmax.f32 %v6880, %v7049
    %v7219 = vmax.f32 %v6881, %v7050
    %v7220 = vmax.f32 %v6882, %v7051
    %v7221 = vmax.f32 %v6883, %v7052
    %v7222 = vmax.f32 %v6884, %v7053
    %v7223 = vmax.f32 %v6885, %v7054
    %v7224 = vmax.f32 %v6886, %v7055
    %v7225 = vmax.f32 %v6887, %v7056
    %v7226 = vmax.f32 %v6888, %v7057
    %v7227 = vmax.f32 %v6889, %v7058
    %v7228 = vmax.f32 %v6890, %v7059
    %v7229 = vmax.f32 %v6891, %v7060
    %v7230 = vmax.f32 %v6892, %v7061
    %v7231 = vmax.f32 %v6893, %v7062
    %v7232 = vmax.f32 %v6894, %v7063
    %v7233 = vmax.f32 %v6895, %v7064
    %v7234 = vmax.f32 %v6896, %v7065
    %v7235 = vmax.f32 %v6897, %v7066
    %v7236 = vmax.f32 %v6898, %v7067
    %v7237 = vmax.f32 %v6899, %v7068
    %v7238 = vmax.f32 %v6900, %v7069
    %v7239 = vmax.f32 %v6901, %v7070
    %v7240 = vmax.f32 %v6902, %v7071
    %v7241 = vmax.f32 %v6903, %v7072
    %v7242 = vmax.f32 %v6904, %v7073
    %v7243 = vmax.f32 %v6905, %v7074
    %v7244 = vmax.f32 %v6906, %v7075
    %v7245 = vmax.f32 %v6907, %v7076
    %v7246 = vmax.f32 %v6908, %v7077
    %v7247 = vmax.f32 %v6909, %v7078
    %v7248 = vmax.f32 %v6910, %v7079
    %v7249 = vmax.f32 %v6911, %v7080
    %v7250 = vmax.f32 %v6912, %v7081
    %v7251 = vmax.f32 %v6913, %v7082
    %v7252 = vmax.f32 %v6914, %v7083
    %v7253 = vmax.f32 %v6915, %v7084
    %v7254 = vmax.f32 %v6916, %v7085
    %v7255 = vmax.f32 %v6917, %v7086
    %v7256 = vmax.f32 %v6918, %v7087
    %v7257 = vmax.f32 %v6919, %v7088
    %v7258 = vmax.f32 %v6920, %v7089
    %v7259 = vmax.f32 %v6921, %v7090
    %v7260 = vmax.f32 %v6922, %v7091
    %v7261 = vmax.f32 %v6923, %v7092
    %v7262 = vmax.f32 %v6924, %v7093
    %v7263 = vmax.f32 %v6925, %v7094
    %v7264 = vmax.f32 %v6926, %v7095
    %v7265 = vmax.f32 %v6927, %v7096
    %v7266 = vmax.f32 %v6928, %v7097
    %v7267 = vmax.f32 %v6929, %v7098
    %v7268 = vmax.f32 %v6930, %v7099
    %v7269 = vmax.f32 %v6931, %v7100
    %v7270 = vmax.f32 %v6932, %v7101
    %v7271 = vmax.f32 %v6933, %v7102
    %v7272 = vmax.f32 %v6934, %v7103
    %v7273 = vmax.f32 %v6935, %v7104
    %v7274 = vmax.f32 %v6936, %v7105
    %v7275 = vmax.f32 %v6937, %v7106
    %v7276 = vmax.f32 %v6938, %v7107
    %v7277 = vmax.f32 %v6939, %v7108
    %v7278 = vmax.f32 %v6940, %v7109
    %v7279 = vmax.f32 %v6941, %v7110
    %v7280 = vmax.f32 %v6942, %v7111
    %v7281 = vmax.f32 %v6943, %v7112
    %v7282 = vmax.f32 %v6944, %v7113
    %v7283 = vmax.f32 %v6945, %v7114
    %v7284 = vmax.f32 %v6946, %v7115
    %v7285 = vmax.f32 %v6947, %v7116
    %v7286 = vmax.f32 %v6948, %v7117
    %v7287 = vmax.f32 %v6949, %v7118
    %v7288 = vmax.f32 %v6950, %v7119
    %v7289 = vmax.f32 %v6951, %v7120
    %v7290 = vmax.f32 %v6952, %v7121
    %v7291 = vmax.f32 %v6953, %v7122
    %v7292 = vmax.f32 %v6954, %v7123
    %v7293 = vmax.f32 %v6955, %v7124
    %v7294 = vmax.f32 %v6956, %v7125
    %v7295 = vmax.f32 %v6957, %v7126
    %v7296 = vmax.f32 %v6958, %v7127
    %v7297 = vmax.f32 %v6959, %v7128
    %v7298 = vmax.f32 %v6960, %v7129
    %v7299 = vmax.f32 %v6961, %v7130
    %v7300 = vmax.f32 %v6962, %v7131
    %v7301 = vmax.f32 %v6963, %v7132
    %v7302 = vmax.f32 %v6964, %v7133
    %v7303 = vmax.f32 %v6965, %v7134
    %v7304 = vmax.f32 %v6966, %v7135
    %v7305 = vmax.f32 %v6967, %v7136
    %v7306 = vmax.f32 %v6968, %v7137
    %v7307 = vmax.f32 %v6969, %v7138
    %v7308 = vmax.f32 %v6970, %v7139
    %v7309 = vmax.f32 %v6971, %v7140
    %v7310 = vmax.f32 %v6972, %v7141
    %v7311 = vmax.f32 %v6973, %v7142
    %v7312 = vmax.f32 %v6974, %v7143
    %v7313 = vmax.f32 %v6975, %v7144
    %v7314 = vmax.f32 %v6976, %v7145
    %v7315 = vmax.f32 %v6977, %v7146
    %v7316 = vmax.f32 %v6978, %v7147
    %v7317 = vmax.f32 %v6979, %v7148
    %v7318 = vmax.f32 %v6980, %v7149
    %v7319 = vmax.f32 %v6981, %v7150
    %v7320 = vmax.f32 %v6982, %v7151
    %v7321 = vmax.f32 %v6983, %v7152
    %v7322 = vmax.f32 %v6984, %v7153
    %v7323 = vmax.f32 %v6985, %v7154
    %v7324 = vmax.f32 %v6986, %v7155
    %v7325 = vmax.f32 %v6987, %v7156
    %v7326 = vmax.f32 %v6988, %v7157
    %v7327 = vmax.f32 %v6989, %v7158
    %v7328 = vmax.f32 %v6990, %v7159
    %v7329 = vmax.f32 %v6991, %v7160
    %v7330 = vmax.f32 %v6992, %v7161
    %v7331 = vmax.f32 %v6993, %v7162
    %v7332 = vmax.f32 %v6994, %v7163
    %v7333 = vmax.f32 %v6995, %v7164
    %v7334 = vmax.f32 %v6996, %v7165
    %v7335 = vmax.f32 %v6997, %v7166
    %v7336 = vmax.f32 %v6998, %v7167
    %v7337 = vmax.f32 %v6999, %v7168
    %v7338 = vmax.f32 %v7000, %v7169
    %v7339 = vmax.f32 %v7001, %v7170
    %v7340 = vmax.f32 %v7002, %v7171
    %v7341 = vmax.f32 %v7003, %v7172
    %v7342 = vmax.f32 %v7004, %v7173
    %v7343 = vmax.f32 %v7005, %v7174
    %v7344 = vmax.f32 %v7006, %v7175
    %v7345 = vmax.f32 %v7007, %v7176
    %v7346 = vmax.f32 %v7008, %v7177
    %v7347 = vmax.f32 %v7009, %v7178
    %v7348 = vmax.f32 %v7010, %v7179
    %v7349 = vmax.f32 %v7011, %v7180
    %v7350 = vmax.f32 %v7012, %v7181
    %v7351 = vmax.f32 %v7013, %v7182
    %v7352 = vmax.f32 %v7014, %v7183
    %v7353 = vmax.f32 %v7015, %v7184
    %v7354 = vmax.f32 %v7016, %v7185
    %v7355 = vmax.f32 %v7017, %v7186
    %v7356 = vmax.f32 %v7018, %v7187
    %v7357 = vmax.f32 %v7019, %v7188
    %v7358 = vmax.f32 %v7020, %v7189
    %v7359 = vmax.f32 %v7021, %v7190
    %v7360 = vmax.f32 %v7022, %v7191
    %7361 = vst [vmem:[#allocation2] sm:$0xff] %v7192
    %7362 = vst [vmem:[#allocation2 + $0x8] sm:$0xff] %v7193
    %7363 = vst [vmem:[#allocation2 + $0x10] sm:$0xff] %v7194
    %7364 = vst [vmem:[#allocation2 + $0x18] sm:$0xff] %v7195
    %7365 = vst [vmem:[#allocation2 + $0x20] sm:$0xff] %v7196
    %7366 = vst [vmem:[#allocation2 + $0x28] sm:$0xff] %v7197
    %7367 = vst [vmem:[#allocation2 + $0x30] sm:$0xff] %v7198
    %7368 = vst [vmem:[#allocation2 + $0x38] sm:$0xff] %v7199
    %7369 = vst [vmem:[#allocation2 + $0x40] sm:$0xff] %v7200
    %7370 = vst [vmem:[#allocation2 + $0x48] sm:$0xff] %v7201
    %7371 = vst [vmem:[#allocation2 + $0x50] sm:$0xff] %v7202
    %7372 = vst [vmem:[#allocation2 + $0x58] sm:$0xff] %v7203
    %7373 = vst [vmem:[#allocation2 + $0x60] sm:$0xff] %v7204
    %7374 = vst [vmem:[#allocation2 + $0x68] sm:$0xff] %v7205
    %7375 = vst [vmem:[#allocation2 + $0x70] sm:$0xff] %v7206
    %7376 = vst [vmem:[#allocation2 + $0x78] sm:$0xff] %v7207
    %7377 = vst [vmem:[#allocation2 + $0x80] sm:$0xff] %v7208
    %7378 = vst [vmem:[#allocation2 + $0x88] sm:$0xff] %v7209
    %7379 = vst [vmem:[#allocation2 + $0x90] sm:$0xff] %v7210
    %7380 = vst [vmem:[#allocation2 + $0x98] sm:$0xff] %v7211
    %7381 = vst [vmem:[#allocation2 + $0xa0] sm:$0xff] %v7212
    %7382 = vst [vmem:[#allocation2 + $0xa8] sm:$0xff] %v7213
    %7383 = vst [vmem:[#allocation2 + $0xb0] sm:$0xff] %v7214
    %7384 = vst [vmem:[#allocation2 + $0xb8] sm:$0xff] %v7215
    %7385 = vst [vmem:[#allocation2 + $0xc0] sm:$0xff] %v7216
    %7386 = vst [vmem:[#allocation2 + $0xc8] sm:$0xff] %v7217
    %7387 = vst [vmem:[#allocation2 + $0xd0] sm:$0xff] %v7218
    %7388 = vst [vmem:[#allocation2 + $0xd8] sm:$0xff] %v7219
    %7389 = vst [vmem:[#allocation2 + $0xe0] sm:$0xff] %v7220
    %7390 = vst [vmem:[#allocation2 + $0xe8] sm:$0xff] %v7221
    %7391 = vst [vmem:[#allocation2 + $0xf0] sm:$0xff] %v7222
    %7392 = vst [vmem:[#allocation2 + $0xf8] sm:$0xff] %v7223
    %7393 = vst [vmem:[#allocation2 + $0x100] sm:$0xff] %v7224
    %7394 = vst [vmem:[#allocation2 + $0x108] sm:$0xff] %v7225
    %7395 = vst [vmem:[#allocation2 + $0x110] sm:$0xff] %v7226
    %7396 = vst [vmem:[#allocation2 + $0x118] sm:$0xff] %v7227
    %7397 = vst [vmem:[#allocation2 + $0x120] sm:$0xff] %v7228
    %7398 = vst [vmem:[#allocation2 + $0x128] sm:$0xff] %v7229
    %7399 = vst [vmem:[#allocation2 + $0x130] sm:$0xff] %v7230
    %7400 = vst [vmem:[#allocation2 + $0x138] sm:$0xff] %v7231
    %7401 = vst [vmem:[#allocation2 + $0x140] sm:$0xff] %v7232
    %7402 = vst [vmem:[#allocation2 + $0x148] sm:$0xff] %v7233
    %7403 = vst [vmem:[#allocation2 + $0x150] sm:$0xff] %v7234
    %7404 = vst [vmem:[#allocation2 + $0x158] sm:$0xff] %v7235
    %7405 = vst [vmem:[#allocation2 + $0x160] sm:$0xff] %v7236
    %7406 = vst [vmem:[#allocation2 + $0x168] sm:$0xff] %v7237
    %7407 = vst [vmem:[#allocation2 + $0x170] sm:$0xff] %v7238
    %7408 = vst [vmem:[#allocation2 + $0x178] sm:$0xff] %v7239
    %7409 = vst [vmem:[#allocation2 + $0x180] sm:$0xff] %v7240
    %7410 = vst [vmem:[#allocation2 + $0x188] sm:$0xff] %v7241
    %7411 = vst [vmem:[#allocation2 + $0x190] sm:$0xff] %v7242
    %7412 = vst [vmem:[#allocation2 + $0x198] sm:$0xff] %v7243
    %7413 = vst [vmem:[#allocation2 + $0x1a0] sm:$0xff] %v7244
    %7414 = vst [vmem:[#allocation2 + $0x1a8] sm:$0xff] %v7245
    %7415 = vst [vmem:[#allocation2 + $0x1b0] sm:$0xff] %v7246
    %7416 = vst [vmem:[#allocation2 + $0x1b8] sm:$0xff] %v7247
    %7417 = vst [vmem:[#allocation2 + $0x1c0] sm:$0xff] %v7248
    %7418 = vst [vmem:[#allocation2 + $0x1c8] sm:$0xff] %v7249
    %7419 = vst [vmem:[#allocation2 + $0x1d0] sm:$0xff] %v7250
    %7420 = vst [vmem:[#allocation2 + $0x1d8] sm:$0xff] %v7251
    %7421 = vst [vmem:[#allocation2 + $0x1e0] sm:$0xff] %v7252
    %7422 = vst [vmem:[#allocation2 + $0x1e8] sm:$0xff] %v7253
    %7423 = vst [vmem:[#allocation2 + $0x1f0] sm:$0xff] %v7254
    %7424 = vst [vmem:[#allocation2 + $0x1f8] sm:$0xff] %v7255
    %7425 = vst [vmem:[#allocation2 + $0x200] sm:$0xff] %v7256
    %7426 = vst [vmem:[#allocation2 + $0x208] sm:$0xff] %v7257
    %7427 = vst [vmem:[#allocation2 + $0x210] sm:$0xff] %v7258
    %7428 = vst [vmem:[#allocation2 + $0x218] sm:$0xff] %v7259
    %7429 = vst [vmem:[#allocation2 + $0x220] sm:$0xff] %v7260
    %7430 = vst [vmem:[#allocation2 + $0x228] sm:$0xff] %v7261
    %7431 = vst [vmem:[#allocation2 + $0x230] sm:$0xff] %v7262
    %7432 = vst [vmem:[#allocation2 + $0x238] sm:$0xff] %v7263
    %7433 = vst [vmem:[#allocation2 + $0x240] sm:$0xff] %v7264
    %7434 = vst [vmem:[#allocation2 + $0x248] sm:$0xff] %v7265
    %7435 = vst [vmem:[#allocation2 + $0x250] sm:$0xff] %v7266
    %7436 = vst [vmem:[#allocation2 + $0x258] sm:$0xff] %v7267
    %7437 = vst [vmem:[#allocation2 + $0x260] sm:$0xff] %v7268
    %7438 = vst [vmem:[#allocation2 + $0x268] sm:$0xff] %v7269
    %7439 = vst [vmem:[#allocation2 + $0x270] sm:$0xff] %v7270
    %7440 = vst [vmem:[#allocation2 + $0x278] sm:$0xff] %v7271
    %7441 = vst [vmem:[#allocation2 + $0x280] sm:$0xff] %v7272
    %7442 = vst [vmem:[#allocation2 + $0x288] sm:$0xff] %v7273
    %7443 = vst [vmem:[#allocation2 + $0x290] sm:$0xff] %v7274
    %7444 = vst [vmem:[#allocation2 + $0x298] sm:$0xff] %v7275
    %7445 = vst [vmem:[#allocation2 + $0x2a0] sm:$0xff] %v7276
    %7446 = vst [vmem:[#allocation2 + $0x2a8] sm:$0xff] %v7277
    %7447 = vst [vmem:[#allocation2 + $0x2b0] sm:$0xff] %v7278
    %7448 = vst [vmem:[#allocation2 + $0x2b8] sm:$0xff] %v7279
    %7449 = vst [vmem:[#allocation2 + $0x2c0] sm:$0xff] %v7280
    %7450 = vst [vmem:[#allocation2 + $0x2c8] sm:$0xff] %v7281
    %7451 = vst [vmem:[#allocation2 + $0x2d0] sm:$0xff] %v7282
    %7452 = vst [vmem:[#allocation2 + $0x2d8] sm:$0xff] %v7283
    %7453 = vst [vmem:[#allocation2 + $0x2e0] sm:$0xff] %v7284
    %7454 = vst [vmem:[#allocation2 + $0x2e8] sm:$0xff] %v7285
    %7455 = vst [vmem:[#allocation2 + $0x2f0] sm:$0xff] %v7286
    %7456 = vst [vmem:[#allocation2 + $0x2f8] sm:$0xff] %v7287
    %7457 = vst [vmem:[#allocation2 + $0x300] sm:$0xff] %v7288
    %7458 = vst [vmem:[#allocation2 + $0x308] sm:$0xff] %v7289
    %7459 = vst [vmem:[#allocation2 + $0x310] sm:$0xff] %v7290
    %7460 = vst [vmem:[#allocation2 + $0x318] sm:$0xff] %v7291
    %7461 = vst [vmem:[#allocation2 + $0x320] sm:$0xff] %v7292
    %7462 = vst [vmem:[#allocation2 + $0x328] sm:$0xff] %v7293
    %7463 = vst [vmem:[#allocation2 + $0x330] sm:$0xff] %v7294
    %7464 = vst [vmem:[#allocation2 + $0x338] sm:$0xff] %v7295
    %7465 = vst [vmem:[#allocation2 + $0x340] sm:$0xff] %v7296
    %7466 = vst [vmem:[#allocation2 + $0x348] sm:$0xff] %v7297
    %7467 = vst [vmem:[#allocation2 + $0x350] sm:$0xff] %v7298
    %7468 = vst [vmem:[#allocation2 + $0x358] sm:$0xff] %v7299
    %7469 = vst [vmem:[#allocation2 + $0x360] sm:$0xff] %v7300
    %7470 = vst [vmem:[#allocation2 + $0x368] sm:$0xff] %v7301
    %7471 = vst [vmem:[#allocation2 + $0x370] sm:$0xff] %v7302
    %7472 = vst [vmem:[#allocation2 + $0x378] sm:$0xff] %v7303
    %7473 = vst [vmem:[#allocation2 + $0x380] sm:$0xff] %v7304
    %7474 = vst [vmem:[#allocation2 + $0x388] sm:$0xff] %v7305
    %7475 = vst [vmem:[#allocation2 + $0x390] sm:$0xff] %v7306
    %7476 = vst [vmem:[#allocation2 + $0x398] sm:$0xff] %v7307
    %7477 = vst [vmem:[#allocation2 + $0x3a0] sm:$0xff] %v7308
    %7478 = vst [vmem:[#allocation2 + $0x3a8] sm:$0xff] %v7309
    %7479 = vst [vmem:[#allocation2 + $0x3b0] sm:$0xff] %v7310
    %7480 = vst [vmem:[#allocation2 + $0x3b8] sm:$0xff] %v7311
    %7481 = vst [vmem:[#allocation2 + $0x3c0] sm:$0xff] %v7312
    %7482 = vst [vmem:[#allocation2 + $0x3c8] sm:$0xff] %v7313
    %7483 = vst [vmem:[#allocation2 + $0x3d0] sm:$0xff] %v7314
    %7484 = vst [vmem:[#allocation2 + $0x3d8] sm:$0xff] %v7315
    %7485 = vst [vmem:[#allocation2 + $0x3e0] sm:$0xff] %v7316
    %7486 = vst [vmem:[#allocation2 + $0x3e8] sm:$0xff] %v7317
    %7487 = vst [vmem:[#allocation2 + $0x3f0] sm:$0xff] %v7318
    %7488 = vst [vmem:[#allocation2 + $0x3f8] sm:$0xff] %v7319
    %7489 = vst [vmem:[#allocation2 + $0x400] sm:$0xff] %v7320
    %7490 = vst [vmem:[#allocation2 + $0x408] sm:$0xff] %v7321
    %7491 = vst [vmem:[#allocation2 + $0x410] sm:$0xff] %v7322
    %7492 = vst [vmem:[#allocation2 + $0x418] sm:$0xff] %v7323
    %7493 = vst [vmem:[#allocation2 + $0x420] sm:$0xff] %v7324
    %7494 = vst [vmem:[#allocation2 + $0x428] sm:$0xff] %v7325
    %7495 = vst [vmem:[#allocation2 + $0x430] sm:$0xff] %v7326
    %7496 = vst [vmem:[#allocation2 + $0x438] sm:$0xff] %v7327
    %7497 = vst [vmem:[#allocation2 + $0x440] sm:$0xff] %v7328
    %7498 = vst [vmem:[#allocation2 + $0x448] sm:$0xff] %v7329
    %7499 = vst [vmem:[#allocation2 + $0x450] sm:$0xff] %v7330
    %7500 = vst [vmem:[#allocation2 + $0x458] sm:$0xff] %v7331
    %7501 = vst [vmem:[#allocation2 + $0x460] sm:$0xff] %v7332
    %7502 = vst [vmem:[#allocation2 + $0x468] sm:$0xff] %v7333
    %7503 = vst [vmem:[#allocation2 + $0x470] sm:$0xff] %v7334
    %7504 = vst [vmem:[#allocation2 + $0x478] sm:$0xff] %v7335
    %7505 = vst [vmem:[#allocation2 + $0x480] sm:$0xff] %v7336
    %7506 = vst [vmem:[#allocation2 + $0x488] sm:$0xff] %v7337
    %7507 = vst [vmem:[#allocation2 + $0x490] sm:$0xff] %v7338
    %7508 = vst [vmem:[#allocation2 + $0x498] sm:$0xff] %v7339
    %7509 = vst [vmem:[#allocation2 + $0x4a0] sm:$0xff] %v7340
    %7510 = vst [vmem:[#allocation2 + $0x4a8] sm:$0xff] %v7341
    %7511 = vst [vmem:[#allocation2 + $0x4b0] sm:$0xff] %v7342
    %7512 = vst [vmem:[#allocation2 + $0x4b8] sm:$0xff] %v7343
    %7513 = vst [vmem:[#allocation2 + $0x4c0] sm:$0xff] %v7344
    %7514 = vst [vmem:[#allocation2 + $0x4c8] sm:$0xff] %v7345
    %7515 = vst [vmem:[#allocation2 + $0x4d0] sm:$0xff] %v7346
    %7516 = vst [vmem:[#allocation2 + $0x4d8] sm:$0xff] %v7347
    %7517 = vst [vmem:[#allocation2 + $0x4e0] sm:$0xff] %v7348
    %7518 = vst [vmem:[#allocation2 + $0x4e8] sm:$0xff] %v7349
    %7519 = vst [vmem:[#allocation2 + $0x4f0] sm:$0xff] %v7350
    %7520 = vst [vmem:[#allocation2 + $0x4f8] sm:$0xff] %v7351
    %7521 = vst [vmem:[#allocation2 + $0x500] sm:$0xff] %v7352
    %7522 = vst [vmem:[#allocation2 + $0x508] sm:$0xff] %v7353
    %7523 = vst [vmem:[#allocation2 + $0x510] sm:$0xff] %v7354
    %7524 = vst [vmem:[#allocation2 + $0x518] sm:$0xff] %v7355
    %7525 = vst [vmem:[#allocation2 + $0x520] sm:$0xff] %v7356
    %7526 = vst [vmem:[#allocation2 + $0x528] sm:$0xff] %v7357
    %7527 = vst [vmem:[#allocation2 + $0x530] sm:$0xff] %v7358
    %7528 = vst [vmem:[#allocation2 + $0x538] sm:$0xff] %v7359
    %7529 = vst [vmem:[#allocation2 + $0x540] sm:$0xff] %v7360
    // Predicated region
    $region14: #{tpu_custom_call.1} parent=1 // pred_check
      _
    $region15: #{tpu_custom_call.1} parent=1 // pred_check_branch
      %7531 = sbr.rel (0) target = $region17
    $region16: #{tpu_custom_call.1} parent=1 // pred_region
      %s7533 = ssub.s32 21632, 21632
      %7534 = vsyncadd [#allocation3], %s7533
      %s7535 = sshll.u32 [#allocation2], 4
      %s7536 = int_to_ptr.vmem [resolvable:$true] %s7535
      %7541 = dma.vmem_to_hbm [thread:$0]  %s7536, 21632, %s3, [#allocation3], 128, 128, 8
    $region17: #{tpu_custom_call.1} parent=1 // pred_fallthru
      _
    // Predicated region
    $region18: #{tpu_custom_call.1} parent=1 // pred_check
      _
    $region19: #{tpu_custom_call.1} parent=1 // pred_check_branch
      %7543 = sbr.rel (0) target = $region21
    $region20: #{tpu_custom_call.1} parent=1 // pred_region
      %7544 = dma.done [#allocation3], 21632
    $region21: #{tpu_custom_call.1} parent=1 // pred_fallthru
      _
    %7545 = vsyncpa [#allocation3], 1

</llo_original>
